<compile_context>
chip_gen: v7x
topology: tpu7x:2x2x1
jax: 0.10.0
libtpu: 0.0.40
codegen_flags: <defaults>
</compile_context>

<pallas_src>
import math

import jax
import jax.numpy as jnp
from jax import lax
from jax.experimental import pallas as pl
from jax.experimental.pallas import tpu as pltpu  # noqa: F401  (kept for parity)

# ----------------------------- configuration --------------------------------
B = 2            # batch
T = 8            # encoder frames (no subsampling)
FEAT = 16        # input feature dim
D = 32           # d_model
H = 4            # attention heads
DK = D // H      # per-head dim
DFF = 64         # feed-forward hidden dim
V = 16           # vocab size
L = 4            # max target length
L1P = 8          # decoder length: (L + 1) padded up to a sublane multiple of 8
SOS = V - 1
EOS = V - 1
IGNORE_ID = -1
BLANK = 0
CTC_WEIGHT = 0.5
LSM_WEIGHT = 0.1
REVERSE_WEIGHT = 0.0
SQRT_D = math.sqrt(D)
LANES = 128

assert L1P % 8 == 0 and L1P == T  # pos table & mask row-lengths are shared

# label-smoothing constants (compile-time scalars; no in-kernel log over (N,V))
LS_CONF = 1.0 - LSM_WEIGHT
LS_LOW = LSM_WEIGHT / (V - 1)
LS_LOG_CONF = math.log(LS_CONF)
LS_LOG_LOW = math.log(LS_LOW) if LS_LOW > 0.0 else 0.0


# --------------------------- packed parameter layout -------------------------
def _build_layouts():
    wspecs = [
        ("enc_emb_w", FEAT, D),
        ("enc_att_qkv_w", D, 3 * D),
        ("enc_att_o_w", D, D),
        ("enc_ff1_w", D, DFF),
        ("enc_ff2_w", DFF, D),
        ("ctc_w", D, V),
        ("dec_emb", V, D),
        ("dec_self_qkv_w", D, 3 * D),
        ("dec_self_o_w", D, D),
        ("dec_src_q_w", D, D),
        ("dec_src_kv_w", D, 2 * D),
        ("dec_src_o_w", D, D),
        ("dec_ff1_w", D, DFF),
        ("dec_ff2_w", DFF, D),
        ("dec_out_w", D, V),
        ("pos2d", B * T, D),           # positional-encoding table (constant)
    ]
    woff, off = {}, 0
    for name, r, c in wspecs:
        assert off % 8 == 0 and c <= LANES
        woff[name] = (off, r, c)
        off += r
    wrows = ((off + 7) // 8) * 8

    vspecs = [
        ("enc_emb_b", D), ("enc_emb_ln_g", D), ("enc_emb_ln_b", D),
        ("enc_ln1_g", D), ("enc_ln1_b", D), ("enc_att_qkv_b", 3 * D),
        ("enc_att_o_b", D), ("enc_ln2_g", D), ("enc_ln2_b", D),
        ("enc_ff1_b", DFF), ("enc_ff2_b", D), ("enc_after_g", D),
        ("enc_after_b", D), ("ctc_b", V),
        ("dec_ln1_g", D), ("dec_ln1_b", D), ("dec_self_qkv_b", 3 * D),
        ("dec_self_o_b", D), ("dec_ln2_g", D), ("dec_ln2_b", D),
        ("dec_src_q_b", D), ("dec_src_kv_b", 2 * D), ("dec_src_o_b", D),
        ("dec_ln3_g", D), ("dec_ln3_b", D), ("dec_ff1_b", DFF),
        ("dec_ff2_b", D), ("dec_after_g", D), ("dec_after_b", D),
        ("dec_out_b", V),
    ]
    vrow = {name: (i, w) for i, (name, w) in enumerate(vspecs)}
    vrows = ((len(vspecs) + 7) // 8) * 8
    return woff, wrows, vrow, vrows


W_OFF, W_ROWS, V_ROW, V_ROWS = _build_layouts()


# ------------------------ in-kernel (trace-time) helpers ---------------------
def _ln(x, g, b, eps=1e-5):
    mean = jnp.mean(x, axis=-1, keepdims=True)
    var = jnp.mean(jnp.square(x - mean), axis=-1, keepdims=True)
    return (x - mean) * lax.rsqrt(var + eps) * g + b


def _log_softmax(x):
    m = jnp.max(x, axis=-1, keepdims=True)
    return x - m - jnp.log(jnp.sum(jnp.exp(x - m), axis=-1, keepdims=True))


def _mha(q2d, k2d, v2d, keep, Lq, Lk):
    """Masked MHA batched over the batch dim (one softmax per head).

    q2d: (B*Lq, D), k2d/v2d: (B*Lk, D), keep: (B, Lq, Lk) bool.
    Returns context (B*Lq, D).
    """
    scale = 1.0 / math.sqrt(DK)
    q3 = q2d.reshape(B, Lq, D)
    k3 = k2d.reshape(B, Lk, D)
    v3 = v2d.reshape(B, Lk, D)
    heads = []
    for h in range(H):
        sl = slice(h * DK, (h + 1) * DK)
        s = jnp.einsum('bqd,bkd->bqk', q3[:, :, sl], k3[:, :, sl],
                       preferred_element_type=jnp.float32) * scale
        s = jnp.where(keep, s, -1e9)
        # masked entries become exactly 0 after exp; rows are never fully masked
        p = jnp.exp(s - jnp.max(s, axis=-1, keepdims=True))
        denom = jnp.sum(p, axis=-1, keepdims=True)
        p = p * pl.reciprocal(denom, approx=True)          # EUP slot
        heads.append(jnp.einsum('bqk,bkd->bqd', p, v3[:, :, sl],
                                preferred_element_type=jnp.float32))
    return jnp.concatenate(heads, axis=-1).reshape(B * Lq, D)


# ----------------------------- fused Pallas kernel ---------------------------
def fused_asr_kernel(speech_ref, ints_ref, vslab_ref, wslab_ref,
                     ctc_ref, stats_ref):
    def wt(name):
        off, r, c = W_OFF[name]
        return wslab_ref[off:off + r, 0:c]

    def vec(name):
        row, w = V_ROW[name]
        return vslab_ref[row:row + 1, 0:w]

    def dense(x, wname, bname, relu=False):
        y = jnp.dot(x, wt(wname), preferred_element_type=jnp.float32) + vec(bname)
        return jnp.maximum(y, 0.0) if relu else y

    ints = ints_ref[...]                                   # (B*L1P, 4) int32
    tgt_in = ints[:, 0:1]
    tgt_out = ints[:, 1:2]
    slen3 = ints[:, 2:3].reshape(B, L1P, 1)                # encoder lengths
    ylen3 = ints[:, 3:4].reshape(B, L1P, 1)                # ys_in lengths
    pos = wt("pos2d")                                      # (B*T, D)

    # ------------------------------ encoder ---------------------------------
    x = dense(speech_ref[...], "enc_emb_w", "enc_emb_b")
    x = _ln(x, vec("enc_emb_ln_g"), vec("enc_emb_ln_b"))
    x = x * SQRT_D + pos
    # pre-norm self-attention with fused QKV projection
    xn = _ln(x, vec("enc_ln1_g"), vec("enc_ln1_b"))
    qkv = dense(xn, "enc_att_qkv_w", "enc_att_qkv_b")
    enc_keep = lax.broadcasted_iota(jnp.int32, (B, T, T), 2) < slen3
    ctx = _mha(qkv[:, 0:D], qkv[:, D:2 * D], qkv[:, 2 * D:3 * D],
               enc_keep, T, T)
    x = x + dense(ctx, "enc_att_o_w", "enc_att_o_b")
    # pre-norm feed-forward
    xn = _ln(x, vec("enc_ln2_g"), vec("enc_ln2_b"))
    x = x + dense(dense(xn, "enc_ff1_w", "enc_ff1_b", relu=True),
                  "enc_ff2_w", "enc_ff2_b")
    enc = _ln(x, vec("enc_after_g"), vec("enc_after_b"))   # (B*T, D)

    # --------------------------- CTC head (fused) ----------------------------
    ctc_ref[...] = _log_softmax(dense(enc, "ctc_w", "ctc_b"))

    # ------------------------------ decoder ----------------------------------
    # embedding gather via one-hot matmul (MXU-friendly, no dynamic gather)
    onehot = jnp.where(
        lax.broadcasted_iota(jnp.int32, (B * L1P, V), 1) == tgt_in, 1.0, 0.0)
    x = jnp.dot(onehot, wt("dec_emb"),
                preferred_element_type=jnp.float32) * SQRT_D + pos
    # masked self-attention (causal + length mask), fused QKV
    xn = _ln(x, vec("dec_ln1_g"), vec("dec_ln1_b"))
    qkv = dense(xn, "dec_self_qkv_w", "dec_self_qkv_b")
    rowq = lax.broadcasted_iota(jnp.int32, (B, L1P, L1P), 1)
    colk = lax.broadcasted_iota(jnp.int32, (B, L1P, L1P), 2)
    tgt_keep = (colk < ylen3) & (colk <= rowq)
    ctx = _mha(qkv[:, 0:D], qkv[:, D:2 * D], qkv[:, 2 * D:3 * D],
               tgt_keep, L1P, L1P)
    x = x + dense(ctx, "dec_self_o_w", "dec_self_o_b")
    # cross-attention over the (still VMEM-resident) encoder output, fused KV
    xn = _ln(x, vec("dec_ln2_g"), vec("dec_ln2_b"))
    q = dense(xn, "dec_src_q_w", "dec_src_q_b")
    kv = dense(enc, "dec_src_kv_w", "dec_src_kv_b")
    src_keep = lax.broadcasted_iota(jnp.int32, (B, L1P, T), 2) < slen3
    ctx = _mha(q, kv[:, 0:D], kv[:, D:2 * D], src_keep, L1P, T)
    x = x + dense(ctx, "dec_src_o_w", "dec_src_o_b")
    # feed-forward + after-norm + output projection (stays in VMEM)
    xn = _ln(x, vec("dec_ln3_g"), vec("dec_ln3_b"))
    x = x + dense(dense(xn, "dec_ff1_w", "dec_ff1_b", relu=True),
                  "dec_ff2_w", "dec_ff2_b")
    x = _ln(x, vec("dec_after_g"), vec("dec_after_b"))
    logits = dense(x, "dec_out_w", "dec_out_b")            # (B*L1P, V)

    # ---------------- label-smoothing KL-sum + th_accuracy -------------------
    logp = _log_softmax(logits)
    cols = lax.broadcasted_iota(jnp.int32, logits.shape, 1)
    on_tgt = cols == tgt_out
    valid = tgt_out != IGNORE_ID
    kl = jnp.where(on_tgt, LS_CONF, LS_LOW) * (
        jnp.where(on_tgt, LS_LOG_CONF, LS_LOG_LOW) - logp)
    kl = jnp.where(valid, kl, 0.0)
    # first-argmax (ties resolved to lowest index, matching torch.argmax)
    row_max = jnp.max(logits, axis=-1, keepdims=True)
    colsf = cols.astype(jnp.float32)
    pred = jnp.min(jnp.where(logits == row_max, colsf, float(V)),
                   axis=-1, keepdims=True)
    correct = jnp.sum(jnp.where(valid & (pred == tgt_out.astype(jnp.float32)),
                                1.0, 0.0))
    total = jnp.sum(jnp.where(valid, 1.0, 0.0))

    stats_ref[0:1, 0:1] = jnp.sum(kl).reshape(1, 1)
    stats_ref[0:1, 1:2] = correct.reshape(1, 1)
    stats_ref[0:1, 2:3] = total.reshape(1, 1)
    stats_ref[0:1, 3:4] = jnp.zeros((1, 1), jnp.float32)


# ----------------------------- plain-JAX glue --------------------------------
def positional_encoding(length, dim):
    pos = jnp.arange(length, dtype=jnp.float32)[:, None]
    div = jnp.exp(jnp.arange(0, dim, 2, dtype=jnp.float32) *
                  (-math.log(10000.0) / dim))
    pe = jnp.zeros((length, dim), jnp.float32)
    pe = pe.at[:, 0::2].set(jnp.sin(pos * div))
    pe = pe.at[:, 1::2].set(jnp.cos(pos * div))
    return pe


def add_sos_eos(ys_pad, sos, eos, ignore_id):
    Bz, Lz = ys_pad.shape
    lens = jnp.sum(ys_pad != ignore_id, axis=1)
    ys_in = jnp.concatenate(
        [jnp.full((Bz, 1), sos, jnp.int32),
         jnp.where(ys_pad == ignore_id, eos, ys_pad)], axis=1)
    idx = jnp.arange(Lz + 1)[None, :]
    ys_ext = jnp.concatenate(
        [ys_pad, jnp.full((Bz, 1), ignore_id, jnp.int32)], axis=1)
    ys_out = jnp.where(idx == lens[:, None], eos, ys_ext)
    ys_out = jnp.where(idx > lens[:, None], ignore_id, ys_out)
    return ys_in.astype(jnp.int32), ys_out.astype(jnp.int32)


def ctc_loss_jax(log_probs, input_lengths, targets, target_lengths, blank=0):
    """CTC NLL (sum reduction), matching torch.nn.CTCLoss.

    TODO(synk): the CTC forward DP is sequential over time with data-dependent
    lengths; it stays in plain JAX but fully unrolled (T-1 steps) so XLA fuses
    it into a handful of fusions instead of 7 serial scan dispatches.
    Assumes targets contain no explicit blank (0) labels (standard CTC rule).
    """
    Bz, Tz, _ = log_probs.shape
    Lz = targets.shape[1]
    S = 2 * Lz + 1
    NEG = -1e30
    labels = jnp.where(targets == IGNORE_ID, 0, targets).astype(jnp.int32)
    ext = jnp.zeros((Bz, S), jnp.int32).at[:, 1::2].set(labels)
    ext_m2 = jnp.pad(ext, ((0, 0), (2, 0)))[:, :S]
    allow = (ext != blank) & (ext != ext_m2)
    allow = allow.at[:, :2].set(False)
    send = 2 * target_lengths

    def final_score(alpha):
        a1 = jnp.take_along_axis(alpha, send[:, None], axis=1)[:, 0]
        a2 = jnp.take_along_axis(alpha, jnp.maximum(send - 1, 0)[:, None],
                                 axis=1)[:, 0]
        m = jnp.maximum(a1, a2)
        return m + jnp.log(jnp.exp(a1 - m) + jnp.exp(a2 - m))

    lp0 = log_probs[:, 0, :]
    alpha = jnp.full((Bz, S), NEG)
    alpha = alpha.at[:, 0].set(lp0[:, blank])
    alpha = alpha.at[:, 1].set(jnp.take_along_axis(lp0, ext[:, 1:2], axis=1)[:, 0])
    per_utt = jnp.where(input_lengths == 1, final_score(alpha),
                        jnp.zeros((Bz,), jnp.float32))
    for t in range(1, Tz):                                   # unrolled DP
        lp_t = log_probs[:, t, :]
        emit = jnp.take_along_axis(lp_t, ext, axis=1)
        a0 = alpha
        a1 = jnp.concatenate([jnp.full((Bz, 1), NEG), alpha[:, :-1]], axis=1)
        a2 = jnp.concatenate([jnp.full((Bz, 2), NEG), alpha[:, :-2]], axis=1)
        a2 = jnp.where(allow, a2, NEG)
        m = jnp.maximum(jnp.maximum(a0, a1), a2)
        alpha = m + jnp.log(jnp.exp(a0 - m) + jnp.exp(a1 - m) +
                            jnp.exp(a2 - m)) + emit
        per_utt = jnp.where(input_lengths == t + 1, final_score(alpha), per_utt)
    return -jnp.sum(per_utt)                                 # reduction='sum'


def asr_forward(packed, speech, speech_lengths, text, text_lengths):
    """Mirrors ASRModel.forward: encoder -> CTC loss + attention loss -> mix."""
    enc_lens = jnp.minimum(speech_lengths, T).astype(jnp.int32)
    ys_in, ys_out = add_sos_eos(text, SOS, EOS, IGNORE_ID)
    pad_n = L1P - (L + 1)
    if pad_n > 0:
        ys_in_p = jnp.concatenate(
            [ys_in, jnp.full((B, pad_n), EOS, jnp.int32)], axis=1)
        ys_out_p = jnp.concatenate(
            [ys_out, jnp.full((B, pad_n), IGNORE_ID, jnp.int32)], axis=1)
    else:
        ys_in_p, ys_out_p = ys_in, ys_out
    ys_in_lens = (text_lengths + 1).astype(jnp.int32)

    # pack all runtime int32 side-data into one (B*L1P, 4) array (one DMA)
    ints = jnp.stack(
        [ys_in_p.reshape(-1), ys_out_p.reshape(-1),
         jnp.repeat(enc_lens, L1P), jnp.repeat(ys_in_lens, L1P)],
        axis=1).astype(jnp.int32)

    ctc_logp2d, stats = pl.pallas_call(
        fused_asr_kernel,
        out_shape=(jax.ShapeDtypeStruct((B * T, V), jnp.float32),
                   jax.ShapeDtypeStruct((1, 4), jnp.float32)),
    )(speech.reshape(B * T, FEAT), ints, packed['vslab'], packed['wslab'])

    kl_sum, correct, total = stats[0, 0], stats[0, 1], stats[0, 2]
    loss_att = (kl_sum / B) * (1.0 - REVERSE_WEIGHT)   # reverse decoder disabled
    acc_att = correct / total

    loss_ctc = ctc_loss_jax(ctc_logp2d.reshape(B, T, V), enc_lens,
                            text, text_lengths, blank=BLANK) / B

    loss = CTC_WEIGHT * loss_ctc + (1.0 - CTC_WEIGHT) * loss_att
    return {'loss': loss, 'loss_att': loss_att, 'loss_ctc': loss_ctc,
            'th_accuracy': acc_att}


# ----------------------------- parameter init --------------------------------
def init_params(key):
    keys = iter(jax.random.split(key, 64))

    def w(shape, scale=0.1):
        return jax.random.normal(next(keys), shape, jnp.float32) * scale

    z = lambda *s: jnp.zeros(s, jnp.float32)
    o = lambda *s: jnp.ones(s, jnp.float32)
    p = {}
    # encoder
    p['enc_emb_w'], p['enc_emb_b'] = w((FEAT, D)), z(D)
    p['enc_emb_ln_g'], p['enc_emb_ln_b'] = o(D), z(D)
    p['enc_att_qkv_w'], p['enc_att_qkv_b'] = w((D, 3 * D)), z(3 * D)   # fused QKV
    p['enc_att_o_w'], p['enc_att_o_b'] = w((D, D)), z(D)
    p['enc_ff1_w'], p['enc_ff1_b'] = w((D, DFF)), z(DFF)
    p['enc_ff2_w'], p['enc_ff2_b'] = w((DFF, D)), z(D)
    for name in ('enc_ln1', 'enc_ln2', 'enc_after'):
        p[f'{name}_g'], p[f'{name}_b'] = o(D), z(D)
    # decoder
    p['dec_emb'] = w((V, D), 1.0)
    p['dec_self_qkv_w'], p['dec_self_qkv_b'] = w((D, 3 * D)), z(3 * D)  # fused QKV
    p['dec_self_o_w'], p['dec_self_o_b'] = w((D, D)), z(D)
    p['dec_src_q_w'], p['dec_src_q_b'] = w((D, D)), z(D)
    p['dec_src_kv_w'], p['dec_src_kv_b'] = w((D, 2 * D)), z(2 * D)      # fused KV
    p['dec_src_o_w'], p['dec_src_o_b'] = w((D, D)), z(D)
    p['dec_ff1_w'], p['dec_ff1_b'] = w((D, DFF)), z(DFF)
    p['dec_ff2_w'], p['dec_ff2_b'] = w((DFF, D)), z(D)
    for name in ('dec_ln1', 'dec_ln2', 'dec_ln3', 'dec_after'):
        p[f'{name}_g'], p[f'{name}_b'] = o(D), z(D)
    p['dec_out_w'], p['dec_out_b'] = w((D, V)), z(V)
    # ctc head
    p['ctc_w'], p['ctc_b'] = w((D, V)), z(V)
    return p


def pack_params(p):
    """Pack all weights/biases into two lane-aligned VMEM slabs (done once,
    eagerly, outside jit -> zero per-call packing cost, 2 input DMAs)."""
    wslab = jnp.zeros((W_ROWS, LANES), jnp.float32)
    for name, (off, r, c) in W_OFF.items():
        val = (jnp.tile(positional_encoding(T, D), (B, 1))
               if name == "pos2d" else p[name])
        wslab = wslab.at[off:off + r, 0:c].set(val)
    vslab = jnp.zeros((V_ROWS, LANES), jnp.float32)
    for name, (row, wdt) in V_ROW.items():
        vslab = vslab.at[row, 0:wdt].set(p[name])
    return {'wslab': wslab, 'vslab': vslab}


# ----------------------------------- main ------------------------------------
if __name__ == "__main__":
    key = jax.random.PRNGKey(0)
    pkey, skey = jax.random.split(key)
    params = init_params(pkey)
    packed = pack_params(params)          # one-time, outside the jitted path

    # batch dict analog: feats, feats_lengths, target, target_lengths
    speech = jax.random.normal(skey, (B, T, FEAT), jnp.float32)
    speech_lengths = jnp.array([8, 6], jnp.int32)
    text = jnp.array([[3, 5, 7, 9], [2, 4, 6, IGNORE_ID]], jnp.int32)
    text_lengths = jnp.array([4, 3], jnp.int32)

    fwd = jax.jit(asr_forward)
    out = fwd(packed, speech, speech_lengths, text, text_lengths)
    jax.block_until_ready(out['loss'])
    assert bool(jnp.isfinite(out['loss']))
    assert bool(jnp.isfinite(out['loss_att']))
    assert bool(jnp.isfinite(out['loss_ctc']))
    assert bool(jnp.isfinite(out['th_accuracy']))
    print("KERNEL_OK")
</pallas_src>

<mosaic_0001>
module attributes {stable_mosaic.version = 11 : i64} {
  func.func @fused_asr_kernel(%arg0: memref<16x16xf32, #tpu.memory_space<vmem>>, %arg1: memref<16x4xi32, #tpu.memory_space<vmem>>, %arg2: memref<32x128xf32, #tpu.memory_space<vmem>>, %arg3: memref<528x128xf32, #tpu.memory_space<vmem>>, %arg4: memref<16x16xf32, #tpu.memory_space<vmem>>, %arg5: memref<1x4xf32, #tpu.memory_space<vmem>>) attributes {dimension_semantics = [], scalar_prefetch = 0 : i64, scratch_operands = 0 : i64, tpu.core_type = #tpu.core_type<tc>} {
    %c0 = arith.constant 0 : index
    %c0_0 = arith.constant 0 : index
    %0 = vector.load %arg1[%c0, %c0_0] : memref<16x4xi32, #tpu.memory_space<vmem>>, vector<16x4xi32>
    %1 = vector.extract_strided_slice %0 {offsets = [0, 0], sizes = [16, 1], strides = [1, 1]} : vector<16x4xi32> to vector<16x1xi32>
    %2 = vector.extract_strided_slice %0 {offsets = [0, 1], sizes = [16, 1], strides = [1, 1]} : vector<16x4xi32> to vector<16x1xi32>
    %3 = vector.extract_strided_slice %0 {offsets = [0, 2], sizes = [16, 1], strides = [1, 1]} : vector<16x4xi32> to vector<16x1xi32>
    %4 = vector.shape_cast %3 : vector<16x1xi32> to vector<2x8x1xi32>
    %5 = vector.extract_strided_slice %0 {offsets = [0, 3], sizes = [16, 1], strides = [1, 1]} : vector<16x4xi32> to vector<16x1xi32>
    %6 = vector.shape_cast %5 : vector<16x1xi32> to vector<2x8x1xi32>
    %c512 = arith.constant 512 : index
    %c0_1 = arith.constant 0 : index
    %7 = vector.load %arg3[%c512, %c0_1] : memref<528x128xf32, #tpu.memory_space<vmem>>, vector<16x32xf32>
    %c0_2 = arith.constant 0 : index
    %c0_3 = arith.constant 0 : index
    %8 = vector.load %arg0[%c0_2, %c0_3] : memref<16x16xf32, #tpu.memory_space<vmem>>, vector<16x16xf32>
    %c0_4 = arith.constant 0 : index
    %c0_5 = arith.constant 0 : index
    %9 = vector.load %arg3[%c0_4, %c0_5] : memref<528x128xf32, #tpu.memory_space<vmem>>, vector<16x32xf32>
    %cst = arith.constant dense<0.000000e+00> : vector<16x32xf32>
    %10 = tpu.matmul %8, %9, %cst {dimension_numbers = #tpu.dot_dimension_numbers<[1], [0], [0], [1], [0, 0, 1, 1], [], []>} : vector<16x16xf32>, vector<16x32xf32>, vector<16x32xf32> -> vector<16x32xf32>
    %c0_6 = arith.constant 0 : index
    %c0_7 = arith.constant 0 : index
    %11 = vector.load %arg2[%c0_6, %c0_7] : memref<32x128xf32, #tpu.memory_space<vmem>>, vector<1x32xf32>
    %12 = vector.broadcast %11 : vector<1x32xf32> to vector<16x32xf32>
    %13 = arith.addf %10, %12 : vector<16x32xf32>
    %c1 = arith.constant 1 : index
    %c0_8 = arith.constant 0 : index
    %14 = vector.load %arg2[%c1, %c0_8] : memref<32x128xf32, #tpu.memory_space<vmem>>, vector<1x32xf32>
    %c2 = arith.constant 2 : index
    %c0_9 = arith.constant 0 : index
    %15 = vector.load %arg2[%c2, %c0_9] : memref<32x128xf32, #tpu.memory_space<vmem>>, vector<1x32xf32>
    %cst_10 = arith.constant dense<0.000000e+00> : vector<16xf32>
    %16 = vector.multi_reduction <add>, %13, %cst_10 [1] : vector<16x32xf32> to vector<16xf32>
    %17 = vector.shape_cast %16 : vector<16xf32> to vector<16x1xf32>
    %cst_11 = arith.constant 3.200000e+01 : f32
    %18 = vector.broadcast %cst_11 : f32 to vector<16x1xf32>
    %19 = arith.divf %17, %18 : vector<16x1xf32>
    %20 = vector.broadcast %19 : vector<16x1xf32> to vector<16x32xf32>
    %21 = arith.subf %13, %20 : vector<16x32xf32>
    %22 = arith.mulf %21, %21 : vector<16x32xf32>
    %cst_12 = arith.constant dense<0.000000e+00> : vector<16xf32>
    %23 = vector.multi_reduction <add>, %22, %cst_12 [1] : vector<16x32xf32> to vector<16xf32>
    %24 = vector.shape_cast %23 : vector<16xf32> to vector<16x1xf32>
    %cst_13 = arith.constant 3.200000e+01 : f32
    %25 = vector.broadcast %cst_13 : f32 to vector<16x1xf32>
    %26 = arith.divf %24, %25 : vector<16x1xf32>
    %27 = vector.broadcast %19 : vector<16x1xf32> to vector<16x32xf32>
    %28 = arith.subf %13, %27 : vector<16x32xf32>
    %cst_14 = arith.constant 9.99999974E-6 : f32
    %29 = vector.broadcast %cst_14 : f32 to vector<16x1xf32>
    %30 = arith.addf %26, %29 : vector<16x1xf32>
    %31 = math.rsqrt %30 : vector<16x1xf32>
    %32 = vector.broadcast %31 : vector<16x1xf32> to vector<16x32xf32>
    %33 = arith.mulf %28, %32 : vector<16x32xf32>
    %34 = vector.broadcast %14 : vector<1x32xf32> to vector<16x32xf32>
    %35 = arith.mulf %33, %34 : vector<16x32xf32>
    %36 = vector.broadcast %15 : vector<1x32xf32> to vector<16x32xf32>
    %37 = arith.addf %35, %36 : vector<16x32xf32>
    %cst_15 = arith.constant 5.65685415 : f32
    %38 = vector.broadcast %cst_15 : f32 to vector<16x32xf32>
    %39 = arith.mulf %37, %38 : vector<16x32xf32>
    %40 = arith.addf %39, %7 : vector<16x32xf32>
    %c3 = arith.constant 3 : index
    %c0_16 = arith.constant 0 : index
    %41 = vector.load %arg2[%c3, %c0_16] : memref<32x128xf32, #tpu.memory_space<vmem>>, vector<1x32xf32>
    %c4 = arith.constant 4 : index
    %c0_17 = arith.constant 0 : index
    %42 = vector.load %arg2[%c4, %c0_17] : memref<32x128xf32, #tpu.memory_space<vmem>>, vector<1x32xf32>
    %cst_18 = arith.constant dense<0.000000e+00> : vector<16xf32>
    %43 = vector.multi_reduction <add>, %40, %cst_18 [1] : vector<16x32xf32> to vector<16xf32>
    %44 = vector.shape_cast %43 : vector<16xf32> to vector<16x1xf32>
    %cst_19 = arith.constant 3.200000e+01 : f32
    %45 = vector.broadcast %cst_19 : f32 to vector<16x1xf32>
    %46 = arith.divf %44, %45 : vector<16x1xf32>
    %47 = vector.broadcast %46 : vector<16x1xf32> to vector<16x32xf32>
    %48 = arith.subf %40, %47 : vector<16x32xf32>
    %49 = arith.mulf %48, %48 : vector<16x32xf32>
    %cst_20 = arith.constant dense<0.000000e+00> : vector<16xf32>
    %50 = vector.multi_reduction <add>, %49, %cst_20 [1] : vector<16x32xf32> to vector<16xf32>
    %51 = vector.shape_cast %50 : vector<16xf32> to vector<16x1xf32>
    %cst_21 = arith.constant 3.200000e+01 : f32
    %52 = vector.broadcast %cst_21 : f32 to vector<16x1xf32>
    %53 = arith.divf %51, %52 : vector<16x1xf32>
    %54 = vector.broadcast %46 : vector<16x1xf32> to vector<16x32xf32>
    %55 = arith.subf %40, %54 : vector<16x32xf32>
    %cst_22 = arith.constant 9.99999974E-6 : f32
    %56 = vector.broadcast %cst_22 : f32 to vector<16x1xf32>
    %57 = arith.addf %53, %56 : vector<16x1xf32>
    %58 = math.rsqrt %57 : vector<16x1xf32>
    %59 = vector.broadcast %58 : vector<16x1xf32> to vector<16x32xf32>
    %60 = arith.mulf %55, %59 : vector<16x32xf32>
    %61 = vector.broadcast %41 : vector<1x32xf32> to vector<16x32xf32>
    %62 = arith.mulf %60, %61 : vector<16x32xf32>
    %63 = vector.broadcast %42 : vector<1x32xf32> to vector<16x32xf32>
    %64 = arith.addf %62, %63 : vector<16x32xf32>
    %c16 = arith.constant 16 : index
    %c0_23 = arith.constant 0 : index
    %65 = vector.load %arg3[%c16, %c0_23] : memref<528x128xf32, #tpu.memory_space<vmem>>, vector<32x96xf32>
    %cst_24 = arith.constant dense<0.000000e+00> : vector<16x96xf32>
    %66 = tpu.matmul %64, %65, %cst_24 {dimension_numbers = #tpu.dot_dimension_numbers<[1], [0], [0], [1], [0, 0, 1, 1], [], []>} : vector<16x32xf32>, vector<32x96xf32>, vector<16x96xf32> -> vector<16x96xf32>
    %c5 = arith.constant 5 : index
    %c0_25 = arith.constant 0 : index
    %67 = vector.load %arg2[%c5, %c0_25] : memref<32x128xf32, #tpu.memory_space<vmem>>, vector<1x96xf32>
    %68 = vector.broadcast %67 : vector<1x96xf32> to vector<16x96xf32>
    %69 = arith.addf %66, %68 : vector<16x96xf32>
    %70 = tpu.iota {dimensions = array<i32: 2>} : vector<2x8x8xi32>
    %71 = vector.broadcast %4 : vector<2x8x1xi32> to vector<2x8x8xi32>
    %72 = arith.cmpi slt, %70, %71 : vector<2x8x8xi32>
    %73 = vector.extract_strided_slice %69 {offsets = [0, 0], sizes = [16, 32], strides = [1, 1]} : vector<16x96xf32> to vector<16x32xf32>
    %74 = vector.extract_strided_slice %69 {offsets = [0, 32], sizes = [16, 32], strides = [1, 1]} : vector<16x96xf32> to vector<16x32xf32>
    %75 = vector.extract_strided_slice %69 {offsets = [0, 64], sizes = [16, 32], strides = [1, 1]} : vector<16x96xf32> to vector<16x32xf32>
    %76 = vector.shape_cast %73 : vector<16x32xf32> to vector<2x8x32xf32>
    %77 = vector.shape_cast %74 : vector<16x32xf32> to vector<2x8x32xf32>
    %78 = vector.shape_cast %75 : vector<16x32xf32> to vector<2x8x32xf32>
    %79 = vector.extract_strided_slice %76 {offsets = [0, 0, 0], sizes = [2, 8, 8], strides = [1, 1, 1]} : vector<2x8x32xf32> to vector<2x8x8xf32>
    %80 = vector.extract_strided_slice %77 {offsets = [0, 0, 0], sizes = [2, 8, 8], strides = [1, 1, 1]} : vector<2x8x32xf32> to vector<2x8x8xf32>
    "tpu.trace_start"() <{level = 10 : i32, message = "bqd,bkd->bqk"}> : () -> ()
    %cst_26 = arith.constant dense<0.000000e+00> : vector<2x8x8xf32>
    %81 = tpu.matmul %79, %80, %cst_26 {dimension_numbers = #tpu.dot_dimension_numbers<[2], [2], [1], [1], [0, 0, 0, 1, 1, 1], [0], [0]>} : vector<2x8x8xf32>, vector<2x8x8xf32>, vector<2x8x8xf32> -> vector<2x8x8xf32>
    "tpu.trace_stop"() : () -> ()
    %cst_27 = arith.constant 0.353553385 : f32
    %82 = vector.broadcast %cst_27 : f32 to vector<2x8x8xf32>
    %83 = arith.mulf %81, %82 : vector<2x8x8xf32>
    %cst_28 = arith.constant -1.000000e+09 : f32
    %84 = vector.broadcast %cst_28 : f32 to vector<2x8x8xf32>
    %85 = arith.select %72, %83, %84 : vector<2x8x8xi1>, vector<2x8x8xf32>
    %cst_29 = arith.constant dense<0xFF800000> : vector<2x8xf32>
    %86 = vector.multi_reduction <maximumf>, %85, %cst_29 [2] : vector<2x8x8xf32> to vector<2x8xf32>
    %87 = vector.shape_cast %86 : vector<2x8xf32> to vector<2x8x1xf32>
    %88 = vector.broadcast %87 : vector<2x8x1xf32> to vector<2x8x8xf32>
    %89 = arith.subf %85, %88 : vector<2x8x8xf32>
    %90 = math.exp %89 : vector<2x8x8xf32>
    %cst_30 = arith.constant dense<0.000000e+00> : vector<2x8xf32>
    %91 = vector.multi_reduction <add>, %90, %cst_30 [2] : vector<2x8x8xf32> to vector<2x8xf32>
    %92 = vector.shape_cast %91 : vector<2x8xf32> to vector<2x8x1xf32>
    %93 = tpu.reciprocal %92 {approx = true} : vector<2x8x1xf32> -> vector<2x8x1xf32>
    %94 = vector.broadcast %93 : vector<2x8x1xf32> to vector<2x8x8xf32>
    %95 = arith.mulf %90, %94 : vector<2x8x8xf32>
    %96 = vector.extract_strided_slice %78 {offsets = [0, 0, 0], sizes = [2, 8, 8], strides = [1, 1, 1]} : vector<2x8x32xf32> to vector<2x8x8xf32>
    "tpu.trace_start"() <{level = 10 : i32, message = "bqk,bkd->bqd"}> : () -> ()
    %cst_31 = arith.constant dense<0.000000e+00> : vector<2x8x8xf32>
    %97 = tpu.matmul %95, %96, %cst_31 {dimension_numbers = #tpu.dot_dimension_numbers<[2], [1], [1], [2], [0, 0, 0, 1, 1, 2], [0], [0]>} : vector<2x8x8xf32>, vector<2x8x8xf32>, vector<2x8x8xf32> -> vector<2x8x8xf32>
    "tpu.trace_stop"() : () -> ()
    %98 = vector.extract_strided_slice %76 {offsets = [0, 0, 8], sizes = [2, 8, 8], strides = [1, 1, 1]} : vector<2x8x32xf32> to vector<2x8x8xf32>
    %99 = vector.extract_strided_slice %77 {offsets = [0, 0, 8], sizes = [2, 8, 8], strides = [1, 1, 1]} : vector<2x8x32xf32> to vector<2x8x8xf32>
    "tpu.trace_start"() <{level = 10 : i32, message = "bqd,bkd->bqk"}> : () -> ()
    %cst_32 = arith.constant dense<0.000000e+00> : vector<2x8x8xf32>
    %100 = tpu.matmul %98, %99, %cst_32 {dimension_numbers = #tpu.dot_dimension_numbers<[2], [2], [1], [1], [0, 0, 0, 1, 1, 1], [0], [0]>} : vector<2x8x8xf32>, vector<2x8x8xf32>, vector<2x8x8xf32> -> vector<2x8x8xf32>
    "tpu.trace_stop"() : () -> ()
    %cst_33 = arith.constant 0.353553385 : f32
    %101 = vector.broadcast %cst_33 : f32 to vector<2x8x8xf32>
    %102 = arith.mulf %100, %101 : vector<2x8x8xf32>
    %cst_34 = arith.constant -1.000000e+09 : f32
    %103 = vector.broadcast %cst_34 : f32 to vector<2x8x8xf32>
    %104 = arith.select %72, %102, %103 : vector<2x8x8xi1>, vector<2x8x8xf32>
    %cst_35 = arith.constant dense<0xFF800000> : vector<2x8xf32>
    %105 = vector.multi_reduction <maximumf>, %104, %cst_35 [2] : vector<2x8x8xf32> to vector<2x8xf32>
    %106 = vector.shape_cast %105 : vector<2x8xf32> to vector<2x8x1xf32>
    %107 = vector.broadcast %106 : vector<2x8x1xf32> to vector<2x8x8xf32>
    %108 = arith.subf %104, %107 : vector<2x8x8xf32>
    %109 = math.exp %108 : vector<2x8x8xf32>
    %cst_36 = arith.constant dense<0.000000e+00> : vector<2x8xf32>
    %110 = vector.multi_reduction <add>, %109, %cst_36 [2] : vector<2x8x8xf32> to vector<2x8xf32>
    %111 = vector.shape_cast %110 : vector<2x8xf32> to vector<2x8x1xf32>
    %112 = tpu.reciprocal %111 {approx = true} : vector<2x8x1xf32> -> vector<2x8x1xf32>
    %113 = vector.broadcast %112 : vector<2x8x1xf32> to vector<2x8x8xf32>
    %114 = arith.mulf %109, %113 : vector<2x8x8xf32>
    %115 = vector.extract_strided_slice %78 {offsets = [0, 0, 8], sizes = [2, 8, 8], strides = [1, 1, 1]} : vector<2x8x32xf32> to vector<2x8x8xf32>
    "tpu.trace_start"() <{level = 10 : i32, message = "bqk,bkd->bqd"}> : () -> ()
    %cst_37 = arith.constant dense<0.000000e+00> : vector<2x8x8xf32>
    %116 = tpu.matmul %114, %115, %cst_37 {dimension_numbers = #tpu.dot_dimension_numbers<[2], [1], [1], [2], [0, 0, 0, 1, 1, 2], [0], [0]>} : vector<2x8x8xf32>, vector<2x8x8xf32>, vector<2x8x8xf32> -> vector<2x8x8xf32>
    "tpu.trace_stop"() : () -> ()
    %117 = vector.extract_strided_slice %76 {offsets = [0, 0, 16], sizes = [2, 8, 8], strides = [1, 1, 1]} : vector<2x8x32xf32> to vector<2x8x8xf32>
    %118 = vector.extract_strided_slice %77 {offsets = [0, 0, 16], sizes = [2, 8, 8], strides = [1, 1, 1]} : vector<2x8x32xf32> to vector<2x8x8xf32>
    "tpu.trace_start"() <{level = 10 : i32, message = "bqd,bkd->bqk"}> : () -> ()
    %cst_38 = arith.constant dense<0.000000e+00> : vector<2x8x8xf32>
    %119 = tpu.matmul %117, %118, %cst_38 {dimension_numbers = #tpu.dot_dimension_numbers<[2], [2], [1], [1], [0, 0, 0, 1, 1, 1], [0], [0]>} : vector<2x8x8xf32>, vector<2x8x8xf32>, vector<2x8x8xf32> -> vector<2x8x8xf32>
    "tpu.trace_stop"() : () -> ()
    %cst_39 = arith.constant 0.353553385 : f32
    %120 = vector.broadcast %cst_39 : f32 to vector<2x8x8xf32>
    %121 = arith.mulf %119, %120 : vector<2x8x8xf32>
    %cst_40 = arith.constant -1.000000e+09 : f32
    %122 = vector.broadcast %cst_40 : f32 to vector<2x8x8xf32>
    %123 = arith.select %72, %121, %122 : vector<2x8x8xi1>, vector<2x8x8xf32>
    %cst_41 = arith.constant dense<0xFF800000> : vector<2x8xf32>
    %124 = vector.multi_reduction <maximumf>, %123, %cst_41 [2] : vector<2x8x8xf32> to vector<2x8xf32>
    %125 = vector.shape_cast %124 : vector<2x8xf32> to vector<2x8x1xf32>
    %126 = vector.broadcast %125 : vector<2x8x1xf32> to vector<2x8x8xf32>
    %127 = arith.subf %123, %126 : vector<2x8x8xf32>
    %128 = math.exp %127 : vector<2x8x8xf32>
    %cst_42 = arith.constant dense<0.000000e+00> : vector<2x8xf32>
    %129 = vector.multi_reduction <add>, %128, %cst_42 [2] : vector<2x8x8xf32> to vector<2x8xf32>
    %130 = vector.shape_cast %129 : vector<2x8xf32> to vector<2x8x1xf32>
    %131 = tpu.reciprocal %130 {approx = true} : vector<2x8x1xf32> -> vector<2x8x1xf32>
    %132 = vector.broadcast %131 : vector<2x8x1xf32> to vector<2x8x8xf32>
    %133 = arith.mulf %128, %132 : vector<2x8x8xf32>
    %134 = vector.extract_strided_slice %78 {offsets = [0, 0, 16], sizes = [2, 8, 8], strides = [1, 1, 1]} : vector<2x8x32xf32> to vector<2x8x8xf32>
    "tpu.trace_start"() <{level = 10 : i32, message = "bqk,bkd->bqd"}> : () -> ()
    %cst_43 = arith.constant dense<0.000000e+00> : vector<2x8x8xf32>
    %135 = tpu.matmul %133, %134, %cst_43 {dimension_numbers = #tpu.dot_dimension_numbers<[2], [1], [1], [2], [0, 0, 0, 1, 1, 2], [0], [0]>} : vector<2x8x8xf32>, vector<2x8x8xf32>, vector<2x8x8xf32> -> vector<2x8x8xf32>
    "tpu.trace_stop"() : () -> ()
    %136 = vector.extract_strided_slice %76 {offsets = [0, 0, 24], sizes = [2, 8, 8], strides = [1, 1, 1]} : vector<2x8x32xf32> to vector<2x8x8xf32>
    %137 = vector.extract_strided_slice %77 {offsets = [0, 0, 24], sizes = [2, 8, 8], strides = [1, 1, 1]} : vector<2x8x32xf32> to vector<2x8x8xf32>
    "tpu.trace_start"() <{level = 10 : i32, message = "bqd,bkd->bqk"}> : () -> ()
    %cst_44 = arith.constant dense<0.000000e+00> : vector<2x8x8xf32>
    %138 = tpu.matmul %136, %137, %cst_44 {dimension_numbers = #tpu.dot_dimension_numbers<[2], [2], [1], [1], [0, 0, 0, 1, 1, 1], [0], [0]>} : vector<2x8x8xf32>, vector<2x8x8xf32>, vector<2x8x8xf32> -> vector<2x8x8xf32>
    "tpu.trace_stop"() : () -> ()
    %cst_45 = arith.constant 0.353553385 : f32
    %139 = vector.broadcast %cst_45 : f32 to vector<2x8x8xf32>
    %140 = arith.mulf %138, %139 : vector<2x8x8xf32>
    %cst_46 = arith.constant -1.000000e+09 : f32
    %141 = vector.broadcast %cst_46 : f32 to vector<2x8x8xf32>
    %142 = arith.select %72, %140, %141 : vector<2x8x8xi1>, vector<2x8x8xf32>
    %cst_47 = arith.constant dense<0xFF800000> : vector<2x8xf32>
    %143 = vector.multi_reduction <maximumf>, %142, %cst_47 [2] : vector<2x8x8xf32> to vector<2x8xf32>
    %144 = vector.shape_cast %143 : vector<2x8xf32> to vector<2x8x1xf32>
    %145 = vector.broadcast %144 : vector<2x8x1xf32> to vector<2x8x8xf32>
    %146 = arith.subf %142, %145 : vector<2x8x8xf32>
    %147 = math.exp %146 : vector<2x8x8xf32>
    %cst_48 = arith.constant dense<0.000000e+00> : vector<2x8xf32>
    %148 = vector.multi_reduction <add>, %147, %cst_48 [2] : vector<2x8x8xf32> to vector<2x8xf32>
    %149 = vector.shape_cast %148 : vector<2x8xf32> to vector<2x8x1xf32>
    %150 = tpu.reciprocal %149 {approx = true} : vector<2x8x1xf32> -> vector<2x8x1xf32>
    %151 = vector.broadcast %150 : vector<2x8x1xf32> to vector<2x8x8xf32>
    %152 = arith.mulf %147, %151 : vector<2x8x8xf32>
    %153 = vector.extract_strided_slice %78 {offsets = [0, 0, 24], sizes = [2, 8, 8], strides = [1, 1, 1]} : vector<2x8x32xf32> to vector<2x8x8xf32>
    "tpu.trace_start"() <{level = 10 : i32, message = "bqk,bkd->bqd"}> : () -> ()
    %cst_49 = arith.constant dense<0.000000e+00> : vector<2x8x8xf32>
    %154 = tpu.matmul %152, %153, %cst_49 {dimension_numbers = #tpu.dot_dimension_numbers<[2], [1], [1], [2], [0, 0, 0, 1, 1, 2], [0], [0]>} : vector<2x8x8xf32>, vector<2x8x8xf32>, vector<2x8x8xf32> -> vector<2x8x8xf32>
    "tpu.trace_stop"() : () -> ()
    %155 = tpu.concatenate %97, %116, %135, %154 in 2 : vector<2x8x8xf32>, vector<2x8x8xf32>, vector<2x8x8xf32>, vector<2x8x8xf32> -> vector<2x8x32xf32>
    %156 = vector.shape_cast %155 : vector<2x8x32xf32> to vector<16x32xf32>
    %c48 = arith.constant 48 : index
    %c0_50 = arith.constant 0 : index
    %157 = vector.load %arg3[%c48, %c0_50] : memref<528x128xf32, #tpu.memory_space<vmem>>, vector<32x32xf32>
    %cst_51 = arith.constant dense<0.000000e+00> : vector<16x32xf32>
    %158 = tpu.matmul %156, %157, %cst_51 {dimension_numbers = #tpu.dot_dimension_numbers<[1], [0], [0], [1], [0, 0, 1, 1], [], []>} : vector<16x32xf32>, vector<32x32xf32>, vector<16x32xf32> -> vector<16x32xf32>
    %c6 = arith.constant 6 : index
    %c0_52 = arith.constant 0 : index
    %159 = vector.load %arg2[%c6, %c0_52] : memref<32x128xf32, #tpu.memory_space<vmem>>, vector<1x32xf32>
    %160 = vector.broadcast %159 : vector<1x32xf32> to vector<16x32xf32>
    %161 = arith.addf %158, %160 : vector<16x32xf32>
    %162 = arith.addf %40, %161 : vector<16x32xf32>
    %c7 = arith.constant 7 : index
    %c0_53 = arith.constant 0 : index
    %163 = vector.load %arg2[%c7, %c0_53] : memref<32x128xf32, #tpu.memory_space<vmem>>, vector<1x32xf32>
    %c8 = arith.constant 8 : index
    %c0_54 = arith.constant 0 : index
    %164 = vector.load %arg2[%c8, %c0_54] : memref<32x128xf32, #tpu.memory_space<vmem>>, vector<1x32xf32>
    %cst_55 = arith.constant dense<0.000000e+00> : vector<16xf32>
    %165 = vector.multi_reduction <add>, %162, %cst_55 [1] : vector<16x32xf32> to vector<16xf32>
    %166 = vector.shape_cast %165 : vector<16xf32> to vector<16x1xf32>
    %cst_56 = arith.constant 3.200000e+01 : f32
    %167 = vector.broadcast %cst_56 : f32 to vector<16x1xf32>
    %168 = arith.divf %166, %167 : vector<16x1xf32>
    %169 = vector.broadcast %168 : vector<16x1xf32> to vector<16x32xf32>
    %170 = arith.subf %162, %169 : vector<16x32xf32>
    %171 = arith.mulf %170, %170 : vector<16x32xf32>
    %cst_57 = arith.constant dense<0.000000e+00> : vector<16xf32>
    %172 = vector.multi_reduction <add>, %171, %cst_57 [1] : vector<16x32xf32> to vector<16xf32>
    %173 = vector.shape_cast %172 : vector<16xf32> to vector<16x1xf32>
    %cst_58 = arith.constant 3.200000e+01 : f32
    %174 = vector.broadcast %cst_58 : f32 to vector<16x1xf32>
    %175 = arith.divf %173, %174 : vector<16x1xf32>
    %176 = vector.broadcast %168 : vector<16x1xf32> to vector<16x32xf32>
    %177 = arith.subf %162, %176 : vector<16x32xf32>
    %cst_59 = arith.constant 9.99999974E-6 : f32
    %178 = vector.broadcast %cst_59 : f32 to vector<16x1xf32>
    %179 = arith.addf %175, %178 : vector<16x1xf32>
    %180 = math.rsqrt %179 : vector<16x1xf32>
    %181 = vector.broadcast %180 : vector<16x1xf32> to vector<16x32xf32>
    %182 = arith.mulf %177, %181 : vector<16x32xf32>
    %183 = vector.broadcast %163 : vector<1x32xf32> to vector<16x32xf32>
    %184 = arith.mulf %182, %183 : vector<16x32xf32>
    %185 = vector.broadcast %164 : vector<1x32xf32> to vector<16x32xf32>
    %186 = arith.addf %184, %185 : vector<16x32xf32>
    %c80 = arith.constant 80 : index
    %c0_60 = arith.constant 0 : index
    %187 = vector.load %arg3[%c80, %c0_60] : memref<528x128xf32, #tpu.memory_space<vmem>>, vector<32x64xf32>
    %cst_61 = arith.constant dense<0.000000e+00> : vector<16x64xf32>
    %188 = tpu.matmul %186, %187, %cst_61 {dimension_numbers = #tpu.dot_dimension_numbers<[1], [0], [0], [1], [0, 0, 1, 1], [], []>} : vector<16x32xf32>, vector<32x64xf32>, vector<16x64xf32> -> vector<16x64xf32>
    %c9 = arith.constant 9 : index
    %c0_62 = arith.constant 0 : index
    %189 = vector.load %arg2[%c9, %c0_62] : memref<32x128xf32, #tpu.memory_space<vmem>>, vector<1x64xf32>
    %190 = vector.broadcast %189 : vector<1x64xf32> to vector<16x64xf32>
    %191 = arith.addf %188, %190 : vector<16x64xf32>
    %cst_63 = arith.constant 0.000000e+00 : f32
    %192 = vector.broadcast %cst_63 : f32 to vector<16x64xf32>
    %193 = arith.maximumf %191, %192 : vector<16x64xf32>
    %c112 = arith.constant 112 : index
    %c0_64 = arith.constant 0 : index
    %194 = vector.load %arg3[%c112, %c0_64] : memref<528x128xf32, #tpu.memory_space<vmem>>, vector<64x32xf32>
    %cst_65 = arith.constant dense<0.000000e+00> : vector<16x32xf32>
    %195 = tpu.matmul %193, %194, %cst_65 {dimension_numbers = #tpu.dot_dimension_numbers<[1], [0], [0], [1], [0, 0, 1, 1], [], []>} : vector<16x64xf32>, vector<64x32xf32>, vector<16x32xf32> -> vector<16x32xf32>
    %c10 = arith.constant 10 : index
    %c0_66 = arith.constant 0 : index
    %196 = vector.load %arg2[%c10, %c0_66] : memref<32x128xf32, #tpu.memory_space<vmem>>, vector<1x32xf32>
    %197 = vector.broadcast %196 : vector<1x32xf32> to vector<16x32xf32>
    %198 = arith.addf %195, %197 : vector<16x32xf32>
    %199 = arith.addf %162, %198 : vector<16x32xf32>
    %c11 = arith.constant 11 : index
    %c0_67 = arith.constant 0 : index
    %200 = vector.load %arg2[%c11, %c0_67] : memref<32x128xf32, #tpu.memory_space<vmem>>, vector<1x32xf32>
    %c12 = arith.constant 12 : index
    %c0_68 = arith.constant 0 : index
    %201 = vector.load %arg2[%c12, %c0_68] : memref<32x128xf32, #tpu.memory_space<vmem>>, vector<1x32xf32>
    %cst_69 = arith.constant dense<0.000000e+00> : vector<16xf32>
    %202 = vector.multi_reduction <add>, %199, %cst_69 [1] : vector<16x32xf32> to vector<16xf32>
    %203 = vector.shape_cast %202 : vector<16xf32> to vector<16x1xf32>
    %cst_70 = arith.constant 3.200000e+01 : f32
    %204 = vector.broadcast %cst_70 : f32 to vector<16x1xf32>
    %205 = arith.divf %203, %204 : vector<16x1xf32>
    %206 = vector.broadcast %205 : vector<16x1xf32> to vector<16x32xf32>
    %207 = arith.subf %199, %206 : vector<16x32xf32>
    %208 = arith.mulf %207, %207 : vector<16x32xf32>
    %cst_71 = arith.constant dense<0.000000e+00> : vector<16xf32>
    %209 = vector.multi_reduction <add>, %208, %cst_71 [1] : vector<16x32xf32> to vector<16xf32>
    %210 = vector.shape_cast %209 : vector<16xf32> to vector<16x1xf32>
    %cst_72 = arith.constant 3.200000e+01 : f32
    %211 = vector.broadcast %cst_72 : f32 to vector<16x1xf32>
    %212 = arith.divf %210, %211 : vector<16x1xf32>
    %213 = vector.broadcast %205 : vector<16x1xf32> to vector<16x32xf32>
    %214 = arith.subf %199, %213 : vector<16x32xf32>
    %cst_73 = arith.constant 9.99999974E-6 : f32
    %215 = vector.broadcast %cst_73 : f32 to vector<16x1xf32>
    %216 = arith.addf %212, %215 : vector<16x1xf32>
    %217 = math.rsqrt %216 : vector<16x1xf32>
    %218 = vector.broadcast %217 : vector<16x1xf32> to vector<16x32xf32>
    %219 = arith.mulf %214, %218 : vector<16x32xf32>
    %220 = vector.broadcast %200 : vector<1x32xf32> to vector<16x32xf32>
    %221 = arith.mulf %219, %220 : vector<16x32xf32>
    %222 = vector.broadcast %201 : vector<1x32xf32> to vector<16x32xf32>
    %223 = arith.addf %221, %222 : vector<16x32xf32>
    %c176 = arith.constant 176 : index
    %c0_74 = arith.constant 0 : index
    %224 = vector.load %arg3[%c176, %c0_74] : memref<528x128xf32, #tpu.memory_space<vmem>>, vector<32x16xf32>
    %cst_75 = arith.constant dense<0.000000e+00> : vector<16x16xf32>
    %225 = tpu.matmul %223, %224, %cst_75 {dimension_numbers = #tpu.dot_dimension_numbers<[1], [0], [0], [1], [0, 0, 1, 1], [], []>} : vector<16x32xf32>, vector<32x16xf32>, vector<16x16xf32> -> vector<16x16xf32>
    %c13 = arith.constant 13 : index
    %c0_76 = arith.constant 0 : index
    %226 = vector.load %arg2[%c13, %c0_76] : memref<32x128xf32, #tpu.memory_space<vmem>>, vector<1x16xf32>
    %227 = vector.broadcast %226 : vector<1x16xf32> to vector<16x16xf32>
    %228 = arith.addf %225, %227 : vector<16x16xf32>
    %cst_77 = arith.constant dense<0xFF800000> : vector<16xf32>
    %229 = vector.multi_reduction <maximumf>, %228, %cst_77 [1] : vector<16x16xf32> to vector<16xf32>
    %230 = vector.shape_cast %229 : vector<16xf32> to vector<16x1xf32>
    %231 = vector.broadcast %230 : vector<16x1xf32> to vector<16x16xf32>
    %232 = arith.subf %228, %231 : vector<16x16xf32>
    %233 = vector.broadcast %230 : vector<16x1xf32> to vector<16x16xf32>
    %234 = arith.subf %228, %233 : vector<16x16xf32>
    %235 = math.exp %234 : vector<16x16xf32>
    %cst_78 = arith.constant dense<0.000000e+00> : vector<16xf32>
    %236 = vector.multi_reduction <add>, %235, %cst_78 [1] : vector<16x16xf32> to vector<16xf32>
    %237 = vector.shape_cast %236 : vector<16xf32> to vector<16x1xf32>
    %238 = math.log %237 : vector<16x1xf32>
    %239 = vector.broadcast %238 : vector<16x1xf32> to vector<16x16xf32>
    %240 = arith.subf %232, %239 : vector<16x16xf32>
    %c0_79 = arith.constant 0 : index
    %c0_80 = arith.constant 0 : index
    %241 = vector.load %arg4[%c0_79, %c0_80] : memref<16x16xf32, #tpu.memory_space<vmem>>, vector<16x16xf32>
    tpu.vector_store %arg4[%c0_79, %c0_80], %240 {strides = array<i32>} : memref<16x16xf32, #tpu.memory_space<vmem>>, vector<16x16xf32>,
    %242 = tpu.iota {dimensions = array<i32: 1>} : vector<16x16xi32>
    %243 = vector.broadcast %1 : vector<16x1xi32> to vector<16x16xi32>
    %244 = arith.cmpi eq, %242, %243 : vector<16x16xi32>
    %cst_81 = arith.constant 1.000000e+00 : f32
    %cst_82 = arith.constant 0.000000e+00 : f32
    %245 = vector.broadcast %cst_81 : f32 to vector<16x16xf32>
    %246 = vector.broadcast %cst_82 : f32 to vector<16x16xf32>
    %247 = arith.select %244, %245, %246 : vector<16x16xi1>, vector<16x16xf32>
    %c208 = arith.constant 208 : index
    %c0_83 = arith.constant 0 : index
    %248 = vector.load %arg3[%c208, %c0_83] : memref<528x128xf32, #tpu.memory_space<vmem>>, vector<16x32xf32>
    %cst_84 = arith.constant dense<0.000000e+00> : vector<16x32xf32>
    %249 = tpu.matmul %247, %248, %cst_84 {dimension_numbers = #tpu.dot_dimension_numbers<[1], [0], [0], [1], [0, 0, 1, 1], [], []>} : vector<16x16xf32>, vector<16x32xf32>, vector<16x32xf32> -> vector<16x32xf32>
    %cst_85 = arith.constant 5.65685415 : f32
    %250 = vector.broadcast %cst_85 : f32 to vector<16x32xf32>
    %251 = arith.mulf %249, %250 : vector<16x32xf32>
    %252 = arith.addf %251, %7 : vector<16x32xf32>
    %c14 = arith.constant 14 : index
    %c0_86 = arith.constant 0 : index
    %253 = vector.load %arg2[%c14, %c0_86] : memref<32x128xf32, #tpu.memory_space<vmem>>, vector<1x32xf32>
    %c15 = arith.constant 15 : index
    %c0_87 = arith.constant 0 : index
    %254 = vector.load %arg2[%c15, %c0_87] : memref<32x128xf32, #tpu.memory_space<vmem>>, vector<1x32xf32>
    %cst_88 = arith.constant dense<0.000000e+00> : vector<16xf32>
    %255 = vector.multi_reduction <add>, %252, %cst_88 [1] : vector<16x32xf32> to vector<16xf32>
    %256 = vector.shape_cast %255 : vector<16xf32> to vector<16x1xf32>
    %cst_89 = arith.constant 3.200000e+01 : f32
    %257 = vector.broadcast %cst_89 : f32 to vector<16x1xf32>
    %258 = arith.divf %256, %257 : vector<16x1xf32>
    %259 = vector.broadcast %258 : vector<16x1xf32> to vector<16x32xf32>
    %260 = arith.subf %252, %259 : vector<16x32xf32>
    %261 = arith.mulf %260, %260 : vector<16x32xf32>
    %cst_90 = arith.constant dense<0.000000e+00> : vector<16xf32>
    %262 = vector.multi_reduction <add>, %261, %cst_90 [1] : vector<16x32xf32> to vector<16xf32>
    %263 = vector.shape_cast %262 : vector<16xf32> to vector<16x1xf32>
    %cst_91 = arith.constant 3.200000e+01 : f32
    %264 = vector.broadcast %cst_91 : f32 to vector<16x1xf32>
    %265 = arith.divf %263, %264 : vector<16x1xf32>
    %266 = vector.broadcast %258 : vector<16x1xf32> to vector<16x32xf32>
    %267 = arith.subf %252, %266 : vector<16x32xf32>
    %cst_92 = arith.constant 9.99999974E-6 : f32
    %268 = vector.broadcast %cst_92 : f32 to vector<16x1xf32>
    %269 = arith.addf %265, %268 : vector<16x1xf32>
    %270 = math.rsqrt %269 : vector<16x1xf32>
    %271 = vector.broadcast %270 : vector<16x1xf32> to vector<16x32xf32>
    %272 = arith.mulf %267, %271 : vector<16x32xf32>
    %273 = vector.broadcast %253 : vector<1x32xf32> to vector<16x32xf32>
    %274 = arith.mulf %272, %273 : vector<16x32xf32>
    %275 = vector.broadcast %254 : vector<1x32xf32> to vector<16x32xf32>
    %276 = arith.addf %274, %275 : vector<16x32xf32>
    %c224 = arith.constant 224 : index
    %c0_93 = arith.constant 0 : index
    %277 = vector.load %arg3[%c224, %c0_93] : memref<528x128xf32, #tpu.memory_space<vmem>>, vector<32x96xf32>
    %cst_94 = arith.constant dense<0.000000e+00> : vector<16x96xf32>
    %278 = tpu.matmul %276, %277, %cst_94 {dimension_numbers = #tpu.dot_dimension_numbers<[1], [0], [0], [1], [0, 0, 1, 1], [], []>} : vector<16x32xf32>, vector<32x96xf32>, vector<16x96xf32> -> vector<16x96xf32>
    %c16_95 = arith.constant 16 : index
    %c0_96 = arith.constant 0 : index
    %279 = vector.load %arg2[%c16_95, %c0_96] : memref<32x128xf32, #tpu.memory_space<vmem>>, vector<1x96xf32>
    %280 = vector.broadcast %279 : vector<1x96xf32> to vector<16x96xf32>
    %281 = arith.addf %278, %280 : vector<16x96xf32>
    %282 = tpu.iota {dimensions = array<i32: 1>} : vector<2x8x8xi32>
    %283 = tpu.iota {dimensions = array<i32: 2>} : vector<2x8x8xi32>
    %284 = vector.broadcast %6 : vector<2x8x1xi32> to vector<2x8x8xi32>
    %285 = arith.cmpi slt, %283, %284 : vector<2x8x8xi32>
    %286 = arith.cmpi sle, %283, %282 : vector<2x8x8xi32>
    %287 = arith.andi %285, %286 : vector<2x8x8xi1>
    %288 = vector.extract_strided_slice %281 {offsets = [0, 0], sizes = [16, 32], strides = [1, 1]} : vector<16x96xf32> to vector<16x32xf32>
    %289 = vector.extract_strided_slice %281 {offsets = [0, 32], sizes = [16, 32], strides = [1, 1]} : vector<16x96xf32> to vector<16x32xf32>
    %290 = vector.extract_strided_slice %281 {offsets = [0, 64], sizes = [16, 32], strides = [1, 1]} : vector<16x96xf32> to vector<16x32xf32>
    %291 = vector.shape_cast %288 : vector<16x32xf32> to vector<2x8x32xf32>
    %292 = vector.shape_cast %289 : vector<16x32xf32> to vector<2x8x32xf32>
    %293 = vector.shape_cast %290 : vector<16x32xf32> to vector<2x8x32xf32>
    %294 = vector.extract_strided_slice %291 {offsets = [0, 0, 0], sizes = [2, 8, 8], strides = [1, 1, 1]} : vector<2x8x32xf32> to vector<2x8x8xf32>
    %295 = vector.extract_strided_slice %292 {offsets = [0, 0, 0], sizes = [2, 8, 8], strides = [1, 1, 1]} : vector<2x8x32xf32> to vector<2x8x8xf32>
    "tpu.trace_start"() <{level = 10 : i32, message = "bqd,bkd->bqk"}> : () -> ()
    %cst_97 = arith.constant dense<0.000000e+00> : vector<2x8x8xf32>
    %296 = tpu.matmul %294, %295, %cst_97 {dimension_numbers = #tpu.dot_dimension_numbers<[2], [2], [1], [1], [0, 0, 0, 1, 1, 1], [0], [0]>} : vector<2x8x8xf32>, vector<2x8x8xf32>, vector<2x8x8xf32> -> vector<2x8x8xf32>
    "tpu.trace_stop"() : () -> ()
    %cst_98 = arith.constant 0.353553385 : f32
    %297 = vector.broadcast %cst_98 : f32 to vector<2x8x8xf32>
    %298 = arith.mulf %296, %297 : vector<2x8x8xf32>
    %cst_99 = arith.constant -1.000000e+09 : f32
    %299 = vector.broadcast %cst_99 : f32 to vector<2x8x8xf32>
    %300 = arith.select %287, %298, %299 : vector<2x8x8xi1>, vector<2x8x8xf32>
    %cst_100 = arith.constant dense<0xFF800000> : vector<2x8xf32>
    %301 = vector.multi_reduction <maximumf>, %300, %cst_100 [2] : vector<2x8x8xf32> to vector<2x8xf32>
    %302 = vector.shape_cast %301 : vector<2x8xf32> to vector<2x8x1xf32>
    %303 = vector.broadcast %302 : vector<2x8x1xf32> to vector<2x8x8xf32>
    %304 = arith.subf %300, %303 : vector<2x8x8xf32>
    %305 = math.exp %304 : vector<2x8x8xf32>
    %cst_101 = arith.constant dense<0.000000e+00> : vector<2x8xf32>
    %306 = vector.multi_reduction <add>, %305, %cst_101 [2] : vector<2x8x8xf32> to vector<2x8xf32>
    %307 = vector.shape_cast %306 : vector<2x8xf32> to vector<2x8x1xf32>
    %308 = tpu.reciprocal %307 {approx = true} : vector<2x8x1xf32> -> vector<2x8x1xf32>
    %309 = vector.broadcast %308 : vector<2x8x1xf32> to vector<2x8x8xf32>
    %310 = arith.mulf %305, %309 : vector<2x8x8xf32>
    %311 = vector.extract_strided_slice %293 {offsets = [0, 0, 0], sizes = [2, 8, 8], strides = [1, 1, 1]} : vector<2x8x32xf32> to vector<2x8x8xf32>
    "tpu.trace_start"() <{level = 10 : i32, message = "bqk,bkd->bqd"}> : () -> ()
    %cst_102 = arith.constant dense<0.000000e+00> : vector<2x8x8xf32>
    %312 = tpu.matmul %310, %311, %cst_102 {dimension_numbers = #tpu.dot_dimension_numbers<[2], [1], [1], [2], [0, 0, 0, 1, 1, 2], [0], [0]>} : vector<2x8x8xf32>, vector<2x8x8xf32>, vector<2x8x8xf32> -> vector<2x8x8xf32>
    "tpu.trace_stop"() : () -> ()
    %313 = vector.extract_strided_slice %291 {offsets = [0, 0, 8], sizes = [2, 8, 8], strides = [1, 1, 1]} : vector<2x8x32xf32> to vector<2x8x8xf32>
    %314 = vector.extract_strided_slice %292 {offsets = [0, 0, 8], sizes = [2, 8, 8], strides = [1, 1, 1]} : vector<2x8x32xf32> to vector<2x8x8xf32>
    "tpu.trace_start"() <{level = 10 : i32, message = "bqd,bkd->bqk"}> : () -> ()
    %cst_103 = arith.constant dense<0.000000e+00> : vector<2x8x8xf32>
    %315 = tpu.matmul %313, %314, %cst_103 {dimension_numbers = #tpu.dot_dimension_numbers<[2], [2], [1], [1], [0, 0, 0, 1, 1, 1], [0], [0]>} : vector<2x8x8xf32>, vector<2x8x8xf32>, vector<2x8x8xf32> -> vector<2x8x8xf32>
    "tpu.trace_stop"() : () -> ()
    %cst_104 = arith.constant 0.353553385 : f32
    %316 = vector.broadcast %cst_104 : f32 to vector<2x8x8xf32>
    %317 = arith.mulf %315, %316 : vector<2x8x8xf32>
    %cst_105 = arith.constant -1.000000e+09 : f32
    %318 = vector.broadcast %cst_105 : f32 to vector<2x8x8xf32>
    %319 = arith.select %287, %317, %318 : vector<2x8x8xi1>, vector<2x8x8xf32>
    %cst_106 = arith.constant dense<0xFF800000> : vector<2x8xf32>
    %320 = vector.multi_reduction <maximumf>, %319, %cst_106 [2] : vector<2x8x8xf32> to vector<2x8xf32>
    %321 = vector.shape_cast %320 : vector<2x8xf32> to vector<2x8x1xf32>
    %322 = vector.broadcast %321 : vector<2x8x1xf32> to vector<2x8x8xf32>
    %323 = arith.subf %319, %322 : vector<2x8x8xf32>
    %324 = math.exp %323 : vector<2x8x8xf32>
    %cst_107 = arith.constant dense<0.000000e+00> : vector<2x8xf32>
    %325 = vector.multi_reduction <add>, %324, %cst_107 [2] : vector<2x8x8xf32> to vector<2x8xf32>
    %326 = vector.shape_cast %325 : vector<2x8xf32> to vector<2x8x1xf32>
    %327 = tpu.reciprocal %326 {approx = true} : vector<2x8x1xf32> -> vector<2x8x1xf32>
    %328 = vector.broadcast %327 : vector<2x8x1xf32> to vector<2x8x8xf32>
    %329 = arith.mulf %324, %328 : vector<2x8x8xf32>
    %330 = vector.extract_strided_slice %293 {offsets = [0, 0, 8], sizes = [2, 8, 8], strides = [1, 1, 1]} : vector<2x8x32xf32> to vector<2x8x8xf32>
    "tpu.trace_start"() <{level = 10 : i32, message = "bqk,bkd->bqd"}> : () -> ()
    %cst_108 = arith.constant dense<0.000000e+00> : vector<2x8x8xf32>
    %331 = tpu.matmul %329, %330, %cst_108 {dimension_numbers = #tpu.dot_dimension_numbers<[2], [1], [1], [2], [0, 0, 0, 1, 1, 2], [0], [0]>} : vector<2x8x8xf32>, vector<2x8x8xf32>, vector<2x8x8xf32> -> vector<2x8x8xf32>
    "tpu.trace_stop"() : () -> ()
    %332 = vector.extract_strided_slice %291 {offsets = [0, 0, 16], sizes = [2, 8, 8], strides = [1, 1, 1]} : vector<2x8x32xf32> to vector<2x8x8xf32>
    %333 = vector.extract_strided_slice %292 {offsets = [0, 0, 16], sizes = [2, 8, 8], strides = [1, 1, 1]} : vector<2x8x32xf32> to vector<2x8x8xf32>
    "tpu.trace_start"() <{level = 10 : i32, message = "bqd,bkd->bqk"}> : () -> ()
    %cst_109 = arith.constant dense<0.000000e+00> : vector<2x8x8xf32>
    %334 = tpu.matmul %332, %333, %cst_109 {dimension_numbers = #tpu.dot_dimension_numbers<[2], [2], [1], [1], [0, 0, 0, 1, 1, 1], [0], [0]>} : vector<2x8x8xf32>, vector<2x8x8xf32>, vector<2x8x8xf32> -> vector<2x8x8xf32>
    "tpu.trace_stop"() : () -> ()
    %cst_110 = arith.constant 0.353553385 : f32
    %335 = vector.broadcast %cst_110 : f32 to vector<2x8x8xf32>
    %336 = arith.mulf %334, %335 : vector<2x8x8xf32>
    %cst_111 = arith.constant -1.000000e+09 : f32
    %337 = vector.broadcast %cst_111 : f32 to vector<2x8x8xf32>
    %338 = arith.select %287, %336, %337 : vector<2x8x8xi1>, vector<2x8x8xf32>
    %cst_112 = arith.constant dense<0xFF800000> : vector<2x8xf32>
    %339 = vector.multi_reduction <maximumf>, %338, %cst_112 [2] : vector<2x8x8xf32> to vector<2x8xf32>
    %340 = vector.shape_cast %339 : vector<2x8xf32> to vector<2x8x1xf32>
    %341 = vector.broadcast %340 : vector<2x8x1xf32> to vector<2x8x8xf32>
    %342 = arith.subf %338, %341 : vector<2x8x8xf32>
    %343 = math.exp %342 : vector<2x8x8xf32>
    %cst_113 = arith.constant dense<0.000000e+00> : vector<2x8xf32>
    %344 = vector.multi_reduction <add>, %343, %cst_113 [2] : vector<2x8x8xf32> to vector<2x8xf32>
    %345 = vector.shape_cast %344 : vector<2x8xf32> to vector<2x8x1xf32>
    %346 = tpu.reciprocal %345 {approx = true} : vector<2x8x1xf32> -> vector<2x8x1xf32>
    %347 = vector.broadcast %346 : vector<2x8x1xf32> to vector<2x8x8xf32>
    %348 = arith.mulf %343, %347 : vector<2x8x8xf32>
    %349 = vector.extract_strided_slice %293 {offsets = [0, 0, 16], sizes = [2, 8, 8], strides = [1, 1, 1]} : vector<2x8x32xf32> to vector<2x8x8xf32>
    "tpu.trace_start"() <{level = 10 : i32, message = "bqk,bkd->bqd"}> : () -> ()
    %cst_114 = arith.constant dense<0.000000e+00> : vector<2x8x8xf32>
    %350 = tpu.matmul %348, %349, %cst_114 {dimension_numbers = #tpu.dot_dimension_numbers<[2], [1], [1], [2], [0, 0, 0, 1, 1, 2], [0], [0]>} : vector<2x8x8xf32>, vector<2x8x8xf32>, vector<2x8x8xf32> -> vector<2x8x8xf32>
    "tpu.trace_stop"() : () -> ()
    %351 = vector.extract_strided_slice %291 {offsets = [0, 0, 24], sizes = [2, 8, 8], strides = [1, 1, 1]} : vector<2x8x32xf32> to vector<2x8x8xf32>
    %352 = vector.extract_strided_slice %292 {offsets = [0, 0, 24], sizes = [2, 8, 8], strides = [1, 1, 1]} : vector<2x8x32xf32> to vector<2x8x8xf32>
    "tpu.trace_start"() <{level = 10 : i32, message = "bqd,bkd->bqk"}> : () -> ()
    %cst_115 = arith.constant dense<0.000000e+00> : vector<2x8x8xf32>
    %353 = tpu.matmul %351, %352, %cst_115 {dimension_numbers = #tpu.dot_dimension_numbers<[2], [2], [1], [1], [0, 0, 0, 1, 1, 1], [0], [0]>} : vector<2x8x8xf32>, vector<2x8x8xf32>, vector<2x8x8xf32> -> vector<2x8x8xf32>
    "tpu.trace_stop"() : () -> ()
    %cst_116 = arith.constant 0.353553385 : f32
    %354 = vector.broadcast %cst_116 : f32 to vector<2x8x8xf32>
    %355 = arith.mulf %353, %354 : vector<2x8x8xf32>
    %cst_117 = arith.constant -1.000000e+09 : f32
    %356 = vector.broadcast %cst_117 : f32 to vector<2x8x8xf32>
    %357 = arith.select %287, %355, %356 : vector<2x8x8xi1>, vector<2x8x8xf32>
    %cst_118 = arith.constant dense<0xFF800000> : vector<2x8xf32>
    %358 = vector.multi_reduction <maximumf>, %357, %cst_118 [2] : vector<2x8x8xf32> to vector<2x8xf32>
    %359 = vector.shape_cast %358 : vector<2x8xf32> to vector<2x8x1xf32>
    %360 = vector.broadcast %359 : vector<2x8x1xf32> to vector<2x8x8xf32>
    %361 = arith.subf %357, %360 : vector<2x8x8xf32>
    %362 = math.exp %361 : vector<2x8x8xf32>
    %cst_119 = arith.constant dense<0.000000e+00> : vector<2x8xf32>
    %363 = vector.multi_reduction <add>, %362, %cst_119 [2] : vector<2x8x8xf32> to vector<2x8xf32>
    %364 = vector.shape_cast %363 : vector<2x8xf32> to vector<2x8x1xf32>
    %365 = tpu.reciprocal %364 {approx = true} : vector<2x8x1xf32> -> vector<2x8x1xf32>
    %366 = vector.broadcast %365 : vector<2x8x1xf32> to vector<2x8x8xf32>
    %367 = arith.mulf %362, %366 : vector<2x8x8xf32>
    %368 = vector.extract_strided_slice %293 {offsets = [0, 0, 24], sizes = [2, 8, 8], strides = [1, 1, 1]} : vector<2x8x32xf32> to vector<2x8x8xf32>
    "tpu.trace_start"() <{level = 10 : i32, message = "bqk,bkd->bqd"}> : () -> ()
    %cst_120 = arith.constant dense<0.000000e+00> : vector<2x8x8xf32>
    %369 = tpu.matmul %367, %368, %cst_120 {dimension_numbers = #tpu.dot_dimension_numbers<[2], [1], [1], [2], [0, 0, 0, 1, 1, 2], [0], [0]>} : vector<2x8x8xf32>, vector<2x8x8xf32>, vector<2x8x8xf32> -> vector<2x8x8xf32>
    "tpu.trace_stop"() : () -> ()
    %370 = tpu.concatenate %312, %331, %350, %369 in 2 : vector<2x8x8xf32>, vector<2x8x8xf32>, vector<2x8x8xf32>, vector<2x8x8xf32> -> vector<2x8x32xf32>
    %371 = vector.shape_cast %370 : vector<2x8x32xf32> to vector<16x32xf32>
    %c256 = arith.constant 256 : index
    %c0_121 = arith.constant 0 : index
    %372 = vector.load %arg3[%c256, %c0_121] : memref<528x128xf32, #tpu.memory_space<vmem>>, vector<32x32xf32>
    %cst_122 = arith.constant dense<0.000000e+00> : vector<16x32xf32>
    %373 = tpu.matmul %371, %372, %cst_122 {dimension_numbers = #tpu.dot_dimension_numbers<[1], [0], [0], [1], [0, 0, 1, 1], [], []>} : vector<16x32xf32>, vector<32x32xf32>, vector<16x32xf32> -> vector<16x32xf32>
    %c17 = arith.constant 17 : index
    %c0_123 = arith.constant 0 : index
    %374 = vector.load %arg2[%c17, %c0_123] : memref<32x128xf32, #tpu.memory_space<vmem>>, vector<1x32xf32>
    %375 = vector.broadcast %374 : vector<1x32xf32> to vector<16x32xf32>
    %376 = arith.addf %373, %375 : vector<16x32xf32>
    %377 = arith.addf %252, %376 : vector<16x32xf32>
    %c18 = arith.constant 18 : index
    %c0_124 = arith.constant 0 : index
    %378 = vector.load %arg2[%c18, %c0_124] : memref<32x128xf32, #tpu.memory_space<vmem>>, vector<1x32xf32>
    %c19 = arith.constant 19 : index
    %c0_125 = arith.constant 0 : index
    %379 = vector.load %arg2[%c19, %c0_125] : memref<32x128xf32, #tpu.memory_space<vmem>>, vector<1x32xf32>
    %cst_126 = arith.constant dense<0.000000e+00> : vector<16xf32>
    %380 = vector.multi_reduction <add>, %377, %cst_126 [1] : vector<16x32xf32> to vector<16xf32>
    %381 = vector.shape_cast %380 : vector<16xf32> to vector<16x1xf32>
    %cst_127 = arith.constant 3.200000e+01 : f32
    %382 = vector.broadcast %cst_127 : f32 to vector<16x1xf32>
    %383 = arith.divf %381, %382 : vector<16x1xf32>
    %384 = vector.broadcast %383 : vector<16x1xf32> to vector<16x32xf32>
    %385 = arith.subf %377, %384 : vector<16x32xf32>
    %386 = arith.mulf %385, %385 : vector<16x32xf32>
    %cst_128 = arith.constant dense<0.000000e+00> : vector<16xf32>
    %387 = vector.multi_reduction <add>, %386, %cst_128 [1] : vector<16x32xf32> to vector<16xf32>
    %388 = vector.shape_cast %387 : vector<16xf32> to vector<16x1xf32>
    %cst_129 = arith.constant 3.200000e+01 : f32
    %389 = vector.broadcast %cst_129 : f32 to vector<16x1xf32>
    %390 = arith.divf %388, %389 : vector<16x1xf32>
    %391 = vector.broadcast %383 : vector<16x1xf32> to vector<16x32xf32>
    %392 = arith.subf %377, %391 : vector<16x32xf32>
    %cst_130 = arith.constant 9.99999974E-6 : f32
    %393 = vector.broadcast %cst_130 : f32 to vector<16x1xf32>
    %394 = arith.addf %390, %393 : vector<16x1xf32>
    %395 = math.rsqrt %394 : vector<16x1xf32>
    %396 = vector.broadcast %395 : vector<16x1xf32> to vector<16x32xf32>
    %397 = arith.mulf %392, %396 : vector<16x32xf32>
    %398 = vector.broadcast %378 : vector<1x32xf32> to vector<16x32xf32>
    %399 = arith.mulf %397, %398 : vector<16x32xf32>
    %400 = vector.broadcast %379 : vector<1x32xf32> to vector<16x32xf32>
    %401 = arith.addf %399, %400 : vector<16x32xf32>
    %c288 = arith.constant 288 : index
    %c0_131 = arith.constant 0 : index
    %402 = vector.load %arg3[%c288, %c0_131] : memref<528x128xf32, #tpu.memory_space<vmem>>, vector<32x32xf32>
    %cst_132 = arith.constant dense<0.000000e+00> : vector<16x32xf32>
    %403 = tpu.matmul %401, %402, %cst_132 {dimension_numbers = #tpu.dot_dimension_numbers<[1], [0], [0], [1], [0, 0, 1, 1], [], []>} : vector<16x32xf32>, vector<32x32xf32>, vector<16x32xf32> -> vector<16x32xf32>
    %c20 = arith.constant 20 : index
    %c0_133 = arith.constant 0 : index
    %404 = vector.load %arg2[%c20, %c0_133] : memref<32x128xf32, #tpu.memory_space<vmem>>, vector<1x32xf32>
    %405 = vector.broadcast %404 : vector<1x32xf32> to vector<16x32xf32>
    %406 = arith.addf %403, %405 : vector<16x32xf32>
    %c320 = arith.constant 320 : index
    %c0_134 = arith.constant 0 : index
    %407 = vector.load %arg3[%c320, %c0_134] : memref<528x128xf32, #tpu.memory_space<vmem>>, vector<32x64xf32>
    %cst_135 = arith.constant dense<0.000000e+00> : vector<16x64xf32>
    %408 = tpu.matmul %223, %407, %cst_135 {dimension_numbers = #tpu.dot_dimension_numbers<[1], [0], [0], [1], [0, 0, 1, 1], [], []>} : vector<16x32xf32>, vector<32x64xf32>, vector<16x64xf32> -> vector<16x64xf32>
    %c21 = arith.constant 21 : index
    %c0_136 = arith.constant 0 : index
    %409 = vector.load %arg2[%c21, %c0_136] : memref<32x128xf32, #tpu.memory_space<vmem>>, vector<1x64xf32>
    %410 = vector.broadcast %409 : vector<1x64xf32> to vector<16x64xf32>
    %411 = arith.addf %408, %410 : vector<16x64xf32>
    %412 = tpu.iota {dimensions = array<i32: 2>} : vector<2x8x8xi32>
    %413 = vector.broadcast %4 : vector<2x8x1xi32> to vector<2x8x8xi32>
    %414 = arith.cmpi slt, %412, %413 : vector<2x8x8xi32>
    %415 = vector.extract_strided_slice %411 {offsets = [0, 0], sizes = [16, 32], strides = [1, 1]} : vector<16x64xf32> to vector<16x32xf32>
    %416 = vector.extract_strided_slice %411 {offsets = [0, 32], sizes = [16, 32], strides = [1, 1]} : vector<16x64xf32> to vector<16x32xf32>
    %417 = vector.shape_cast %406 : vector<16x32xf32> to vector<2x8x32xf32>
    %418 = vector.shape_cast %415 : vector<16x32xf32> to vector<2x8x32xf32>
    %419 = vector.shape_cast %416 : vector<16x32xf32> to vector<2x8x32xf32>
    %420 = vector.extract_strided_slice %417 {offsets = [0, 0, 0], sizes = [2, 8, 8], strides = [1, 1, 1]} : vector<2x8x32xf32> to vector<2x8x8xf32>
    %421 = vector.extract_strided_slice %418 {offsets = [0, 0, 0], sizes = [2, 8, 8], strides = [1, 1, 1]} : vector<2x8x32xf32> to vector<2x8x8xf32>
    "tpu.trace_start"() <{level = 10 : i32, message = "bqd,bkd->bqk"}> : () -> ()
    %cst_137 = arith.constant dense<0.000000e+00> : vector<2x8x8xf32>
    %422 = tpu.matmul %420, %421, %cst_137 {dimension_numbers = #tpu.dot_dimension_numbers<[2], [2], [1], [1], [0, 0, 0, 1, 1, 1], [0], [0]>} : vector<2x8x8xf32>, vector<2x8x8xf32>, vector<2x8x8xf32> -> vector<2x8x8xf32>
    "tpu.trace_stop"() : () -> ()
    %cst_138 = arith.constant 0.353553385 : f32
    %423 = vector.broadcast %cst_138 : f32 to vector<2x8x8xf32>
    %424 = arith.mulf %422, %423 : vector<2x8x8xf32>
    %cst_139 = arith.constant -1.000000e+09 : f32
    %425 = vector.broadcast %cst_139 : f32 to vector<2x8x8xf32>
    %426 = arith.select %414, %424, %425 : vector<2x8x8xi1>, vector<2x8x8xf32>
    %cst_140 = arith.constant dense<0xFF800000> : vector<2x8xf32>
    %427 = vector.multi_reduction <maximumf>, %426, %cst_140 [2] : vector<2x8x8xf32> to vector<2x8xf32>
    %428 = vector.shape_cast %427 : vector<2x8xf32> to vector<2x8x1xf32>
    %429 = vector.broadcast %428 : vector<2x8x1xf32> to vector<2x8x8xf32>
    %430 = arith.subf %426, %429 : vector<2x8x8xf32>
    %431 = math.exp %430 : vector<2x8x8xf32>
    %cst_141 = arith.constant dense<0.000000e+00> : vector<2x8xf32>
    %432 = vector.multi_reduction <add>, %431, %cst_141 [2] : vector<2x8x8xf32> to vector<2x8xf32>
    %433 = vector.shape_cast %432 : vector<2x8xf32> to vector<2x8x1xf32>
    %434 = tpu.reciprocal %433 {approx = true} : vector<2x8x1xf32> -> vector<2x8x1xf32>
    %435 = vector.broadcast %434 : vector<2x8x1xf32> to vector<2x8x8xf32>
    %436 = arith.mulf %431, %435 : vector<2x8x8xf32>
    %437 = vector.extract_strided_slice %419 {offsets = [0, 0, 0], sizes = [2, 8, 8], strides = [1, 1, 1]} : vector<2x8x32xf32> to vector<2x8x8xf32>
    "tpu.trace_start"() <{level = 10 : i32, message = "bqk,bkd->bqd"}> : () -> ()
    %cst_142 = arith.constant dense<0.000000e+00> : vector<2x8x8xf32>
    %438 = tpu.matmul %436, %437, %cst_142 {dimension_numbers = #tpu.dot_dimension_numbers<[2], [1], [1], [2], [0, 0, 0, 1, 1, 2], [0], [0]>} : vector<2x8x8xf32>, vector<2x8x8xf32>, vector<2x8x8xf32> -> vector<2x8x8xf32>
    "tpu.trace_stop"() : () -> ()
    %439 = vector.extract_strided_slice %417 {offsets = [0, 0, 8], sizes = [2, 8, 8], strides = [1, 1, 1]} : vector<2x8x32xf32> to vector<2x8x8xf32>
    %440 = vector.extract_strided_slice %418 {offsets = [0, 0, 8], sizes = [2, 8, 8], strides = [1, 1, 1]} : vector<2x8x32xf32> to vector<2x8x8xf32>
    "tpu.trace_start"() <{level = 10 : i32, message = "bqd,bkd->bqk"}> : () -> ()
    %cst_143 = arith.constant dense<0.000000e+00> : vector<2x8x8xf32>
    %441 = tpu.matmul %439, %440, %cst_143 {dimension_numbers = #tpu.dot_dimension_numbers<[2], [2], [1], [1], [0, 0, 0, 1, 1, 1], [0], [0]>} : vector<2x8x8xf32>, vector<2x8x8xf32>, vector<2x8x8xf32> -> vector<2x8x8xf32>
    "tpu.trace_stop"() : () -> ()
    %cst_144 = arith.constant 0.353553385 : f32
    %442 = vector.broadcast %cst_144 : f32 to vector<2x8x8xf32>
    %443 = arith.mulf %441, %442 : vector<2x8x8xf32>
    %cst_145 = arith.constant -1.000000e+09 : f32
    %444 = vector.broadcast %cst_145 : f32 to vector<2x8x8xf32>
    %445 = arith.select %414, %443, %444 : vector<2x8x8xi1>, vector<2x8x8xf32>
    %cst_146 = arith.constant dense<0xFF800000> : vector<2x8xf32>
    %446 = vector.multi_reduction <maximumf>, %445, %cst_146 [2] : vector<2x8x8xf32> to vector<2x8xf32>
    %447 = vector.shape_cast %446 : vector<2x8xf32> to vector<2x8x1xf32>
    %448 = vector.broadcast %447 : vector<2x8x1xf32> to vector<2x8x8xf32>
    %449 = arith.subf %445, %448 : vector<2x8x8xf32>
    %450 = math.exp %449 : vector<2x8x8xf32>
    %cst_147 = arith.constant dense<0.000000e+00> : vector<2x8xf32>
    %451 = vector.multi_reduction <add>, %450, %cst_147 [2] : vector<2x8x8xf32> to vector<2x8xf32>
    %452 = vector.shape_cast %451 : vector<2x8xf32> to vector<2x8x1xf32>
    %453 = tpu.reciprocal %452 {approx = true} : vector<2x8x1xf32> -> vector<2x8x1xf32>
    %454 = vector.broadcast %453 : vector<2x8x1xf32> to vector<2x8x8xf32>
    %455 = arith.mulf %450, %454 : vector<2x8x8xf32>
    %456 = vector.extract_strided_slice %419 {offsets = [0, 0, 8], sizes = [2, 8, 8], strides = [1, 1, 1]} : vector<2x8x32xf32> to vector<2x8x8xf32>
    "tpu.trace_start"() <{level = 10 : i32, message = "bqk,bkd->bqd"}> : () -> ()
    %cst_148 = arith.constant dense<0.000000e+00> : vector<2x8x8xf32>
    %457 = tpu.matmul %455, %456, %cst_148 {dimension_numbers = #tpu.dot_dimension_numbers<[2], [1], [1], [2], [0, 0, 0, 1, 1, 2], [0], [0]>} : vector<2x8x8xf32>, vector<2x8x8xf32>, vector<2x8x8xf32> -> vector<2x8x8xf32>
    "tpu.trace_stop"() : () -> ()
    %458 = vector.extract_strided_slice %417 {offsets = [0, 0, 16], sizes = [2, 8, 8], strides = [1, 1, 1]} : vector<2x8x32xf32> to vector<2x8x8xf32>
    %459 = vector.extract_strided_slice %418 {offsets = [0, 0, 16], sizes = [2, 8, 8], strides = [1, 1, 1]} : vector<2x8x32xf32> to vector<2x8x8xf32>
    "tpu.trace_start"() <{level = 10 : i32, message = "bqd,bkd->bqk"}> : () -> ()
    %cst_149 = arith.constant dense<0.000000e+00> : vector<2x8x8xf32>
    %460 = tpu.matmul %458, %459, %cst_149 {dimension_numbers = #tpu.dot_dimension_numbers<[2], [2], [1], [1], [0, 0, 0, 1, 1, 1], [0], [0]>} : vector<2x8x8xf32>, vector<2x8x8xf32>, vector<2x8x8xf32> -> vector<2x8x8xf32>
    "tpu.trace_stop"() : () -> ()
    %cst_150 = arith.constant 0.353553385 : f32
    %461 = vector.broadcast %cst_150 : f32 to vector<2x8x8xf32>
    %462 = arith.mulf %460, %461 : vector<2x8x8xf32>
    %cst_151 = arith.constant -1.000000e+09 : f32
    %463 = vector.broadcast %cst_151 : f32 to vector<2x8x8xf32>
    %464 = arith.select %414, %462, %463 : vector<2x8x8xi1>, vector<2x8x8xf32>
    %cst_152 = arith.constant dense<0xFF800000> : vector<2x8xf32>
    %465 = vector.multi_reduction <maximumf>, %464, %cst_152 [2] : vector<2x8x8xf32> to vector<2x8xf32>
    %466 = vector.shape_cast %465 : vector<2x8xf32> to vector<2x8x1xf32>
    %467 = vector.broadcast %466 : vector<2x8x1xf32> to vector<2x8x8xf32>
    %468 = arith.subf %464, %467 : vector<2x8x8xf32>
    %469 = math.exp %468 : vector<2x8x8xf32>
    %cst_153 = arith.constant dense<0.000000e+00> : vector<2x8xf32>
    %470 = vector.multi_reduction <add>, %469, %cst_153 [2] : vector<2x8x8xf32> to vector<2x8xf32>
    %471 = vector.shape_cast %470 : vector<2x8xf32> to vector<2x8x1xf32>
    %472 = tpu.reciprocal %471 {approx = true} : vector<2x8x1xf32> -> vector<2x8x1xf32>
    %473 = vector.broadcast %472 : vector<2x8x1xf32> to vector<2x8x8xf32>
    %474 = arith.mulf %469, %473 : vector<2x8x8xf32>
    %475 = vector.extract_strided_slice %419 {offsets = [0, 0, 16], sizes = [2, 8, 8], strides = [1, 1, 1]} : vector<2x8x32xf32> to vector<2x8x8xf32>
    "tpu.trace_start"() <{level = 10 : i32, message = "bqk,bkd->bqd"}> : () -> ()
    %cst_154 = arith.constant dense<0.000000e+00> : vector<2x8x8xf32>
    %476 = tpu.matmul %474, %475, %cst_154 {dimension_numbers = #tpu.dot_dimension_numbers<[2], [1], [1], [2], [0, 0, 0, 1, 1, 2], [0], [0]>} : vector<2x8x8xf32>, vector<2x8x8xf32>, vector<2x8x8xf32> -> vector<2x8x8xf32>
    "tpu.trace_stop"() : () -> ()
    %477 = vector.extract_strided_slice %417 {offsets = [0, 0, 24], sizes = [2, 8, 8], strides = [1, 1, 1]} : vector<2x8x32xf32> to vector<2x8x8xf32>
    %478 = vector.extract_strided_slice %418 {offsets = [0, 0, 24], sizes = [2, 8, 8], strides = [1, 1, 1]} : vector<2x8x32xf32> to vector<2x8x8xf32>
    "tpu.trace_start"() <{level = 10 : i32, message = "bqd,bkd->bqk"}> : () -> ()
    %cst_155 = arith.constant dense<0.000000e+00> : vector<2x8x8xf32>
    %479 = tpu.matmul %477, %478, %cst_155 {dimension_numbers = #tpu.dot_dimension_numbers<[2], [2], [1], [1], [0, 0, 0, 1, 1, 1], [0], [0]>} : vector<2x8x8xf32>, vector<2x8x8xf32>, vector<2x8x8xf32> -> vector<2x8x8xf32>
    "tpu.trace_stop"() : () -> ()
    %cst_156 = arith.constant 0.353553385 : f32
    %480 = vector.broadcast %cst_156 : f32 to vector<2x8x8xf32>
    %481 = arith.mulf %479, %480 : vector<2x8x8xf32>
    %cst_157 = arith.constant -1.000000e+09 : f32
    %482 = vector.broadcast %cst_157 : f32 to vector<2x8x8xf32>
    %483 = arith.select %414, %481, %482 : vector<2x8x8xi1>, vector<2x8x8xf32>
    %cst_158 = arith.constant dense<0xFF800000> : vector<2x8xf32>
    %484 = vector.multi_reduction <maximumf>, %483, %cst_158 [2] : vector<2x8x8xf32> to vector<2x8xf32>
    %485 = vector.shape_cast %484 : vector<2x8xf32> to vector<2x8x1xf32>
    %486 = vector.broadcast %485 : vector<2x8x1xf32> to vector<2x8x8xf32>
    %487 = arith.subf %483, %486 : vector<2x8x8xf32>
    %488 = math.exp %487 : vector<2x8x8xf32>
    %cst_159 = arith.constant dense<0.000000e+00> : vector<2x8xf32>
    %489 = vector.multi_reduction <add>, %488, %cst_159 [2] : vector<2x8x8xf32> to vector<2x8xf32>
    %490 = vector.shape_cast %489 : vector<2x8xf32> to vector<2x8x1xf32>
    %491 = tpu.reciprocal %490 {approx = true} : vector<2x8x1xf32> -> vector<2x8x1xf32>
    %492 = vector.broadcast %491 : vector<2x8x1xf32> to vector<2x8x8xf32>
    %493 = arith.mulf %488, %492 : vector<2x8x8xf32>
    %494 = vector.extract_strided_slice %419 {offsets = [0, 0, 24], sizes = [2, 8, 8], strides = [1, 1, 1]} : vector<2x8x32xf32> to vector<2x8x8xf32>
    "tpu.trace_start"() <{level = 10 : i32, message = "bqk,bkd->bqd"}> : () -> ()
    %cst_160 = arith.constant dense<0.000000e+00> : vector<2x8x8xf32>
    %495 = tpu.matmul %493, %494, %cst_160 {dimension_numbers = #tpu.dot_dimension_numbers<[2], [1], [1], [2], [0, 0, 0, 1, 1, 2], [0], [0]>} : vector<2x8x8xf32>, vector<2x8x8xf32>, vector<2x8x8xf32> -> vector<2x8x8xf32>
    "tpu.trace_stop"() : () -> ()
    %496 = tpu.concatenate %438, %457, %476, %495 in 2 : vector<2x8x8xf32>, vector<2x8x8xf32>, vector<2x8x8xf32>, vector<2x8x8xf32> -> vector<2x8x32xf32>
    %497 = vector.shape_cast %496 : vector<2x8x32xf32> to vector<16x32xf32>
    %c352 = arith.constant 352 : index
    %c0_161 = arith.constant 0 : index
    %498 = vector.load %arg3[%c352, %c0_161] : memref<528x128xf32, #tpu.memory_space<vmem>>, vector<32x32xf32>
    %cst_162 = arith.constant dense<0.000000e+00> : vector<16x32xf32>
    %499 = tpu.matmul %497, %498, %cst_162 {dimension_numbers = #tpu.dot_dimension_numbers<[1], [0], [0], [1], [0, 0, 1, 1], [], []>} : vector<16x32xf32>, vector<32x32xf32>, vector<16x32xf32> -> vector<16x32xf32>
    %c22 = arith.constant 22 : index
    %c0_163 = arith.constant 0 : index
    %500 = vector.load %arg2[%c22, %c0_163] : memref<32x128xf32, #tpu.memory_space<vmem>>, vector<1x32xf32>
    %501 = vector.broadcast %500 : vector<1x32xf32> to vector<16x32xf32>
    %502 = arith.addf %499, %501 : vector<16x32xf32>
    %503 = arith.addf %377, %502 : vector<16x32xf32>
    %c23 = arith.constant 23 : index
    %c0_164 = arith.constant 0 : index
    %504 = vector.load %arg2[%c23, %c0_164] : memref<32x128xf32, #tpu.memory_space<vmem>>, vector<1x32xf32>
    %c24 = arith.constant 24 : index
    %c0_165 = arith.constant 0 : index
    %505 = vector.load %arg2[%c24, %c0_165] : memref<32x128xf32, #tpu.memory_space<vmem>>, vector<1x32xf32>
    %cst_166 = arith.constant dense<0.000000e+00> : vector<16xf32>
    %506 = vector.multi_reduction <add>, %503, %cst_166 [1] : vector<16x32xf32> to vector<16xf32>
    %507 = vector.shape_cast %506 : vector<16xf32> to vector<16x1xf32>
    %cst_167 = arith.constant 3.200000e+01 : f32
    %508 = vector.broadcast %cst_167 : f32 to vector<16x1xf32>
    %509 = arith.divf %507, %508 : vector<16x1xf32>
    %510 = vector.broadcast %509 : vector<16x1xf32> to vector<16x32xf32>
    %511 = arith.subf %503, %510 : vector<16x32xf32>
    %512 = arith.mulf %511, %511 : vector<16x32xf32>
    %cst_168 = arith.constant dense<0.000000e+00> : vector<16xf32>
    %513 = vector.multi_reduction <add>, %512, %cst_168 [1] : vector<16x32xf32> to vector<16xf32>
    %514 = vector.shape_cast %513 : vector<16xf32> to vector<16x1xf32>
    %cst_169 = arith.constant 3.200000e+01 : f32
    %515 = vector.broadcast %cst_169 : f32 to vector<16x1xf32>
    %516 = arith.divf %514, %515 : vector<16x1xf32>
    %517 = vector.broadcast %509 : vector<16x1xf32> to vector<16x32xf32>
    %518 = arith.subf %503, %517 : vector<16x32xf32>
    %cst_170 = arith.constant 9.99999974E-6 : f32
    %519 = vector.broadcast %cst_170 : f32 to vector<16x1xf32>
    %520 = arith.addf %516, %519 : vector<16x1xf32>
    %521 = math.rsqrt %520 : vector<16x1xf32>
    %522 = vector.broadcast %521 : vector<16x1xf32> to vector<16x32xf32>
    %523 = arith.mulf %518, %522 : vector<16x32xf32>
    %524 = vector.broadcast %504 : vector<1x32xf32> to vector<16x32xf32>
    %525 = arith.mulf %523, %524 : vector<16x32xf32>
    %526 = vector.broadcast %505 : vector<1x32xf32> to vector<16x32xf32>
    %527 = arith.addf %525, %526 : vector<16x32xf32>
    %c384 = arith.constant 384 : index
    %c0_171 = arith.constant 0 : index
    %528 = vector.load %arg3[%c384, %c0_171] : memref<528x128xf32, #tpu.memory_space<vmem>>, vector<32x64xf32>
    %cst_172 = arith.constant dense<0.000000e+00> : vector<16x64xf32>
    %529 = tpu.matmul %527, %528, %cst_172 {dimension_numbers = #tpu.dot_dimension_numbers<[1], [0], [0], [1], [0, 0, 1, 1], [], []>} : vector<16x32xf32>, vector<32x64xf32>, vector<16x64xf32> -> vector<16x64xf32>
    %c25 = arith.constant 25 : index
    %c0_173 = arith.constant 0 : index
    %530 = vector.load %arg2[%c25, %c0_173] : memref<32x128xf32, #tpu.memory_space<vmem>>, vector<1x64xf32>
    %531 = vector.broadcast %530 : vector<1x64xf32> to vector<16x64xf32>
    %532 = arith.addf %529, %531 : vector<16x64xf32>
    %cst_174 = arith.constant 0.000000e+00 : f32
    %533 = vector.broadcast %cst_174 : f32 to vector<16x64xf32>
    %534 = arith.maximumf %532, %533 : vector<16x64xf32>
    %c416 = arith.constant 416 : index
    %c0_175 = arith.constant 0 : index
    %535 = vector.load %arg3[%c416, %c0_175] : memref<528x128xf32, #tpu.memory_space<vmem>>, vector<64x32xf32>
    %cst_176 = arith.constant dense<0.000000e+00> : vector<16x32xf32>
    %536 = tpu.matmul %534, %535, %cst_176 {dimension_numbers = #tpu.dot_dimension_numbers<[1], [0], [0], [1], [0, 0, 1, 1], [], []>} : vector<16x64xf32>, vector<64x32xf32>, vector<16x32xf32> -> vector<16x32xf32>
    %c26 = arith.constant 26 : index
    %c0_177 = arith.constant 0 : index
    %537 = vector.load %arg2[%c26, %c0_177] : memref<32x128xf32, #tpu.memory_space<vmem>>, vector<1x32xf32>
    %538 = vector.broadcast %537 : vector<1x32xf32> to vector<16x32xf32>
    %539 = arith.addf %536, %538 : vector<16x32xf32>
    %540 = arith.addf %503, %539 : vector<16x32xf32>
    %c27 = arith.constant 27 : index
    %c0_178 = arith.constant 0 : index
    %541 = vector.load %arg2[%c27, %c0_178] : memref<32x128xf32, #tpu.memory_space<vmem>>, vector<1x32xf32>
    %c28 = arith.constant 28 : index
    %c0_179 = arith.constant 0 : index
    %542 = vector.load %arg2[%c28, %c0_179] : memref<32x128xf32, #tpu.memory_space<vmem>>, vector<1x32xf32>
    %cst_180 = arith.constant dense<0.000000e+00> : vector<16xf32>
    %543 = vector.multi_reduction <add>, %540, %cst_180 [1] : vector<16x32xf32> to vector<16xf32>
    %544 = vector.shape_cast %543 : vector<16xf32> to vector<16x1xf32>
    %cst_181 = arith.constant 3.200000e+01 : f32
    %545 = vector.broadcast %cst_181 : f32 to vector<16x1xf32>
    %546 = arith.divf %544, %545 : vector<16x1xf32>
    %547 = vector.broadcast %546 : vector<16x1xf32> to vector<16x32xf32>
    %548 = arith.subf %540, %547 : vector<16x32xf32>
    %549 = arith.mulf %548, %548 : vector<16x32xf32>
    %cst_182 = arith.constant dense<0.000000e+00> : vector<16xf32>
    %550 = vector.multi_reduction <add>, %549, %cst_182 [1] : vector<16x32xf32> to vector<16xf32>
    %551 = vector.shape_cast %550 : vector<16xf32> to vector<16x1xf32>
    %cst_183 = arith.constant 3.200000e+01 : f32
    %552 = vector.broadcast %cst_183 : f32 to vector<16x1xf32>
    %553 = arith.divf %551, %552 : vector<16x1xf32>
    %554 = vector.broadcast %546 : vector<16x1xf32> to vector<16x32xf32>
    %555 = arith.subf %540, %554 : vector<16x32xf32>
    %cst_184 = arith.constant 9.99999974E-6 : f32
    %556 = vector.broadcast %cst_184 : f32 to vector<16x1xf32>
    %557 = arith.addf %553, %556 : vector<16x1xf32>
    %558 = math.rsqrt %557 : vector<16x1xf32>
    %559 = vector.broadcast %558 : vector<16x1xf32> to vector<16x32xf32>
    %560 = arith.mulf %555, %559 : vector<16x32xf32>
    %561 = vector.broadcast %541 : vector<1x32xf32> to vector<16x32xf32>
    %562 = arith.mulf %560, %561 : vector<16x32xf32>
    %563 = vector.broadcast %542 : vector<1x32xf32> to vector<16x32xf32>
    %564 = arith.addf %562, %563 : vector<16x32xf32>
    %c480 = arith.constant 480 : index
    %c0_185 = arith.constant 0 : index
    %565 = vector.load %arg3[%c480, %c0_185] : memref<528x128xf32, #tpu.memory_space<vmem>>, vector<32x16xf32>
    %cst_186 = arith.constant dense<0.000000e+00> : vector<16x16xf32>
    %566 = tpu.matmul %564, %565, %cst_186 {dimension_numbers = #tpu.dot_dimension_numbers<[1], [0], [0], [1], [0, 0, 1, 1], [], []>} : vector<16x32xf32>, vector<32x16xf32>, vector<16x16xf32> -> vector<16x16xf32>
    %c29 = arith.constant 29 : index
    %c0_187 = arith.constant 0 : index
    %567 = vector.load %arg2[%c29, %c0_187] : memref<32x128xf32, #tpu.memory_space<vmem>>, vector<1x16xf32>
    %568 = vector.broadcast %567 : vector<1x16xf32> to vector<16x16xf32>
    %569 = arith.addf %566, %568 : vector<16x16xf32>
    %cst_188 = arith.constant dense<0xFF800000> : vector<16xf32>
    %570 = vector.multi_reduction <maximumf>, %569, %cst_188 [1] : vector<16x16xf32> to vector<16xf32>
    %571 = vector.shape_cast %570 : vector<16xf32> to vector<16x1xf32>
    %572 = vector.broadcast %571 : vector<16x1xf32> to vector<16x16xf32>
    %573 = arith.subf %569, %572 : vector<16x16xf32>
    %574 = vector.broadcast %571 : vector<16x1xf32> to vector<16x16xf32>
    %575 = arith.subf %569, %574 : vector<16x16xf32>
    %576 = math.exp %575 : vector<16x16xf32>
    %cst_189 = arith.constant dense<0.000000e+00> : vector<16xf32>
    %577 = vector.multi_reduction <add>, %576, %cst_189 [1] : vector<16x16xf32> to vector<16xf32>
    %578 = vector.shape_cast %577 : vector<16xf32> to vector<16x1xf32>
    %579 = math.log %578 : vector<16x1xf32>
    %580 = vector.broadcast %579 : vector<16x1xf32> to vector<16x16xf32>
    %581 = arith.subf %573, %580 : vector<16x16xf32>
    %582 = tpu.iota {dimensions = array<i32: 1>} : vector<16x16xi32>
    %583 = vector.broadcast %2 : vector<16x1xi32> to vector<16x16xi32>
    %584 = arith.cmpi eq, %582, %583 : vector<16x16xi32>
    %c-1_i32 = arith.constant -1 : i32
    %585 = vector.broadcast %c-1_i32 : i32 to vector<16x1xi32>
    %586 = arith.cmpi ne, %2, %585 : vector<16x1xi32>
    %cst_190 = arith.constant 0.899999976 : f32
    %cst_191 = arith.constant 0.00666666683 : f32
    %587 = vector.broadcast %cst_190 : f32 to vector<16x16xf32>
    %588 = vector.broadcast %cst_191 : f32 to vector<16x16xf32>
    %589 = arith.select %584, %587, %588 : vector<16x16xi1>, vector<16x16xf32>
    %cst_192 = arith.constant -0.105360515 : f32
    %cst_193 = arith.constant -5.01063538 : f32
    %590 = vector.broadcast %cst_192 : f32 to vector<16x16xf32>
    %591 = vector.broadcast %cst_193 : f32 to vector<16x16xf32>
    %592 = arith.select %584, %590, %591 : vector<16x16xi1>, vector<16x16xf32>
    %593 = arith.subf %592, %581 : vector<16x16xf32>
    %594 = arith.mulf %589, %593 : vector<16x16xf32>
    %cst_194 = arith.constant 0.000000e+00 : f32
    %595 = vector.shape_cast %586 : vector<16x1xi1> to vector<16x1xi1>
    %596 = vector.broadcast %595 : vector<16x1xi1> to vector<16x16xi1>
    %597 = vector.broadcast %cst_194 : f32 to vector<16x16xf32>
    %598 = arith.select %596, %594, %597 : vector<16x16xi1>, vector<16x16xf32>
    %cst_195 = arith.constant dense<0xFF800000> : vector<16xf32>
    %599 = vector.multi_reduction <maximumf>, %569, %cst_195 [1] : vector<16x16xf32> to vector<16xf32>
    %600 = vector.shape_cast %599 : vector<16xf32> to vector<16x1xf32>
    %601 = arith.sitofp %582 : vector<16x16xi32> to vector<16x16xf32>
    %602 = vector.broadcast %600 : vector<16x1xf32> to vector<16x16xf32>
    %603 = arith.cmpf oeq, %569, %602 : vector<16x16xf32>
    %cst_196 = arith.constant 1.600000e+01 : f32
    %604 = vector.broadcast %cst_196 : f32 to vector<16x16xf32>
    %605 = arith.select %603, %601, %604 : vector<16x16xi1>, vector<16x16xf32>
    %cst_197 = arith.constant dense<0x7F800000> : vector<16xf32>
    %606 = vector.multi_reduction <minimumf>, %605, %cst_197 [1] : vector<16x16xf32> to vector<16xf32>
    %607 = vector.shape_cast %606 : vector<16xf32> to vector<16x1xf32>
    %608 = arith.sitofp %2 : vector<16x1xi32> to vector<16x1xf32>
    %609 = arith.cmpf oeq, %607, %608 : vector<16x1xf32>
    %610 = arith.andi %586, %609 : vector<16x1xi1>
    %cst_198 = arith.constant 1.000000e+00 : f32
    %cst_199 = arith.constant 0.000000e+00 : f32
    %611 = vector.broadcast %cst_198 : f32 to vector<16x1xf32>
    %612 = vector.broadcast %cst_199 : f32 to vector<16x1xf32>
    %613 = arith.select %610, %611, %612 : vector<16x1xi1>, vector<16x1xf32>
    %614 = vector.shape_cast %613 : vector<16x1xf32> to vector<1x16x1xf32>
    %cst_200 = arith.constant dense<0.000000e+00> : vector<1xf32>
    %615 = vector.multi_reduction <add>, %614, %cst_200 [1, 2] : vector<1x16x1xf32> to vector<1xf32>
    %616 = vector.shape_cast %615 : vector<1xf32> to vector<1x1x1xf32>
    %617 = vector.extract %616[0, 0, 0] : f32 from vector<1x1x1xf32>
    %cst_201 = arith.constant 1.000000e+00 : f32
    %cst_202 = arith.constant 0.000000e+00 : f32
    %618 = vector.broadcast %cst_201 : f32 to vector<16x1xf32>
    %619 = vector.broadcast %cst_202 : f32 to vector<16x1xf32>
    %620 = arith.select %586, %618, %619 : vector<16x1xi1>, vector<16x1xf32>
    %621 = vector.shape_cast %620 : vector<16x1xf32> to vector<1x16x1xf32>
    %cst_203 = arith.constant dense<0.000000e+00> : vector<1xf32>
    %622 = vector.multi_reduction <add>, %621, %cst_203 [1, 2] : vector<1x16x1xf32> to vector<1xf32>
    %623 = vector.shape_cast %622 : vector<1xf32> to vector<1x1x1xf32>
    %624 = vector.extract %623[0, 0, 0] : f32 from vector<1x1x1xf32>
    %625 = vector.shape_cast %598 : vector<16x16xf32> to vector<1x16x16xf32>
    %cst_204 = arith.constant dense<0.000000e+00> : vector<1xf32>
    %626 = vector.multi_reduction <add>, %625, %cst_204 [1, 2] : vector<1x16x16xf32> to vector<1xf32>
    %627 = vector.shape_cast %626 : vector<1xf32> to vector<1x1x1xf32>
    %628 = vector.extract %627[0, 0, 0] : f32 from vector<1x1x1xf32>
    %629 = vector.broadcast %628 : f32 to vector<1x1xf32>
    %c0_205 = arith.constant 0 : index
    %c0_206 = arith.constant 0 : index
    %630 = vector.load %arg5[%c0_205, %c0_206] : memref<1x4xf32, #tpu.memory_space<vmem>>, vector<1x1xf32>
    tpu.vector_store %arg5[%c0_205, %c0_206], %629 {strides = array<i32>} : memref<1x4xf32, #tpu.memory_space<vmem>>, vector<1x1xf32>,
    %631 = vector.broadcast %617 : f32 to vector<1x1xf32>
    %c0_207 = arith.constant 0 : index
    %c1_208 = arith.constant 1 : index
    %632 = vector.load %arg5[%c0_207, %c1_208] : memref<1x4xf32, #tpu.memory_space<vmem>>, vector<1x1xf32>
    tpu.vector_store %arg5[%c0_207, %c1_208], %631 {strides = array<i32>} : memref<1x4xf32, #tpu.memory_space<vmem>>, vector<1x1xf32>,
    %633 = vector.broadcast %624 : f32 to vector<1x1xf32>
    %c0_209 = arith.constant 0 : index
    %c2_210 = arith.constant 2 : index
    %634 = vector.load %arg5[%c0_209, %c2_210] : memref<1x4xf32, #tpu.memory_space<vmem>>, vector<1x1xf32>
    tpu.vector_store %arg5[%c0_209, %c2_210], %633 {strides = array<i32>} : memref<1x4xf32, #tpu.memory_space<vmem>>, vector<1x1xf32>,
    %cst_211 = arith.constant 0.000000e+00 : f32
    %635 = vector.broadcast %cst_211 : f32 to vector<1x1xf32>
    %c0_212 = arith.constant 0 : index
    %c3_213 = arith.constant 3 : index
    %636 = vector.load %arg5[%c0_212, %c3_213] : memref<1x4xf32, #tpu.memory_space<vmem>>, vector<1x1xf32>
    tpu.vector_store %arg5[%c0_212, %c3_213], %635 {strides = array<i32>} : memref<1x4xf32, #tpu.memory_space<vmem>>, vector<1x1xf32>,
    return
  }
}

</mosaic_0001>

<llo_original>
// kernel: asr_forward.1
$region0: #{asr_forward.1}
  #allocation0 [shape = 'u32[]', space=smem, size = 0x4, offset = 0x4, fixed_abs, tag = 'smem constant byte address 0x4 - core index']
  #allocation1 [shape = 'u32[144,128]{1,0:T(1,128)}', space=vmem, size = 0x12000, scoped, tag = 'internal scratch']
  %s0 = inlined_call_operand.vmem [shape: f32[16,16], index: 0, kind: input, shape index: {}]
  %s1 = inlined_call_operand.vmem [shape: s32[16,4], index: 1, kind: input, shape index: {}]
  %s2 = inlined_call_operand.vmem [shape: f32[32,128], index: 2, kind: input, shape index: {}]
  %s3 = inlined_call_operand.hbm [shape: f32[528,128], index: 3, kind: input, shape index: {}]
  %s4 = inlined_call_operand.vmem [shape: f32[16,16], index: 4, kind: output, shape index: {0}]
  %s5 = inlined_call_operand.vmem [shape: f32[1,4], index: 5, kind: output, shape index: {1}]
  %6 = xla_tuple %s4, %s5
  %s7 = sld [smem:[#allocation0]]
  $region38: #{asr_forward.1} parent=0
    _
  %s9 = ssub.s32 1, %s7
  %s10 = scalar_select 0, %s9, %s7
  $region1: #{asr_forward.1} parent=0
    #allocation2 [shape = 'u8[270336]{0}', space=vmem, size = 0x42000, scoped, tag = 'input window, operand 3, single buffered']
    #allocation3 [shape = 's32[1]{0}', space=sflag, size = 0x4, scoped, tag = 'scoped memory for asr_forward.1']
    %11 = vsyncpa [#allocation3], 0
    // Predicated region
    $region2: #{asr_forward.1} parent=1 // pred_check
      _
    $region3: #{asr_forward.1} parent=1 // pred_check_branch
      %13 = sbr.rel (0) target = $region5
    $region4: #{asr_forward.1} parent=1 // pred_region
      _
    $region5: #{asr_forward.1} parent=1 // pred_fallthru
      _
    // Predicated region
    $region6: #{asr_forward.1} parent=1 // pred_check
      _
    $region7: #{asr_forward.1} parent=1 // pred_check_branch
      %15 = sbr.rel (0) target = $region9
    $region8: #{asr_forward.1} parent=1 // pred_region
      _
    $region9: #{asr_forward.1} parent=1 // pred_fallthru
      _
    // Predicated region
    $region10: #{asr_forward.1} parent=1 // pred_check
      _
    $region11: #{asr_forward.1} parent=1 // pred_check_branch
      %17 = sbr.rel (0) target = $region13
    $region12: #{asr_forward.1} parent=1 // pred_region
      _
    $region13: #{asr_forward.1} parent=1 // pred_fallthru
      _
    // Predicated region
    $region14: #{asr_forward.1} parent=1 // pred_check
      _
    $region15: #{asr_forward.1} parent=1 // pred_check_branch
      %19 = sbr.rel (0) target = $region17
    $region16: #{asr_forward.1} parent=1 // pred_region
      %s21 = ssub.s32 8448, 8448
      %22 = vsyncadd [#allocation3], %s21
      %s23 = sshll.u32 [#allocation2], 4
      %s24 = int_to_ptr.vmem [resolvable:$true] %s23
      %29 = dma.hbm_to_vmem [thread:$0]  %s3, 8448, %s24, [#allocation3], 128, 128, 8
    $region17: #{asr_forward.1} parent=1 // pred_fallthru
      _
    // Predicated region
    $region18: #{asr_forward.1} parent=1 // pred_check
      _
    $region19: #{asr_forward.1} parent=1 // pred_check_branch
      %31 = sbr.rel (0) target = $region21
    $region20: #{asr_forward.1} parent=1 // pred_region
      %32 = dma.done [#allocation3], 8448
    $region21: #{asr_forward.1} parent=1 // pred_fallthru
      _
    %v33 = vld [vmem:[%s1] sm:$0xff]
    %v34 = vld [vmem:[%s1 + $0x8] sm:$0xff]
    %v35 = vld [vmem:[#allocation2 + $0x200] sm:$0xff]
    %v36 = vld [vmem:[#allocation2 + $0x208] sm:$0xff]
    %v37 = vld [vmem:[%s0] sm:$0xff]
    %v38 = vld [vmem:[%s0 + $0x8] sm:$0xff]
    %v39 = vld [vmem:[#allocation2] sm:$0xff]
    %v40 = vld [vmem:[#allocation2 + $0x8] sm:$0xff]
    %v41 = vld [vmem:[%s2] sm:$0x1]
    %v42 = vlaneseq
    %v43 = vshrl.u32 %v42, 7
    %v44 = vsub.s32 0, %v43
    %v45 = vrot.slane %v41, %v44
    %vm46 = vcmask 130048
    %v48 = vsel %vm46, %v37, 0
    %v51 = vsel %vm46, %v38, 0
    %53 = vmatprep.subr.mxu0 0.0
    %54 = vmatpush1.msra.mxu0 %v39
    %55 = vmatprep.subr.mxu0 0.0
    %56 = vmatpush1.msra.mxu0 %v40
    %57 = vmatprep.subr.mxu0 0.0
    %58 = vmatpush1.msra.mxu0 0.0
    %59 = vmatprep.subr.mxu0 0.0
    %60 = vmatpush1.msra.mxu0 0.0
    %61 = vmatprep.subr.mxu0 0.0
    %62 = vmatpush1.msra.mxu0 0.0
    %63 = vmatprep.subr.mxu0 0.0
    %64 = vmatpush1.msra.mxu0 0.0
    %65 = vmatprep.subr.mxu0 0.0
    %66 = vmatpush1.msra.mxu0 0.0
    %67 = vmatprep.subr.mxu0 0.0
    %68 = vmatpush1.msra.mxu0 0.0
    %69 = vmatprep.subr.mxu0 0.0
    %70 = vmatpush1.msra.mxu0 0.0
    %71 = vmatprep.subr.mxu0 0.0
    %72 = vmatpush1.msra.mxu0 0.0
    %73 = vmatprep.subr.mxu0 0.0
    %74 = vmatpush1.msra.mxu0 0.0
    %75 = vmatprep.subr.mxu0 0.0
    %76 = vmatpush1.msra.mxu0 0.0
    %77 = vmatprep.subr.mxu0 0.0
    %78 = vmatpush1.msra.mxu0 0.0
    %79 = vmatprep.subr.mxu0 0.0
    %80 = vmatpush1.msra.mxu0 0.0
    %81 = vmatprep.subr.mxu0 0.0
    %82 = vmatpush1.msra.mxu0 0.0
    %83 = vmatprep.subr.mxu0 0.0
    %84 = vmatpush1.msra.mxu0 0.0
    %85 = vmatprep.subr.mxu0 0.0
    %86 = vmatpush1.msra.mxu0 0.0
    %87 = vmatprep.subr.mxu0 0.0
    %88 = vmatpush1.msra.mxu0 0.0
    %89 = vmatprep.subr.mxu0 0.0
    %90 = vmatpush1.msra.mxu0 0.0
    %91 = vmatprep.subr.mxu0 0.0
    %92 = vmatpush1.msra.mxu0 0.0
    %93 = vmatprep.subr.mxu0 0.0
    %94 = vmatpush1.msra.mxu0 0.0
    %95 = vmatprep.subr.mxu0 0.0
    %96 = vmatpush1.msra.mxu0 0.0
    %97 = vmatprep.subr.mxu0 0.0
    %98 = vmatpush1.msra.mxu0 0.0
    %99 = vmatprep.subr.mxu0 0.0
    %100 = vmatpush1.msra.mxu0 0.0
    %101 = vmatprep.subr.mxu0 0.0
    %102 = vmatpush1.msra.mxu0 0.0
    %103 = vmatprep.subr.mxu0 0.0
    %104 = vmatpush1.msra.mxu0 0.0
    %105 = vmatprep.subr.mxu0 0.0
    %106 = vmatpush1.msra.mxu0 0.0
    %107 = vmatprep.subr.mxu0 0.0
    %108 = vmatpush1.msra.mxu0 0.0
    %109 = vmatprep.subr.mxu0 0.0
    %110 = vmatpush1.msra.mxu0 0.0
    %111 = vmatprep.subr.mxu0 0.0
    %112 = vmatpush1.msra.mxu0 0.0
    %113 = vmatprep.subr.mxu0 0.0
    %114 = vmatpush1.msra.mxu0 0.0
    %115 = vmatprep.subr.mxu0 0.0
    %116 = vmatpush1.msra.mxu0 0.0
    %117 = vmatprep.mubr.f32.mxu0 0.0
    %118 = vmatmul.mubr.f32.gmra.mrb[0].mxu0 %v48
    %v119 = vpop.f32.mrb[0].mxu0
    %v120 = vadd.f32 %v45, %v119
    %v121 = vpop.f32.mrb[0].mxu0
    %122 = vmatprep.mubr.f32.mxu0 0.0
    %123 = vmatmul.mubr.f32.gmra.mrb[0].mxu0 %v51
    %v124 = vpop.f32.mrb[0].mxu0
    %v125 = vadd.f32 %v45, %v124
    %v126 = vpop.f32.mrb[0].mxu0
    %127 = vdwg.mxu0
    %v128 = vld [vmem:[%s2 + $0x1] sm:$0x1]
    %v129 = vld [vmem:[%s2 + $0x2] sm:$0x1]
    %vm130 = vcmask 261120
    %v131 = vsel %vm130, %v120, 0.0
    %132 = vadd.xlane.f32.xlu0 %v131
    %v133 = vpop.xlane.xlu0 %132
    %v134 = vsel %vm130, %v125, 0.0
    %135 = vadd.xlane.f32.xlu0 %v134
    %v136 = vpop.xlane.xlu0 %135
    %v137 = vrcp.pop 32.0
    %v138 = vmul.f32 %v133, %v137
    %v139 = vmul.f32 %v136, %v137
    %v140 = vsub.f32 %v120, %v138
    %v141 = vsub.f32 %v125, %v139
    %v142 = vmul.f32 %v140, %v140
    %v143 = vmul.f32 %v141, %v141
    %v144 = vsel %vm130, %v142, 0.0
    %145 = vadd.xlane.f32.xlu0 %v144
    %v146 = vpop.xlane.xlu0 %145
    %v147 = vsel %vm130, %v143, 0.0
    %148 = vadd.xlane.f32.xlu0 %v147
    %v149 = vpop.xlane.xlu0 %148
    %v150 = vmul.f32 %v146, %v137
    %v151 = vmul.f32 %v149, %v137
    %v152 = vadd.f32 %v150, 1e-05
    %v153 = vadd.f32 %v151, 1e-05
    %v154 = vrsqrt.pop %v152
    %v155 = vrsqrt.pop %v153
    %v156 = vmul.f32 %v140, %v154
    %v157 = vmul.f32 %v141, %v155
    %v158 = vlaneseq
    %v159 = vshrl.u32 %v158, 7
    %v160 = vsub.s32 0, %v159
    %v161 = vrot.slane %v128, %v160
    %v162 = vmul.f32 %v156, %v161
    %v163 = vmul.f32 %v157, %v161
    %v164 = vlaneseq
    %v165 = vshrl.u32 %v164, 7
    %v166 = vsub.s32 0, %v165
    %v167 = vrot.slane %v129, %v166
    %v168 = vadd.f32 %v162, %v167
    %v169 = vadd.f32 %v163, %v167
    %v170 = vmul.f32 %v168, 5.656854
    %v171 = vmul.f32 %v169, 5.656854
    %v172 = vadd.f32 %v170, %v35
    %v173 = vadd.f32 %v171, %v36
    %v174 = vld [vmem:[%s2 + $0x3] sm:$0x1]
    %v175 = vld [vmem:[%s2 + $0x4] sm:$0x1]
    %v176 = vsel %vm130, %v172, 0.0
    %177 = vadd.xlane.f32.xlu0 %v176
    %v178 = vpop.xlane.xlu0 %177
    %v179 = vsel %vm130, %v173, 0.0
    %180 = vadd.xlane.f32.xlu0 %v179
    %v181 = vpop.xlane.xlu0 %180
    %v182 = vmul.f32 %v178, %v137
    %v183 = vmul.f32 %v181, %v137
    %v184 = vsub.f32 %v172, %v182
    %v185 = vsub.f32 %v173, %v183
    %v186 = vmul.f32 %v184, %v184
    %v187 = vmul.f32 %v185, %v185
    %v188 = vsel %vm130, %v186, 0.0
    %189 = vadd.xlane.f32.xlu0 %v188
    %v190 = vpop.xlane.xlu0 %189
    %v191 = vsel %vm130, %v187, 0.0
    %192 = vadd.xlane.f32.xlu0 %v191
    %v193 = vpop.xlane.xlu0 %192
    %v194 = vmul.f32 %v190, %v137
    %v195 = vmul.f32 %v193, %v137
    %v196 = vadd.f32 %v194, 1e-05
    %v197 = vadd.f32 %v195, 1e-05
    %v198 = vrsqrt.pop %v196
    %v199 = vrsqrt.pop %v197
    %v200 = vmul.f32 %v184, %v198
    %v201 = vmul.f32 %v185, %v199
    %v202 = vlaneseq
    %v203 = vshrl.u32 %v202, 7
    %v204 = vsub.s32 0, %v203
    %v205 = vrot.slane %v174, %v204
    %v206 = vmul.f32 %v200, %v205
    %v207 = vmul.f32 %v201, %v205
    %v208 = vlaneseq
    %v209 = vshrl.u32 %v208, 7
    %v210 = vsub.s32 0, %v209
    %v211 = vrot.slane %v175, %v210
    %v212 = vadd.f32 %v206, %v211
    %v213 = vadd.f32 %v207, %v211
    %v214 = vld [vmem:[#allocation2 + $0x10] sm:$0xff]
    %v215 = vld [vmem:[#allocation2 + $0x18] sm:$0xff]
    %v216 = vld [vmem:[#allocation2 + $0x20] sm:$0xff]
    %v217 = vld [vmem:[#allocation2 + $0x28] sm:$0xff]
    %v218 = vld [vmem:[%s2 + $0x5] sm:$0x1]
    %v219 = vlaneseq
    %v220 = vshrl.u32 %v219, 7
    %v221 = vsub.s32 0, %v220
    %v222 = vrot.slane %v218, %v221
    %v224 = vsel %vm130, %v212, 0
    %v227 = vsel %vm130, %v213, 0
    %229 = vmatprep.subr.mxu0 0.0
    %230 = vmatpush1.msra.mxu0 %v214
    %231 = vmatprep.subr.mxu0 0.0
    %232 = vmatpush1.msra.mxu0 %v215
    %233 = vmatprep.subr.mxu0 0.0
    %234 = vmatpush1.msra.mxu0 %v216
    %235 = vmatprep.subr.mxu0 0.0
    %236 = vmatpush1.msra.mxu0 %v217
    %237 = vmatprep.subr.mxu0 0.0
    %238 = vmatpush1.msra.mxu0 0.0
    %239 = vmatprep.subr.mxu0 0.0
    %240 = vmatpush1.msra.mxu0 0.0
    %241 = vmatprep.subr.mxu0 0.0
    %242 = vmatpush1.msra.mxu0 0.0
    %243 = vmatprep.subr.mxu0 0.0
    %244 = vmatpush1.msra.mxu0 0.0
    %245 = vmatprep.subr.mxu0 0.0
    %246 = vmatpush1.msra.mxu0 0.0
    %247 = vmatprep.subr.mxu0 0.0
    %248 = vmatpush1.msra.mxu0 0.0
    %249 = vmatprep.subr.mxu0 0.0
    %250 = vmatpush1.msra.mxu0 0.0
    %251 = vmatprep.subr.mxu0 0.0
    %252 = vmatpush1.msra.mxu0 0.0
    %253 = vmatprep.subr.mxu0 0.0
    %254 = vmatpush1.msra.mxu0 0.0
    %255 = vmatprep.subr.mxu0 0.0
    %256 = vmatpush1.msra.mxu0 0.0
    %257 = vmatprep.subr.mxu0 0.0
    %258 = vmatpush1.msra.mxu0 0.0
    %259 = vmatprep.subr.mxu0 0.0
    %260 = vmatpush1.msra.mxu0 0.0
    %261 = vmatprep.subr.mxu0 0.0
    %262 = vmatpush1.msra.mxu0 0.0
    %263 = vmatprep.subr.mxu0 0.0
    %264 = vmatpush1.msra.mxu0 0.0
    %265 = vmatprep.subr.mxu0 0.0
    %266 = vmatpush1.msra.mxu0 0.0
    %267 = vmatprep.subr.mxu0 0.0
    %268 = vmatpush1.msra.mxu0 0.0
    %269 = vmatprep.subr.mxu0 0.0
    %270 = vmatpush1.msra.mxu0 0.0
    %271 = vmatprep.subr.mxu0 0.0
    %272 = vmatpush1.msra.mxu0 0.0
    %273 = vmatprep.subr.mxu0 0.0
    %274 = vmatpush1.msra.mxu0 0.0
    %275 = vmatprep.subr.mxu0 0.0
    %276 = vmatpush1.msra.mxu0 0.0
    %277 = vmatprep.subr.mxu0 0.0
    %278 = vmatpush1.msra.mxu0 0.0
    %279 = vmatprep.subr.mxu0 0.0
    %280 = vmatpush1.msra.mxu0 0.0
    %281 = vmatprep.subr.mxu0 0.0
    %282 = vmatpush1.msra.mxu0 0.0
    %283 = vmatprep.subr.mxu0 0.0
    %284 = vmatpush1.msra.mxu0 0.0
    %285 = vmatprep.subr.mxu0 0.0
    %286 = vmatpush1.msra.mxu0 0.0
    %287 = vmatprep.subr.mxu0 0.0
    %288 = vmatpush1.msra.mxu0 0.0
    %289 = vmatprep.subr.mxu0 0.0
    %290 = vmatpush1.msra.mxu0 0.0
    %291 = vmatprep.subr.mxu0 0.0
    %292 = vmatpush1.msra.mxu0 0.0
    %293 = vmatprep.mubr.f32.mxu0 0.0
    %294 = vmatmul.mubr.f32.gmra.mrb[0].mxu0 %v224
    %v295 = vpop.f32.mrb[0].mxu0
    %v296 = vadd.f32 %v222, %v295
    %v297 = vpop.f32.mrb[0].mxu0
    %298 = vmatprep.mubr.f32.mxu0 0.0
    %299 = vmatmul.mubr.f32.gmra.mrb[0].mxu0 %v227
    %v300 = vpop.f32.mrb[0].mxu0
    %v301 = vadd.f32 %v222, %v300
    %v302 = vpop.f32.mrb[0].mxu0
    %303 = vdwg.mxu0
    %v304 = vlaneseq
    %v305 = vand.u32 %v304, 127
    %306 = vset.pattern.permute.xlu0 2
    %307 = vperm.xlu0 %306, %v33
    %v308 = vpop.permute.xlu0 %307
    %309 = vset.pattern.permute.xlu0 2
    %310 = vperm.xlu0 %309, %v34
    %v311 = vpop.permute.xlu0 %310
    %vm312 = vcmp.lt.s32.totalorder %v305, %v308
    %vm313 = vcmp.lt.s32.totalorder %v305, %v311
    %315 = vrot.lane.b32.xlu0 %v296, 96
    %v316 = vpop.permute.xlu0 %315
    %vm317 = vcmask 64512
    %v318 = vsel %vm317, %v296, 0
    %v320 = vsel %vm317, %v316, 0
    %322 = vmatprep.subr.mxu0 0.0
    %323 = vmatpush1.xpose.msra.mxu0 %v320
    %324 = vmatprep.subr.mxu0 0.0
    %325 = vmatpush1.xpose.msra.mxu0 0.0
    %326 = vmatprep.subr.mxu0 0.0
    %327 = vmatpush1.xpose.msra.mxu0 0.0
    %328 = vmatprep.subr.mxu0 0.0
    %329 = vmatpush1.xpose.msra.mxu0 0.0
    %330 = vmatprep.subr.mxu0 0.0
    %331 = vmatpush1.xpose.msra.mxu0 0.0
    %332 = vmatprep.subr.mxu0 0.0
    %333 = vmatpush1.xpose.msra.mxu0 0.0
    %334 = vmatprep.subr.mxu0 0.0
    %335 = vmatpush1.xpose.msra.mxu0 0.0
    %336 = vmatprep.subr.mxu0 0.0
    %337 = vmatpush1.xpose.msra.mxu0 0.0
    %338 = vmatprep.subr.mxu0 0.0
    %339 = vmatpush1.xpose.msra.mxu0 0.0
    %340 = vmatprep.subr.mxu0 0.0
    %341 = vmatpush1.xpose.msra.mxu0 0.0
    %342 = vmatprep.subr.mxu0 0.0
    %343 = vmatpush1.xpose.msra.mxu0 0.0
    %344 = vmatprep.subr.mxu0 0.0
    %345 = vmatpush1.xpose.msra.mxu0 0.0
    %346 = vmatprep.subr.mxu0 0.0
    %347 = vmatpush1.xpose.msra.mxu0 0.0
    %348 = vmatprep.subr.mxu0 0.0
    %349 = vmatpush1.xpose.msra.mxu0 0.0
    %350 = vmatprep.subr.mxu0 0.0
    %351 = vmatpush1.xpose.msra.mxu0 0.0
    %352 = vmatprep.subr.mxu0 0.0
    %353 = vmatpush1.xpose.msra.mxu0 0.0
    %354 = vmatprep.subr.mxu0 0.0
    %355 = vmatpush1.xpose.msra.mxu0 0.0
    %356 = vmatprep.subr.mxu0 0.0
    %357 = vmatpush1.xpose.msra.mxu0 0.0
    %358 = vmatprep.subr.mxu0 0.0
    %359 = vmatpush1.xpose.msra.mxu0 0.0
    %360 = vmatprep.subr.mxu0 0.0
    %361 = vmatpush1.xpose.msra.mxu0 0.0
    %362 = vmatprep.subr.mxu0 0.0
    %363 = vmatpush1.xpose.msra.mxu0 0.0
    %364 = vmatprep.subr.mxu0 0.0
    %365 = vmatpush1.xpose.msra.mxu0 0.0
    %366 = vmatprep.subr.mxu0 0.0
    %367 = vmatpush1.xpose.msra.mxu0 0.0
    %368 = vmatprep.subr.mxu0 0.0
    %369 = vmatpush1.xpose.msra.mxu0 0.0
    %370 = vmatprep.subr.mxu0 0.0
    %371 = vmatpush1.xpose.msra.mxu0 0.0
    %372 = vmatprep.subr.mxu0 0.0
    %373 = vmatpush1.xpose.msra.mxu0 0.0
    %374 = vmatprep.subr.mxu0 0.0
    %375 = vmatpush1.xpose.msra.mxu0 0.0
    %376 = vmatprep.subr.mxu0 0.0
    %377 = vmatpush1.xpose.msra.mxu0 0.0
    %378 = vmatprep.subr.mxu0 0.0
    %379 = vmatpush1.xpose.msra.mxu0 0.0
    %380 = vmatprep.subr.mxu0 0.0
    %381 = vmatpush1.xpose.msra.mxu0 0.0
    %382 = vmatprep.subr.mxu0 0.0
    %383 = vmatpush1.xpose.msra.mxu0 0.0
    %384 = vmatprep.subr.mxu0 0.0
    %385 = vmatpush1.xpose.msra.mxu0 0.0
    %386 = vmatprep.mubr.f32.mxu0 0.0
    %387 = vmatmul.mubr.f32.gmra.mrb[0].mxu0 %v318
    %v388 = vpop.f32.mrb[0].mxu0
    %v389 = vadd.f32 0.0, %v388
    %v390 = vpop.f32.mrb[0].mxu0
    %391 = vdwg.mxu0
    %393 = vrot.lane.b32.xlu0 %v301, 96
    %v394 = vpop.permute.xlu0 %393
    %v395 = vsel %vm317, %v301, 0
    %v397 = vsel %vm317, %v394, 0
    %399 = vmatprep.subr.mxu0 0.0
    %400 = vmatpush1.xpose.msra.mxu0 %v397
    %401 = vmatprep.subr.mxu0 0.0
    %402 = vmatpush1.xpose.msra.mxu0 0.0
    %403 = vmatprep.subr.mxu0 0.0
    %404 = vmatpush1.xpose.msra.mxu0 0.0
    %405 = vmatprep.subr.mxu0 0.0
    %406 = vmatpush1.xpose.msra.mxu0 0.0
    %407 = vmatprep.subr.mxu0 0.0
    %408 = vmatpush1.xpose.msra.mxu0 0.0
    %409 = vmatprep.subr.mxu0 0.0
    %410 = vmatpush1.xpose.msra.mxu0 0.0
    %411 = vmatprep.subr.mxu0 0.0
    %412 = vmatpush1.xpose.msra.mxu0 0.0
    %413 = vmatprep.subr.mxu0 0.0
    %414 = vmatpush1.xpose.msra.mxu0 0.0
    %415 = vmatprep.subr.mxu0 0.0
    %416 = vmatpush1.xpose.msra.mxu0 0.0
    %417 = vmatprep.subr.mxu0 0.0
    %418 = vmatpush1.xpose.msra.mxu0 0.0
    %419 = vmatprep.subr.mxu0 0.0
    %420 = vmatpush1.xpose.msra.mxu0 0.0
    %421 = vmatprep.subr.mxu0 0.0
    %422 = vmatpush1.xpose.msra.mxu0 0.0
    %423 = vmatprep.subr.mxu0 0.0
    %424 = vmatpush1.xpose.msra.mxu0 0.0
    %425 = vmatprep.subr.mxu0 0.0
    %426 = vmatpush1.xpose.msra.mxu0 0.0
    %427 = vmatprep.subr.mxu0 0.0
    %428 = vmatpush1.xpose.msra.mxu0 0.0
    %429 = vmatprep.subr.mxu0 0.0
    %430 = vmatpush1.xpose.msra.mxu0 0.0
    %431 = vmatprep.subr.mxu0 0.0
    %432 = vmatpush1.xpose.msra.mxu0 0.0
    %433 = vmatprep.subr.mxu0 0.0
    %434 = vmatpush1.xpose.msra.mxu0 0.0
    %435 = vmatprep.subr.mxu0 0.0
    %436 = vmatpush1.xpose.msra.mxu0 0.0
    %437 = vmatprep.subr.mxu0 0.0
    %438 = vmatpush1.xpose.msra.mxu0 0.0
    %439 = vmatprep.subr.mxu0 0.0
    %440 = vmatpush1.xpose.msra.mxu0 0.0
    %441 = vmatprep.subr.mxu0 0.0
    %442 = vmatpush1.xpose.msra.mxu0 0.0
    %443 = vmatprep.subr.mxu0 0.0
    %444 = vmatpush1.xpose.msra.mxu0 0.0
    %445 = vmatprep.subr.mxu0 0.0
    %446 = vmatpush1.xpose.msra.mxu0 0.0
    %447 = vmatprep.subr.mxu0 0.0
    %448 = vmatpush1.xpose.msra.mxu0 0.0
    %449 = vmatprep.subr.mxu0 0.0
    %450 = vmatpush1.xpose.msra.mxu0 0.0
    %451 = vmatprep.subr.mxu0 0.0
    %452 = vmatpush1.xpose.msra.mxu0 0.0
    %453 = vmatprep.subr.mxu0 0.0
    %454 = vmatpush1.xpose.msra.mxu0 0.0
    %455 = vmatprep.subr.mxu0 0.0
    %456 = vmatpush1.xpose.msra.mxu0 0.0
    %457 = vmatprep.subr.mxu0 0.0
    %458 = vmatpush1.xpose.msra.mxu0 0.0
    %459 = vmatprep.subr.mxu0 0.0
    %460 = vmatpush1.xpose.msra.mxu0 0.0
    %461 = vmatprep.subr.mxu0 0.0
    %462 = vmatpush1.xpose.msra.mxu0 0.0
    %463 = vmatprep.mubr.f32.mxu0 0.0
    %464 = vmatmul.mubr.f32.gmra.mrb[0].mxu0 %v395
    %v465 = vpop.f32.mrb[0].mxu0
    %v466 = vadd.f32 0.0, %v465
    %v467 = vpop.f32.mrb[0].mxu0
    %468 = vdwg.mxu0
    %v469 = vmul.f32 %v389, 0.35355338
    %v470 = vmul.f32 %v466, 0.35355338
    %v471 = vsel %vm312, %v469, -1e+09
    %v472 = vsel %vm313, %v470, -1e+09
    %v473 = vsel %vm317, %v471, -inf
    %474 = vmax.xlane.f32.xlu0 %v473
    %v475 = vpop.xlane.xlu0 %474
    %v476 = vsel %vm317, %v472, -inf
    %477 = vmax.xlane.f32.xlu0 %v476
    %v478 = vpop.xlane.xlu0 %477
    %v479 = vsub.f32 %v471, %v475
    %v480 = vsub.f32 %v472, %v478
    %v481 = vmul.f32 %v479, 1.442695
    %v482 = vpow.pop %v481
    %v483 = vmul.f32 %v480, 1.442695
    %v484 = vpow.pop %v483
    %v485 = vsel %vm317, %v482, 0.0
    %486 = vadd.xlane.f32.xlu0 %v485
    %v487 = vpop.xlane.xlu0 %486
    %v488 = vsel %vm317, %v484, 0.0
    %489 = vadd.xlane.f32.xlu0 %v488
    %v490 = vpop.xlane.xlu0 %489
    %v491 = vrcp.pop %v487
    %v492 = vrcp.pop %v490
    %v493 = vmul.f32 %v482, %v491
    %v494 = vmul.f32 %v484, %v492
    %495 = vrot.lane.b32.xlu0 %v296, 64
    %v496 = vpop.permute.xlu0 %495
    %v499 = vsel %vm317, %v493, 0
    %501 = vmatprep.subr.mxu0 0.0
    %502 = vmatpush1.msra.mxu0 %v496
    %503 = vmatprep.subr.mxu0 0.0
    %504 = vmatpush1.msra.mxu0 0.0
    %505 = vmatprep.subr.mxu0 0.0
    %506 = vmatpush1.msra.mxu0 0.0
    %507 = vmatprep.subr.mxu0 0.0
    %508 = vmatpush1.msra.mxu0 0.0
    %509 = vmatprep.subr.mxu0 0.0
    %510 = vmatpush1.msra.mxu0 0.0
    %511 = vmatprep.subr.mxu0 0.0
    %512 = vmatpush1.msra.mxu0 0.0
    %513 = vmatprep.subr.mxu0 0.0
    %514 = vmatpush1.msra.mxu0 0.0
    %515 = vmatprep.subr.mxu0 0.0
    %516 = vmatpush1.msra.mxu0 0.0
    %517 = vmatprep.subr.mxu0 0.0
    %518 = vmatpush1.msra.mxu0 0.0
    %519 = vmatprep.subr.mxu0 0.0
    %520 = vmatpush1.msra.mxu0 0.0
    %521 = vmatprep.subr.mxu0 0.0
    %522 = vmatpush1.msra.mxu0 0.0
    %523 = vmatprep.subr.mxu0 0.0
    %524 = vmatpush1.msra.mxu0 0.0
    %525 = vmatprep.subr.mxu0 0.0
    %526 = vmatpush1.msra.mxu0 0.0
    %527 = vmatprep.subr.mxu0 0.0
    %528 = vmatpush1.msra.mxu0 0.0
    %529 = vmatprep.subr.mxu0 0.0
    %530 = vmatpush1.msra.mxu0 0.0
    %531 = vmatprep.subr.mxu0 0.0
    %532 = vmatpush1.msra.mxu0 0.0
    %533 = vmatprep.subr.mxu0 0.0
    %534 = vmatpush1.msra.mxu0 0.0
    %535 = vmatprep.subr.mxu0 0.0
    %536 = vmatpush1.msra.mxu0 0.0
    %537 = vmatprep.subr.mxu0 0.0
    %538 = vmatpush1.msra.mxu0 0.0
    %539 = vmatprep.subr.mxu0 0.0
    %540 = vmatpush1.msra.mxu0 0.0
    %541 = vmatprep.subr.mxu0 0.0
    %542 = vmatpush1.msra.mxu0 0.0
    %543 = vmatprep.subr.mxu0 0.0
    %544 = vmatpush1.msra.mxu0 0.0
    %545 = vmatprep.subr.mxu0 0.0
    %546 = vmatpush1.msra.mxu0 0.0
    %547 = vmatprep.subr.mxu0 0.0
    %548 = vmatpush1.msra.mxu0 0.0
    %549 = vmatprep.subr.mxu0 0.0
    %550 = vmatpush1.msra.mxu0 0.0
    %551 = vmatprep.subr.mxu0 0.0
    %552 = vmatpush1.msra.mxu0 0.0
    %553 = vmatprep.subr.mxu0 0.0
    %554 = vmatpush1.msra.mxu0 0.0
    %555 = vmatprep.subr.mxu0 0.0
    %556 = vmatpush1.msra.mxu0 0.0
    %557 = vmatprep.subr.mxu0 0.0
    %558 = vmatpush1.msra.mxu0 0.0
    %559 = vmatprep.subr.mxu0 0.0
    %560 = vmatpush1.msra.mxu0 0.0
    %561 = vmatprep.subr.mxu0 0.0
    %562 = vmatpush1.msra.mxu0 0.0
    %563 = vmatprep.subr.mxu0 0.0
    %564 = vmatpush1.msra.mxu0 0.0
    %565 = vmatprep.mubr.f32.mxu0 0.0
    %566 = vmatmul.mubr.f32.gmra.mrb[0].mxu0 %v499
    %v567 = vpop.f32.mrb[0].mxu0
    %v568 = vadd.f32 0.0, %v567
    %v569 = vpop.f32.mrb[0].mxu0
    %570 = vdwg.mxu0
    %571 = vrot.lane.b32.xlu0 %v301, 64
    %v572 = vpop.permute.xlu0 %571
    %v575 = vsel %vm317, %v494, 0
    %577 = vmatprep.subr.mxu0 0.0
    %578 = vmatpush1.msra.mxu0 %v572
    %579 = vmatprep.subr.mxu0 0.0
    %580 = vmatpush1.msra.mxu0 0.0
    %581 = vmatprep.subr.mxu0 0.0
    %582 = vmatpush1.msra.mxu0 0.0
    %583 = vmatprep.subr.mxu0 0.0
    %584 = vmatpush1.msra.mxu0 0.0
    %585 = vmatprep.subr.mxu0 0.0
    %586 = vmatpush1.msra.mxu0 0.0
    %587 = vmatprep.subr.mxu0 0.0
    %588 = vmatpush1.msra.mxu0 0.0
    %589 = vmatprep.subr.mxu0 0.0
    %590 = vmatpush1.msra.mxu0 0.0
    %591 = vmatprep.subr.mxu0 0.0
    %592 = vmatpush1.msra.mxu0 0.0
    %593 = vmatprep.subr.mxu0 0.0
    %594 = vmatpush1.msra.mxu0 0.0
    %595 = vmatprep.subr.mxu0 0.0
    %596 = vmatpush1.msra.mxu0 0.0
    %597 = vmatprep.subr.mxu0 0.0
    %598 = vmatpush1.msra.mxu0 0.0
    %599 = vmatprep.subr.mxu0 0.0
    %600 = vmatpush1.msra.mxu0 0.0
    %601 = vmatprep.subr.mxu0 0.0
    %602 = vmatpush1.msra.mxu0 0.0
    %603 = vmatprep.subr.mxu0 0.0
    %604 = vmatpush1.msra.mxu0 0.0
    %605 = vmatprep.subr.mxu0 0.0
    %606 = vmatpush1.msra.mxu0 0.0
    %607 = vmatprep.subr.mxu0 0.0
    %608 = vmatpush1.msra.mxu0 0.0
    %609 = vmatprep.subr.mxu0 0.0
    %610 = vmatpush1.msra.mxu0 0.0
    %611 = vmatprep.subr.mxu0 0.0
    %612 = vmatpush1.msra.mxu0 0.0
    %613 = vmatprep.subr.mxu0 0.0
    %614 = vmatpush1.msra.mxu0 0.0
    %615 = vmatprep.subr.mxu0 0.0
    %616 = vmatpush1.msra.mxu0 0.0
    %617 = vmatprep.subr.mxu0 0.0
    %618 = vmatpush1.msra.mxu0 0.0
    %619 = vmatprep.subr.mxu0 0.0
    %620 = vmatpush1.msra.mxu0 0.0
    %621 = vmatprep.subr.mxu0 0.0
    %622 = vmatpush1.msra.mxu0 0.0
    %623 = vmatprep.subr.mxu0 0.0
    %624 = vmatpush1.msra.mxu0 0.0
    %625 = vmatprep.subr.mxu0 0.0
    %626 = vmatpush1.msra.mxu0 0.0
    %627 = vmatprep.subr.mxu0 0.0
    %628 = vmatpush1.msra.mxu0 0.0
    %629 = vmatprep.subr.mxu0 0.0
    %630 = vmatpush1.msra.mxu0 0.0
    %631 = vmatprep.subr.mxu0 0.0
    %632 = vmatpush1.msra.mxu0 0.0
    %633 = vmatprep.subr.mxu0 0.0
    %634 = vmatpush1.msra.mxu0 0.0
    %635 = vmatprep.subr.mxu0 0.0
    %636 = vmatpush1.msra.mxu0 0.0
    %637 = vmatprep.subr.mxu0 0.0
    %638 = vmatpush1.msra.mxu0 0.0
    %639 = vmatprep.subr.mxu0 0.0
    %640 = vmatpush1.msra.mxu0 0.0
    %641 = vmatprep.mubr.f32.mxu0 0.0
    %642 = vmatmul.mubr.f32.gmra.mrb[0].mxu0 %v575
    %v643 = vpop.f32.mrb[0].mxu0
    %v644 = vadd.f32 0.0, %v643
    %v645 = vpop.f32.mrb[0].mxu0
    %646 = vdwg.mxu0
    %647 = vrot.lane.b32.xlu0 %v296, 120
    %v648 = vpop.permute.xlu0 %647
    %649 = vrot.lane.b32.xlu0 %v296, 88
    %v650 = vpop.permute.xlu0 %649
    %v651 = vsel %vm317, %v648, 0
    %v653 = vsel %vm317, %v650, 0
    %655 = vmatprep.subr.mxu0 0.0
    %656 = vmatpush1.xpose.msra.mxu0 %v653
    %657 = vmatprep.subr.mxu0 0.0
    %658 = vmatpush1.xpose.msra.mxu0 0.0
    %659 = vmatprep.subr.mxu0 0.0
    %660 = vmatpush1.xpose.msra.mxu0 0.0
    %661 = vmatprep.subr.mxu0 0.0
    %662 = vmatpush1.xpose.msra.mxu0 0.0
    %663 = vmatprep.subr.mxu0 0.0
    %664 = vmatpush1.xpose.msra.mxu0 0.0
    %665 = vmatprep.subr.mxu0 0.0
    %666 = vmatpush1.xpose.msra.mxu0 0.0
    %667 = vmatprep.subr.mxu0 0.0
    %668 = vmatpush1.xpose.msra.mxu0 0.0
    %669 = vmatprep.subr.mxu0 0.0
    %670 = vmatpush1.xpose.msra.mxu0 0.0
    %671 = vmatprep.subr.mxu0 0.0
    %672 = vmatpush1.xpose.msra.mxu0 0.0
    %673 = vmatprep.subr.mxu0 0.0
    %674 = vmatpush1.xpose.msra.mxu0 0.0
    %675 = vmatprep.subr.mxu0 0.0
    %676 = vmatpush1.xpose.msra.mxu0 0.0
    %677 = vmatprep.subr.mxu0 0.0
    %678 = vmatpush1.xpose.msra.mxu0 0.0
    %679 = vmatprep.subr.mxu0 0.0
    %680 = vmatpush1.xpose.msra.mxu0 0.0
    %681 = vmatprep.subr.mxu0 0.0
    %682 = vmatpush1.xpose.msra.mxu0 0.0
    %683 = vmatprep.subr.mxu0 0.0
    %684 = vmatpush1.xpose.msra.mxu0 0.0
    %685 = vmatprep.subr.mxu0 0.0
    %686 = vmatpush1.xpose.msra.mxu0 0.0
    %687 = vmatprep.subr.mxu0 0.0
    %688 = vmatpush1.xpose.msra.mxu0 0.0
    %689 = vmatprep.subr.mxu0 0.0
    %690 = vmatpush1.xpose.msra.mxu0 0.0
    %691 = vmatprep.subr.mxu0 0.0
    %692 = vmatpush1.xpose.msra.mxu0 0.0
    %693 = vmatprep.subr.mxu0 0.0
    %694 = vmatpush1.xpose.msra.mxu0 0.0
    %695 = vmatprep.subr.mxu0 0.0
    %696 = vmatpush1.xpose.msra.mxu0 0.0
    %697 = vmatprep.subr.mxu0 0.0
    %698 = vmatpush1.xpose.msra.mxu0 0.0
    %699 = vmatprep.subr.mxu0 0.0
    %700 = vmatpush1.xpose.msra.mxu0 0.0
    %701 = vmatprep.subr.mxu0 0.0
    %702 = vmatpush1.xpose.msra.mxu0 0.0
    %703 = vmatprep.subr.mxu0 0.0
    %704 = vmatpush1.xpose.msra.mxu0 0.0
    %705 = vmatprep.subr.mxu0 0.0
    %706 = vmatpush1.xpose.msra.mxu0 0.0
    %707 = vmatprep.subr.mxu0 0.0
    %708 = vmatpush1.xpose.msra.mxu0 0.0
    %709 = vmatprep.subr.mxu0 0.0
    %710 = vmatpush1.xpose.msra.mxu0 0.0
    %711 = vmatprep.subr.mxu0 0.0
    %712 = vmatpush1.xpose.msra.mxu0 0.0
    %713 = vmatprep.subr.mxu0 0.0
    %714 = vmatpush1.xpose.msra.mxu0 0.0
    %715 = vmatprep.subr.mxu0 0.0
    %716 = vmatpush1.xpose.msra.mxu0 0.0
    %717 = vmatprep.subr.mxu0 0.0
    %718 = vmatpush1.xpose.msra.mxu0 0.0
    %719 = vmatprep.mubr.f32.mxu0 0.0
    %720 = vmatmul.mubr.f32.gmra.mrb[0].mxu0 %v651
    %v721 = vpop.f32.mrb[0].mxu0
    %v722 = vadd.f32 0.0, %v721
    %v723 = vpop.f32.mrb[0].mxu0
    %724 = vdwg.mxu0
    %725 = vrot.lane.b32.xlu0 %v301, 120
    %v726 = vpop.permute.xlu0 %725
    %727 = vrot.lane.b32.xlu0 %v301, 88
    %v728 = vpop.permute.xlu0 %727
    %v729 = vsel %vm317, %v726, 0
    %v731 = vsel %vm317, %v728, 0
    %733 = vmatprep.subr.mxu0 0.0
    %734 = vmatpush1.xpose.msra.mxu0 %v731
    %735 = vmatprep.subr.mxu0 0.0
    %736 = vmatpush1.xpose.msra.mxu0 0.0
    %737 = vmatprep.subr.mxu0 0.0
    %738 = vmatpush1.xpose.msra.mxu0 0.0
    %739 = vmatprep.subr.mxu0 0.0
    %740 = vmatpush1.xpose.msra.mxu0 0.0
    %741 = vmatprep.subr.mxu0 0.0
    %742 = vmatpush1.xpose.msra.mxu0 0.0
    %743 = vmatprep.subr.mxu0 0.0
    %744 = vmatpush1.xpose.msra.mxu0 0.0
    %745 = vmatprep.subr.mxu0 0.0
    %746 = vmatpush1.xpose.msra.mxu0 0.0
    %747 = vmatprep.subr.mxu0 0.0
    %748 = vmatpush1.xpose.msra.mxu0 0.0
    %749 = vmatprep.subr.mxu0 0.0
    %750 = vmatpush1.xpose.msra.mxu0 0.0
    %751 = vmatprep.subr.mxu0 0.0
    %752 = vmatpush1.xpose.msra.mxu0 0.0
    %753 = vmatprep.subr.mxu0 0.0
    %754 = vmatpush1.xpose.msra.mxu0 0.0
    %755 = vmatprep.subr.mxu0 0.0
    %756 = vmatpush1.xpose.msra.mxu0 0.0
    %757 = vmatprep.subr.mxu0 0.0
    %758 = vmatpush1.xpose.msra.mxu0 0.0
    %759 = vmatprep.subr.mxu0 0.0
    %760 = vmatpush1.xpose.msra.mxu0 0.0
    %761 = vmatprep.subr.mxu0 0.0
    %762 = vmatpush1.xpose.msra.mxu0 0.0
    %763 = vmatprep.subr.mxu0 0.0
    %764 = vmatpush1.xpose.msra.mxu0 0.0
    %765 = vmatprep.subr.mxu0 0.0
    %766 = vmatpush1.xpose.msra.mxu0 0.0
    %767 = vmatprep.subr.mxu0 0.0
    %768 = vmatpush1.xpose.msra.mxu0 0.0
    %769 = vmatprep.subr.mxu0 0.0
    %770 = vmatpush1.xpose.msra.mxu0 0.0
    %771 = vmatprep.subr.mxu0 0.0
    %772 = vmatpush1.xpose.msra.mxu0 0.0
    %773 = vmatprep.subr.mxu0 0.0
    %774 = vmatpush1.xpose.msra.mxu0 0.0
    %775 = vmatprep.subr.mxu0 0.0
    %776 = vmatpush1.xpose.msra.mxu0 0.0
    %777 = vmatprep.subr.mxu0 0.0
    %778 = vmatpush1.xpose.msra.mxu0 0.0
    %779 = vmatprep.subr.mxu0 0.0
    %780 = vmatpush1.xpose.msra.mxu0 0.0
    %781 = vmatprep.subr.mxu0 0.0
    %782 = vmatpush1.xpose.msra.mxu0 0.0
    %783 = vmatprep.subr.mxu0 0.0
    %784 = vmatpush1.xpose.msra.mxu0 0.0
    %785 = vmatprep.subr.mxu0 0.0
    %786 = vmatpush1.xpose.msra.mxu0 0.0
    %787 = vmatprep.subr.mxu0 0.0
    %788 = vmatpush1.xpose.msra.mxu0 0.0
    %789 = vmatprep.subr.mxu0 0.0
    %790 = vmatpush1.xpose.msra.mxu0 0.0
    %791 = vmatprep.subr.mxu0 0.0
    %792 = vmatpush1.xpose.msra.mxu0 0.0
    %793 = vmatprep.subr.mxu0 0.0
    %794 = vmatpush1.xpose.msra.mxu0 0.0
    %795 = vmatprep.subr.mxu0 0.0
    %796 = vmatpush1.xpose.msra.mxu0 0.0
    %797 = vmatprep.mubr.f32.mxu0 0.0
    %798 = vmatmul.mubr.f32.gmra.mrb[0].mxu0 %v729
    %v799 = vpop.f32.mrb[0].mxu0
    %v800 = vadd.f32 0.0, %v799
    %v801 = vpop.f32.mrb[0].mxu0
    %802 = vdwg.mxu0
    %v803 = vmul.f32 %v722, 0.35355338
    %v804 = vmul.f32 %v800, 0.35355338
    %v805 = vsel %vm312, %v803, -1e+09
    %v806 = vsel %vm313, %v804, -1e+09
    %v807 = vsel %vm317, %v805, -inf
    %808 = vmax.xlane.f32.xlu0 %v807
    %v809 = vpop.xlane.xlu0 %808
    %v810 = vsel %vm317, %v806, -inf
    %811 = vmax.xlane.f32.xlu0 %v810
    %v812 = vpop.xlane.xlu0 %811
    %v813 = vsub.f32 %v805, %v809
    %v814 = vsub.f32 %v806, %v812
    %v815 = vmul.f32 %v813, 1.442695
    %v816 = vpow.pop %v815
    %v817 = vmul.f32 %v814, 1.442695
    %v818 = vpow.pop %v817
    %v819 = vsel %vm317, %v816, 0.0
    %820 = vadd.xlane.f32.xlu0 %v819
    %v821 = vpop.xlane.xlu0 %820
    %v822 = vsel %vm317, %v818, 0.0
    %823 = vadd.xlane.f32.xlu0 %v822
    %v824 = vpop.xlane.xlu0 %823
    %v825 = vrcp.pop %v821
    %v826 = vrcp.pop %v824
    %v827 = vmul.f32 %v816, %v825
    %v828 = vmul.f32 %v818, %v826
    %829 = vrot.lane.b32.xlu0 %v296, 56
    %v830 = vpop.permute.xlu0 %829
    %v833 = vsel %vm317, %v827, 0
    %835 = vmatprep.subr.mxu0 0.0
    %836 = vmatpush1.msra.mxu0 %v830
    %837 = vmatprep.subr.mxu0 0.0
    %838 = vmatpush1.msra.mxu0 0.0
    %839 = vmatprep.subr.mxu0 0.0
    %840 = vmatpush1.msra.mxu0 0.0
    %841 = vmatprep.subr.mxu0 0.0
    %842 = vmatpush1.msra.mxu0 0.0
    %843 = vmatprep.subr.mxu0 0.0
    %844 = vmatpush1.msra.mxu0 0.0
    %845 = vmatprep.subr.mxu0 0.0
    %846 = vmatpush1.msra.mxu0 0.0
    %847 = vmatprep.subr.mxu0 0.0
    %848 = vmatpush1.msra.mxu0 0.0
    %849 = vmatprep.subr.mxu0 0.0
    %850 = vmatpush1.msra.mxu0 0.0
    %851 = vmatprep.subr.mxu0 0.0
    %852 = vmatpush1.msra.mxu0 0.0
    %853 = vmatprep.subr.mxu0 0.0
    %854 = vmatpush1.msra.mxu0 0.0
    %855 = vmatprep.subr.mxu0 0.0
    %856 = vmatpush1.msra.mxu0 0.0
    %857 = vmatprep.subr.mxu0 0.0
    %858 = vmatpush1.msra.mxu0 0.0
    %859 = vmatprep.subr.mxu0 0.0
    %860 = vmatpush1.msra.mxu0 0.0
    %861 = vmatprep.subr.mxu0 0.0
    %862 = vmatpush1.msra.mxu0 0.0
    %863 = vmatprep.subr.mxu0 0.0
    %864 = vmatpush1.msra.mxu0 0.0
    %865 = vmatprep.subr.mxu0 0.0
    %866 = vmatpush1.msra.mxu0 0.0
    %867 = vmatprep.subr.mxu0 0.0
    %868 = vmatpush1.msra.mxu0 0.0
    %869 = vmatprep.subr.mxu0 0.0
    %870 = vmatpush1.msra.mxu0 0.0
    %871 = vmatprep.subr.mxu0 0.0
    %872 = vmatpush1.msra.mxu0 0.0
    %873 = vmatprep.subr.mxu0 0.0
    %874 = vmatpush1.msra.mxu0 0.0
    %875 = vmatprep.subr.mxu0 0.0
    %876 = vmatpush1.msra.mxu0 0.0
    %877 = vmatprep.subr.mxu0 0.0
    %878 = vmatpush1.msra.mxu0 0.0
    %879 = vmatprep.subr.mxu0 0.0
    %880 = vmatpush1.msra.mxu0 0.0
    %881 = vmatprep.subr.mxu0 0.0
    %882 = vmatpush1.msra.mxu0 0.0
    %883 = vmatprep.subr.mxu0 0.0
    %884 = vmatpush1.msra.mxu0 0.0
    %885 = vmatprep.subr.mxu0 0.0
    %886 = vmatpush1.msra.mxu0 0.0
    %887 = vmatprep.subr.mxu0 0.0
    %888 = vmatpush1.msra.mxu0 0.0
    %889 = vmatprep.subr.mxu0 0.0
    %890 = vmatpush1.msra.mxu0 0.0
    %891 = vmatprep.subr.mxu0 0.0
    %892 = vmatpush1.msra.mxu0 0.0
    %893 = vmatprep.subr.mxu0 0.0
    %894 = vmatpush1.msra.mxu0 0.0
    %895 = vmatprep.subr.mxu0 0.0
    %896 = vmatpush1.msra.mxu0 0.0
    %897 = vmatprep.subr.mxu0 0.0
    %898 = vmatpush1.msra.mxu0 0.0
    %899 = vmatprep.mubr.f32.mxu0 0.0
    %900 = vmatmul.mubr.f32.gmra.mrb[0].mxu0 %v833
    %v901 = vpop.f32.mrb[0].mxu0
    %v902 = vadd.f32 0.0, %v901
    %v903 = vpop.f32.mrb[0].mxu0
    %904 = vdwg.mxu0
    %905 = vrot.lane.b32.xlu0 %v301, 56
    %v906 = vpop.permute.xlu0 %905
    %v909 = vsel %vm317, %v828, 0
    %911 = vmatprep.subr.mxu0 0.0
    %912 = vmatpush1.msra.mxu0 %v906
    %913 = vmatprep.subr.mxu0 0.0
    %914 = vmatpush1.msra.mxu0 0.0
    %915 = vmatprep.subr.mxu0 0.0
    %916 = vmatpush1.msra.mxu0 0.0
    %917 = vmatprep.subr.mxu0 0.0
    %918 = vmatpush1.msra.mxu0 0.0
    %919 = vmatprep.subr.mxu0 0.0
    %920 = vmatpush1.msra.mxu0 0.0
    %921 = vmatprep.subr.mxu0 0.0
    %922 = vmatpush1.msra.mxu0 0.0
    %923 = vmatprep.subr.mxu0 0.0
    %924 = vmatpush1.msra.mxu0 0.0
    %925 = vmatprep.subr.mxu0 0.0
    %926 = vmatpush1.msra.mxu0 0.0
    %927 = vmatprep.subr.mxu0 0.0
    %928 = vmatpush1.msra.mxu0 0.0
    %929 = vmatprep.subr.mxu0 0.0
    %930 = vmatpush1.msra.mxu0 0.0
    %931 = vmatprep.subr.mxu0 0.0
    %932 = vmatpush1.msra.mxu0 0.0
    %933 = vmatprep.subr.mxu0 0.0
    %934 = vmatpush1.msra.mxu0 0.0
    %935 = vmatprep.subr.mxu0 0.0
    %936 = vmatpush1.msra.mxu0 0.0
    %937 = vmatprep.subr.mxu0 0.0
    %938 = vmatpush1.msra.mxu0 0.0
    %939 = vmatprep.subr.mxu0 0.0
    %940 = vmatpush1.msra.mxu0 0.0
    %941 = vmatprep.subr.mxu0 0.0
    %942 = vmatpush1.msra.mxu0 0.0
    %943 = vmatprep.subr.mxu0 0.0
    %944 = vmatpush1.msra.mxu0 0.0
    %945 = vmatprep.subr.mxu0 0.0
    %946 = vmatpush1.msra.mxu0 0.0
    %947 = vmatprep.subr.mxu0 0.0
    %948 = vmatpush1.msra.mxu0 0.0
    %949 = vmatprep.subr.mxu0 0.0
    %950 = vmatpush1.msra.mxu0 0.0
    %951 = vmatprep.subr.mxu0 0.0
    %952 = vmatpush1.msra.mxu0 0.0
    %953 = vmatprep.subr.mxu0 0.0
    %954 = vmatpush1.msra.mxu0 0.0
    %955 = vmatprep.subr.mxu0 0.0
    %956 = vmatpush1.msra.mxu0 0.0
    %957 = vmatprep.subr.mxu0 0.0
    %958 = vmatpush1.msra.mxu0 0.0
    %959 = vmatprep.subr.mxu0 0.0
    %960 = vmatpush1.msra.mxu0 0.0
    %961 = vmatprep.subr.mxu0 0.0
    %962 = vmatpush1.msra.mxu0 0.0
    %963 = vmatprep.subr.mxu0 0.0
    %964 = vmatpush1.msra.mxu0 0.0
    %965 = vmatprep.subr.mxu0 0.0
    %966 = vmatpush1.msra.mxu0 0.0
    %967 = vmatprep.subr.mxu0 0.0
    %968 = vmatpush1.msra.mxu0 0.0
    %969 = vmatprep.subr.mxu0 0.0
    %970 = vmatpush1.msra.mxu0 0.0
    %971 = vmatprep.subr.mxu0 0.0
    %972 = vmatpush1.msra.mxu0 0.0
    %973 = vmatprep.subr.mxu0 0.0
    %974 = vmatpush1.msra.mxu0 0.0
    %975 = vmatprep.mubr.f32.mxu0 0.0
    %976 = vmatmul.mubr.f32.gmra.mrb[0].mxu0 %v909
    %v977 = vpop.f32.mrb[0].mxu0
    %v978 = vadd.f32 0.0, %v977
    %v979 = vpop.f32.mrb[0].mxu0
    %980 = vdwg.mxu0
    %981 = vrot.lane.b32.xlu0 %v296, 112
    %v982 = vpop.permute.xlu0 %981
    %983 = vrot.lane.b32.xlu0 %v296, 80
    %v984 = vpop.permute.xlu0 %983
    %v985 = vsel %vm317, %v982, 0
    %v987 = vsel %vm317, %v984, 0
    %989 = vmatprep.subr.mxu0 0.0
    %990 = vmatpush1.xpose.msra.mxu0 %v987
    %991 = vmatprep.subr.mxu0 0.0
    %992 = vmatpush1.xpose.msra.mxu0 0.0
    %993 = vmatprep.subr.mxu0 0.0
    %994 = vmatpush1.xpose.msra.mxu0 0.0
    %995 = vmatprep.subr.mxu0 0.0
    %996 = vmatpush1.xpose.msra.mxu0 0.0
    %997 = vmatprep.subr.mxu0 0.0
    %998 = vmatpush1.xpose.msra.mxu0 0.0
    %999 = vmatprep.subr.mxu0 0.0
    %1000 = vmatpush1.xpose.msra.mxu0 0.0
    %1001 = vmatprep.subr.mxu0 0.0
    %1002 = vmatpush1.xpose.msra.mxu0 0.0
    %1003 = vmatprep.subr.mxu0 0.0
    %1004 = vmatpush1.xpose.msra.mxu0 0.0
    %1005 = vmatprep.subr.mxu0 0.0
    %1006 = vmatpush1.xpose.msra.mxu0 0.0
    %1007 = vmatprep.subr.mxu0 0.0
    %1008 = vmatpush1.xpose.msra.mxu0 0.0
    %1009 = vmatprep.subr.mxu0 0.0
    %1010 = vmatpush1.xpose.msra.mxu0 0.0
    %1011 = vmatprep.subr.mxu0 0.0
    %1012 = vmatpush1.xpose.msra.mxu0 0.0
    %1013 = vmatprep.subr.mxu0 0.0
    %1014 = vmatpush1.xpose.msra.mxu0 0.0
    %1015 = vmatprep.subr.mxu0 0.0
    %1016 = vmatpush1.xpose.msra.mxu0 0.0
    %1017 = vmatprep.subr.mxu0 0.0
    %1018 = vmatpush1.xpose.msra.mxu0 0.0
    %1019 = vmatprep.subr.mxu0 0.0
    %1020 = vmatpush1.xpose.msra.mxu0 0.0
    %1021 = vmatprep.subr.mxu0 0.0
    %1022 = vmatpush1.xpose.msra.mxu0 0.0
    %1023 = vmatprep.subr.mxu0 0.0
    %1024 = vmatpush1.xpose.msra.mxu0 0.0
    %1025 = vmatprep.subr.mxu0 0.0
    %1026 = vmatpush1.xpose.msra.mxu0 0.0
    %1027 = vmatprep.subr.mxu0 0.0
    %1028 = vmatpush1.xpose.msra.mxu0 0.0
    %1029 = vmatprep.subr.mxu0 0.0
    %1030 = vmatpush1.xpose.msra.mxu0 0.0
    %1031 = vmatprep.subr.mxu0 0.0
    %1032 = vmatpush1.xpose.msra.mxu0 0.0
    %1033 = vmatprep.subr.mxu0 0.0
    %1034 = vmatpush1.xpose.msra.mxu0 0.0
    %1035 = vmatprep.subr.mxu0 0.0
    %1036 = vmatpush1.xpose.msra.mxu0 0.0
    %1037 = vmatprep.subr.mxu0 0.0
    %1038 = vmatpush1.xpose.msra.mxu0 0.0
    %1039 = vmatprep.subr.mxu0 0.0
    %1040 = vmatpush1.xpose.msra.mxu0 0.0
    %1041 = vmatprep.subr.mxu0 0.0
    %1042 = vmatpush1.xpose.msra.mxu0 0.0
    %1043 = vmatprep.subr.mxu0 0.0
    %1044 = vmatpush1.xpose.msra.mxu0 0.0
    %1045 = vmatprep.subr.mxu0 0.0
    %1046 = vmatpush1.xpose.msra.mxu0 0.0
    %1047 = vmatprep.subr.mxu0 0.0
    %1048 = vmatpush1.xpose.msra.mxu0 0.0
    %1049 = vmatprep.subr.mxu0 0.0
    %1050 = vmatpush1.xpose.msra.mxu0 0.0
    %1051 = vmatprep.subr.mxu0 0.0
    %1052 = vmatpush1.xpose.msra.mxu0 0.0
    %1053 = vmatprep.mubr.f32.mxu0 0.0
    %1054 = vmatmul.mubr.f32.gmra.mrb[0].mxu0 %v985
    %v1055 = vpop.f32.mrb[0].mxu0
    %v1056 = vadd.f32 0.0, %v1055
    %v1057 = vpop.f32.mrb[0].mxu0
    %1058 = vdwg.mxu0
    %1059 = vrot.lane.b32.xlu0 %v301, 112
    %v1060 = vpop.permute.xlu0 %1059
    %1061 = vrot.lane.b32.xlu0 %v301, 80
    %v1062 = vpop.permute.xlu0 %1061
    %v1063 = vsel %vm317, %v1060, 0
    %v1065 = vsel %vm317, %v1062, 0
    %1067 = vmatprep.subr.mxu0 0.0
    %1068 = vmatpush1.xpose.msra.mxu0 %v1065
    %1069 = vmatprep.subr.mxu0 0.0
    %1070 = vmatpush1.xpose.msra.mxu0 0.0
    %1071 = vmatprep.subr.mxu0 0.0
    %1072 = vmatpush1.xpose.msra.mxu0 0.0
    %1073 = vmatprep.subr.mxu0 0.0
    %1074 = vmatpush1.xpose.msra.mxu0 0.0
    %1075 = vmatprep.subr.mxu0 0.0
    %1076 = vmatpush1.xpose.msra.mxu0 0.0
    %1077 = vmatprep.subr.mxu0 0.0
    %1078 = vmatpush1.xpose.msra.mxu0 0.0
    %1079 = vmatprep.subr.mxu0 0.0
    %1080 = vmatpush1.xpose.msra.mxu0 0.0
    %1081 = vmatprep.subr.mxu0 0.0
    %1082 = vmatpush1.xpose.msra.mxu0 0.0
    %1083 = vmatprep.subr.mxu0 0.0
    %1084 = vmatpush1.xpose.msra.mxu0 0.0
    %1085 = vmatprep.subr.mxu0 0.0
    %1086 = vmatpush1.xpose.msra.mxu0 0.0
    %1087 = vmatprep.subr.mxu0 0.0
    %1088 = vmatpush1.xpose.msra.mxu0 0.0
    %1089 = vmatprep.subr.mxu0 0.0
    %1090 = vmatpush1.xpose.msra.mxu0 0.0
    %1091 = vmatprep.subr.mxu0 0.0
    %1092 = vmatpush1.xpose.msra.mxu0 0.0
    %1093 = vmatprep.subr.mxu0 0.0
    %1094 = vmatpush1.xpose.msra.mxu0 0.0
    %1095 = vmatprep.subr.mxu0 0.0
    %1096 = vmatpush1.xpose.msra.mxu0 0.0
    %1097 = vmatprep.subr.mxu0 0.0
    %1098 = vmatpush1.xpose.msra.mxu0 0.0
    %1099 = vmatprep.subr.mxu0 0.0
    %1100 = vmatpush1.xpose.msra.mxu0 0.0
    %1101 = vmatprep.subr.mxu0 0.0
    %1102 = vmatpush1.xpose.msra.mxu0 0.0
    %1103 = vmatprep.subr.mxu0 0.0
    %1104 = vmatpush1.xpose.msra.mxu0 0.0
    %1105 = vmatprep.subr.mxu0 0.0
    %1106 = vmatpush1.xpose.msra.mxu0 0.0
    %1107 = vmatprep.subr.mxu0 0.0
    %1108 = vmatpush1.xpose.msra.mxu0 0.0
    %1109 = vmatprep.subr.mxu0 0.0
    %1110 = vmatpush1.xpose.msra.mxu0 0.0
    %1111 = vmatprep.subr.mxu0 0.0
    %1112 = vmatpush1.xpose.msra.mxu0 0.0
    %1113 = vmatprep.subr.mxu0 0.0
    %1114 = vmatpush1.xpose.msra.mxu0 0.0
    %1115 = vmatprep.subr.mxu0 0.0
    %1116 = vmatpush1.xpose.msra.mxu0 0.0
    %1117 = vmatprep.subr.mxu0 0.0
    %1118 = vmatpush1.xpose.msra.mxu0 0.0
    %1119 = vmatprep.subr.mxu0 0.0
    %1120 = vmatpush1.xpose.msra.mxu0 0.0
    %1121 = vmatprep.subr.mxu0 0.0
    %1122 = vmatpush1.xpose.msra.mxu0 0.0
    %1123 = vmatprep.subr.mxu0 0.0
    %1124 = vmatpush1.xpose.msra.mxu0 0.0
    %1125 = vmatprep.subr.mxu0 0.0
    %1126 = vmatpush1.xpose.msra.mxu0 0.0
    %1127 = vmatprep.subr.mxu0 0.0
    %1128 = vmatpush1.xpose.msra.mxu0 0.0
    %1129 = vmatprep.subr.mxu0 0.0
    %1130 = vmatpush1.xpose.msra.mxu0 0.0
    %1131 = vmatprep.mubr.f32.mxu0 0.0
    %1132 = vmatmul.mubr.f32.gmra.mrb[0].mxu0 %v1063
    %v1133 = vpop.f32.mrb[0].mxu0
    %v1134 = vadd.f32 0.0, %v1133
    %v1135 = vpop.f32.mrb[0].mxu0
    %1136 = vdwg.mxu0
    %v1137 = vmul.f32 %v1056, 0.35355338
    %v1138 = vmul.f32 %v1134, 0.35355338
    %v1139 = vsel %vm312, %v1137, -1e+09
    %v1140 = vsel %vm313, %v1138, -1e+09
    %v1141 = vsel %vm317, %v1139, -inf
    %1142 = vmax.xlane.f32.xlu0 %v1141
    %v1143 = vpop.xlane.xlu0 %1142
    %v1144 = vsel %vm317, %v1140, -inf
    %1145 = vmax.xlane.f32.xlu0 %v1144
    %v1146 = vpop.xlane.xlu0 %1145
    %v1147 = vsub.f32 %v1139, %v1143
    %v1148 = vsub.f32 %v1140, %v1146
    %v1149 = vmul.f32 %v1147, 1.442695
    %v1150 = vpow.pop %v1149
    %v1151 = vmul.f32 %v1148, 1.442695
    %v1152 = vpow.pop %v1151
    %v1153 = vsel %vm317, %v1150, 0.0
    %1154 = vadd.xlane.f32.xlu0 %v1153
    %v1155 = vpop.xlane.xlu0 %1154
    %v1156 = vsel %vm317, %v1152, 0.0
    %1157 = vadd.xlane.f32.xlu0 %v1156
    %v1158 = vpop.xlane.xlu0 %1157
    %v1159 = vrcp.pop %v1155
    %v1160 = vrcp.pop %v1158
    %v1161 = vmul.f32 %v1150, %v1159
    %v1162 = vmul.f32 %v1152, %v1160
    %1163 = vrot.lane.b32.xlu0 %v296, 48
    %v1164 = vpop.permute.xlu0 %1163
    %v1167 = vsel %vm317, %v1161, 0
    %1169 = vmatprep.subr.mxu0 0.0
    %1170 = vmatpush1.msra.mxu0 %v1164
    %1171 = vmatprep.subr.mxu0 0.0
    %1172 = vmatpush1.msra.mxu0 0.0
    %1173 = vmatprep.subr.mxu0 0.0
    %1174 = vmatpush1.msra.mxu0 0.0
    %1175 = vmatprep.subr.mxu0 0.0
    %1176 = vmatpush1.msra.mxu0 0.0
    %1177 = vmatprep.subr.mxu0 0.0
    %1178 = vmatpush1.msra.mxu0 0.0
    %1179 = vmatprep.subr.mxu0 0.0
    %1180 = vmatpush1.msra.mxu0 0.0
    %1181 = vmatprep.subr.mxu0 0.0
    %1182 = vmatpush1.msra.mxu0 0.0
    %1183 = vmatprep.subr.mxu0 0.0
    %1184 = vmatpush1.msra.mxu0 0.0
    %1185 = vmatprep.subr.mxu0 0.0
    %1186 = vmatpush1.msra.mxu0 0.0
    %1187 = vmatprep.subr.mxu0 0.0
    %1188 = vmatpush1.msra.mxu0 0.0
    %1189 = vmatprep.subr.mxu0 0.0
    %1190 = vmatpush1.msra.mxu0 0.0
    %1191 = vmatprep.subr.mxu0 0.0
    %1192 = vmatpush1.msra.mxu0 0.0
    %1193 = vmatprep.subr.mxu0 0.0
    %1194 = vmatpush1.msra.mxu0 0.0
    %1195 = vmatprep.subr.mxu0 0.0
    %1196 = vmatpush1.msra.mxu0 0.0
    %1197 = vmatprep.subr.mxu0 0.0
    %1198 = vmatpush1.msra.mxu0 0.0
    %1199 = vmatprep.subr.mxu0 0.0
    %1200 = vmatpush1.msra.mxu0 0.0
    %1201 = vmatprep.subr.mxu0 0.0
    %1202 = vmatpush1.msra.mxu0 0.0
    %1203 = vmatprep.subr.mxu0 0.0
    %1204 = vmatpush1.msra.mxu0 0.0
    %1205 = vmatprep.subr.mxu0 0.0
    %1206 = vmatpush1.msra.mxu0 0.0
    %1207 = vmatprep.subr.mxu0 0.0
    %1208 = vmatpush1.msra.mxu0 0.0
    %1209 = vmatprep.subr.mxu0 0.0
    %1210 = vmatpush1.msra.mxu0 0.0
    %1211 = vmatprep.subr.mxu0 0.0
    %1212 = vmatpush1.msra.mxu0 0.0
    %1213 = vmatprep.subr.mxu0 0.0
    %1214 = vmatpush1.msra.mxu0 0.0
    %1215 = vmatprep.subr.mxu0 0.0
    %1216 = vmatpush1.msra.mxu0 0.0
    %1217 = vmatprep.subr.mxu0 0.0
    %1218 = vmatpush1.msra.mxu0 0.0
    %1219 = vmatprep.subr.mxu0 0.0
    %1220 = vmatpush1.msra.mxu0 0.0
    %1221 = vmatprep.subr.mxu0 0.0
    %1222 = vmatpush1.msra.mxu0 0.0
    %1223 = vmatprep.subr.mxu0 0.0
    %1224 = vmatpush1.msra.mxu0 0.0
    %1225 = vmatprep.subr.mxu0 0.0
    %1226 = vmatpush1.msra.mxu0 0.0
    %1227 = vmatprep.subr.mxu0 0.0
    %1228 = vmatpush1.msra.mxu0 0.0
    %1229 = vmatprep.subr.mxu0 0.0
    %1230 = vmatpush1.msra.mxu0 0.0
    %1231 = vmatprep.subr.mxu0 0.0
    %1232 = vmatpush1.msra.mxu0 0.0
    %1233 = vmatprep.mubr.f32.mxu0 0.0
    %1234 = vmatmul.mubr.f32.gmra.mrb[0].mxu0 %v1167
    %v1235 = vpop.f32.mrb[0].mxu0
    %v1236 = vadd.f32 0.0, %v1235
    %v1237 = vpop.f32.mrb[0].mxu0
    %1238 = vdwg.mxu0
    %1239 = vrot.lane.b32.xlu0 %v301, 48
    %v1240 = vpop.permute.xlu0 %1239
    %v1243 = vsel %vm317, %v1162, 0
    %1245 = vmatprep.subr.mxu0 0.0
    %1246 = vmatpush1.msra.mxu0 %v1240
    %1247 = vmatprep.subr.mxu0 0.0
    %1248 = vmatpush1.msra.mxu0 0.0
    %1249 = vmatprep.subr.mxu0 0.0
    %1250 = vmatpush1.msra.mxu0 0.0
    %1251 = vmatprep.subr.mxu0 0.0
    %1252 = vmatpush1.msra.mxu0 0.0
    %1253 = vmatprep.subr.mxu0 0.0
    %1254 = vmatpush1.msra.mxu0 0.0
    %1255 = vmatprep.subr.mxu0 0.0
    %1256 = vmatpush1.msra.mxu0 0.0
    %1257 = vmatprep.subr.mxu0 0.0
    %1258 = vmatpush1.msra.mxu0 0.0
    %1259 = vmatprep.subr.mxu0 0.0
    %1260 = vmatpush1.msra.mxu0 0.0
    %1261 = vmatprep.subr.mxu0 0.0
    %1262 = vmatpush1.msra.mxu0 0.0
    %1263 = vmatprep.subr.mxu0 0.0
    %1264 = vmatpush1.msra.mxu0 0.0
    %1265 = vmatprep.subr.mxu0 0.0
    %1266 = vmatpush1.msra.mxu0 0.0
    %1267 = vmatprep.subr.mxu0 0.0
    %1268 = vmatpush1.msra.mxu0 0.0
    %1269 = vmatprep.subr.mxu0 0.0
    %1270 = vmatpush1.msra.mxu0 0.0
    %1271 = vmatprep.subr.mxu0 0.0
    %1272 = vmatpush1.msra.mxu0 0.0
    %1273 = vmatprep.subr.mxu0 0.0
    %1274 = vmatpush1.msra.mxu0 0.0
    %1275 = vmatprep.subr.mxu0 0.0
    %1276 = vmatpush1.msra.mxu0 0.0
    %1277 = vmatprep.subr.mxu0 0.0
    %1278 = vmatpush1.msra.mxu0 0.0
    %1279 = vmatprep.subr.mxu0 0.0
    %1280 = vmatpush1.msra.mxu0 0.0
    %1281 = vmatprep.subr.mxu0 0.0
    %1282 = vmatpush1.msra.mxu0 0.0
    %1283 = vmatprep.subr.mxu0 0.0
    %1284 = vmatpush1.msra.mxu0 0.0
    %1285 = vmatprep.subr.mxu0 0.0
    %1286 = vmatpush1.msra.mxu0 0.0
    %1287 = vmatprep.subr.mxu0 0.0
    %1288 = vmatpush1.msra.mxu0 0.0
    %1289 = vmatprep.subr.mxu0 0.0
    %1290 = vmatpush1.msra.mxu0 0.0
    %1291 = vmatprep.subr.mxu0 0.0
    %1292 = vmatpush1.msra.mxu0 0.0
    %1293 = vmatprep.subr.mxu0 0.0
    %1294 = vmatpush1.msra.mxu0 0.0
    %1295 = vmatprep.subr.mxu0 0.0
    %1296 = vmatpush1.msra.mxu0 0.0
    %1297 = vmatprep.subr.mxu0 0.0
    %1298 = vmatpush1.msra.mxu0 0.0
    %1299 = vmatprep.subr.mxu0 0.0
    %1300 = vmatpush1.msra.mxu0 0.0
    %1301 = vmatprep.subr.mxu0 0.0
    %1302 = vmatpush1.msra.mxu0 0.0
    %1303 = vmatprep.subr.mxu0 0.0
    %1304 = vmatpush1.msra.mxu0 0.0
    %1305 = vmatprep.subr.mxu0 0.0
    %1306 = vmatpush1.msra.mxu0 0.0
    %1307 = vmatprep.subr.mxu0 0.0
    %1308 = vmatpush1.msra.mxu0 0.0
    %1309 = vmatprep.mubr.f32.mxu0 0.0
    %1310 = vmatmul.mubr.f32.gmra.mrb[0].mxu0 %v1243
    %v1311 = vpop.f32.mrb[0].mxu0
    %v1312 = vadd.f32 0.0, %v1311
    %v1313 = vpop.f32.mrb[0].mxu0
    %1314 = vdwg.mxu0
    %1315 = vrot.lane.b32.xlu0 %v296, 104
    %v1316 = vpop.permute.xlu0 %1315
    %1317 = vrot.lane.b32.xlu0 %v296, 72
    %v1318 = vpop.permute.xlu0 %1317
    %v1319 = vsel %vm317, %v1316, 0
    %v1321 = vsel %vm317, %v1318, 0
    %1323 = vmatprep.subr.mxu0 0.0
    %1324 = vmatpush1.xpose.msra.mxu0 %v1321
    %1325 = vmatprep.subr.mxu0 0.0
    %1326 = vmatpush1.xpose.msra.mxu0 0.0
    %1327 = vmatprep.subr.mxu0 0.0
    %1328 = vmatpush1.xpose.msra.mxu0 0.0
    %1329 = vmatprep.subr.mxu0 0.0
    %1330 = vmatpush1.xpose.msra.mxu0 0.0
    %1331 = vmatprep.subr.mxu0 0.0
    %1332 = vmatpush1.xpose.msra.mxu0 0.0
    %1333 = vmatprep.subr.mxu0 0.0
    %1334 = vmatpush1.xpose.msra.mxu0 0.0
    %1335 = vmatprep.subr.mxu0 0.0
    %1336 = vmatpush1.xpose.msra.mxu0 0.0
    %1337 = vmatprep.subr.mxu0 0.0
    %1338 = vmatpush1.xpose.msra.mxu0 0.0
    %1339 = vmatprep.subr.mxu0 0.0
    %1340 = vmatpush1.xpose.msra.mxu0 0.0
    %1341 = vmatprep.subr.mxu0 0.0
    %1342 = vmatpush1.xpose.msra.mxu0 0.0
    %1343 = vmatprep.subr.mxu0 0.0
    %1344 = vmatpush1.xpose.msra.mxu0 0.0
    %1345 = vmatprep.subr.mxu0 0.0
    %1346 = vmatpush1.xpose.msra.mxu0 0.0
    %1347 = vmatprep.subr.mxu0 0.0
    %1348 = vmatpush1.xpose.msra.mxu0 0.0
    %1349 = vmatprep.subr.mxu0 0.0
    %1350 = vmatpush1.xpose.msra.mxu0 0.0
    %1351 = vmatprep.subr.mxu0 0.0
    %1352 = vmatpush1.xpose.msra.mxu0 0.0
    %1353 = vmatprep.subr.mxu0 0.0
    %1354 = vmatpush1.xpose.msra.mxu0 0.0
    %1355 = vmatprep.subr.mxu0 0.0
    %1356 = vmatpush1.xpose.msra.mxu0 0.0
    %1357 = vmatprep.subr.mxu0 0.0
    %1358 = vmatpush1.xpose.msra.mxu0 0.0
    %1359 = vmatprep.subr.mxu0 0.0
    %1360 = vmatpush1.xpose.msra.mxu0 0.0
    %1361 = vmatprep.subr.mxu0 0.0
    %1362 = vmatpush1.xpose.msra.mxu0 0.0
    %1363 = vmatprep.subr.mxu0 0.0
    %1364 = vmatpush1.xpose.msra.mxu0 0.0
    %1365 = vmatprep.subr.mxu0 0.0
    %1366 = vmatpush1.xpose.msra.mxu0 0.0
    %1367 = vmatprep.subr.mxu0 0.0
    %1368 = vmatpush1.xpose.msra.mxu0 0.0
    %1369 = vmatprep.subr.mxu0 0.0
    %1370 = vmatpush1.xpose.msra.mxu0 0.0
    %1371 = vmatprep.subr.mxu0 0.0
    %1372 = vmatpush1.xpose.msra.mxu0 0.0
    %1373 = vmatprep.subr.mxu0 0.0
    %1374 = vmatpush1.xpose.msra.mxu0 0.0
    %1375 = vmatprep.subr.mxu0 0.0
    %1376 = vmatpush1.xpose.msra.mxu0 0.0
    %1377 = vmatprep.subr.mxu0 0.0
    %1378 = vmatpush1.xpose.msra.mxu0 0.0
    %1379 = vmatprep.subr.mxu0 0.0
    %1380 = vmatpush1.xpose.msra.mxu0 0.0
    %1381 = vmatprep.subr.mxu0 0.0
    %1382 = vmatpush1.xpose.msra.mxu0 0.0
    %1383 = vmatprep.subr.mxu0 0.0
    %1384 = vmatpush1.xpose.msra.mxu0 0.0
    %1385 = vmatprep.subr.mxu0 0.0
    %1386 = vmatpush1.xpose.msra.mxu0 0.0
    %1387 = vmatprep.mubr.f32.mxu0 0.0
    %1388 = vmatmul.mubr.f32.gmra.mrb[0].mxu0 %v1319
    %v1389 = vpop.f32.mrb[0].mxu0
    %v1390 = vadd.f32 0.0, %v1389
    %v1391 = vpop.f32.mrb[0].mxu0
    %1392 = vdwg.mxu0
    %1393 = vrot.lane.b32.xlu0 %v301, 104
    %v1394 = vpop.permute.xlu0 %1393
    %1395 = vrot.lane.b32.xlu0 %v301, 72
    %v1396 = vpop.permute.xlu0 %1395
    %v1397 = vsel %vm317, %v1394, 0
    %v1399 = vsel %vm317, %v1396, 0
    %1401 = vmatprep.subr.mxu0 0.0
    %1402 = vmatpush1.xpose.msra.mxu0 %v1399
    %1403 = vmatprep.subr.mxu0 0.0
    %1404 = vmatpush1.xpose.msra.mxu0 0.0
    %1405 = vmatprep.subr.mxu0 0.0
    %1406 = vmatpush1.xpose.msra.mxu0 0.0
    %1407 = vmatprep.subr.mxu0 0.0
    %1408 = vmatpush1.xpose.msra.mxu0 0.0
    %1409 = vmatprep.subr.mxu0 0.0
    %1410 = vmatpush1.xpose.msra.mxu0 0.0
    %1411 = vmatprep.subr.mxu0 0.0
    %1412 = vmatpush1.xpose.msra.mxu0 0.0
    %1413 = vmatprep.subr.mxu0 0.0
    %1414 = vmatpush1.xpose.msra.mxu0 0.0
    %1415 = vmatprep.subr.mxu0 0.0
    %1416 = vmatpush1.xpose.msra.mxu0 0.0
    %1417 = vmatprep.subr.mxu0 0.0
    %1418 = vmatpush1.xpose.msra.mxu0 0.0
    %1419 = vmatprep.subr.mxu0 0.0
    %1420 = vmatpush1.xpose.msra.mxu0 0.0
    %1421 = vmatprep.subr.mxu0 0.0
    %1422 = vmatpush1.xpose.msra.mxu0 0.0
    %1423 = vmatprep.subr.mxu0 0.0
    %1424 = vmatpush1.xpose.msra.mxu0 0.0
    %1425 = vmatprep.subr.mxu0 0.0
    %1426 = vmatpush1.xpose.msra.mxu0 0.0
    %1427 = vmatprep.subr.mxu0 0.0
    %1428 = vmatpush1.xpose.msra.mxu0 0.0
    %1429 = vmatprep.subr.mxu0 0.0
    %1430 = vmatpush1.xpose.msra.mxu0 0.0
    %1431 = vmatprep.subr.mxu0 0.0
    %1432 = vmatpush1.xpose.msra.mxu0 0.0
    %1433 = vmatprep.subr.mxu0 0.0
    %1434 = vmatpush1.xpose.msra.mxu0 0.0
    %1435 = vmatprep.subr.mxu0 0.0
    %1436 = vmatpush1.xpose.msra.mxu0 0.0
    %1437 = vmatprep.subr.mxu0 0.0
    %1438 = vmatpush1.xpose.msra.mxu0 0.0
    %1439 = vmatprep.subr.mxu0 0.0
    %1440 = vmatpush1.xpose.msra.mxu0 0.0
    %1441 = vmatprep.subr.mxu0 0.0
    %1442 = vmatpush1.xpose.msra.mxu0 0.0
    %1443 = vmatprep.subr.mxu0 0.0
    %1444 = vmatpush1.xpose.msra.mxu0 0.0
    %1445 = vmatprep.subr.mxu0 0.0
    %1446 = vmatpush1.xpose.msra.mxu0 0.0
    %1447 = vmatprep.subr.mxu0 0.0
    %1448 = vmatpush1.xpose.msra.mxu0 0.0
    %1449 = vmatprep.subr.mxu0 0.0
    %1450 = vmatpush1.xpose.msra.mxu0 0.0
    %1451 = vmatprep.subr.mxu0 0.0
    %1452 = vmatpush1.xpose.msra.mxu0 0.0
    %1453 = vmatprep.subr.mxu0 0.0
    %1454 = vmatpush1.xpose.msra.mxu0 0.0
    %1455 = vmatprep.subr.mxu0 0.0
    %1456 = vmatpush1.xpose.msra.mxu0 0.0
    %1457 = vmatprep.subr.mxu0 0.0
    %1458 = vmatpush1.xpose.msra.mxu0 0.0
    %1459 = vmatprep.subr.mxu0 0.0
    %1460 = vmatpush1.xpose.msra.mxu0 0.0
    %1461 = vmatprep.subr.mxu0 0.0
    %1462 = vmatpush1.xpose.msra.mxu0 0.0
    %1463 = vmatprep.subr.mxu0 0.0
    %1464 = vmatpush1.xpose.msra.mxu0 0.0
    %1465 = vmatprep.mubr.f32.mxu0 0.0
    %1466 = vmatmul.mubr.f32.gmra.mrb[0].mxu0 %v1397
    %v1467 = vpop.f32.mrb[0].mxu0
    %v1468 = vadd.f32 0.0, %v1467
    %v1469 = vpop.f32.mrb[0].mxu0
    %1470 = vdwg.mxu0
    %v1471 = vmul.f32 %v1390, 0.35355338
    %v1472 = vmul.f32 %v1468, 0.35355338
    %v1473 = vsel %vm312, %v1471, -1e+09
    %v1474 = vsel %vm313, %v1472, -1e+09
    %v1475 = vsel %vm317, %v1473, -inf
    %1476 = vmax.xlane.f32.xlu0 %v1475
    %v1477 = vpop.xlane.xlu0 %1476
    %v1478 = vsel %vm317, %v1474, -inf
    %1479 = vmax.xlane.f32.xlu0 %v1478
    %v1480 = vpop.xlane.xlu0 %1479
    %v1481 = vsub.f32 %v1473, %v1477
    %v1482 = vsub.f32 %v1474, %v1480
    %v1483 = vmul.f32 %v1481, 1.442695
    %v1484 = vpow.pop %v1483
    %v1485 = vmul.f32 %v1482, 1.442695
    %v1486 = vpow.pop %v1485
    %v1487 = vsel %vm317, %v1484, 0.0
    %1488 = vadd.xlane.f32.xlu0 %v1487
    %v1489 = vpop.xlane.xlu0 %1488
    %v1490 = vsel %vm317, %v1486, 0.0
    %1491 = vadd.xlane.f32.xlu0 %v1490
    %v1492 = vpop.xlane.xlu0 %1491
    %v1493 = vrcp.pop %v1489
    %v1494 = vrcp.pop %v1492
    %v1495 = vmul.f32 %v1484, %v1493
    %v1496 = vmul.f32 %v1486, %v1494
    %1497 = vrot.lane.b32.xlu0 %v296, 40
    %v1498 = vpop.permute.xlu0 %1497
    %v1501 = vsel %vm317, %v1495, 0
    %1503 = vmatprep.subr.mxu0 0.0
    %1504 = vmatpush1.msra.mxu0 %v1498
    %1505 = vmatprep.subr.mxu0 0.0
    %1506 = vmatpush1.msra.mxu0 0.0
    %1507 = vmatprep.subr.mxu0 0.0
    %1508 = vmatpush1.msra.mxu0 0.0
    %1509 = vmatprep.subr.mxu0 0.0
    %1510 = vmatpush1.msra.mxu0 0.0
    %1511 = vmatprep.subr.mxu0 0.0
    %1512 = vmatpush1.msra.mxu0 0.0
    %1513 = vmatprep.subr.mxu0 0.0
    %1514 = vmatpush1.msra.mxu0 0.0
    %1515 = vmatprep.subr.mxu0 0.0
    %1516 = vmatpush1.msra.mxu0 0.0
    %1517 = vmatprep.subr.mxu0 0.0
    %1518 = vmatpush1.msra.mxu0 0.0
    %1519 = vmatprep.subr.mxu0 0.0
    %1520 = vmatpush1.msra.mxu0 0.0
    %1521 = vmatprep.subr.mxu0 0.0
    %1522 = vmatpush1.msra.mxu0 0.0
    %1523 = vmatprep.subr.mxu0 0.0
    %1524 = vmatpush1.msra.mxu0 0.0
    %1525 = vmatprep.subr.mxu0 0.0
    %1526 = vmatpush1.msra.mxu0 0.0
    %1527 = vmatprep.subr.mxu0 0.0
    %1528 = vmatpush1.msra.mxu0 0.0
    %1529 = vmatprep.subr.mxu0 0.0
    %1530 = vmatpush1.msra.mxu0 0.0
    %1531 = vmatprep.subr.mxu0 0.0
    %1532 = vmatpush1.msra.mxu0 0.0
    %1533 = vmatprep.subr.mxu0 0.0
    %1534 = vmatpush1.msra.mxu0 0.0
    %1535 = vmatprep.subr.mxu0 0.0
    %1536 = vmatpush1.msra.mxu0 0.0
    %1537 = vmatprep.subr.mxu0 0.0
    %1538 = vmatpush1.msra.mxu0 0.0
    %1539 = vmatprep.subr.mxu0 0.0
    %1540 = vmatpush1.msra.mxu0 0.0
    %1541 = vmatprep.subr.mxu0 0.0
    %1542 = vmatpush1.msra.mxu0 0.0
    %1543 = vmatprep.subr.mxu0 0.0
    %1544 = vmatpush1.msra.mxu0 0.0
    %1545 = vmatprep.subr.mxu0 0.0
    %1546 = vmatpush1.msra.mxu0 0.0
    %1547 = vmatprep.subr.mxu0 0.0
    %1548 = vmatpush1.msra.mxu0 0.0
    %1549 = vmatprep.subr.mxu0 0.0
    %1550 = vmatpush1.msra.mxu0 0.0
    %1551 = vmatprep.subr.mxu0 0.0
    %1552 = vmatpush1.msra.mxu0 0.0
    %1553 = vmatprep.subr.mxu0 0.0
    %1554 = vmatpush1.msra.mxu0 0.0
    %1555 = vmatprep.subr.mxu0 0.0
    %1556 = vmatpush1.msra.mxu0 0.0
    %1557 = vmatprep.subr.mxu0 0.0
    %1558 = vmatpush1.msra.mxu0 0.0
    %1559 = vmatprep.subr.mxu0 0.0
    %1560 = vmatpush1.msra.mxu0 0.0
    %1561 = vmatprep.subr.mxu0 0.0
    %1562 = vmatpush1.msra.mxu0 0.0
    %1563 = vmatprep.subr.mxu0 0.0
    %1564 = vmatpush1.msra.mxu0 0.0
    %1565 = vmatprep.subr.mxu0 0.0
    %1566 = vmatpush1.msra.mxu0 0.0
    %1567 = vmatprep.mubr.f32.mxu0 0.0
    %1568 = vmatmul.mubr.f32.gmra.mrb[0].mxu0 %v1501
    %v1569 = vpop.f32.mrb[0].mxu0
    %v1570 = vadd.f32 0.0, %v1569
    %v1571 = vpop.f32.mrb[0].mxu0
    %1572 = vdwg.mxu0
    %1573 = vrot.lane.b32.xlu0 %v301, 40
    %v1574 = vpop.permute.xlu0 %1573
    %v1577 = vsel %vm317, %v1496, 0
    %1579 = vmatprep.subr.mxu0 0.0
    %1580 = vmatpush1.msra.mxu0 %v1574
    %1581 = vmatprep.subr.mxu0 0.0
    %1582 = vmatpush1.msra.mxu0 0.0
    %1583 = vmatprep.subr.mxu0 0.0
    %1584 = vmatpush1.msra.mxu0 0.0
    %1585 = vmatprep.subr.mxu0 0.0
    %1586 = vmatpush1.msra.mxu0 0.0
    %1587 = vmatprep.subr.mxu0 0.0
    %1588 = vmatpush1.msra.mxu0 0.0
    %1589 = vmatprep.subr.mxu0 0.0
    %1590 = vmatpush1.msra.mxu0 0.0
    %1591 = vmatprep.subr.mxu0 0.0
    %1592 = vmatpush1.msra.mxu0 0.0
    %1593 = vmatprep.subr.mxu0 0.0
    %1594 = vmatpush1.msra.mxu0 0.0
    %1595 = vmatprep.subr.mxu0 0.0
    %1596 = vmatpush1.msra.mxu0 0.0
    %1597 = vmatprep.subr.mxu0 0.0
    %1598 = vmatpush1.msra.mxu0 0.0
    %1599 = vmatprep.subr.mxu0 0.0
    %1600 = vmatpush1.msra.mxu0 0.0
    %1601 = vmatprep.subr.mxu0 0.0
    %1602 = vmatpush1.msra.mxu0 0.0
    %1603 = vmatprep.subr.mxu0 0.0
    %1604 = vmatpush1.msra.mxu0 0.0
    %1605 = vmatprep.subr.mxu0 0.0
    %1606 = vmatpush1.msra.mxu0 0.0
    %1607 = vmatprep.subr.mxu0 0.0
    %1608 = vmatpush1.msra.mxu0 0.0
    %1609 = vmatprep.subr.mxu0 0.0
    %1610 = vmatpush1.msra.mxu0 0.0
    %1611 = vmatprep.subr.mxu0 0.0
    %1612 = vmatpush1.msra.mxu0 0.0
    %1613 = vmatprep.subr.mxu0 0.0
    %1614 = vmatpush1.msra.mxu0 0.0
    %1615 = vmatprep.subr.mxu0 0.0
    %1616 = vmatpush1.msra.mxu0 0.0
    %1617 = vmatprep.subr.mxu0 0.0
    %1618 = vmatpush1.msra.mxu0 0.0
    %1619 = vmatprep.subr.mxu0 0.0
    %1620 = vmatpush1.msra.mxu0 0.0
    %1621 = vmatprep.subr.mxu0 0.0
    %1622 = vmatpush1.msra.mxu0 0.0
    %1623 = vmatprep.subr.mxu0 0.0
    %1624 = vmatpush1.msra.mxu0 0.0
    %1625 = vmatprep.subr.mxu0 0.0
    %1626 = vmatpush1.msra.mxu0 0.0
    %1627 = vmatprep.subr.mxu0 0.0
    %1628 = vmatpush1.msra.mxu0 0.0
    %1629 = vmatprep.subr.mxu0 0.0
    %1630 = vmatpush1.msra.mxu0 0.0
    %1631 = vmatprep.subr.mxu0 0.0
    %1632 = vmatpush1.msra.mxu0 0.0
    %1633 = vmatprep.subr.mxu0 0.0
    %1634 = vmatpush1.msra.mxu0 0.0
    %1635 = vmatprep.subr.mxu0 0.0
    %1636 = vmatpush1.msra.mxu0 0.0
    %1637 = vmatprep.subr.mxu0 0.0
    %1638 = vmatpush1.msra.mxu0 0.0
    %1639 = vmatprep.subr.mxu0 0.0
    %1640 = vmatpush1.msra.mxu0 0.0
    %1641 = vmatprep.subr.mxu0 0.0
    %1642 = vmatpush1.msra.mxu0 0.0
    %1643 = vmatprep.mubr.f32.mxu0 0.0
    %1644 = vmatmul.mubr.f32.gmra.mrb[0].mxu0 %v1577
    %v1645 = vpop.f32.mrb[0].mxu0
    %v1646 = vadd.f32 0.0, %v1645
    %v1647 = vpop.f32.mrb[0].mxu0
    %1648 = vdwg.mxu0
    %1651 = vrot.lane.b32.xlu0 %v902, 8
    %v1652 = vpop.permute.xlu0 %1651
    %1653 = vrot.lane.b32.xlu0 %v978, 8
    %v1654 = vpop.permute.xlu0 %1653
    %1659 = vrot.lane.b32.xlu0 %v1236, 16
    %v1660 = vpop.permute.xlu0 %1659
    %1661 = vrot.lane.b32.xlu0 %v1312, 16
    %v1662 = vpop.permute.xlu0 %1661
    %1667 = vrot.lane.b32.xlu0 %v1570, 24
    %v1668 = vpop.permute.xlu0 %1667
    %1669 = vrot.lane.b32.xlu0 %v1646, 24
    %v1670 = vpop.permute.xlu0 %1669
    %v1673 = vsel %vm317, %v568, %v1652
    %v1674 = vsel %vm317, %v644, %v1654
    %v1675 = vsel %vm46, %v1673, %v1660
    %v1676 = vsel %vm46, %v1674, %v1662
    %vm1677 = vcmask 195584
    %v1678 = vsel %vm1677, %v1675, %v1668
    %v1679 = vsel %vm1677, %v1676, %v1670
    %v1680 = vld [vmem:[#allocation2 + $0x30] sm:$0xff]
    %v1681 = vld [vmem:[#allocation2 + $0x38] sm:$0xff]
    %v1682 = vld [vmem:[#allocation2 + $0x40] sm:$0xff]
    %v1683 = vld [vmem:[#allocation2 + $0x48] sm:$0xff]
    %v1684 = vld [vmem:[%s2 + $0x6] sm:$0x1]
    %v1685 = vlaneseq
    %v1686 = vshrl.u32 %v1685, 7
    %v1687 = vsub.s32 0, %v1686
    %v1688 = vrot.slane %v1684, %v1687
    %v1690 = vsel %vm130, %v1678, 0
    %v1693 = vsel %vm130, %v1679, 0
    %1695 = vmatprep.subr.mxu0 0.0
    %1696 = vmatpush1.msra.mxu0 %v1680
    %1697 = vmatprep.subr.mxu0 0.0
    %1698 = vmatpush1.msra.mxu0 %v1681
    %1699 = vmatprep.subr.mxu0 0.0
    %1700 = vmatpush1.msra.mxu0 %v1682
    %1701 = vmatprep.subr.mxu0 0.0
    %1702 = vmatpush1.msra.mxu0 %v1683
    %1703 = vmatprep.subr.mxu0 0.0
    %1704 = vmatpush1.msra.mxu0 0.0
    %1705 = vmatprep.subr.mxu0 0.0
    %1706 = vmatpush1.msra.mxu0 0.0
    %1707 = vmatprep.subr.mxu0 0.0
    %1708 = vmatpush1.msra.mxu0 0.0
    %1709 = vmatprep.subr.mxu0 0.0
    %1710 = vmatpush1.msra.mxu0 0.0
    %1711 = vmatprep.subr.mxu0 0.0
    %1712 = vmatpush1.msra.mxu0 0.0
    %1713 = vmatprep.subr.mxu0 0.0
    %1714 = vmatpush1.msra.mxu0 0.0
    %1715 = vmatprep.subr.mxu0 0.0
    %1716 = vmatpush1.msra.mxu0 0.0
    %1717 = vmatprep.subr.mxu0 0.0
    %1718 = vmatpush1.msra.mxu0 0.0
    %1719 = vmatprep.subr.mxu0 0.0
    %1720 = vmatpush1.msra.mxu0 0.0
    %1721 = vmatprep.subr.mxu0 0.0
    %1722 = vmatpush1.msra.mxu0 0.0
    %1723 = vmatprep.subr.mxu0 0.0
    %1724 = vmatpush1.msra.mxu0 0.0
    %1725 = vmatprep.subr.mxu0 0.0
    %1726 = vmatpush1.msra.mxu0 0.0
    %1727 = vmatprep.subr.mxu0 0.0
    %1728 = vmatpush1.msra.mxu0 0.0
    %1729 = vmatprep.subr.mxu0 0.0
    %1730 = vmatpush1.msra.mxu0 0.0
    %1731 = vmatprep.subr.mxu0 0.0
    %1732 = vmatpush1.msra.mxu0 0.0
    %1733 = vmatprep.subr.mxu0 0.0
    %1734 = vmatpush1.msra.mxu0 0.0
    %1735 = vmatprep.subr.mxu0 0.0
    %1736 = vmatpush1.msra.mxu0 0.0
    %1737 = vmatprep.subr.mxu0 0.0
    %1738 = vmatpush1.msra.mxu0 0.0
    %1739 = vmatprep.subr.mxu0 0.0
    %1740 = vmatpush1.msra.mxu0 0.0
    %1741 = vmatprep.subr.mxu0 0.0
    %1742 = vmatpush1.msra.mxu0 0.0
    %1743 = vmatprep.subr.mxu0 0.0
    %1744 = vmatpush1.msra.mxu0 0.0
    %1745 = vmatprep.subr.mxu0 0.0
    %1746 = vmatpush1.msra.mxu0 0.0
    %1747 = vmatprep.subr.mxu0 0.0
    %1748 = vmatpush1.msra.mxu0 0.0
    %1749 = vmatprep.subr.mxu0 0.0
    %1750 = vmatpush1.msra.mxu0 0.0
    %1751 = vmatprep.subr.mxu0 0.0
    %1752 = vmatpush1.msra.mxu0 0.0
    %1753 = vmatprep.subr.mxu0 0.0
    %1754 = vmatpush1.msra.mxu0 0.0
    %1755 = vmatprep.subr.mxu0 0.0
    %1756 = vmatpush1.msra.mxu0 0.0
    %1757 = vmatprep.subr.mxu0 0.0
    %1758 = vmatpush1.msra.mxu0 0.0
    %1759 = vmatprep.mubr.f32.mxu0 0.0
    %1760 = vmatmul.mubr.f32.gmra.mrb[0].mxu0 %v1690
    %v1761 = vpop.f32.mrb[0].mxu0
    %v1762 = vadd.f32 %v1688, %v1761
    %v1763 = vpop.f32.mrb[0].mxu0
    %1764 = vmatprep.mubr.f32.mxu0 0.0
    %1765 = vmatmul.mubr.f32.gmra.mrb[0].mxu0 %v1693
    %v1766 = vpop.f32.mrb[0].mxu0
    %v1767 = vadd.f32 %v1688, %v1766
    %v1768 = vpop.f32.mrb[0].mxu0
    %1769 = vdwg.mxu0
    %v1770 = vadd.f32 %v172, %v1762
    %v1771 = vadd.f32 %v173, %v1767
    %v1772 = vld [vmem:[%s2 + $0x7] sm:$0x1]
    %v1773 = vld [vmem:[%s2 + $0x8] sm:$0x1]
    %v1774 = vsel %vm130, %v1770, 0.0
    %1775 = vadd.xlane.f32.xlu0 %v1774
    %v1776 = vpop.xlane.xlu0 %1775
    %v1777 = vsel %vm130, %v1771, 0.0
    %1778 = vadd.xlane.f32.xlu0 %v1777
    %v1779 = vpop.xlane.xlu0 %1778
    %v1780 = vmul.f32 %v1776, %v137
    %v1781 = vmul.f32 %v1779, %v137
    %v1782 = vsub.f32 %v1770, %v1780
    %v1783 = vsub.f32 %v1771, %v1781
    %v1784 = vmul.f32 %v1782, %v1782
    %v1785 = vmul.f32 %v1783, %v1783
    %v1786 = vsel %vm130, %v1784, 0.0
    %1787 = vadd.xlane.f32.xlu0 %v1786
    %v1788 = vpop.xlane.xlu0 %1787
    %v1789 = vsel %vm130, %v1785, 0.0
    %1790 = vadd.xlane.f32.xlu0 %v1789
    %v1791 = vpop.xlane.xlu0 %1790
    %v1792 = vmul.f32 %v1788, %v137
    %v1793 = vmul.f32 %v1791, %v137
    %v1794 = vadd.f32 %v1792, 1e-05
    %v1795 = vadd.f32 %v1793, 1e-05
    %v1796 = vrsqrt.pop %v1794
    %v1797 = vrsqrt.pop %v1795
    %v1798 = vmul.f32 %v1782, %v1796
    %v1799 = vmul.f32 %v1783, %v1797
    %v1800 = vlaneseq
    %v1801 = vshrl.u32 %v1800, 7
    %v1802 = vsub.s32 0, %v1801
    %v1803 = vrot.slane %v1772, %v1802
    %v1804 = vmul.f32 %v1798, %v1803
    %v1805 = vmul.f32 %v1799, %v1803
    %v1806 = vlaneseq
    %v1807 = vshrl.u32 %v1806, 7
    %v1808 = vsub.s32 0, %v1807
    %v1809 = vrot.slane %v1773, %v1808
    %v1810 = vadd.f32 %v1804, %v1809
    %v1811 = vadd.f32 %v1805, %v1809
    %v1812 = vld [vmem:[#allocation2 + $0x50] sm:$0xff]
    %v1813 = vld [vmem:[#allocation2 + $0x58] sm:$0xff]
    %v1814 = vld [vmem:[#allocation2 + $0x60] sm:$0xff]
    %v1815 = vld [vmem:[#allocation2 + $0x68] sm:$0xff]
    %v1816 = vld [vmem:[%s2 + $0x9] sm:$0x1]
    %v1817 = vlaneseq
    %v1818 = vshrl.u32 %v1817, 7
    %v1819 = vsub.s32 0, %v1818
    %v1820 = vrot.slane %v1816, %v1819
    %v1822 = vsel %vm130, %v1810, 0
    %v1825 = vsel %vm130, %v1811, 0
    %1827 = vmatprep.subr.mxu0 0.0
    %1828 = vmatpush1.msra.mxu0 %v1812
    %1829 = vmatprep.subr.mxu0 0.0
    %1830 = vmatpush1.msra.mxu0 %v1813
    %1831 = vmatprep.subr.mxu0 0.0
    %1832 = vmatpush1.msra.mxu0 %v1814
    %1833 = vmatprep.subr.mxu0 0.0
    %1834 = vmatpush1.msra.mxu0 %v1815
    %1835 = vmatprep.subr.mxu0 0.0
    %1836 = vmatpush1.msra.mxu0 0.0
    %1837 = vmatprep.subr.mxu0 0.0
    %1838 = vmatpush1.msra.mxu0 0.0
    %1839 = vmatprep.subr.mxu0 0.0
    %1840 = vmatpush1.msra.mxu0 0.0
    %1841 = vmatprep.subr.mxu0 0.0
    %1842 = vmatpush1.msra.mxu0 0.0
    %1843 = vmatprep.subr.mxu0 0.0
    %1844 = vmatpush1.msra.mxu0 0.0
    %1845 = vmatprep.subr.mxu0 0.0
    %1846 = vmatpush1.msra.mxu0 0.0
    %1847 = vmatprep.subr.mxu0 0.0
    %1848 = vmatpush1.msra.mxu0 0.0
    %1849 = vmatprep.subr.mxu0 0.0
    %1850 = vmatpush1.msra.mxu0 0.0
    %1851 = vmatprep.subr.mxu0 0.0
    %1852 = vmatpush1.msra.mxu0 0.0
    %1853 = vmatprep.subr.mxu0 0.0
    %1854 = vmatpush1.msra.mxu0 0.0
    %1855 = vmatprep.subr.mxu0 0.0
    %1856 = vmatpush1.msra.mxu0 0.0
    %1857 = vmatprep.subr.mxu0 0.0
    %1858 = vmatpush1.msra.mxu0 0.0
    %1859 = vmatprep.subr.mxu0 0.0
    %1860 = vmatpush1.msra.mxu0 0.0
    %1861 = vmatprep.subr.mxu0 0.0
    %1862 = vmatpush1.msra.mxu0 0.0
    %1863 = vmatprep.subr.mxu0 0.0
    %1864 = vmatpush1.msra.mxu0 0.0
    %1865 = vmatprep.subr.mxu0 0.0
    %1866 = vmatpush1.msra.mxu0 0.0
    %1867 = vmatprep.subr.mxu0 0.0
    %1868 = vmatpush1.msra.mxu0 0.0
    %1869 = vmatprep.subr.mxu0 0.0
    %1870 = vmatpush1.msra.mxu0 0.0
    %1871 = vmatprep.subr.mxu0 0.0
    %1872 = vmatpush1.msra.mxu0 0.0
    %1873 = vmatprep.subr.mxu0 0.0
    %1874 = vmatpush1.msra.mxu0 0.0
    %1875 = vmatprep.subr.mxu0 0.0
    %1876 = vmatpush1.msra.mxu0 0.0
    %1877 = vmatprep.subr.mxu0 0.0
    %1878 = vmatpush1.msra.mxu0 0.0
    %1879 = vmatprep.subr.mxu0 0.0
    %1880 = vmatpush1.msra.mxu0 0.0
    %1881 = vmatprep.subr.mxu0 0.0
    %1882 = vmatpush1.msra.mxu0 0.0
    %1883 = vmatprep.subr.mxu0 0.0
    %1884 = vmatpush1.msra.mxu0 0.0
    %1885 = vmatprep.subr.mxu0 0.0
    %1886 = vmatpush1.msra.mxu0 0.0
    %1887 = vmatprep.subr.mxu0 0.0
    %1888 = vmatpush1.msra.mxu0 0.0
    %1889 = vmatprep.subr.mxu0 0.0
    %1890 = vmatpush1.msra.mxu0 0.0
    %1891 = vmatprep.mubr.f32.mxu0 0.0
    %1892 = vmatmul.mubr.f32.gmra.mrb[0].mxu0 %v1822
    %v1893 = vpop.f32.mrb[0].mxu0
    %v1894 = vadd.f32 %v1820, %v1893
    %v1895 = vpop.f32.mrb[0].mxu0
    %1896 = vmatprep.mubr.f32.mxu0 0.0
    %1897 = vmatmul.mubr.f32.gmra.mrb[0].mxu0 %v1825
    %v1898 = vpop.f32.mrb[0].mxu0
    %v1899 = vadd.f32 %v1820, %v1898
    %v1900 = vpop.f32.mrb[0].mxu0
    %1901 = vdwg.mxu0
    %v1902 = vmax.f32 %v1894, 0.0
    %v1903 = vmax.f32 %v1899, 0.0
    %v1904 = vld [vmem:[#allocation2 + $0x70] sm:$0xff]
    %v1905 = vld [vmem:[#allocation2 + $0x78] sm:$0xff]
    %v1906 = vld [vmem:[#allocation2 + $0x80] sm:$0xff]
    %v1907 = vld [vmem:[#allocation2 + $0x88] sm:$0xff]
    %v1908 = vld [vmem:[#allocation2 + $0x90] sm:$0xff]
    %v1909 = vld [vmem:[#allocation2 + $0x98] sm:$0xff]
    %v1910 = vld [vmem:[#allocation2 + $0xa0] sm:$0xff]
    %v1911 = vld [vmem:[#allocation2 + $0xa8] sm:$0xff]
    %v1912 = vld [vmem:[%s2 + $0xa] sm:$0x1]
    %v1913 = vlaneseq
    %v1914 = vshrl.u32 %v1913, 7
    %v1915 = vsub.s32 0, %v1914
    %v1916 = vrot.slane %v1912, %v1915
    %vm1917 = vcmask 523264
    %v1919 = vsel %vm1917, %v1902, 0
    %v1922 = vsel %vm1917, %v1903, 0
    %1924 = vmatprep.subr.mxu0 0.0
    %1925 = vmatpush1.msra.mxu0 %v1904
    %1926 = vmatprep.subr.mxu0 0.0
    %1927 = vmatpush1.msra.mxu0 %v1905
    %1928 = vmatprep.subr.mxu0 0.0
    %1929 = vmatpush1.msra.mxu0 %v1906
    %1930 = vmatprep.subr.mxu0 0.0
    %1931 = vmatpush1.msra.mxu0 %v1907
    %1932 = vmatprep.subr.mxu0 0.0
    %1933 = vmatpush1.msra.mxu0 %v1908
    %1934 = vmatprep.subr.mxu0 0.0
    %1935 = vmatpush1.msra.mxu0 %v1909
    %1936 = vmatprep.subr.mxu0 0.0
    %1937 = vmatpush1.msra.mxu0 %v1910
    %1938 = vmatprep.subr.mxu0 0.0
    %1939 = vmatpush1.msra.mxu0 %v1911
    %1940 = vmatprep.subr.mxu0 0.0
    %1941 = vmatpush1.msra.mxu0 0.0
    %1942 = vmatprep.subr.mxu0 0.0
    %1943 = vmatpush1.msra.mxu0 0.0
    %1944 = vmatprep.subr.mxu0 0.0
    %1945 = vmatpush1.msra.mxu0 0.0
    %1946 = vmatprep.subr.mxu0 0.0
    %1947 = vmatpush1.msra.mxu0 0.0
    %1948 = vmatprep.subr.mxu0 0.0
    %1949 = vmatpush1.msra.mxu0 0.0
    %1950 = vmatprep.subr.mxu0 0.0
    %1951 = vmatpush1.msra.mxu0 0.0
    %1952 = vmatprep.subr.mxu0 0.0
    %1953 = vmatpush1.msra.mxu0 0.0
    %1954 = vmatprep.subr.mxu0 0.0
    %1955 = vmatpush1.msra.mxu0 0.0
    %1956 = vmatprep.subr.mxu0 0.0
    %1957 = vmatpush1.msra.mxu0 0.0
    %1958 = vmatprep.subr.mxu0 0.0
    %1959 = vmatpush1.msra.mxu0 0.0
    %1960 = vmatprep.subr.mxu0 0.0
    %1961 = vmatpush1.msra.mxu0 0.0
    %1962 = vmatprep.subr.mxu0 0.0
    %1963 = vmatpush1.msra.mxu0 0.0
    %1964 = vmatprep.subr.mxu0 0.0
    %1965 = vmatpush1.msra.mxu0 0.0
    %1966 = vmatprep.subr.mxu0 0.0
    %1967 = vmatpush1.msra.mxu0 0.0
    %1968 = vmatprep.subr.mxu0 0.0
    %1969 = vmatpush1.msra.mxu0 0.0
    %1970 = vmatprep.subr.mxu0 0.0
    %1971 = vmatpush1.msra.mxu0 0.0
    %1972 = vmatprep.subr.mxu0 0.0
    %1973 = vmatpush1.msra.mxu0 0.0
    %1974 = vmatprep.subr.mxu0 0.0
    %1975 = vmatpush1.msra.mxu0 0.0
    %1976 = vmatprep.subr.mxu0 0.0
    %1977 = vmatpush1.msra.mxu0 0.0
    %1978 = vmatprep.subr.mxu0 0.0
    %1979 = vmatpush1.msra.mxu0 0.0
    %1980 = vmatprep.subr.mxu0 0.0
    %1981 = vmatpush1.msra.mxu0 0.0
    %1982 = vmatprep.subr.mxu0 0.0
    %1983 = vmatpush1.msra.mxu0 0.0
    %1984 = vmatprep.subr.mxu0 0.0
    %1985 = vmatpush1.msra.mxu0 0.0
    %1986 = vmatprep.subr.mxu0 0.0
    %1987 = vmatpush1.msra.mxu0 0.0
    %1988 = vmatprep.mubr.f32.mxu0 0.0
    %1989 = vmatmul.mubr.f32.gmra.mrb[0].mxu0 %v1919
    %v1990 = vpop.f32.mrb[0].mxu0
    %v1991 = vadd.f32 %v1916, %v1990
    %v1992 = vpop.f32.mrb[0].mxu0
    %1993 = vmatprep.mubr.f32.mxu0 0.0
    %1994 = vmatmul.mubr.f32.gmra.mrb[0].mxu0 %v1922
    %v1995 = vpop.f32.mrb[0].mxu0
    %v1996 = vadd.f32 %v1916, %v1995
    %v1997 = vpop.f32.mrb[0].mxu0
    %1998 = vdwg.mxu0
    %v1999 = vadd.f32 %v1770, %v1991
    %v2000 = vadd.f32 %v1771, %v1996
    %v2001 = vld [vmem:[%s2 + $0xb] sm:$0x1]
    %v2002 = vld [vmem:[%s2 + $0xc] sm:$0x1]
    %v2003 = vsel %vm130, %v1999, 0.0
    %2004 = vadd.xlane.f32.xlu0 %v2003
    %v2005 = vpop.xlane.xlu0 %2004
    %v2006 = vsel %vm130, %v2000, 0.0
    %2007 = vadd.xlane.f32.xlu0 %v2006
    %v2008 = vpop.xlane.xlu0 %2007
    %v2009 = vmul.f32 %v2005, %v137
    %v2010 = vmul.f32 %v2008, %v137
    %v2011 = vsub.f32 %v1999, %v2009
    %v2012 = vsub.f32 %v2000, %v2010
    %v2013 = vmul.f32 %v2011, %v2011
    %v2014 = vmul.f32 %v2012, %v2012
    %v2015 = vsel %vm130, %v2013, 0.0
    %2016 = vadd.xlane.f32.xlu0 %v2015
    %v2017 = vpop.xlane.xlu0 %2016
    %v2018 = vsel %vm130, %v2014, 0.0
    %2019 = vadd.xlane.f32.xlu0 %v2018
    %v2020 = vpop.xlane.xlu0 %2019
    %v2021 = vmul.f32 %v2017, %v137
    %v2022 = vmul.f32 %v2020, %v137
    %v2023 = vadd.f32 %v2021, 1e-05
    %v2024 = vadd.f32 %v2022, 1e-05
    %v2025 = vrsqrt.pop %v2023
    %v2026 = vrsqrt.pop %v2024
    %v2027 = vmul.f32 %v2011, %v2025
    %v2028 = vmul.f32 %v2012, %v2026
    %v2029 = vlaneseq
    %v2030 = vshrl.u32 %v2029, 7
    %v2031 = vsub.s32 0, %v2030
    %v2032 = vrot.slane %v2001, %v2031
    %v2033 = vmul.f32 %v2027, %v2032
    %v2034 = vmul.f32 %v2028, %v2032
    %v2035 = vlaneseq
    %v2036 = vshrl.u32 %v2035, 7
    %v2037 = vsub.s32 0, %v2036
    %v2038 = vrot.slane %v2002, %v2037
    %v2039 = vadd.f32 %v2033, %v2038
    %v2040 = vadd.f32 %v2034, %v2038
    %v2041 = vld [vmem:[#allocation2 + $0xb0] sm:$0xff]
    %v2042 = vld [vmem:[#allocation2 + $0xb8] sm:$0xff]
    %v2043 = vld [vmem:[#allocation2 + $0xc0] sm:$0xff]
    %v2044 = vld [vmem:[#allocation2 + $0xc8] sm:$0xff]
    %v2045 = vld [vmem:[%s2 + $0xd] sm:$0x1]
    %v2046 = vlaneseq
    %v2047 = vshrl.u32 %v2046, 7
    %v2048 = vsub.s32 0, %v2047
    %v2049 = vrot.slane %v2045, %v2048
    %v2051 = vsel %vm130, %v2039, 0
    %v2054 = vsel %vm130, %v2040, 0
    %2056 = vmatprep.subr.mxu0 0.0
    %2057 = vmatpush1.msra.mxu0 %v2041
    %2058 = vmatprep.subr.mxu0 0.0
    %2059 = vmatpush1.msra.mxu0 %v2042
    %2060 = vmatprep.subr.mxu0 0.0
    %2061 = vmatpush1.msra.mxu0 %v2043
    %2062 = vmatprep.subr.mxu0 0.0
    %2063 = vmatpush1.msra.mxu0 %v2044
    %2064 = vmatprep.subr.mxu0 0.0
    %2065 = vmatpush1.msra.mxu0 0.0
    %2066 = vmatprep.subr.mxu0 0.0
    %2067 = vmatpush1.msra.mxu0 0.0
    %2068 = vmatprep.subr.mxu0 0.0
    %2069 = vmatpush1.msra.mxu0 0.0
    %2070 = vmatprep.subr.mxu0 0.0
    %2071 = vmatpush1.msra.mxu0 0.0
    %2072 = vmatprep.subr.mxu0 0.0
    %2073 = vmatpush1.msra.mxu0 0.0
    %2074 = vmatprep.subr.mxu0 0.0
    %2075 = vmatpush1.msra.mxu0 0.0
    %2076 = vmatprep.subr.mxu0 0.0
    %2077 = vmatpush1.msra.mxu0 0.0
    %2078 = vmatprep.subr.mxu0 0.0
    %2079 = vmatpush1.msra.mxu0 0.0
    %2080 = vmatprep.subr.mxu0 0.0
    %2081 = vmatpush1.msra.mxu0 0.0
    %2082 = vmatprep.subr.mxu0 0.0
    %2083 = vmatpush1.msra.mxu0 0.0
    %2084 = vmatprep.subr.mxu0 0.0
    %2085 = vmatpush1.msra.mxu0 0.0
    %2086 = vmatprep.subr.mxu0 0.0
    %2087 = vmatpush1.msra.mxu0 0.0
    %2088 = vmatprep.subr.mxu0 0.0
    %2089 = vmatpush1.msra.mxu0 0.0
    %2090 = vmatprep.subr.mxu0 0.0
    %2091 = vmatpush1.msra.mxu0 0.0
    %2092 = vmatprep.subr.mxu0 0.0
    %2093 = vmatpush1.msra.mxu0 0.0
    %2094 = vmatprep.subr.mxu0 0.0
    %2095 = vmatpush1.msra.mxu0 0.0
    %2096 = vmatprep.subr.mxu0 0.0
    %2097 = vmatpush1.msra.mxu0 0.0
    %2098 = vmatprep.subr.mxu0 0.0
    %2099 = vmatpush1.msra.mxu0 0.0
    %2100 = vmatprep.subr.mxu0 0.0
    %2101 = vmatpush1.msra.mxu0 0.0
    %2102 = vmatprep.subr.mxu0 0.0
    %2103 = vmatpush1.msra.mxu0 0.0
    %2104 = vmatprep.subr.mxu0 0.0
    %2105 = vmatpush1.msra.mxu0 0.0
    %2106 = vmatprep.subr.mxu0 0.0
    %2107 = vmatpush1.msra.mxu0 0.0
    %2108 = vmatprep.subr.mxu0 0.0
    %2109 = vmatpush1.msra.mxu0 0.0
    %2110 = vmatprep.subr.mxu0 0.0
    %2111 = vmatpush1.msra.mxu0 0.0
    %2112 = vmatprep.subr.mxu0 0.0
    %2113 = vmatpush1.msra.mxu0 0.0
    %2114 = vmatprep.subr.mxu0 0.0
    %2115 = vmatpush1.msra.mxu0 0.0
    %2116 = vmatprep.subr.mxu0 0.0
    %2117 = vmatpush1.msra.mxu0 0.0
    %2118 = vmatprep.subr.mxu0 0.0
    %2119 = vmatpush1.msra.mxu0 0.0
    %2120 = vmatprep.mubr.f32.mxu0 0.0
    %2121 = vmatmul.mubr.f32.gmra.mrb[0].mxu0 %v2051
    %v2122 = vpop.f32.mrb[0].mxu0
    %v2123 = vadd.f32 %v2049, %v2122
    %v2124 = vpop.f32.mrb[0].mxu0
    %2125 = vmatprep.mubr.f32.mxu0 0.0
    %2126 = vmatmul.mubr.f32.gmra.mrb[0].mxu0 %v2054
    %v2127 = vpop.f32.mrb[0].mxu0
    %v2128 = vadd.f32 %v2049, %v2127
    %v2129 = vpop.f32.mrb[0].mxu0
    %2130 = vdwg.mxu0
    %v2131 = vsel %vm46, %v2123, -inf
    %2132 = vmax.xlane.f32.xlu0 %v2131
    %v2133 = vpop.xlane.xlu0 %2132
    %v2134 = vsel %vm46, %v2128, -inf
    %2135 = vmax.xlane.f32.xlu0 %v2134
    %v2136 = vpop.xlane.xlu0 %2135
    %v2137 = vsub.f32 %v2123, %v2133
    %v2138 = vsub.f32 %v2128, %v2136
    %v2139 = vmul.f32 %v2137, 1.442695
    %v2140 = vpow.pop %v2139
    %v2141 = vmul.f32 %v2138, 1.442695
    %v2142 = vpow.pop %v2141
    %v2143 = vsel %vm46, %v2140, 0.0
    %2144 = vadd.xlane.f32.xlu0 %v2143
    %v2145 = vpop.xlane.xlu0 %2144
    %v2146 = vsel %vm46, %v2142, 0.0
    %2147 = vadd.xlane.f32.xlu0 %v2146
    %v2148 = vpop.xlane.xlu0 %2147
    %v2149 = vlog2.pop %v2145
    %v2150 = vmul.f32 %v2149, 0.6931472
    %v2151 = vlog2.pop %v2148
    %v2152 = vmul.f32 %v2151, 0.6931472
    %v2153 = vsub.f32 %v2137, %v2150
    %v2154 = vsub.f32 %v2138, %v2152
    %2155 = vst.msk [vmem:[%s4] sm:$0xff] %vm46, %v2153
    %2156 = vst.msk [vmem:[%s4 + $0x8] sm:$0xff] %vm46, %v2154
    %2157 = vset.pattern.permute.xlu0 0
    %2158 = vperm.xlu0 %2157, %v33
    %v2159 = vpop.permute.xlu0 %2158
    %2160 = vset.pattern.permute.xlu0 0
    %2161 = vperm.xlu0 %2160, %v34
    %v2162 = vpop.permute.xlu0 %2161
    %vm2163 = vcmp.eq.s32.totalorder %v305, %v2159
    %vm2164 = vcmp.eq.s32.totalorder %v305, %v2162
    %v2165 = vsel %vm2163, 1.0, 0.0
    %v2166 = vsel %vm2164, 1.0, 0.0
    %v2167 = vld [vmem:[#allocation2 + $0xd0] sm:$0xff]
    %v2168 = vld [vmem:[#allocation2 + $0xd8] sm:$0xff]
    %v2170 = vsel %vm46, %v2165, 0
    %v2173 = vsel %vm46, %v2166, 0
    %2175 = vmatprep.subr.mxu0 0.0
    %2176 = vmatpush1.msra.mxu0 %v2167
    %2177 = vmatprep.subr.mxu0 0.0
    %2178 = vmatpush1.msra.mxu0 %v2168
    %2179 = vmatprep.subr.mxu0 0.0
    %2180 = vmatpush1.msra.mxu0 0.0
    %2181 = vmatprep.subr.mxu0 0.0
    %2182 = vmatpush1.msra.mxu0 0.0
    %2183 = vmatprep.subr.mxu0 0.0
    %2184 = vmatpush1.msra.mxu0 0.0
    %2185 = vmatprep.subr.mxu0 0.0
    %2186 = vmatpush1.msra.mxu0 0.0
    %2187 = vmatprep.subr.mxu0 0.0
    %2188 = vmatpush1.msra.mxu0 0.0
    %2189 = vmatprep.subr.mxu0 0.0
    %2190 = vmatpush1.msra.mxu0 0.0
    %2191 = vmatprep.subr.mxu0 0.0
    %2192 = vmatpush1.msra.mxu0 0.0
    %2193 = vmatprep.subr.mxu0 0.0
    %2194 = vmatpush1.msra.mxu0 0.0
    %2195 = vmatprep.subr.mxu0 0.0
    %2196 = vmatpush1.msra.mxu0 0.0
    %2197 = vmatprep.subr.mxu0 0.0
    %2198 = vmatpush1.msra.mxu0 0.0
    %2199 = vmatprep.subr.mxu0 0.0
    %2200 = vmatpush1.msra.mxu0 0.0
    %2201 = vmatprep.subr.mxu0 0.0
    %2202 = vmatpush1.msra.mxu0 0.0
    %2203 = vmatprep.subr.mxu0 0.0
    %2204 = vmatpush1.msra.mxu0 0.0
    %2205 = vmatprep.subr.mxu0 0.0
    %2206 = vmatpush1.msra.mxu0 0.0
    %2207 = vmatprep.subr.mxu0 0.0
    %2208 = vmatpush1.msra.mxu0 0.0
    %2209 = vmatprep.subr.mxu0 0.0
    %2210 = vmatpush1.msra.mxu0 0.0
    %2211 = vmatprep.subr.mxu0 0.0
    %2212 = vmatpush1.msra.mxu0 0.0
    %2213 = vmatprep.subr.mxu0 0.0
    %2214 = vmatpush1.msra.mxu0 0.0
    %2215 = vmatprep.subr.mxu0 0.0
    %2216 = vmatpush1.msra.mxu0 0.0
    %2217 = vmatprep.subr.mxu0 0.0
    %2218 = vmatpush1.msra.mxu0 0.0
    %2219 = vmatprep.subr.mxu0 0.0
    %2220 = vmatpush1.msra.mxu0 0.0
    %2221 = vmatprep.subr.mxu0 0.0
    %2222 = vmatpush1.msra.mxu0 0.0
    %2223 = vmatprep.subr.mxu0 0.0
    %2224 = vmatpush1.msra.mxu0 0.0
    %2225 = vmatprep.subr.mxu0 0.0
    %2226 = vmatpush1.msra.mxu0 0.0
    %2227 = vmatprep.subr.mxu0 0.0
    %2228 = vmatpush1.msra.mxu0 0.0
    %2229 = vmatprep.subr.mxu0 0.0
    %2230 = vmatpush1.msra.mxu0 0.0
    %2231 = vmatprep.subr.mxu0 0.0
    %2232 = vmatpush1.msra.mxu0 0.0
    %2233 = vmatprep.subr.mxu0 0.0
    %2234 = vmatpush1.msra.mxu0 0.0
    %2235 = vmatprep.subr.mxu0 0.0
    %2236 = vmatpush1.msra.mxu0 0.0
    %2237 = vmatprep.subr.mxu0 0.0
    %2238 = vmatpush1.msra.mxu0 0.0
    %2239 = vmatprep.mubr.f32.mxu0 0.0
    %2240 = vmatmul.mubr.f32.gmra.mrb[0].mxu0 %v2170
    %v2241 = vpop.f32.mrb[0].mxu0
    %v2242 = vadd.f32 0.0, %v2241
    %v2243 = vpop.f32.mrb[0].mxu0
    %2244 = vmatprep.mubr.f32.mxu0 0.0
    %2245 = vmatmul.mubr.f32.gmra.mrb[0].mxu0 %v2173
    %v2246 = vpop.f32.mrb[0].mxu0
    %v2247 = vadd.f32 0.0, %v2246
    %v2248 = vpop.f32.mrb[0].mxu0
    %2249 = vdwg.mxu0
    %v2250 = vmul.f32 %v2242, 5.656854
    %v2251 = vmul.f32 %v2247, 5.656854
    %v2252 = vadd.f32 %v2250, %v35
    %v2253 = vadd.f32 %v2251, %v36
    %v2254 = vld [vmem:[%s2 + $0xe] sm:$0x1]
    %v2255 = vld [vmem:[%s2 + $0xf] sm:$0x1]
    %v2256 = vsel %vm130, %v2252, 0.0
    %2257 = vadd.xlane.f32.xlu0 %v2256
    %v2258 = vpop.xlane.xlu0 %2257
    %v2259 = vsel %vm130, %v2253, 0.0
    %2260 = vadd.xlane.f32.xlu0 %v2259
    %v2261 = vpop.xlane.xlu0 %2260
    %v2262 = vmul.f32 %v2258, %v137
    %v2263 = vmul.f32 %v2261, %v137
    %v2264 = vsub.f32 %v2252, %v2262
    %v2265 = vsub.f32 %v2253, %v2263
    %v2266 = vmul.f32 %v2264, %v2264
    %v2267 = vmul.f32 %v2265, %v2265
    %v2268 = vsel %vm130, %v2266, 0.0
    %2269 = vadd.xlane.f32.xlu0 %v2268
    %v2270 = vpop.xlane.xlu0 %2269
    %v2271 = vsel %vm130, %v2267, 0.0
    %2272 = vadd.xlane.f32.xlu0 %v2271
    %v2273 = vpop.xlane.xlu0 %2272
    %v2274 = vmul.f32 %v2270, %v137
    %v2275 = vmul.f32 %v2273, %v137
    %v2276 = vadd.f32 %v2274, 1e-05
    %v2277 = vadd.f32 %v2275, 1e-05
    %v2278 = vrsqrt.pop %v2276
    %v2279 = vrsqrt.pop %v2277
    %v2280 = vmul.f32 %v2264, %v2278
    %v2281 = vmul.f32 %v2265, %v2279
    %v2282 = vlaneseq
    %v2283 = vshrl.u32 %v2282, 7
    %v2284 = vsub.s32 0, %v2283
    %v2285 = vrot.slane %v2254, %v2284
    %v2286 = vmul.f32 %v2280, %v2285
    %v2287 = vmul.f32 %v2281, %v2285
    %v2288 = vlaneseq
    %v2289 = vshrl.u32 %v2288, 7
    %v2290 = vsub.s32 0, %v2289
    %v2291 = vrot.slane %v2255, %v2290
    %v2292 = vadd.f32 %v2286, %v2291
    %v2293 = vadd.f32 %v2287, %v2291
    %v2294 = vld [vmem:[#allocation2 + $0xe0] sm:$0xff]
    %v2295 = vld [vmem:[#allocation2 + $0xe8] sm:$0xff]
    %v2296 = vld [vmem:[#allocation2 + $0xf0] sm:$0xff]
    %v2297 = vld [vmem:[#allocation2 + $0xf8] sm:$0xff]
    %v2298 = vld [vmem:[%s2 + $0x10] sm:$0x1]
    %v2299 = vlaneseq
    %v2300 = vshrl.u32 %v2299, 7
    %v2301 = vsub.s32 0, %v2300
    %v2302 = vrot.slane %v2298, %v2301
    %v2304 = vsel %vm130, %v2292, 0
    %v2307 = vsel %vm130, %v2293, 0
    %2309 = vmatprep.subr.mxu0 0.0
    %2310 = vmatpush1.msra.mxu0 %v2294
    %2311 = vmatprep.subr.mxu0 0.0
    %2312 = vmatpush1.msra.mxu0 %v2295
    %2313 = vmatprep.subr.mxu0 0.0
    %2314 = vmatpush1.msra.mxu0 %v2296
    %2315 = vmatprep.subr.mxu0 0.0
    %2316 = vmatpush1.msra.mxu0 %v2297
    %2317 = vmatprep.subr.mxu0 0.0
    %2318 = vmatpush1.msra.mxu0 0.0
    %2319 = vmatprep.subr.mxu0 0.0
    %2320 = vmatpush1.msra.mxu0 0.0
    %2321 = vmatprep.subr.mxu0 0.0
    %2322 = vmatpush1.msra.mxu0 0.0
    %2323 = vmatprep.subr.mxu0 0.0
    %2324 = vmatpush1.msra.mxu0 0.0
    %2325 = vmatprep.subr.mxu0 0.0
    %2326 = vmatpush1.msra.mxu0 0.0
    %2327 = vmatprep.subr.mxu0 0.0
    %2328 = vmatpush1.msra.mxu0 0.0
    %2329 = vmatprep.subr.mxu0 0.0
    %2330 = vmatpush1.msra.mxu0 0.0
    %2331 = vmatprep.subr.mxu0 0.0
    %2332 = vmatpush1.msra.mxu0 0.0
    %2333 = vmatprep.subr.mxu0 0.0
    %2334 = vmatpush1.msra.mxu0 0.0
    %2335 = vmatprep.subr.mxu0 0.0
    %2336 = vmatpush1.msra.mxu0 0.0
    %2337 = vmatprep.subr.mxu0 0.0
    %2338 = vmatpush1.msra.mxu0 0.0
    %2339 = vmatprep.subr.mxu0 0.0
    %2340 = vmatpush1.msra.mxu0 0.0
    %2341 = vmatprep.subr.mxu0 0.0
    %2342 = vmatpush1.msra.mxu0 0.0
    %2343 = vmatprep.subr.mxu0 0.0
    %2344 = vmatpush1.msra.mxu0 0.0
    %2345 = vmatprep.subr.mxu0 0.0
    %2346 = vmatpush1.msra.mxu0 0.0
    %2347 = vmatprep.subr.mxu0 0.0
    %2348 = vmatpush1.msra.mxu0 0.0
    %2349 = vmatprep.subr.mxu0 0.0
    %2350 = vmatpush1.msra.mxu0 0.0
    %2351 = vmatprep.subr.mxu0 0.0
    %2352 = vmatpush1.msra.mxu0 0.0
    %2353 = vmatprep.subr.mxu0 0.0
    %2354 = vmatpush1.msra.mxu0 0.0
    %2355 = vmatprep.subr.mxu0 0.0
    %2356 = vmatpush1.msra.mxu0 0.0
    %2357 = vmatprep.subr.mxu0 0.0
    %2358 = vmatpush1.msra.mxu0 0.0
    %2359 = vmatprep.subr.mxu0 0.0
    %2360 = vmatpush1.msra.mxu0 0.0
    %2361 = vmatprep.subr.mxu0 0.0
    %2362 = vmatpush1.msra.mxu0 0.0
    %2363 = vmatprep.subr.mxu0 0.0
    %2364 = vmatpush1.msra.mxu0 0.0
    %2365 = vmatprep.subr.mxu0 0.0
    %2366 = vmatpush1.msra.mxu0 0.0
    %2367 = vmatprep.subr.mxu0 0.0
    %2368 = vmatpush1.msra.mxu0 0.0
    %2369 = vmatprep.subr.mxu0 0.0
    %2370 = vmatpush1.msra.mxu0 0.0
    %2371 = vmatprep.subr.mxu0 0.0
    %2372 = vmatpush1.msra.mxu0 0.0
    %2373 = vmatprep.mubr.f32.mxu0 0.0
    %2374 = vmatmul.mubr.f32.gmra.mrb[0].mxu0 %v2304
    %v2375 = vpop.f32.mrb[0].mxu0
    %v2376 = vadd.f32 %v2302, %v2375
    %v2377 = vpop.f32.mrb[0].mxu0
    %2378 = vmatprep.mubr.f32.mxu0 0.0
    %2379 = vmatmul.mubr.f32.gmra.mrb[0].mxu0 %v2307
    %v2380 = vpop.f32.mrb[0].mxu0
    %v2381 = vadd.f32 %v2302, %v2380
    %v2382 = vpop.f32.mrb[0].mxu0
    %2383 = vdwg.mxu0
    %v2384 = vlaneseq
    %v2385 = vshrl.u32 %v2384, 7
    %2386 = vset.pattern.permute.xlu0 3
    %2387 = vperm.xlu0 %2386, %v33
    %v2388 = vpop.permute.xlu0 %2387
    %2389 = vset.pattern.permute.xlu0 3
    %2390 = vperm.xlu0 %2389, %v34
    %v2391 = vpop.permute.xlu0 %2390
    %vm2392 = vcmp.lt.s32.totalorder %v305, %v2388
    %vm2393 = vcmp.lt.s32.totalorder %v305, %v2391
    %vm2394 = vcmp.le.s32.totalorder %v305, %v2385
    %vm2395 = vmand %vm2392, %vm2394
    %vm2396 = vmand %vm2393, %vm2394
    %2398 = vrot.lane.b32.xlu0 %v2376, 96
    %v2399 = vpop.permute.xlu0 %2398
    %v2400 = vsel %vm317, %v2376, 0
    %v2402 = vsel %vm317, %v2399, 0
    %2404 = vmatprep.subr.mxu0 0.0
    %2405 = vmatpush1.xpose.msra.mxu0 %v2402
    %2406 = vmatprep.subr.mxu0 0.0
    %2407 = vmatpush1.xpose.msra.mxu0 0.0
    %2408 = vmatprep.subr.mxu0 0.0
    %2409 = vmatpush1.xpose.msra.mxu0 0.0
    %2410 = vmatprep.subr.mxu0 0.0
    %2411 = vmatpush1.xpose.msra.mxu0 0.0
    %2412 = vmatprep.subr.mxu0 0.0
    %2413 = vmatpush1.xpose.msra.mxu0 0.0
    %2414 = vmatprep.subr.mxu0 0.0
    %2415 = vmatpush1.xpose.msra.mxu0 0.0
    %2416 = vmatprep.subr.mxu0 0.0
    %2417 = vmatpush1.xpose.msra.mxu0 0.0
    %2418 = vmatprep.subr.mxu0 0.0
    %2419 = vmatpush1.xpose.msra.mxu0 0.0
    %2420 = vmatprep.subr.mxu0 0.0
    %2421 = vmatpush1.xpose.msra.mxu0 0.0
    %2422 = vmatprep.subr.mxu0 0.0
    %2423 = vmatpush1.xpose.msra.mxu0 0.0
    %2424 = vmatprep.subr.mxu0 0.0
    %2425 = vmatpush1.xpose.msra.mxu0 0.0
    %2426 = vmatprep.subr.mxu0 0.0
    %2427 = vmatpush1.xpose.msra.mxu0 0.0
    %2428 = vmatprep.subr.mxu0 0.0
    %2429 = vmatpush1.xpose.msra.mxu0 0.0
    %2430 = vmatprep.subr.mxu0 0.0
    %2431 = vmatpush1.xpose.msra.mxu0 0.0
    %2432 = vmatprep.subr.mxu0 0.0
    %2433 = vmatpush1.xpose.msra.mxu0 0.0
    %2434 = vmatprep.subr.mxu0 0.0
    %2435 = vmatpush1.xpose.msra.mxu0 0.0
    %2436 = vmatprep.subr.mxu0 0.0
    %2437 = vmatpush1.xpose.msra.mxu0 0.0
    %2438 = vmatprep.subr.mxu0 0.0
    %2439 = vmatpush1.xpose.msra.mxu0 0.0
    %2440 = vmatprep.subr.mxu0 0.0
    %2441 = vmatpush1.xpose.msra.mxu0 0.0
    %2442 = vmatprep.subr.mxu0 0.0
    %2443 = vmatpush1.xpose.msra.mxu0 0.0
    %2444 = vmatprep.subr.mxu0 0.0
    %2445 = vmatpush1.xpose.msra.mxu0 0.0
    %2446 = vmatprep.subr.mxu0 0.0
    %2447 = vmatpush1.xpose.msra.mxu0 0.0
    %2448 = vmatprep.subr.mxu0 0.0
    %2449 = vmatpush1.xpose.msra.mxu0 0.0
    %2450 = vmatprep.subr.mxu0 0.0
    %2451 = vmatpush1.xpose.msra.mxu0 0.0
    %2452 = vmatprep.subr.mxu0 0.0
    %2453 = vmatpush1.xpose.msra.mxu0 0.0
    %2454 = vmatprep.subr.mxu0 0.0
    %2455 = vmatpush1.xpose.msra.mxu0 0.0
    %2456 = vmatprep.subr.mxu0 0.0
    %2457 = vmatpush1.xpose.msra.mxu0 0.0
    %2458 = vmatprep.subr.mxu0 0.0
    %2459 = vmatpush1.xpose.msra.mxu0 0.0
    %2460 = vmatprep.subr.mxu0 0.0
    %2461 = vmatpush1.xpose.msra.mxu0 0.0
    %2462 = vmatprep.subr.mxu0 0.0
    %2463 = vmatpush1.xpose.msra.mxu0 0.0
    %2464 = vmatprep.subr.mxu0 0.0
    %2465 = vmatpush1.xpose.msra.mxu0 0.0
    %2466 = vmatprep.subr.mxu0 0.0
    %2467 = vmatpush1.xpose.msra.mxu0 0.0
    %2468 = vmatprep.mubr.f32.mxu0 0.0
    %2469 = vmatmul.mubr.f32.gmra.mrb[0].mxu0 %v2400
    %v2470 = vpop.f32.mrb[0].mxu0
    %v2471 = vadd.f32 0.0, %v2470
    %v2472 = vpop.f32.mrb[0].mxu0
    %2473 = vdwg.mxu0
    %2475 = vrot.lane.b32.xlu0 %v2381, 96
    %v2476 = vpop.permute.xlu0 %2475
    %v2477 = vsel %vm317, %v2381, 0
    %v2479 = vsel %vm317, %v2476, 0
    %2481 = vmatprep.subr.mxu0 0.0
    %2482 = vmatpush1.xpose.msra.mxu0 %v2479
    %2483 = vmatprep.subr.mxu0 0.0
    %2484 = vmatpush1.xpose.msra.mxu0 0.0
    %2485 = vmatprep.subr.mxu0 0.0
    %2486 = vmatpush1.xpose.msra.mxu0 0.0
    %2487 = vmatprep.subr.mxu0 0.0
    %2488 = vmatpush1.xpose.msra.mxu0 0.0
    %2489 = vmatprep.subr.mxu0 0.0
    %2490 = vmatpush1.xpose.msra.mxu0 0.0
    %2491 = vmatprep.subr.mxu0 0.0
    %2492 = vmatpush1.xpose.msra.mxu0 0.0
    %2493 = vmatprep.subr.mxu0 0.0
    %2494 = vmatpush1.xpose.msra.mxu0 0.0
    %2495 = vmatprep.subr.mxu0 0.0
    %2496 = vmatpush1.xpose.msra.mxu0 0.0
    %2497 = vmatprep.subr.mxu0 0.0
    %2498 = vmatpush1.xpose.msra.mxu0 0.0
    %2499 = vmatprep.subr.mxu0 0.0
    %2500 = vmatpush1.xpose.msra.mxu0 0.0
    %2501 = vmatprep.subr.mxu0 0.0
    %2502 = vmatpush1.xpose.msra.mxu0 0.0
    %2503 = vmatprep.subr.mxu0 0.0
    %2504 = vmatpush1.xpose.msra.mxu0 0.0
    %2505 = vmatprep.subr.mxu0 0.0
    %2506 = vmatpush1.xpose.msra.mxu0 0.0
    %2507 = vmatprep.subr.mxu0 0.0
    %2508 = vmatpush1.xpose.msra.mxu0 0.0
    %2509 = vmatprep.subr.mxu0 0.0
    %2510 = vmatpush1.xpose.msra.mxu0 0.0
    %2511 = vmatprep.subr.mxu0 0.0
    %2512 = vmatpush1.xpose.msra.mxu0 0.0
    %2513 = vmatprep.subr.mxu0 0.0
    %2514 = vmatpush1.xpose.msra.mxu0 0.0
    %2515 = vmatprep.subr.mxu0 0.0
    %2516 = vmatpush1.xpose.msra.mxu0 0.0
    %2517 = vmatprep.subr.mxu0 0.0
    %2518 = vmatpush1.xpose.msra.mxu0 0.0
    %2519 = vmatprep.subr.mxu0 0.0
    %2520 = vmatpush1.xpose.msra.mxu0 0.0
    %2521 = vmatprep.subr.mxu0 0.0
    %2522 = vmatpush1.xpose.msra.mxu0 0.0
    %2523 = vmatprep.subr.mxu0 0.0
    %2524 = vmatpush1.xpose.msra.mxu0 0.0
    %2525 = vmatprep.subr.mxu0 0.0
    %2526 = vmatpush1.xpose.msra.mxu0 0.0
    %2527 = vmatprep.subr.mxu0 0.0
    %2528 = vmatpush1.xpose.msra.mxu0 0.0
    %2529 = vmatprep.subr.mxu0 0.0
    %2530 = vmatpush1.xpose.msra.mxu0 0.0
    %2531 = vmatprep.subr.mxu0 0.0
    %2532 = vmatpush1.xpose.msra.mxu0 0.0
    %2533 = vmatprep.subr.mxu0 0.0
    %2534 = vmatpush1.xpose.msra.mxu0 0.0
    %2535 = vmatprep.subr.mxu0 0.0
    %2536 = vmatpush1.xpose.msra.mxu0 0.0
    %2537 = vmatprep.subr.mxu0 0.0
    %2538 = vmatpush1.xpose.msra.mxu0 0.0
    %2539 = vmatprep.subr.mxu0 0.0
    %2540 = vmatpush1.xpose.msra.mxu0 0.0
    %2541 = vmatprep.subr.mxu0 0.0
    %2542 = vmatpush1.xpose.msra.mxu0 0.0
    %2543 = vmatprep.subr.mxu0 0.0
    %2544 = vmatpush1.xpose.msra.mxu0 0.0
    %2545 = vmatprep.mubr.f32.mxu0 0.0
    %2546 = vmatmul.mubr.f32.gmra.mrb[0].mxu0 %v2477
    %v2547 = vpop.f32.mrb[0].mxu0
    %v2548 = vadd.f32 0.0, %v2547
    %v2549 = vpop.f32.mrb[0].mxu0
    %2550 = vdwg.mxu0
    %v2551 = vmul.f32 %v2471, 0.35355338
    %v2552 = vmul.f32 %v2548, 0.35355338
    %v2553 = vsel %vm2395, %v2551, -1e+09
    %v2554 = vsel %vm2396, %v2552, -1e+09
    %v2555 = vsel %vm317, %v2553, -inf
    %2556 = vmax.xlane.f32.xlu0 %v2555
    %v2557 = vpop.xlane.xlu0 %2556
    %v2558 = vsel %vm317, %v2554, -inf
    %2559 = vmax.xlane.f32.xlu0 %v2558
    %v2560 = vpop.xlane.xlu0 %2559
    %v2561 = vsub.f32 %v2553, %v2557
    %v2562 = vsub.f32 %v2554, %v2560
    %v2563 = vmul.f32 %v2561, 1.442695
    %v2564 = vpow.pop %v2563
    %v2565 = vmul.f32 %v2562, 1.442695
    %v2566 = vpow.pop %v2565
    %v2567 = vsel %vm317, %v2564, 0.0
    %2568 = vadd.xlane.f32.xlu0 %v2567
    %v2569 = vpop.xlane.xlu0 %2568
    %v2570 = vsel %vm317, %v2566, 0.0
    %2571 = vadd.xlane.f32.xlu0 %v2570
    %v2572 = vpop.xlane.xlu0 %2571
    %v2573 = vrcp.pop %v2569
    %v2574 = vrcp.pop %v2572
    %v2575 = vmul.f32 %v2564, %v2573
    %v2576 = vmul.f32 %v2566, %v2574
    %2577 = vrot.lane.b32.xlu0 %v2376, 64
    %v2578 = vpop.permute.xlu0 %2577
    %v2581 = vsel %vm317, %v2575, 0
    %2583 = vmatprep.subr.mxu0 0.0
    %2584 = vmatpush1.msra.mxu0 %v2578
    %2585 = vmatprep.subr.mxu0 0.0
    %2586 = vmatpush1.msra.mxu0 0.0
    %2587 = vmatprep.subr.mxu0 0.0
    %2588 = vmatpush1.msra.mxu0 0.0
    %2589 = vmatprep.subr.mxu0 0.0
    %2590 = vmatpush1.msra.mxu0 0.0
    %2591 = vmatprep.subr.mxu0 0.0
    %2592 = vmatpush1.msra.mxu0 0.0
    %2593 = vmatprep.subr.mxu0 0.0
    %2594 = vmatpush1.msra.mxu0 0.0
    %2595 = vmatprep.subr.mxu0 0.0
    %2596 = vmatpush1.msra.mxu0 0.0
    %2597 = vmatprep.subr.mxu0 0.0
    %2598 = vmatpush1.msra.mxu0 0.0
    %2599 = vmatprep.subr.mxu0 0.0
    %2600 = vmatpush1.msra.mxu0 0.0
    %2601 = vmatprep.subr.mxu0 0.0
    %2602 = vmatpush1.msra.mxu0 0.0
    %2603 = vmatprep.subr.mxu0 0.0
    %2604 = vmatpush1.msra.mxu0 0.0
    %2605 = vmatprep.subr.mxu0 0.0
    %2606 = vmatpush1.msra.mxu0 0.0
    %2607 = vmatprep.subr.mxu0 0.0
    %2608 = vmatpush1.msra.mxu0 0.0
    %2609 = vmatprep.subr.mxu0 0.0
    %2610 = vmatpush1.msra.mxu0 0.0
    %2611 = vmatprep.subr.mxu0 0.0
    %2612 = vmatpush1.msra.mxu0 0.0
    %2613 = vmatprep.subr.mxu0 0.0
    %2614 = vmatpush1.msra.mxu0 0.0
    %2615 = vmatprep.subr.mxu0 0.0
    %2616 = vmatpush1.msra.mxu0 0.0
    %2617 = vmatprep.subr.mxu0 0.0
    %2618 = vmatpush1.msra.mxu0 0.0
    %2619 = vmatprep.subr.mxu0 0.0
    %2620 = vmatpush1.msra.mxu0 0.0
    %2621 = vmatprep.subr.mxu0 0.0
    %2622 = vmatpush1.msra.mxu0 0.0
    %2623 = vmatprep.subr.mxu0 0.0
    %2624 = vmatpush1.msra.mxu0 0.0
    %2625 = vmatprep.subr.mxu0 0.0
    %2626 = vmatpush1.msra.mxu0 0.0
    %2627 = vmatprep.subr.mxu0 0.0
    %2628 = vmatpush1.msra.mxu0 0.0
    %2629 = vmatprep.subr.mxu0 0.0
    %2630 = vmatpush1.msra.mxu0 0.0
    %2631 = vmatprep.subr.mxu0 0.0
    %2632 = vmatpush1.msra.mxu0 0.0
    %2633 = vmatprep.subr.mxu0 0.0
    %2634 = vmatpush1.msra.mxu0 0.0
    %2635 = vmatprep.subr.mxu0 0.0
    %2636 = vmatpush1.msra.mxu0 0.0
    %2637 = vmatprep.subr.mxu0 0.0
    %2638 = vmatpush1.msra.mxu0 0.0
    %2639 = vmatprep.subr.mxu0 0.0
    %2640 = vmatpush1.msra.mxu0 0.0
    %2641 = vmatprep.subr.mxu0 0.0
    %2642 = vmatpush1.msra.mxu0 0.0
    %2643 = vmatprep.subr.mxu0 0.0
    %2644 = vmatpush1.msra.mxu0 0.0
    %2645 = vmatprep.subr.mxu0 0.0
    %2646 = vmatpush1.msra.mxu0 0.0
    %2647 = vmatprep.mubr.f32.mxu0 0.0
    %2648 = vmatmul.mubr.f32.gmra.mrb[0].mxu0 %v2581
    %v2649 = vpop.f32.mrb[0].mxu0
    %v2650 = vadd.f32 0.0, %v2649
    %v2651 = vpop.f32.mrb[0].mxu0
    %2652 = vdwg.mxu0
    %2653 = vrot.lane.b32.xlu0 %v2381, 64
    %v2654 = vpop.permute.xlu0 %2653
    %v2657 = vsel %vm317, %v2576, 0
    %2659 = vmatprep.subr.mxu0 0.0
    %2660 = vmatpush1.msra.mxu0 %v2654
    %2661 = vmatprep.subr.mxu0 0.0
    %2662 = vmatpush1.msra.mxu0 0.0
    %2663 = vmatprep.subr.mxu0 0.0
    %2664 = vmatpush1.msra.mxu0 0.0
    %2665 = vmatprep.subr.mxu0 0.0
    %2666 = vmatpush1.msra.mxu0 0.0
    %2667 = vmatprep.subr.mxu0 0.0
    %2668 = vmatpush1.msra.mxu0 0.0
    %2669 = vmatprep.subr.mxu0 0.0
    %2670 = vmatpush1.msra.mxu0 0.0
    %2671 = vmatprep.subr.mxu0 0.0
    %2672 = vmatpush1.msra.mxu0 0.0
    %2673 = vmatprep.subr.mxu0 0.0
    %2674 = vmatpush1.msra.mxu0 0.0
    %2675 = vmatprep.subr.mxu0 0.0
    %2676 = vmatpush1.msra.mxu0 0.0
    %2677 = vmatprep.subr.mxu0 0.0
    %2678 = vmatpush1.msra.mxu0 0.0
    %2679 = vmatprep.subr.mxu0 0.0
    %2680 = vmatpush1.msra.mxu0 0.0
    %2681 = vmatprep.subr.mxu0 0.0
    %2682 = vmatpush1.msra.mxu0 0.0
    %2683 = vmatprep.subr.mxu0 0.0
    %2684 = vmatpush1.msra.mxu0 0.0
    %2685 = vmatprep.subr.mxu0 0.0
    %2686 = vmatpush1.msra.mxu0 0.0
    %2687 = vmatprep.subr.mxu0 0.0
    %2688 = vmatpush1.msra.mxu0 0.0
    %2689 = vmatprep.subr.mxu0 0.0
    %2690 = vmatpush1.msra.mxu0 0.0
    %2691 = vmatprep.subr.mxu0 0.0
    %2692 = vmatpush1.msra.mxu0 0.0
    %2693 = vmatprep.subr.mxu0 0.0
    %2694 = vmatpush1.msra.mxu0 0.0
    %2695 = vmatprep.subr.mxu0 0.0
    %2696 = vmatpush1.msra.mxu0 0.0
    %2697 = vmatprep.subr.mxu0 0.0
    %2698 = vmatpush1.msra.mxu0 0.0
    %2699 = vmatprep.subr.mxu0 0.0
    %2700 = vmatpush1.msra.mxu0 0.0
    %2701 = vmatprep.subr.mxu0 0.0
    %2702 = vmatpush1.msra.mxu0 0.0
    %2703 = vmatprep.subr.mxu0 0.0
    %2704 = vmatpush1.msra.mxu0 0.0
    %2705 = vmatprep.subr.mxu0 0.0
    %2706 = vmatpush1.msra.mxu0 0.0
    %2707 = vmatprep.subr.mxu0 0.0
    %2708 = vmatpush1.msra.mxu0 0.0
    %2709 = vmatprep.subr.mxu0 0.0
    %2710 = vmatpush1.msra.mxu0 0.0
    %2711 = vmatprep.subr.mxu0 0.0
    %2712 = vmatpush1.msra.mxu0 0.0
    %2713 = vmatprep.subr.mxu0 0.0
    %2714 = vmatpush1.msra.mxu0 0.0
    %2715 = vmatprep.subr.mxu0 0.0
    %2716 = vmatpush1.msra.mxu0 0.0
    %2717 = vmatprep.subr.mxu0 0.0
    %2718 = vmatpush1.msra.mxu0 0.0
    %2719 = vmatprep.subr.mxu0 0.0
    %2720 = vmatpush1.msra.mxu0 0.0
    %2721 = vmatprep.subr.mxu0 0.0
    %2722 = vmatpush1.msra.mxu0 0.0
    %2723 = vmatprep.mubr.f32.mxu0 0.0
    %2724 = vmatmul.mubr.f32.gmra.mrb[0].mxu0 %v2657
    %v2725 = vpop.f32.mrb[0].mxu0
    %v2726 = vadd.f32 0.0, %v2725
    %v2727 = vpop.f32.mrb[0].mxu0
    %2728 = vdwg.mxu0
    %2729 = vrot.lane.b32.xlu0 %v2376, 120
    %v2730 = vpop.permute.xlu0 %2729
    %2731 = vrot.lane.b32.xlu0 %v2376, 88
    %v2732 = vpop.permute.xlu0 %2731
    %v2733 = vsel %vm317, %v2730, 0
    %v2735 = vsel %vm317, %v2732, 0
    %2737 = vmatprep.subr.mxu0 0.0
    %2738 = vmatpush1.xpose.msra.mxu0 %v2735
    %2739 = vmatprep.subr.mxu0 0.0
    %2740 = vmatpush1.xpose.msra.mxu0 0.0
    %2741 = vmatprep.subr.mxu0 0.0
    %2742 = vmatpush1.xpose.msra.mxu0 0.0
    %2743 = vmatprep.subr.mxu0 0.0
    %2744 = vmatpush1.xpose.msra.mxu0 0.0
    %2745 = vmatprep.subr.mxu0 0.0
    %2746 = vmatpush1.xpose.msra.mxu0 0.0
    %2747 = vmatprep.subr.mxu0 0.0
    %2748 = vmatpush1.xpose.msra.mxu0 0.0
    %2749 = vmatprep.subr.mxu0 0.0
    %2750 = vmatpush1.xpose.msra.mxu0 0.0
    %2751 = vmatprep.subr.mxu0 0.0
    %2752 = vmatpush1.xpose.msra.mxu0 0.0
    %2753 = vmatprep.subr.mxu0 0.0
    %2754 = vmatpush1.xpose.msra.mxu0 0.0
    %2755 = vmatprep.subr.mxu0 0.0
    %2756 = vmatpush1.xpose.msra.mxu0 0.0
    %2757 = vmatprep.subr.mxu0 0.0
    %2758 = vmatpush1.xpose.msra.mxu0 0.0
    %2759 = vmatprep.subr.mxu0 0.0
    %2760 = vmatpush1.xpose.msra.mxu0 0.0
    %2761 = vmatprep.subr.mxu0 0.0
    %2762 = vmatpush1.xpose.msra.mxu0 0.0
    %2763 = vmatprep.subr.mxu0 0.0
    %2764 = vmatpush1.xpose.msra.mxu0 0.0
    %2765 = vmatprep.subr.mxu0 0.0
    %2766 = vmatpush1.xpose.msra.mxu0 0.0
    %2767 = vmatprep.subr.mxu0 0.0
    %2768 = vmatpush1.xpose.msra.mxu0 0.0
    %2769 = vmatprep.subr.mxu0 0.0
    %2770 = vmatpush1.xpose.msra.mxu0 0.0
    %2771 = vmatprep.subr.mxu0 0.0
    %2772 = vmatpush1.xpose.msra.mxu0 0.0
    %2773 = vmatprep.subr.mxu0 0.0
    %2774 = vmatpush1.xpose.msra.mxu0 0.0
    %2775 = vmatprep.subr.mxu0 0.0
    %2776 = vmatpush1.xpose.msra.mxu0 0.0
    %2777 = vmatprep.subr.mxu0 0.0
    %2778 = vmatpush1.xpose.msra.mxu0 0.0
    %2779 = vmatprep.subr.mxu0 0.0
    %2780 = vmatpush1.xpose.msra.mxu0 0.0
    %2781 = vmatprep.subr.mxu0 0.0
    %2782 = vmatpush1.xpose.msra.mxu0 0.0
    %2783 = vmatprep.subr.mxu0 0.0
    %2784 = vmatpush1.xpose.msra.mxu0 0.0
    %2785 = vmatprep.subr.mxu0 0.0
    %2786 = vmatpush1.xpose.msra.mxu0 0.0
    %2787 = vmatprep.subr.mxu0 0.0
    %2788 = vmatpush1.xpose.msra.mxu0 0.0
    %2789 = vmatprep.subr.mxu0 0.0
    %2790 = vmatpush1.xpose.msra.mxu0 0.0
    %2791 = vmatprep.subr.mxu0 0.0
    %2792 = vmatpush1.xpose.msra.mxu0 0.0
    %2793 = vmatprep.subr.mxu0 0.0
    %2794 = vmatpush1.xpose.msra.mxu0 0.0
    %2795 = vmatprep.subr.mxu0 0.0
    %2796 = vmatpush1.xpose.msra.mxu0 0.0
    %2797 = vmatprep.subr.mxu0 0.0
    %2798 = vmatpush1.xpose.msra.mxu0 0.0
    %2799 = vmatprep.subr.mxu0 0.0
    %2800 = vmatpush1.xpose.msra.mxu0 0.0
    %2801 = vmatprep.mubr.f32.mxu0 0.0
    %2802 = vmatmul.mubr.f32.gmra.mrb[0].mxu0 %v2733
    %v2803 = vpop.f32.mrb[0].mxu0
    %v2804 = vadd.f32 0.0, %v2803
    %v2805 = vpop.f32.mrb[0].mxu0
    %2806 = vdwg.mxu0
    %2807 = vrot.lane.b32.xlu0 %v2381, 120
    %v2808 = vpop.permute.xlu0 %2807
    %2809 = vrot.lane.b32.xlu0 %v2381, 88
    %v2810 = vpop.permute.xlu0 %2809
    %v2811 = vsel %vm317, %v2808, 0
    %v2813 = vsel %vm317, %v2810, 0
    %2815 = vmatprep.subr.mxu0 0.0
    %2816 = vmatpush1.xpose.msra.mxu0 %v2813
    %2817 = vmatprep.subr.mxu0 0.0
    %2818 = vmatpush1.xpose.msra.mxu0 0.0
    %2819 = vmatprep.subr.mxu0 0.0
    %2820 = vmatpush1.xpose.msra.mxu0 0.0
    %2821 = vmatprep.subr.mxu0 0.0
    %2822 = vmatpush1.xpose.msra.mxu0 0.0
    %2823 = vmatprep.subr.mxu0 0.0
    %2824 = vmatpush1.xpose.msra.mxu0 0.0
    %2825 = vmatprep.subr.mxu0 0.0
    %2826 = vmatpush1.xpose.msra.mxu0 0.0
    %2827 = vmatprep.subr.mxu0 0.0
    %2828 = vmatpush1.xpose.msra.mxu0 0.0
    %2829 = vmatprep.subr.mxu0 0.0
    %2830 = vmatpush1.xpose.msra.mxu0 0.0
    %2831 = vmatprep.subr.mxu0 0.0
    %2832 = vmatpush1.xpose.msra.mxu0 0.0
    %2833 = vmatprep.subr.mxu0 0.0
    %2834 = vmatpush1.xpose.msra.mxu0 0.0
    %2835 = vmatprep.subr.mxu0 0.0
    %2836 = vmatpush1.xpose.msra.mxu0 0.0
    %2837 = vmatprep.subr.mxu0 0.0
    %2838 = vmatpush1.xpose.msra.mxu0 0.0
    %2839 = vmatprep.subr.mxu0 0.0
    %2840 = vmatpush1.xpose.msra.mxu0 0.0
    %2841 = vmatprep.subr.mxu0 0.0
    %2842 = vmatpush1.xpose.msra.mxu0 0.0
    %2843 = vmatprep.subr.mxu0 0.0
    %2844 = vmatpush1.xpose.msra.mxu0 0.0
    %2845 = vmatprep.subr.mxu0 0.0
    %2846 = vmatpush1.xpose.msra.mxu0 0.0
    %2847 = vmatprep.subr.mxu0 0.0
    %2848 = vmatpush1.xpose.msra.mxu0 0.0
    %2849 = vmatprep.subr.mxu0 0.0
    %2850 = vmatpush1.xpose.msra.mxu0 0.0
    %2851 = vmatprep.subr.mxu0 0.0
    %2852 = vmatpush1.xpose.msra.mxu0 0.0
    %2853 = vmatprep.subr.mxu0 0.0
    %2854 = vmatpush1.xpose.msra.mxu0 0.0
    %2855 = vmatprep.subr.mxu0 0.0
    %2856 = vmatpush1.xpose.msra.mxu0 0.0
    %2857 = vmatprep.subr.mxu0 0.0
    %2858 = vmatpush1.xpose.msra.mxu0 0.0
    %2859 = vmatprep.subr.mxu0 0.0
    %2860 = vmatpush1.xpose.msra.mxu0 0.0
    %2861 = vmatprep.subr.mxu0 0.0
    %2862 = vmatpush1.xpose.msra.mxu0 0.0
    %2863 = vmatprep.subr.mxu0 0.0
    %2864 = vmatpush1.xpose.msra.mxu0 0.0
    %2865 = vmatprep.subr.mxu0 0.0
    %2866 = vmatpush1.xpose.msra.mxu0 0.0
    %2867 = vmatprep.subr.mxu0 0.0
    %2868 = vmatpush1.xpose.msra.mxu0 0.0
    %2869 = vmatprep.subr.mxu0 0.0
    %2870 = vmatpush1.xpose.msra.mxu0 0.0
    %2871 = vmatprep.subr.mxu0 0.0
    %2872 = vmatpush1.xpose.msra.mxu0 0.0
    %2873 = vmatprep.subr.mxu0 0.0
    %2874 = vmatpush1.xpose.msra.mxu0 0.0
    %2875 = vmatprep.subr.mxu0 0.0
    %2876 = vmatpush1.xpose.msra.mxu0 0.0
    %2877 = vmatprep.subr.mxu0 0.0
    %2878 = vmatpush1.xpose.msra.mxu0 0.0
    %2879 = vmatprep.mubr.f32.mxu0 0.0
    %2880 = vmatmul.mubr.f32.gmra.mrb[0].mxu0 %v2811
    %v2881 = vpop.f32.mrb[0].mxu0
    %v2882 = vadd.f32 0.0, %v2881
    %v2883 = vpop.f32.mrb[0].mxu0
    %2884 = vdwg.mxu0
    %v2885 = vmul.f32 %v2804, 0.35355338
    %v2886 = vmul.f32 %v2882, 0.35355338
    %v2887 = vsel %vm2395, %v2885, -1e+09
    %v2888 = vsel %vm2396, %v2886, -1e+09
    %v2889 = vsel %vm317, %v2887, -inf
    %2890 = vmax.xlane.f32.xlu0 %v2889
    %v2891 = vpop.xlane.xlu0 %2890
    %v2892 = vsel %vm317, %v2888, -inf
    %2893 = vmax.xlane.f32.xlu0 %v2892
    %v2894 = vpop.xlane.xlu0 %2893
    %v2895 = vsub.f32 %v2887, %v2891
    %v2896 = vsub.f32 %v2888, %v2894
    %v2897 = vmul.f32 %v2895, 1.442695
    %v2898 = vpow.pop %v2897
    %v2899 = vmul.f32 %v2896, 1.442695
    %v2900 = vpow.pop %v2899
    %v2901 = vsel %vm317, %v2898, 0.0
    %2902 = vadd.xlane.f32.xlu0 %v2901
    %v2903 = vpop.xlane.xlu0 %2902
    %v2904 = vsel %vm317, %v2900, 0.0
    %2905 = vadd.xlane.f32.xlu0 %v2904
    %v2906 = vpop.xlane.xlu0 %2905
    %v2907 = vrcp.pop %v2903
    %v2908 = vrcp.pop %v2906
    %v2909 = vmul.f32 %v2898, %v2907
    %v2910 = vmul.f32 %v2900, %v2908
    %2911 = vrot.lane.b32.xlu0 %v2376, 56
    %v2912 = vpop.permute.xlu0 %2911
    %v2915 = vsel %vm317, %v2909, 0
    %2917 = vmatprep.subr.mxu0 0.0
    %2918 = vmatpush1.msra.mxu0 %v2912
    %2919 = vmatprep.subr.mxu0 0.0
    %2920 = vmatpush1.msra.mxu0 0.0
    %2921 = vmatprep.subr.mxu0 0.0
    %2922 = vmatpush1.msra.mxu0 0.0
    %2923 = vmatprep.subr.mxu0 0.0
    %2924 = vmatpush1.msra.mxu0 0.0
    %2925 = vmatprep.subr.mxu0 0.0
    %2926 = vmatpush1.msra.mxu0 0.0
    %2927 = vmatprep.subr.mxu0 0.0
    %2928 = vmatpush1.msra.mxu0 0.0
    %2929 = vmatprep.subr.mxu0 0.0
    %2930 = vmatpush1.msra.mxu0 0.0
    %2931 = vmatprep.subr.mxu0 0.0
    %2932 = vmatpush1.msra.mxu0 0.0
    %2933 = vmatprep.subr.mxu0 0.0
    %2934 = vmatpush1.msra.mxu0 0.0
    %2935 = vmatprep.subr.mxu0 0.0
    %2936 = vmatpush1.msra.mxu0 0.0
    %2937 = vmatprep.subr.mxu0 0.0
    %2938 = vmatpush1.msra.mxu0 0.0
    %2939 = vmatprep.subr.mxu0 0.0
    %2940 = vmatpush1.msra.mxu0 0.0
    %2941 = vmatprep.subr.mxu0 0.0
    %2942 = vmatpush1.msra.mxu0 0.0
    %2943 = vmatprep.subr.mxu0 0.0
    %2944 = vmatpush1.msra.mxu0 0.0
    %2945 = vmatprep.subr.mxu0 0.0
    %2946 = vmatpush1.msra.mxu0 0.0
    %2947 = vmatprep.subr.mxu0 0.0
    %2948 = vmatpush1.msra.mxu0 0.0
    %2949 = vmatprep.subr.mxu0 0.0
    %2950 = vmatpush1.msra.mxu0 0.0
    %2951 = vmatprep.subr.mxu0 0.0
    %2952 = vmatpush1.msra.mxu0 0.0
    %2953 = vmatprep.subr.mxu0 0.0
    %2954 = vmatpush1.msra.mxu0 0.0
    %2955 = vmatprep.subr.mxu0 0.0
    %2956 = vmatpush1.msra.mxu0 0.0
    %2957 = vmatprep.subr.mxu0 0.0
    %2958 = vmatpush1.msra.mxu0 0.0
    %2959 = vmatprep.subr.mxu0 0.0
    %2960 = vmatpush1.msra.mxu0 0.0
    %2961 = vmatprep.subr.mxu0 0.0
    %2962 = vmatpush1.msra.mxu0 0.0
    %2963 = vmatprep.subr.mxu0 0.0
    %2964 = vmatpush1.msra.mxu0 0.0
    %2965 = vmatprep.subr.mxu0 0.0
    %2966 = vmatpush1.msra.mxu0 0.0
    %2967 = vmatprep.subr.mxu0 0.0
    %2968 = vmatpush1.msra.mxu0 0.0
    %2969 = vmatprep.subr.mxu0 0.0
    %2970 = vmatpush1.msra.mxu0 0.0
    %2971 = vmatprep.subr.mxu0 0.0
    %2972 = vmatpush1.msra.mxu0 0.0
    %2973 = vmatprep.subr.mxu0 0.0
    %2974 = vmatpush1.msra.mxu0 0.0
    %2975 = vmatprep.subr.mxu0 0.0
    %2976 = vmatpush1.msra.mxu0 0.0
    %2977 = vmatprep.subr.mxu0 0.0
    %2978 = vmatpush1.msra.mxu0 0.0
    %2979 = vmatprep.subr.mxu0 0.0
    %2980 = vmatpush1.msra.mxu0 0.0
    %2981 = vmatprep.mubr.f32.mxu0 0.0
    %2982 = vmatmul.mubr.f32.gmra.mrb[0].mxu0 %v2915
    %v2983 = vpop.f32.mrb[0].mxu0
    %v2984 = vadd.f32 0.0, %v2983
    %v2985 = vpop.f32.mrb[0].mxu0
    %2986 = vdwg.mxu0
    %2987 = vrot.lane.b32.xlu0 %v2381, 56
    %v2988 = vpop.permute.xlu0 %2987
    %v2991 = vsel %vm317, %v2910, 0
    %2993 = vmatprep.subr.mxu0 0.0
    %2994 = vmatpush1.msra.mxu0 %v2988
    %2995 = vmatprep.subr.mxu0 0.0
    %2996 = vmatpush1.msra.mxu0 0.0
    %2997 = vmatprep.subr.mxu0 0.0
    %2998 = vmatpush1.msra.mxu0 0.0
    %2999 = vmatprep.subr.mxu0 0.0
    %3000 = vmatpush1.msra.mxu0 0.0
    %3001 = vmatprep.subr.mxu0 0.0
    %3002 = vmatpush1.msra.mxu0 0.0
    %3003 = vmatprep.subr.mxu0 0.0
    %3004 = vmatpush1.msra.mxu0 0.0
    %3005 = vmatprep.subr.mxu0 0.0
    %3006 = vmatpush1.msra.mxu0 0.0
    %3007 = vmatprep.subr.mxu0 0.0
    %3008 = vmatpush1.msra.mxu0 0.0
    %3009 = vmatprep.subr.mxu0 0.0
    %3010 = vmatpush1.msra.mxu0 0.0
    %3011 = vmatprep.subr.mxu0 0.0
    %3012 = vmatpush1.msra.mxu0 0.0
    %3013 = vmatprep.subr.mxu0 0.0
    %3014 = vmatpush1.msra.mxu0 0.0
    %3015 = vmatprep.subr.mxu0 0.0
    %3016 = vmatpush1.msra.mxu0 0.0
    %3017 = vmatprep.subr.mxu0 0.0
    %3018 = vmatpush1.msra.mxu0 0.0
    %3019 = vmatprep.subr.mxu0 0.0
    %3020 = vmatpush1.msra.mxu0 0.0
    %3021 = vmatprep.subr.mxu0 0.0
    %3022 = vmatpush1.msra.mxu0 0.0
    %3023 = vmatprep.subr.mxu0 0.0
    %3024 = vmatpush1.msra.mxu0 0.0
    %3025 = vmatprep.subr.mxu0 0.0
    %3026 = vmatpush1.msra.mxu0 0.0
    %3027 = vmatprep.subr.mxu0 0.0
    %3028 = vmatpush1.msra.mxu0 0.0
    %3029 = vmatprep.subr.mxu0 0.0
    %3030 = vmatpush1.msra.mxu0 0.0
    %3031 = vmatprep.subr.mxu0 0.0
    %3032 = vmatpush1.msra.mxu0 0.0
    %3033 = vmatprep.subr.mxu0 0.0
    %3034 = vmatpush1.msra.mxu0 0.0
    %3035 = vmatprep.subr.mxu0 0.0
    %3036 = vmatpush1.msra.mxu0 0.0
    %3037 = vmatprep.subr.mxu0 0.0
    %3038 = vmatpush1.msra.mxu0 0.0
    %3039 = vmatprep.subr.mxu0 0.0
    %3040 = vmatpush1.msra.mxu0 0.0
    %3041 = vmatprep.subr.mxu0 0.0
    %3042 = vmatpush1.msra.mxu0 0.0
    %3043 = vmatprep.subr.mxu0 0.0
    %3044 = vmatpush1.msra.mxu0 0.0
    %3045 = vmatprep.subr.mxu0 0.0
    %3046 = vmatpush1.msra.mxu0 0.0
    %3047 = vmatprep.subr.mxu0 0.0
    %3048 = vmatpush1.msra.mxu0 0.0
    %3049 = vmatprep.subr.mxu0 0.0
    %3050 = vmatpush1.msra.mxu0 0.0
    %3051 = vmatprep.subr.mxu0 0.0
    %3052 = vmatpush1.msra.mxu0 0.0
    %3053 = vmatprep.subr.mxu0 0.0
    %3054 = vmatpush1.msra.mxu0 0.0
    %3055 = vmatprep.subr.mxu0 0.0
    %3056 = vmatpush1.msra.mxu0 0.0
    %3057 = vmatprep.mubr.f32.mxu0 0.0
    %3058 = vmatmul.mubr.f32.gmra.mrb[0].mxu0 %v2991
    %v3059 = vpop.f32.mrb[0].mxu0
    %v3060 = vadd.f32 0.0, %v3059
    %v3061 = vpop.f32.mrb[0].mxu0
    %3062 = vdwg.mxu0
    %3063 = vrot.lane.b32.xlu0 %v2376, 112
    %v3064 = vpop.permute.xlu0 %3063
    %3065 = vrot.lane.b32.xlu0 %v2376, 80
    %v3066 = vpop.permute.xlu0 %3065
    %v3067 = vsel %vm317, %v3064, 0
    %v3069 = vsel %vm317, %v3066, 0
    %3071 = vmatprep.subr.mxu0 0.0
    %3072 = vmatpush1.xpose.msra.mxu0 %v3069
    %3073 = vmatprep.subr.mxu0 0.0
    %3074 = vmatpush1.xpose.msra.mxu0 0.0
    %3075 = vmatprep.subr.mxu0 0.0
    %3076 = vmatpush1.xpose.msra.mxu0 0.0
    %3077 = vmatprep.subr.mxu0 0.0
    %3078 = vmatpush1.xpose.msra.mxu0 0.0
    %3079 = vmatprep.subr.mxu0 0.0
    %3080 = vmatpush1.xpose.msra.mxu0 0.0
    %3081 = vmatprep.subr.mxu0 0.0
    %3082 = vmatpush1.xpose.msra.mxu0 0.0
    %3083 = vmatprep.subr.mxu0 0.0
    %3084 = vmatpush1.xpose.msra.mxu0 0.0
    %3085 = vmatprep.subr.mxu0 0.0
    %3086 = vmatpush1.xpose.msra.mxu0 0.0
    %3087 = vmatprep.subr.mxu0 0.0
    %3088 = vmatpush1.xpose.msra.mxu0 0.0
    %3089 = vmatprep.subr.mxu0 0.0
    %3090 = vmatpush1.xpose.msra.mxu0 0.0
    %3091 = vmatprep.subr.mxu0 0.0
    %3092 = vmatpush1.xpose.msra.mxu0 0.0
    %3093 = vmatprep.subr.mxu0 0.0
    %3094 = vmatpush1.xpose.msra.mxu0 0.0
    %3095 = vmatprep.subr.mxu0 0.0
    %3096 = vmatpush1.xpose.msra.mxu0 0.0
    %3097 = vmatprep.subr.mxu0 0.0
    %3098 = vmatpush1.xpose.msra.mxu0 0.0
    %3099 = vmatprep.subr.mxu0 0.0
    %3100 = vmatpush1.xpose.msra.mxu0 0.0
    %3101 = vmatprep.subr.mxu0 0.0
    %3102 = vmatpush1.xpose.msra.mxu0 0.0
    %3103 = vmatprep.subr.mxu0 0.0
    %3104 = vmatpush1.xpose.msra.mxu0 0.0
    %3105 = vmatprep.subr.mxu0 0.0
    %3106 = vmatpush1.xpose.msra.mxu0 0.0
    %3107 = vmatprep.subr.mxu0 0.0
    %3108 = vmatpush1.xpose.msra.mxu0 0.0
    %3109 = vmatprep.subr.mxu0 0.0
    %3110 = vmatpush1.xpose.msra.mxu0 0.0
    %3111 = vmatprep.subr.mxu0 0.0
    %3112 = vmatpush1.xpose.msra.mxu0 0.0
    %3113 = vmatprep.subr.mxu0 0.0
    %3114 = vmatpush1.xpose.msra.mxu0 0.0
    %3115 = vmatprep.subr.mxu0 0.0
    %3116 = vmatpush1.xpose.msra.mxu0 0.0
    %3117 = vmatprep.subr.mxu0 0.0
    %3118 = vmatpush1.xpose.msra.mxu0 0.0
    %3119 = vmatprep.subr.mxu0 0.0
    %3120 = vmatpush1.xpose.msra.mxu0 0.0
    %3121 = vmatprep.subr.mxu0 0.0
    %3122 = vmatpush1.xpose.msra.mxu0 0.0
    %3123 = vmatprep.subr.mxu0 0.0
    %3124 = vmatpush1.xpose.msra.mxu0 0.0
    %3125 = vmatprep.subr.mxu0 0.0
    %3126 = vmatpush1.xpose.msra.mxu0 0.0
    %3127 = vmatprep.subr.mxu0 0.0
    %3128 = vmatpush1.xpose.msra.mxu0 0.0
    %3129 = vmatprep.subr.mxu0 0.0
    %3130 = vmatpush1.xpose.msra.mxu0 0.0
    %3131 = vmatprep.subr.mxu0 0.0
    %3132 = vmatpush1.xpose.msra.mxu0 0.0
    %3133 = vmatprep.subr.mxu0 0.0
    %3134 = vmatpush1.xpose.msra.mxu0 0.0
    %3135 = vmatprep.mubr.f32.mxu0 0.0
    %3136 = vmatmul.mubr.f32.gmra.mrb[0].mxu0 %v3067
    %v3137 = vpop.f32.mrb[0].mxu0
    %v3138 = vadd.f32 0.0, %v3137
    %v3139 = vpop.f32.mrb[0].mxu0
    %3140 = vdwg.mxu0
    %3141 = vrot.lane.b32.xlu0 %v2381, 112
    %v3142 = vpop.permute.xlu0 %3141
    %3143 = vrot.lane.b32.xlu0 %v2381, 80
    %v3144 = vpop.permute.xlu0 %3143
    %v3145 = vsel %vm317, %v3142, 0
    %v3147 = vsel %vm317, %v3144, 0
    %3149 = vmatprep.subr.mxu0 0.0
    %3150 = vmatpush1.xpose.msra.mxu0 %v3147
    %3151 = vmatprep.subr.mxu0 0.0
    %3152 = vmatpush1.xpose.msra.mxu0 0.0
    %3153 = vmatprep.subr.mxu0 0.0
    %3154 = vmatpush1.xpose.msra.mxu0 0.0
    %3155 = vmatprep.subr.mxu0 0.0
    %3156 = vmatpush1.xpose.msra.mxu0 0.0
    %3157 = vmatprep.subr.mxu0 0.0
    %3158 = vmatpush1.xpose.msra.mxu0 0.0
    %3159 = vmatprep.subr.mxu0 0.0
    %3160 = vmatpush1.xpose.msra.mxu0 0.0
    %3161 = vmatprep.subr.mxu0 0.0
    %3162 = vmatpush1.xpose.msra.mxu0 0.0
    %3163 = vmatprep.subr.mxu0 0.0
    %3164 = vmatpush1.xpose.msra.mxu0 0.0
    %3165 = vmatprep.subr.mxu0 0.0
    %3166 = vmatpush1.xpose.msra.mxu0 0.0
    %3167 = vmatprep.subr.mxu0 0.0
    %3168 = vmatpush1.xpose.msra.mxu0 0.0
    %3169 = vmatprep.subr.mxu0 0.0
    %3170 = vmatpush1.xpose.msra.mxu0 0.0
    %3171 = vmatprep.subr.mxu0 0.0
    %3172 = vmatpush1.xpose.msra.mxu0 0.0
    %3173 = vmatprep.subr.mxu0 0.0
    %3174 = vmatpush1.xpose.msra.mxu0 0.0
    %3175 = vmatprep.subr.mxu0 0.0
    %3176 = vmatpush1.xpose.msra.mxu0 0.0
    %3177 = vmatprep.subr.mxu0 0.0
    %3178 = vmatpush1.xpose.msra.mxu0 0.0
    %3179 = vmatprep.subr.mxu0 0.0
    %3180 = vmatpush1.xpose.msra.mxu0 0.0
    %3181 = vmatprep.subr.mxu0 0.0
    %3182 = vmatpush1.xpose.msra.mxu0 0.0
    %3183 = vmatprep.subr.mxu0 0.0
    %3184 = vmatpush1.xpose.msra.mxu0 0.0
    %3185 = vmatprep.subr.mxu0 0.0
    %3186 = vmatpush1.xpose.msra.mxu0 0.0
    %3187 = vmatprep.subr.mxu0 0.0
    %3188 = vmatpush1.xpose.msra.mxu0 0.0
    %3189 = vmatprep.subr.mxu0 0.0
    %3190 = vmatpush1.xpose.msra.mxu0 0.0
    %3191 = vmatprep.subr.mxu0 0.0
    %3192 = vmatpush1.xpose.msra.mxu0 0.0
    %3193 = vmatprep.subr.mxu0 0.0
    %3194 = vmatpush1.xpose.msra.mxu0 0.0
    %3195 = vmatprep.subr.mxu0 0.0
    %3196 = vmatpush1.xpose.msra.mxu0 0.0
    %3197 = vmatprep.subr.mxu0 0.0
    %3198 = vmatpush1.xpose.msra.mxu0 0.0
    %3199 = vmatprep.subr.mxu0 0.0
    %3200 = vmatpush1.xpose.msra.mxu0 0.0
    %3201 = vmatprep.subr.mxu0 0.0
    %3202 = vmatpush1.xpose.msra.mxu0 0.0
    %3203 = vmatprep.subr.mxu0 0.0
    %3204 = vmatpush1.xpose.msra.mxu0 0.0
    %3205 = vmatprep.subr.mxu0 0.0
    %3206 = vmatpush1.xpose.msra.mxu0 0.0
    %3207 = vmatprep.subr.mxu0 0.0
    %3208 = vmatpush1.xpose.msra.mxu0 0.0
    %3209 = vmatprep.subr.mxu0 0.0
    %3210 = vmatpush1.xpose.msra.mxu0 0.0
    %3211 = vmatprep.subr.mxu0 0.0
    %3212 = vmatpush1.xpose.msra.mxu0 0.0
    %3213 = vmatprep.mubr.f32.mxu0 0.0
    %3214 = vmatmul.mubr.f32.gmra.mrb[0].mxu0 %v3145
    %v3215 = vpop.f32.mrb[0].mxu0
    %v3216 = vadd.f32 0.0, %v3215
    %v3217 = vpop.f32.mrb[0].mxu0
    %3218 = vdwg.mxu0
    %v3219 = vmul.f32 %v3138, 0.35355338
    %v3220 = vmul.f32 %v3216, 0.35355338
    %v3221 = vsel %vm2395, %v3219, -1e+09
    %v3222 = vsel %vm2396, %v3220, -1e+09
    %v3223 = vsel %vm317, %v3221, -inf
    %3224 = vmax.xlane.f32.xlu0 %v3223
    %v3225 = vpop.xlane.xlu0 %3224
    %v3226 = vsel %vm317, %v3222, -inf
    %3227 = vmax.xlane.f32.xlu0 %v3226
    %v3228 = vpop.xlane.xlu0 %3227
    %v3229 = vsub.f32 %v3221, %v3225
    %v3230 = vsub.f32 %v3222, %v3228
    %v3231 = vmul.f32 %v3229, 1.442695
    %v3232 = vpow.pop %v3231
    %v3233 = vmul.f32 %v3230, 1.442695
    %v3234 = vpow.pop %v3233
    %v3235 = vsel %vm317, %v3232, 0.0
    %3236 = vadd.xlane.f32.xlu0 %v3235
    %v3237 = vpop.xlane.xlu0 %3236
    %v3238 = vsel %vm317, %v3234, 0.0
    %3239 = vadd.xlane.f32.xlu0 %v3238
    %v3240 = vpop.xlane.xlu0 %3239
    %v3241 = vrcp.pop %v3237
    %v3242 = vrcp.pop %v3240
    %v3243 = vmul.f32 %v3232, %v3241
    %v3244 = vmul.f32 %v3234, %v3242
    %3245 = vrot.lane.b32.xlu0 %v2376, 48
    %v3246 = vpop.permute.xlu0 %3245
    %v3249 = vsel %vm317, %v3243, 0
    %3251 = vmatprep.subr.mxu0 0.0
    %3252 = vmatpush1.msra.mxu0 %v3246
    %3253 = vmatprep.subr.mxu0 0.0
    %3254 = vmatpush1.msra.mxu0 0.0
    %3255 = vmatprep.subr.mxu0 0.0
    %3256 = vmatpush1.msra.mxu0 0.0
    %3257 = vmatprep.subr.mxu0 0.0
    %3258 = vmatpush1.msra.mxu0 0.0
    %3259 = vmatprep.subr.mxu0 0.0
    %3260 = vmatpush1.msra.mxu0 0.0
    %3261 = vmatprep.subr.mxu0 0.0
    %3262 = vmatpush1.msra.mxu0 0.0
    %3263 = vmatprep.subr.mxu0 0.0
    %3264 = vmatpush1.msra.mxu0 0.0
    %3265 = vmatprep.subr.mxu0 0.0
    %3266 = vmatpush1.msra.mxu0 0.0
    %3267 = vmatprep.subr.mxu0 0.0
    %3268 = vmatpush1.msra.mxu0 0.0
    %3269 = vmatprep.subr.mxu0 0.0
    %3270 = vmatpush1.msra.mxu0 0.0
    %3271 = vmatprep.subr.mxu0 0.0
    %3272 = vmatpush1.msra.mxu0 0.0
    %3273 = vmatprep.subr.mxu0 0.0
    %3274 = vmatpush1.msra.mxu0 0.0
    %3275 = vmatprep.subr.mxu0 0.0
    %3276 = vmatpush1.msra.mxu0 0.0
    %3277 = vmatprep.subr.mxu0 0.0
    %3278 = vmatpush1.msra.mxu0 0.0
    %3279 = vmatprep.subr.mxu0 0.0
    %3280 = vmatpush1.msra.mxu0 0.0
    %3281 = vmatprep.subr.mxu0 0.0
    %3282 = vmatpush1.msra.mxu0 0.0
    %3283 = vmatprep.subr.mxu0 0.0
    %3284 = vmatpush1.msra.mxu0 0.0
    %3285 = vmatprep.subr.mxu0 0.0
    %3286 = vmatpush1.msra.mxu0 0.0
    %3287 = vmatprep.subr.mxu0 0.0
    %3288 = vmatpush1.msra.mxu0 0.0
    %3289 = vmatprep.subr.mxu0 0.0
    %3290 = vmatpush1.msra.mxu0 0.0
    %3291 = vmatprep.subr.mxu0 0.0
    %3292 = vmatpush1.msra.mxu0 0.0
    %3293 = vmatprep.subr.mxu0 0.0
    %3294 = vmatpush1.msra.mxu0 0.0
    %3295 = vmatprep.subr.mxu0 0.0
    %3296 = vmatpush1.msra.mxu0 0.0
    %3297 = vmatprep.subr.mxu0 0.0
    %3298 = vmatpush1.msra.mxu0 0.0
    %3299 = vmatprep.subr.mxu0 0.0
    %3300 = vmatpush1.msra.mxu0 0.0
    %3301 = vmatprep.subr.mxu0 0.0
    %3302 = vmatpush1.msra.mxu0 0.0
    %3303 = vmatprep.subr.mxu0 0.0
    %3304 = vmatpush1.msra.mxu0 0.0
    %3305 = vmatprep.subr.mxu0 0.0
    %3306 = vmatpush1.msra.mxu0 0.0
    %3307 = vmatprep.subr.mxu0 0.0
    %3308 = vmatpush1.msra.mxu0 0.0
    %3309 = vmatprep.subr.mxu0 0.0
    %3310 = vmatpush1.msra.mxu0 0.0
    %3311 = vmatprep.subr.mxu0 0.0
    %3312 = vmatpush1.msra.mxu0 0.0
    %3313 = vmatprep.subr.mxu0 0.0
    %3314 = vmatpush1.msra.mxu0 0.0
    %3315 = vmatprep.mubr.f32.mxu0 0.0
    %3316 = vmatmul.mubr.f32.gmra.mrb[0].mxu0 %v3249
    %v3317 = vpop.f32.mrb[0].mxu0
    %v3318 = vadd.f32 0.0, %v3317
    %v3319 = vpop.f32.mrb[0].mxu0
    %3320 = vdwg.mxu0
    %3321 = vrot.lane.b32.xlu0 %v2381, 48
    %v3322 = vpop.permute.xlu0 %3321
    %v3325 = vsel %vm317, %v3244, 0
    %3327 = vmatprep.subr.mxu0 0.0
    %3328 = vmatpush1.msra.mxu0 %v3322
    %3329 = vmatprep.subr.mxu0 0.0
    %3330 = vmatpush1.msra.mxu0 0.0
    %3331 = vmatprep.subr.mxu0 0.0
    %3332 = vmatpush1.msra.mxu0 0.0
    %3333 = vmatprep.subr.mxu0 0.0
    %3334 = vmatpush1.msra.mxu0 0.0
    %3335 = vmatprep.subr.mxu0 0.0
    %3336 = vmatpush1.msra.mxu0 0.0
    %3337 = vmatprep.subr.mxu0 0.0
    %3338 = vmatpush1.msra.mxu0 0.0
    %3339 = vmatprep.subr.mxu0 0.0
    %3340 = vmatpush1.msra.mxu0 0.0
    %3341 = vmatprep.subr.mxu0 0.0
    %3342 = vmatpush1.msra.mxu0 0.0
    %3343 = vmatprep.subr.mxu0 0.0
    %3344 = vmatpush1.msra.mxu0 0.0
    %3345 = vmatprep.subr.mxu0 0.0
    %3346 = vmatpush1.msra.mxu0 0.0
    %3347 = vmatprep.subr.mxu0 0.0
    %3348 = vmatpush1.msra.mxu0 0.0
    %3349 = vmatprep.subr.mxu0 0.0
    %3350 = vmatpush1.msra.mxu0 0.0
    %3351 = vmatprep.subr.mxu0 0.0
    %3352 = vmatpush1.msra.mxu0 0.0
    %3353 = vmatprep.subr.mxu0 0.0
    %3354 = vmatpush1.msra.mxu0 0.0
    %3355 = vmatprep.subr.mxu0 0.0
    %3356 = vmatpush1.msra.mxu0 0.0
    %3357 = vmatprep.subr.mxu0 0.0
    %3358 = vmatpush1.msra.mxu0 0.0
    %3359 = vmatprep.subr.mxu0 0.0
    %3360 = vmatpush1.msra.mxu0 0.0
    %3361 = vmatprep.subr.mxu0 0.0
    %3362 = vmatpush1.msra.mxu0 0.0
    %3363 = vmatprep.subr.mxu0 0.0
    %3364 = vmatpush1.msra.mxu0 0.0
    %3365 = vmatprep.subr.mxu0 0.0
    %3366 = vmatpush1.msra.mxu0 0.0
    %3367 = vmatprep.subr.mxu0 0.0
    %3368 = vmatpush1.msra.mxu0 0.0
    %3369 = vmatprep.subr.mxu0 0.0
    %3370 = vmatpush1.msra.mxu0 0.0
    %3371 = vmatprep.subr.mxu0 0.0
    %3372 = vmatpush1.msra.mxu0 0.0
    %3373 = vmatprep.subr.mxu0 0.0
    %3374 = vmatpush1.msra.mxu0 0.0
    %3375 = vmatprep.subr.mxu0 0.0
    %3376 = vmatpush1.msra.mxu0 0.0
    %3377 = vmatprep.subr.mxu0 0.0
    %3378 = vmatpush1.msra.mxu0 0.0
    %3379 = vmatprep.subr.mxu0 0.0
    %3380 = vmatpush1.msra.mxu0 0.0
    %3381 = vmatprep.subr.mxu0 0.0
    %3382 = vmatpush1.msra.mxu0 0.0
    %3383 = vmatprep.subr.mxu0 0.0
    %3384 = vmatpush1.msra.mxu0 0.0
    %3385 = vmatprep.subr.mxu0 0.0
    %3386 = vmatpush1.msra.mxu0 0.0
    %3387 = vmatprep.subr.mxu0 0.0
    %3388 = vmatpush1.msra.mxu0 0.0
    %3389 = vmatprep.subr.mxu0 0.0
    %3390 = vmatpush1.msra.mxu0 0.0
    %3391 = vmatprep.mubr.f32.mxu0 0.0
    %3392 = vmatmul.mubr.f32.gmra.mrb[0].mxu0 %v3325
    %v3393 = vpop.f32.mrb[0].mxu0
    %v3394 = vadd.f32 0.0, %v3393
    %v3395 = vpop.f32.mrb[0].mxu0
    %3396 = vdwg.mxu0
    %3397 = vrot.lane.b32.xlu0 %v2376, 104
    %v3398 = vpop.permute.xlu0 %3397
    %3399 = vrot.lane.b32.xlu0 %v2376, 72
    %v3400 = vpop.permute.xlu0 %3399
    %v3401 = vsel %vm317, %v3398, 0
    %v3403 = vsel %vm317, %v3400, 0
    %3405 = vmatprep.subr.mxu0 0.0
    %3406 = vmatpush1.xpose.msra.mxu0 %v3403
    %3407 = vmatprep.subr.mxu0 0.0
    %3408 = vmatpush1.xpose.msra.mxu0 0.0
    %3409 = vmatprep.subr.mxu0 0.0
    %3410 = vmatpush1.xpose.msra.mxu0 0.0
    %3411 = vmatprep.subr.mxu0 0.0
    %3412 = vmatpush1.xpose.msra.mxu0 0.0
    %3413 = vmatprep.subr.mxu0 0.0
    %3414 = vmatpush1.xpose.msra.mxu0 0.0
    %3415 = vmatprep.subr.mxu0 0.0
    %3416 = vmatpush1.xpose.msra.mxu0 0.0
    %3417 = vmatprep.subr.mxu0 0.0
    %3418 = vmatpush1.xpose.msra.mxu0 0.0
    %3419 = vmatprep.subr.mxu0 0.0
    %3420 = vmatpush1.xpose.msra.mxu0 0.0
    %3421 = vmatprep.subr.mxu0 0.0
    %3422 = vmatpush1.xpose.msra.mxu0 0.0
    %3423 = vmatprep.subr.mxu0 0.0
    %3424 = vmatpush1.xpose.msra.mxu0 0.0
    %3425 = vmatprep.subr.mxu0 0.0
    %3426 = vmatpush1.xpose.msra.mxu0 0.0
    %3427 = vmatprep.subr.mxu0 0.0
    %3428 = vmatpush1.xpose.msra.mxu0 0.0
    %3429 = vmatprep.subr.mxu0 0.0
    %3430 = vmatpush1.xpose.msra.mxu0 0.0
    %3431 = vmatprep.subr.mxu0 0.0
    %3432 = vmatpush1.xpose.msra.mxu0 0.0
    %3433 = vmatprep.subr.mxu0 0.0
    %3434 = vmatpush1.xpose.msra.mxu0 0.0
    %3435 = vmatprep.subr.mxu0 0.0
    %3436 = vmatpush1.xpose.msra.mxu0 0.0
    %3437 = vmatprep.subr.mxu0 0.0
    %3438 = vmatpush1.xpose.msra.mxu0 0.0
    %3439 = vmatprep.subr.mxu0 0.0
    %3440 = vmatpush1.xpose.msra.mxu0 0.0
    %3441 = vmatprep.subr.mxu0 0.0
    %3442 = vmatpush1.xpose.msra.mxu0 0.0
    %3443 = vmatprep.subr.mxu0 0.0
    %3444 = vmatpush1.xpose.msra.mxu0 0.0
    %3445 = vmatprep.subr.mxu0 0.0
    %3446 = vmatpush1.xpose.msra.mxu0 0.0
    %3447 = vmatprep.subr.mxu0 0.0
    %3448 = vmatpush1.xpose.msra.mxu0 0.0
    %3449 = vmatprep.subr.mxu0 0.0
    %3450 = vmatpush1.xpose.msra.mxu0 0.0
    %3451 = vmatprep.subr.mxu0 0.0
    %3452 = vmatpush1.xpose.msra.mxu0 0.0
    %3453 = vmatprep.subr.mxu0 0.0
    %3454 = vmatpush1.xpose.msra.mxu0 0.0
    %3455 = vmatprep.subr.mxu0 0.0
    %3456 = vmatpush1.xpose.msra.mxu0 0.0
    %3457 = vmatprep.subr.mxu0 0.0
    %3458 = vmatpush1.xpose.msra.mxu0 0.0
    %3459 = vmatprep.subr.mxu0 0.0
    %3460 = vmatpush1.xpose.msra.mxu0 0.0
    %3461 = vmatprep.subr.mxu0 0.0
    %3462 = vmatpush1.xpose.msra.mxu0 0.0
    %3463 = vmatprep.subr.mxu0 0.0
    %3464 = vmatpush1.xpose.msra.mxu0 0.0
    %3465 = vmatprep.subr.mxu0 0.0
    %3466 = vmatpush1.xpose.msra.mxu0 0.0
    %3467 = vmatprep.subr.mxu0 0.0
    %3468 = vmatpush1.xpose.msra.mxu0 0.0
    %3469 = vmatprep.mubr.f32.mxu0 0.0
    %3470 = vmatmul.mubr.f32.gmra.mrb[0].mxu0 %v3401
    %v3471 = vpop.f32.mrb[0].mxu0
    %v3472 = vadd.f32 0.0, %v3471
    %v3473 = vpop.f32.mrb[0].mxu0
    %3474 = vdwg.mxu0
    %3475 = vrot.lane.b32.xlu0 %v2381, 104
    %v3476 = vpop.permute.xlu0 %3475
    %3477 = vrot.lane.b32.xlu0 %v2381, 72
    %v3478 = vpop.permute.xlu0 %3477
    %v3479 = vsel %vm317, %v3476, 0
    %v3481 = vsel %vm317, %v3478, 0
    %3483 = vmatprep.subr.mxu0 0.0
    %3484 = vmatpush1.xpose.msra.mxu0 %v3481
    %3485 = vmatprep.subr.mxu0 0.0
    %3486 = vmatpush1.xpose.msra.mxu0 0.0
    %3487 = vmatprep.subr.mxu0 0.0
    %3488 = vmatpush1.xpose.msra.mxu0 0.0
    %3489 = vmatprep.subr.mxu0 0.0
    %3490 = vmatpush1.xpose.msra.mxu0 0.0
    %3491 = vmatprep.subr.mxu0 0.0
    %3492 = vmatpush1.xpose.msra.mxu0 0.0
    %3493 = vmatprep.subr.mxu0 0.0
    %3494 = vmatpush1.xpose.msra.mxu0 0.0
    %3495 = vmatprep.subr.mxu0 0.0
    %3496 = vmatpush1.xpose.msra.mxu0 0.0
    %3497 = vmatprep.subr.mxu0 0.0
    %3498 = vmatpush1.xpose.msra.mxu0 0.0
    %3499 = vmatprep.subr.mxu0 0.0
    %3500 = vmatpush1.xpose.msra.mxu0 0.0
    %3501 = vmatprep.subr.mxu0 0.0
    %3502 = vmatpush1.xpose.msra.mxu0 0.0
    %3503 = vmatprep.subr.mxu0 0.0
    %3504 = vmatpush1.xpose.msra.mxu0 0.0
    %3505 = vmatprep.subr.mxu0 0.0
    %3506 = vmatpush1.xpose.msra.mxu0 0.0
    %3507 = vmatprep.subr.mxu0 0.0
    %3508 = vmatpush1.xpose.msra.mxu0 0.0
    %3509 = vmatprep.subr.mxu0 0.0
    %3510 = vmatpush1.xpose.msra.mxu0 0.0
    %3511 = vmatprep.subr.mxu0 0.0
    %3512 = vmatpush1.xpose.msra.mxu0 0.0
    %3513 = vmatprep.subr.mxu0 0.0
    %3514 = vmatpush1.xpose.msra.mxu0 0.0
    %3515 = vmatprep.subr.mxu0 0.0
    %3516 = vmatpush1.xpose.msra.mxu0 0.0
    %3517 = vmatprep.subr.mxu0 0.0
    %3518 = vmatpush1.xpose.msra.mxu0 0.0
    %3519 = vmatprep.subr.mxu0 0.0
    %3520 = vmatpush1.xpose.msra.mxu0 0.0
    %3521 = vmatprep.subr.mxu0 0.0
    %3522 = vmatpush1.xpose.msra.mxu0 0.0
    %3523 = vmatprep.subr.mxu0 0.0
    %3524 = vmatpush1.xpose.msra.mxu0 0.0
    %3525 = vmatprep.subr.mxu0 0.0
    %3526 = vmatpush1.xpose.msra.mxu0 0.0
    %3527 = vmatprep.subr.mxu0 0.0
    %3528 = vmatpush1.xpose.msra.mxu0 0.0
    %3529 = vmatprep.subr.mxu0 0.0
    %3530 = vmatpush1.xpose.msra.mxu0 0.0
    %3531 = vmatprep.subr.mxu0 0.0
    %3532 = vmatpush1.xpose.msra.mxu0 0.0
    %3533 = vmatprep.subr.mxu0 0.0
    %3534 = vmatpush1.xpose.msra.mxu0 0.0
    %3535 = vmatprep.subr.mxu0 0.0
    %3536 = vmatpush1.xpose.msra.mxu0 0.0
    %3537 = vmatprep.subr.mxu0 0.0
    %3538 = vmatpush1.xpose.msra.mxu0 0.0
    %3539 = vmatprep.subr.mxu0 0.0
    %3540 = vmatpush1.xpose.msra.mxu0 0.0
    %3541 = vmatprep.subr.mxu0 0.0
    %3542 = vmatpush1.xpose.msra.mxu0 0.0
    %3543 = vmatprep.subr.mxu0 0.0
    %3544 = vmatpush1.xpose.msra.mxu0 0.0
    %3545 = vmatprep.subr.mxu0 0.0
    %3546 = vmatpush1.xpose.msra.mxu0 0.0
    %3547 = vmatprep.mubr.f32.mxu0 0.0
    %3548 = vmatmul.mubr.f32.gmra.mrb[0].mxu0 %v3479
    %v3549 = vpop.f32.mrb[0].mxu0
    %v3550 = vadd.f32 0.0, %v3549
    %v3551 = vpop.f32.mrb[0].mxu0
    %3552 = vdwg.mxu0
    %v3553 = vmul.f32 %v3472, 0.35355338
    %v3554 = vmul.f32 %v3550, 0.35355338
    %v3555 = vsel %vm2395, %v3553, -1e+09
    %v3556 = vsel %vm2396, %v3554, -1e+09
    %v3557 = vsel %vm317, %v3555, -inf
    %3558 = vmax.xlane.f32.xlu0 %v3557
    %v3559 = vpop.xlane.xlu0 %3558
    %v3560 = vsel %vm317, %v3556, -inf
    %3561 = vmax.xlane.f32.xlu0 %v3560
    %v3562 = vpop.xlane.xlu0 %3561
    %v3563 = vsub.f32 %v3555, %v3559
    %v3564 = vsub.f32 %v3556, %v3562
    %v3565 = vmul.f32 %v3563, 1.442695
    %v3566 = vpow.pop %v3565
    %v3567 = vmul.f32 %v3564, 1.442695
    %v3568 = vpow.pop %v3567
    %v3569 = vsel %vm317, %v3566, 0.0
    %3570 = vadd.xlane.f32.xlu0 %v3569
    %v3571 = vpop.xlane.xlu0 %3570
    %v3572 = vsel %vm317, %v3568, 0.0
    %3573 = vadd.xlane.f32.xlu0 %v3572
    %v3574 = vpop.xlane.xlu0 %3573
    %v3575 = vrcp.pop %v3571
    %v3576 = vrcp.pop %v3574
    %v3577 = vmul.f32 %v3566, %v3575
    %v3578 = vmul.f32 %v3568, %v3576
    %3579 = vrot.lane.b32.xlu0 %v2376, 40
    %v3580 = vpop.permute.xlu0 %3579
    %v3583 = vsel %vm317, %v3577, 0
    %3585 = vmatprep.subr.mxu0 0.0
    %3586 = vmatpush1.msra.mxu0 %v3580
    %3587 = vmatprep.subr.mxu0 0.0
    %3588 = vmatpush1.msra.mxu0 0.0
    %3589 = vmatprep.subr.mxu0 0.0
    %3590 = vmatpush1.msra.mxu0 0.0
    %3591 = vmatprep.subr.mxu0 0.0
    %3592 = vmatpush1.msra.mxu0 0.0
    %3593 = vmatprep.subr.mxu0 0.0
    %3594 = vmatpush1.msra.mxu0 0.0
    %3595 = vmatprep.subr.mxu0 0.0
    %3596 = vmatpush1.msra.mxu0 0.0
    %3597 = vmatprep.subr.mxu0 0.0
    %3598 = vmatpush1.msra.mxu0 0.0
    %3599 = vmatprep.subr.mxu0 0.0
    %3600 = vmatpush1.msra.mxu0 0.0
    %3601 = vmatprep.subr.mxu0 0.0
    %3602 = vmatpush1.msra.mxu0 0.0
    %3603 = vmatprep.subr.mxu0 0.0
    %3604 = vmatpush1.msra.mxu0 0.0
    %3605 = vmatprep.subr.mxu0 0.0
    %3606 = vmatpush1.msra.mxu0 0.0
    %3607 = vmatprep.subr.mxu0 0.0
    %3608 = vmatpush1.msra.mxu0 0.0
    %3609 = vmatprep.subr.mxu0 0.0
    %3610 = vmatpush1.msra.mxu0 0.0
    %3611 = vmatprep.subr.mxu0 0.0
    %3612 = vmatpush1.msra.mxu0 0.0
    %3613 = vmatprep.subr.mxu0 0.0
    %3614 = vmatpush1.msra.mxu0 0.0
    %3615 = vmatprep.subr.mxu0 0.0
    %3616 = vmatpush1.msra.mxu0 0.0
    %3617 = vmatprep.subr.mxu0 0.0
    %3618 = vmatpush1.msra.mxu0 0.0
    %3619 = vmatprep.subr.mxu0 0.0
    %3620 = vmatpush1.msra.mxu0 0.0
    %3621 = vmatprep.subr.mxu0 0.0
    %3622 = vmatpush1.msra.mxu0 0.0
    %3623 = vmatprep.subr.mxu0 0.0
    %3624 = vmatpush1.msra.mxu0 0.0
    %3625 = vmatprep.subr.mxu0 0.0
    %3626 = vmatpush1.msra.mxu0 0.0
    %3627 = vmatprep.subr.mxu0 0.0
    %3628 = vmatpush1.msra.mxu0 0.0
    %3629 = vmatprep.subr.mxu0 0.0
    %3630 = vmatpush1.msra.mxu0 0.0
    %3631 = vmatprep.subr.mxu0 0.0
    %3632 = vmatpush1.msra.mxu0 0.0
    %3633 = vmatprep.subr.mxu0 0.0
    %3634 = vmatpush1.msra.mxu0 0.0
    %3635 = vmatprep.subr.mxu0 0.0
    %3636 = vmatpush1.msra.mxu0 0.0
    %3637 = vmatprep.subr.mxu0 0.0
    %3638 = vmatpush1.msra.mxu0 0.0
    %3639 = vmatprep.subr.mxu0 0.0
    %3640 = vmatpush1.msra.mxu0 0.0
    %3641 = vmatprep.subr.mxu0 0.0
    %3642 = vmatpush1.msra.mxu0 0.0
    %3643 = vmatprep.subr.mxu0 0.0
    %3644 = vmatpush1.msra.mxu0 0.0
    %3645 = vmatprep.subr.mxu0 0.0
    %3646 = vmatpush1.msra.mxu0 0.0
    %3647 = vmatprep.subr.mxu0 0.0
    %3648 = vmatpush1.msra.mxu0 0.0
    %3649 = vmatprep.mubr.f32.mxu0 0.0
    %3650 = vmatmul.mubr.f32.gmra.mrb[0].mxu0 %v3583
    %v3651 = vpop.f32.mrb[0].mxu0
    %v3652 = vadd.f32 0.0, %v3651
    %v3653 = vpop.f32.mrb[0].mxu0
    %3654 = vdwg.mxu0
    %3655 = vrot.lane.b32.xlu0 %v2381, 40
    %v3656 = vpop.permute.xlu0 %3655
    %v3659 = vsel %vm317, %v3578, 0
    %3661 = vmatprep.subr.mxu0 0.0
    %3662 = vmatpush1.msra.mxu0 %v3656
    %3663 = vmatprep.subr.mxu0 0.0
    %3664 = vmatpush1.msra.mxu0 0.0
    %3665 = vmatprep.subr.mxu0 0.0
    %3666 = vmatpush1.msra.mxu0 0.0
    %3667 = vmatprep.subr.mxu0 0.0
    %3668 = vmatpush1.msra.mxu0 0.0
    %3669 = vmatprep.subr.mxu0 0.0
    %3670 = vmatpush1.msra.mxu0 0.0
    %3671 = vmatprep.subr.mxu0 0.0
    %3672 = vmatpush1.msra.mxu0 0.0
    %3673 = vmatprep.subr.mxu0 0.0
    %3674 = vmatpush1.msra.mxu0 0.0
    %3675 = vmatprep.subr.mxu0 0.0
    %3676 = vmatpush1.msra.mxu0 0.0
    %3677 = vmatprep.subr.mxu0 0.0
    %3678 = vmatpush1.msra.mxu0 0.0
    %3679 = vmatprep.subr.mxu0 0.0
    %3680 = vmatpush1.msra.mxu0 0.0
    %3681 = vmatprep.subr.mxu0 0.0
    %3682 = vmatpush1.msra.mxu0 0.0
    %3683 = vmatprep.subr.mxu0 0.0
    %3684 = vmatpush1.msra.mxu0 0.0
    %3685 = vmatprep.subr.mxu0 0.0
    %3686 = vmatpush1.msra.mxu0 0.0
    %3687 = vmatprep.subr.mxu0 0.0
    %3688 = vmatpush1.msra.mxu0 0.0
    %3689 = vmatprep.subr.mxu0 0.0
    %3690 = vmatpush1.msra.mxu0 0.0
    %3691 = vmatprep.subr.mxu0 0.0
    %3692 = vmatpush1.msra.mxu0 0.0
    %3693 = vmatprep.subr.mxu0 0.0
    %3694 = vmatpush1.msra.mxu0 0.0
    %3695 = vmatprep.subr.mxu0 0.0
    %3696 = vmatpush1.msra.mxu0 0.0
    %3697 = vmatprep.subr.mxu0 0.0
    %3698 = vmatpush1.msra.mxu0 0.0
    %3699 = vmatprep.subr.mxu0 0.0
    %3700 = vmatpush1.msra.mxu0 0.0
    %3701 = vmatprep.subr.mxu0 0.0
    %3702 = vmatpush1.msra.mxu0 0.0
    %3703 = vmatprep.subr.mxu0 0.0
    %3704 = vmatpush1.msra.mxu0 0.0
    %3705 = vmatprep.subr.mxu0 0.0
    %3706 = vmatpush1.msra.mxu0 0.0
    %3707 = vmatprep.subr.mxu0 0.0
    %3708 = vmatpush1.msra.mxu0 0.0
    %3709 = vmatprep.subr.mxu0 0.0
    %3710 = vmatpush1.msra.mxu0 0.0
    %3711 = vmatprep.subr.mxu0 0.0
    %3712 = vmatpush1.msra.mxu0 0.0
    %3713 = vmatprep.subr.mxu0 0.0
    %3714 = vmatpush1.msra.mxu0 0.0
    %3715 = vmatprep.subr.mxu0 0.0
    %3716 = vmatpush1.msra.mxu0 0.0
    %3717 = vmatprep.subr.mxu0 0.0
    %3718 = vmatpush1.msra.mxu0 0.0
    %3719 = vmatprep.subr.mxu0 0.0
    %3720 = vmatpush1.msra.mxu0 0.0
    %3721 = vmatprep.subr.mxu0 0.0
    %3722 = vmatpush1.msra.mxu0 0.0
    %3723 = vmatprep.subr.mxu0 0.0
    %3724 = vmatpush1.msra.mxu0 0.0
    %3725 = vmatprep.mubr.f32.mxu0 0.0
    %3726 = vmatmul.mubr.f32.gmra.mrb[0].mxu0 %v3659
    %v3727 = vpop.f32.mrb[0].mxu0
    %v3728 = vadd.f32 0.0, %v3727
    %v3729 = vpop.f32.mrb[0].mxu0
    %3730 = vdwg.mxu0
    %3733 = vrot.lane.b32.xlu0 %v2984, 8
    %v3734 = vpop.permute.xlu0 %3733
    %3735 = vrot.lane.b32.xlu0 %v3060, 8
    %v3736 = vpop.permute.xlu0 %3735
    %3741 = vrot.lane.b32.xlu0 %v3318, 16
    %v3742 = vpop.permute.xlu0 %3741
    %3743 = vrot.lane.b32.xlu0 %v3394, 16
    %v3744 = vpop.permute.xlu0 %3743
    %3749 = vrot.lane.b32.xlu0 %v3652, 24
    %v3750 = vpop.permute.xlu0 %3749
    %3751 = vrot.lane.b32.xlu0 %v3728, 24
    %v3752 = vpop.permute.xlu0 %3751
    %v3755 = vsel %vm317, %v2650, %v3734
    %v3756 = vsel %vm317, %v2726, %v3736
    %v3757 = vsel %vm46, %v3755, %v3742
    %v3758 = vsel %vm46, %v3756, %v3744
    %v3759 = vsel %vm1677, %v3757, %v3750
    %v3760 = vsel %vm1677, %v3758, %v3752
    %v3761 = vld [vmem:[#allocation2 + $0x100] sm:$0xff]
    %v3762 = vld [vmem:[#allocation2 + $0x108] sm:$0xff]
    %v3763 = vld [vmem:[#allocation2 + $0x110] sm:$0xff]
    %v3764 = vld [vmem:[#allocation2 + $0x118] sm:$0xff]
    %v3765 = vld [vmem:[%s2 + $0x11] sm:$0x1]
    %v3766 = vlaneseq
    %v3767 = vshrl.u32 %v3766, 7
    %v3768 = vsub.s32 0, %v3767
    %v3769 = vrot.slane %v3765, %v3768
    %v3771 = vsel %vm130, %v3759, 0
    %v3774 = vsel %vm130, %v3760, 0
    %3776 = vmatprep.subr.mxu0 0.0
    %3777 = vmatpush1.msra.mxu0 %v3761
    %3778 = vmatprep.subr.mxu0 0.0
    %3779 = vmatpush1.msra.mxu0 %v3762
    %3780 = vmatprep.subr.mxu0 0.0
    %3781 = vmatpush1.msra.mxu0 %v3763
    %3782 = vmatprep.subr.mxu0 0.0
    %3783 = vmatpush1.msra.mxu0 %v3764
    %3784 = vmatprep.subr.mxu0 0.0
    %3785 = vmatpush1.msra.mxu0 0.0
    %3786 = vmatprep.subr.mxu0 0.0
    %3787 = vmatpush1.msra.mxu0 0.0
    %3788 = vmatprep.subr.mxu0 0.0
    %3789 = vmatpush1.msra.mxu0 0.0
    %3790 = vmatprep.subr.mxu0 0.0
    %3791 = vmatpush1.msra.mxu0 0.0
    %3792 = vmatprep.subr.mxu0 0.0
    %3793 = vmatpush1.msra.mxu0 0.0
    %3794 = vmatprep.subr.mxu0 0.0
    %3795 = vmatpush1.msra.mxu0 0.0
    %3796 = vmatprep.subr.mxu0 0.0
    %3797 = vmatpush1.msra.mxu0 0.0
    %3798 = vmatprep.subr.mxu0 0.0
    %3799 = vmatpush1.msra.mxu0 0.0
    %3800 = vmatprep.subr.mxu0 0.0
    %3801 = vmatpush1.msra.mxu0 0.0
    %3802 = vmatprep.subr.mxu0 0.0
    %3803 = vmatpush1.msra.mxu0 0.0
    %3804 = vmatprep.subr.mxu0 0.0
    %3805 = vmatpush1.msra.mxu0 0.0
    %3806 = vmatprep.subr.mxu0 0.0
    %3807 = vmatpush1.msra.mxu0 0.0
    %3808 = vmatprep.subr.mxu0 0.0
    %3809 = vmatpush1.msra.mxu0 0.0
    %3810 = vmatprep.subr.mxu0 0.0
    %3811 = vmatpush1.msra.mxu0 0.0
    %3812 = vmatprep.subr.mxu0 0.0
    %3813 = vmatpush1.msra.mxu0 0.0
    %3814 = vmatprep.subr.mxu0 0.0
    %3815 = vmatpush1.msra.mxu0 0.0
    %3816 = vmatprep.subr.mxu0 0.0
    %3817 = vmatpush1.msra.mxu0 0.0
    %3818 = vmatprep.subr.mxu0 0.0
    %3819 = vmatpush1.msra.mxu0 0.0
    %3820 = vmatprep.subr.mxu0 0.0
    %3821 = vmatpush1.msra.mxu0 0.0
    %3822 = vmatprep.subr.mxu0 0.0
    %3823 = vmatpush1.msra.mxu0 0.0
    %3824 = vmatprep.subr.mxu0 0.0
    %3825 = vmatpush1.msra.mxu0 0.0
    %3826 = vmatprep.subr.mxu0 0.0
    %3827 = vmatpush1.msra.mxu0 0.0
    %3828 = vmatprep.subr.mxu0 0.0
    %3829 = vmatpush1.msra.mxu0 0.0
    %3830 = vmatprep.subr.mxu0 0.0
    %3831 = vmatpush1.msra.mxu0 0.0
    %3832 = vmatprep.subr.mxu0 0.0
    %3833 = vmatpush1.msra.mxu0 0.0
    %3834 = vmatprep.subr.mxu0 0.0
    %3835 = vmatpush1.msra.mxu0 0.0
    %3836 = vmatprep.subr.mxu0 0.0
    %3837 = vmatpush1.msra.mxu0 0.0
    %3838 = vmatprep.subr.mxu0 0.0
    %3839 = vmatpush1.msra.mxu0 0.0
    %3840 = vmatprep.mubr.f32.mxu0 0.0
    %3841 = vmatmul.mubr.f32.gmra.mrb[0].mxu0 %v3771
    %v3842 = vpop.f32.mrb[0].mxu0
    %v3843 = vadd.f32 %v3769, %v3842
    %v3844 = vpop.f32.mrb[0].mxu0
    %3845 = vmatprep.mubr.f32.mxu0 0.0
    %3846 = vmatmul.mubr.f32.gmra.mrb[0].mxu0 %v3774
    %v3847 = vpop.f32.mrb[0].mxu0
    %v3848 = vadd.f32 %v3769, %v3847
    %v3849 = vpop.f32.mrb[0].mxu0
    %3850 = vdwg.mxu0
    %v3851 = vadd.f32 %v2252, %v3843
    %v3852 = vadd.f32 %v2253, %v3848
    %v3853 = vld [vmem:[%s2 + $0x12] sm:$0x1]
    %v3854 = vld [vmem:[%s2 + $0x13] sm:$0x1]
    %v3855 = vsel %vm130, %v3851, 0.0
    %3856 = vadd.xlane.f32.xlu0 %v3855
    %v3857 = vpop.xlane.xlu0 %3856
    %v3858 = vsel %vm130, %v3852, 0.0
    %3859 = vadd.xlane.f32.xlu0 %v3858
    %v3860 = vpop.xlane.xlu0 %3859
    %v3861 = vmul.f32 %v3857, %v137
    %v3862 = vmul.f32 %v3860, %v137
    %v3863 = vsub.f32 %v3851, %v3861
    %v3864 = vsub.f32 %v3852, %v3862
    %v3865 = vmul.f32 %v3863, %v3863
    %v3866 = vmul.f32 %v3864, %v3864
    %v3867 = vsel %vm130, %v3865, 0.0
    %3868 = vadd.xlane.f32.xlu0 %v3867
    %v3869 = vpop.xlane.xlu0 %3868
    %v3870 = vsel %vm130, %v3866, 0.0
    %3871 = vadd.xlane.f32.xlu0 %v3870
    %v3872 = vpop.xlane.xlu0 %3871
    %v3873 = vmul.f32 %v3869, %v137
    %v3874 = vmul.f32 %v3872, %v137
    %v3875 = vadd.f32 %v3873, 1e-05
    %v3876 = vadd.f32 %v3874, 1e-05
    %v3877 = vrsqrt.pop %v3875
    %v3878 = vrsqrt.pop %v3876
    %v3879 = vmul.f32 %v3863, %v3877
    %v3880 = vmul.f32 %v3864, %v3878
    %v3881 = vlaneseq
    %v3882 = vshrl.u32 %v3881, 7
    %v3883 = vsub.s32 0, %v3882
    %v3884 = vrot.slane %v3853, %v3883
    %v3885 = vmul.f32 %v3879, %v3884
    %v3886 = vmul.f32 %v3880, %v3884
    %v3887 = vlaneseq
    %v3888 = vshrl.u32 %v3887, 7
    %v3889 = vsub.s32 0, %v3888
    %v3890 = vrot.slane %v3854, %v3889
    %v3891 = vadd.f32 %v3885, %v3890
    %v3892 = vadd.f32 %v3886, %v3890
    %v3893 = vld [vmem:[#allocation2 + $0x120] sm:$0xff]
    %v3894 = vld [vmem:[#allocation2 + $0x128] sm:$0xff]
    %v3895 = vld [vmem:[#allocation2 + $0x130] sm:$0xff]
    %v3896 = vld [vmem:[#allocation2 + $0x138] sm:$0xff]
    %v3897 = vld [vmem:[%s2 + $0x14] sm:$0x1]
    %v3898 = vlaneseq
    %v3899 = vshrl.u32 %v3898, 7
    %v3900 = vsub.s32 0, %v3899
    %v3901 = vrot.slane %v3897, %v3900
    %v3903 = vsel %vm130, %v3891, 0
    %v3906 = vsel %vm130, %v3892, 0
    %3908 = vmatprep.subr.mxu0 0.0
    %3909 = vmatpush1.msra.mxu0 %v3893
    %3910 = vmatprep.subr.mxu0 0.0
    %3911 = vmatpush1.msra.mxu0 %v3894
    %3912 = vmatprep.subr.mxu0 0.0
    %3913 = vmatpush1.msra.mxu0 %v3895
    %3914 = vmatprep.subr.mxu0 0.0
    %3915 = vmatpush1.msra.mxu0 %v3896
    %3916 = vmatprep.subr.mxu0 0.0
    %3917 = vmatpush1.msra.mxu0 0.0
    %3918 = vmatprep.subr.mxu0 0.0
    %3919 = vmatpush1.msra.mxu0 0.0
    %3920 = vmatprep.subr.mxu0 0.0
    %3921 = vmatpush1.msra.mxu0 0.0
    %3922 = vmatprep.subr.mxu0 0.0
    %3923 = vmatpush1.msra.mxu0 0.0
    %3924 = vmatprep.subr.mxu0 0.0
    %3925 = vmatpush1.msra.mxu0 0.0
    %3926 = vmatprep.subr.mxu0 0.0
    %3927 = vmatpush1.msra.mxu0 0.0
    %3928 = vmatprep.subr.mxu0 0.0
    %3929 = vmatpush1.msra.mxu0 0.0
    %3930 = vmatprep.subr.mxu0 0.0
    %3931 = vmatpush1.msra.mxu0 0.0
    %3932 = vmatprep.subr.mxu0 0.0
    %3933 = vmatpush1.msra.mxu0 0.0
    %3934 = vmatprep.subr.mxu0 0.0
    %3935 = vmatpush1.msra.mxu0 0.0
    %3936 = vmatprep.subr.mxu0 0.0
    %3937 = vmatpush1.msra.mxu0 0.0
    %3938 = vmatprep.subr.mxu0 0.0
    %3939 = vmatpush1.msra.mxu0 0.0
    %3940 = vmatprep.subr.mxu0 0.0
    %3941 = vmatpush1.msra.mxu0 0.0
    %3942 = vmatprep.subr.mxu0 0.0
    %3943 = vmatpush1.msra.mxu0 0.0
    %3944 = vmatprep.subr.mxu0 0.0
    %3945 = vmatpush1.msra.mxu0 0.0
    %3946 = vmatprep.subr.mxu0 0.0
    %3947 = vmatpush1.msra.mxu0 0.0
    %3948 = vmatprep.subr.mxu0 0.0
    %3949 = vmatpush1.msra.mxu0 0.0
    %3950 = vmatprep.subr.mxu0 0.0
    %3951 = vmatpush1.msra.mxu0 0.0
    %3952 = vmatprep.subr.mxu0 0.0
    %3953 = vmatpush1.msra.mxu0 0.0
    %3954 = vmatprep.subr.mxu0 0.0
    %3955 = vmatpush1.msra.mxu0 0.0
    %3956 = vmatprep.subr.mxu0 0.0
    %3957 = vmatpush1.msra.mxu0 0.0
    %3958 = vmatprep.subr.mxu0 0.0
    %3959 = vmatpush1.msra.mxu0 0.0
    %3960 = vmatprep.subr.mxu0 0.0
    %3961 = vmatpush1.msra.mxu0 0.0
    %3962 = vmatprep.subr.mxu0 0.0
    %3963 = vmatpush1.msra.mxu0 0.0
    %3964 = vmatprep.subr.mxu0 0.0
    %3965 = vmatpush1.msra.mxu0 0.0
    %3966 = vmatprep.subr.mxu0 0.0
    %3967 = vmatpush1.msra.mxu0 0.0
    %3968 = vmatprep.subr.mxu0 0.0
    %3969 = vmatpush1.msra.mxu0 0.0
    %3970 = vmatprep.subr.mxu0 0.0
    %3971 = vmatpush1.msra.mxu0 0.0
    %3972 = vmatprep.mubr.f32.mxu0 0.0
    %3973 = vmatmul.mubr.f32.gmra.mrb[0].mxu0 %v3903
    %v3974 = vpop.f32.mrb[0].mxu0
    %v3975 = vadd.f32 %v3901, %v3974
    %v3976 = vpop.f32.mrb[0].mxu0
    %3977 = vmatprep.mubr.f32.mxu0 0.0
    %3978 = vmatmul.mubr.f32.gmra.mrb[0].mxu0 %v3906
    %v3979 = vpop.f32.mrb[0].mxu0
    %v3980 = vadd.f32 %v3901, %v3979
    %v3981 = vpop.f32.mrb[0].mxu0
    %3982 = vdwg.mxu0
    %v3983 = vld [vmem:[#allocation2 + $0x140] sm:$0xff]
    %v3984 = vld [vmem:[#allocation2 + $0x148] sm:$0xff]
    %v3985 = vld [vmem:[#allocation2 + $0x150] sm:$0xff]
    %v3986 = vld [vmem:[#allocation2 + $0x158] sm:$0xff]
    %v3987 = vld [vmem:[%s2 + $0x15] sm:$0x1]
    %v3988 = vlaneseq
    %v3989 = vshrl.u32 %v3988, 7
    %v3990 = vsub.s32 0, %v3989
    %v3991 = vrot.slane %v3987, %v3990
    %3992 = vmatprep.subr.mxu0 0.0
    %3993 = vmatpush1.msra.mxu0 %v3983
    %3994 = vmatprep.subr.mxu0 0.0
    %3995 = vmatpush1.msra.mxu0 %v3984
    %3996 = vmatprep.subr.mxu0 0.0
    %3997 = vmatpush1.msra.mxu0 %v3985
    %3998 = vmatprep.subr.mxu0 0.0
    %3999 = vmatpush1.msra.mxu0 %v3986
    %4000 = vmatprep.subr.mxu0 0.0
    %4001 = vmatpush1.msra.mxu0 0.0
    %4002 = vmatprep.subr.mxu0 0.0
    %4003 = vmatpush1.msra.mxu0 0.0
    %4004 = vmatprep.subr.mxu0 0.0
    %4005 = vmatpush1.msra.mxu0 0.0
    %4006 = vmatprep.subr.mxu0 0.0
    %4007 = vmatpush1.msra.mxu0 0.0
    %4008 = vmatprep.subr.mxu0 0.0
    %4009 = vmatpush1.msra.mxu0 0.0
    %4010 = vmatprep.subr.mxu0 0.0
    %4011 = vmatpush1.msra.mxu0 0.0
    %4012 = vmatprep.subr.mxu0 0.0
    %4013 = vmatpush1.msra.mxu0 0.0
    %4014 = vmatprep.subr.mxu0 0.0
    %4015 = vmatpush1.msra.mxu0 0.0
    %4016 = vmatprep.subr.mxu0 0.0
    %4017 = vmatpush1.msra.mxu0 0.0
    %4018 = vmatprep.subr.mxu0 0.0
    %4019 = vmatpush1.msra.mxu0 0.0
    %4020 = vmatprep.subr.mxu0 0.0
    %4021 = vmatpush1.msra.mxu0 0.0
    %4022 = vmatprep.subr.mxu0 0.0
    %4023 = vmatpush1.msra.mxu0 0.0
    %4024 = vmatprep.subr.mxu0 0.0
    %4025 = vmatpush1.msra.mxu0 0.0
    %4026 = vmatprep.subr.mxu0 0.0
    %4027 = vmatpush1.msra.mxu0 0.0
    %4028 = vmatprep.subr.mxu0 0.0
    %4029 = vmatpush1.msra.mxu0 0.0
    %4030 = vmatprep.subr.mxu0 0.0
    %4031 = vmatpush1.msra.mxu0 0.0
    %4032 = vmatprep.subr.mxu0 0.0
    %4033 = vmatpush1.msra.mxu0 0.0
    %4034 = vmatprep.subr.mxu0 0.0
    %4035 = vmatpush1.msra.mxu0 0.0
    %4036 = vmatprep.subr.mxu0 0.0
    %4037 = vmatpush1.msra.mxu0 0.0
    %4038 = vmatprep.subr.mxu0 0.0
    %4039 = vmatpush1.msra.mxu0 0.0
    %4040 = vmatprep.subr.mxu0 0.0
    %4041 = vmatpush1.msra.mxu0 0.0
    %4042 = vmatprep.subr.mxu0 0.0
    %4043 = vmatpush1.msra.mxu0 0.0
    %4044 = vmatprep.subr.mxu0 0.0
    %4045 = vmatpush1.msra.mxu0 0.0
    %4046 = vmatprep.subr.mxu0 0.0
    %4047 = vmatpush1.msra.mxu0 0.0
    %4048 = vmatprep.subr.mxu0 0.0
    %4049 = vmatpush1.msra.mxu0 0.0
    %4050 = vmatprep.subr.mxu0 0.0
    %4051 = vmatpush1.msra.mxu0 0.0
    %4052 = vmatprep.subr.mxu0 0.0
    %4053 = vmatpush1.msra.mxu0 0.0
    %4054 = vmatprep.subr.mxu0 0.0
    %4055 = vmatpush1.msra.mxu0 0.0
    %4056 = vmatprep.mubr.f32.mxu0 0.0
    %4057 = vmatmul.mubr.f32.gmra.mrb[0].mxu0 %v2051
    %v4058 = vpop.f32.mrb[0].mxu0
    %v4059 = vadd.f32 %v3991, %v4058
    %v4060 = vpop.f32.mrb[0].mxu0
    %4061 = vmatprep.mubr.f32.mxu0 0.0
    %4062 = vmatmul.mubr.f32.gmra.mrb[0].mxu0 %v2054
    %v4063 = vpop.f32.mrb[0].mxu0
    %v4064 = vadd.f32 %v3991, %v4063
    %v4065 = vpop.f32.mrb[0].mxu0
    %4066 = vdwg.mxu0
    %v4068 = vsel %vm317, %v3975, 0
    %v4071 = vsel %vm317, %v4059, 0
    %4073 = vmatprep.subr.mxu0 0.0
    %4074 = vmatpush1.xpose.msra.mxu0 %v4071
    %4075 = vmatprep.subr.mxu0 0.0
    %4076 = vmatpush1.xpose.msra.mxu0 0.0
    %4077 = vmatprep.subr.mxu0 0.0
    %4078 = vmatpush1.xpose.msra.mxu0 0.0
    %4079 = vmatprep.subr.mxu0 0.0
    %4080 = vmatpush1.xpose.msra.mxu0 0.0
    %4081 = vmatprep.subr.mxu0 0.0
    %4082 = vmatpush1.xpose.msra.mxu0 0.0
    %4083 = vmatprep.subr.mxu0 0.0
    %4084 = vmatpush1.xpose.msra.mxu0 0.0
    %4085 = vmatprep.subr.mxu0 0.0
    %4086 = vmatpush1.xpose.msra.mxu0 0.0
    %4087 = vmatprep.subr.mxu0 0.0
    %4088 = vmatpush1.xpose.msra.mxu0 0.0
    %4089 = vmatprep.subr.mxu0 0.0
    %4090 = vmatpush1.xpose.msra.mxu0 0.0
    %4091 = vmatprep.subr.mxu0 0.0
    %4092 = vmatpush1.xpose.msra.mxu0 0.0
    %4093 = vmatprep.subr.mxu0 0.0
    %4094 = vmatpush1.xpose.msra.mxu0 0.0
    %4095 = vmatprep.subr.mxu0 0.0
    %4096 = vmatpush1.xpose.msra.mxu0 0.0
    %4097 = vmatprep.subr.mxu0 0.0
    %4098 = vmatpush1.xpose.msra.mxu0 0.0
    %4099 = vmatprep.subr.mxu0 0.0
    %4100 = vmatpush1.xpose.msra.mxu0 0.0
    %4101 = vmatprep.subr.mxu0 0.0
    %4102 = vmatpush1.xpose.msra.mxu0 0.0
    %4103 = vmatprep.subr.mxu0 0.0
    %4104 = vmatpush1.xpose.msra.mxu0 0.0
    %4105 = vmatprep.subr.mxu0 0.0
    %4106 = vmatpush1.xpose.msra.mxu0 0.0
    %4107 = vmatprep.subr.mxu0 0.0
    %4108 = vmatpush1.xpose.msra.mxu0 0.0
    %4109 = vmatprep.subr.mxu0 0.0
    %4110 = vmatpush1.xpose.msra.mxu0 0.0
    %4111 = vmatprep.subr.mxu0 0.0
    %4112 = vmatpush1.xpose.msra.mxu0 0.0
    %4113 = vmatprep.subr.mxu0 0.0
    %4114 = vmatpush1.xpose.msra.mxu0 0.0
    %4115 = vmatprep.subr.mxu0 0.0
    %4116 = vmatpush1.xpose.msra.mxu0 0.0
    %4117 = vmatprep.subr.mxu0 0.0
    %4118 = vmatpush1.xpose.msra.mxu0 0.0
    %4119 = vmatprep.subr.mxu0 0.0
    %4120 = vmatpush1.xpose.msra.mxu0 0.0
    %4121 = vmatprep.subr.mxu0 0.0
    %4122 = vmatpush1.xpose.msra.mxu0 0.0
    %4123 = vmatprep.subr.mxu0 0.0
    %4124 = vmatpush1.xpose.msra.mxu0 0.0
    %4125 = vmatprep.subr.mxu0 0.0
    %4126 = vmatpush1.xpose.msra.mxu0 0.0
    %4127 = vmatprep.subr.mxu0 0.0
    %4128 = vmatpush1.xpose.msra.mxu0 0.0
    %4129 = vmatprep.subr.mxu0 0.0
    %4130 = vmatpush1.xpose.msra.mxu0 0.0
    %4131 = vmatprep.subr.mxu0 0.0
    %4132 = vmatpush1.xpose.msra.mxu0 0.0
    %4133 = vmatprep.subr.mxu0 0.0
    %4134 = vmatpush1.xpose.msra.mxu0 0.0
    %4135 = vmatprep.subr.mxu0 0.0
    %4136 = vmatpush1.xpose.msra.mxu0 0.0
    %4137 = vmatprep.mubr.f32.mxu0 0.0
    %4138 = vmatmul.mubr.f32.gmra.mrb[0].mxu0 %v4068
    %v4139 = vpop.f32.mrb[0].mxu0
    %v4140 = vadd.f32 0.0, %v4139
    %v4141 = vpop.f32.mrb[0].mxu0
    %4142 = vdwg.mxu0
    %v4144 = vsel %vm317, %v3980, 0
    %v4147 = vsel %vm317, %v4064, 0
    %4149 = vmatprep.subr.mxu0 0.0
    %4150 = vmatpush1.xpose.msra.mxu0 %v4147
    %4151 = vmatprep.subr.mxu0 0.0
    %4152 = vmatpush1.xpose.msra.mxu0 0.0
    %4153 = vmatprep.subr.mxu0 0.0
    %4154 = vmatpush1.xpose.msra.mxu0 0.0
    %4155 = vmatprep.subr.mxu0 0.0
    %4156 = vmatpush1.xpose.msra.mxu0 0.0
    %4157 = vmatprep.subr.mxu0 0.0
    %4158 = vmatpush1.xpose.msra.mxu0 0.0
    %4159 = vmatprep.subr.mxu0 0.0
    %4160 = vmatpush1.xpose.msra.mxu0 0.0
    %4161 = vmatprep.subr.mxu0 0.0
    %4162 = vmatpush1.xpose.msra.mxu0 0.0
    %4163 = vmatprep.subr.mxu0 0.0
    %4164 = vmatpush1.xpose.msra.mxu0 0.0
    %4165 = vmatprep.subr.mxu0 0.0
    %4166 = vmatpush1.xpose.msra.mxu0 0.0
    %4167 = vmatprep.subr.mxu0 0.0
    %4168 = vmatpush1.xpose.msra.mxu0 0.0
    %4169 = vmatprep.subr.mxu0 0.0
    %4170 = vmatpush1.xpose.msra.mxu0 0.0
    %4171 = vmatprep.subr.mxu0 0.0
    %4172 = vmatpush1.xpose.msra.mxu0 0.0
    %4173 = vmatprep.subr.mxu0 0.0
    %4174 = vmatpush1.xpose.msra.mxu0 0.0
    %4175 = vmatprep.subr.mxu0 0.0
    %4176 = vmatpush1.xpose.msra.mxu0 0.0
    %4177 = vmatprep.subr.mxu0 0.0
    %4178 = vmatpush1.xpose.msra.mxu0 0.0
    %4179 = vmatprep.subr.mxu0 0.0
    %4180 = vmatpush1.xpose.msra.mxu0 0.0
    %4181 = vmatprep.subr.mxu0 0.0
    %4182 = vmatpush1.xpose.msra.mxu0 0.0
    %4183 = vmatprep.subr.mxu0 0.0
    %4184 = vmatpush1.xpose.msra.mxu0 0.0
    %4185 = vmatprep.subr.mxu0 0.0
    %4186 = vmatpush1.xpose.msra.mxu0 0.0
    %4187 = vmatprep.subr.mxu0 0.0
    %4188 = vmatpush1.xpose.msra.mxu0 0.0
    %4189 = vmatprep.subr.mxu0 0.0
    %4190 = vmatpush1.xpose.msra.mxu0 0.0
    %4191 = vmatprep.subr.mxu0 0.0
    %4192 = vmatpush1.xpose.msra.mxu0 0.0
    %4193 = vmatprep.subr.mxu0 0.0
    %4194 = vmatpush1.xpose.msra.mxu0 0.0
    %4195 = vmatprep.subr.mxu0 0.0
    %4196 = vmatpush1.xpose.msra.mxu0 0.0
    %4197 = vmatprep.subr.mxu0 0.0
    %4198 = vmatpush1.xpose.msra.mxu0 0.0
    %4199 = vmatprep.subr.mxu0 0.0
    %4200 = vmatpush1.xpose.msra.mxu0 0.0
    %4201 = vmatprep.subr.mxu0 0.0
    %4202 = vmatpush1.xpose.msra.mxu0 0.0
    %4203 = vmatprep.subr.mxu0 0.0
    %4204 = vmatpush1.xpose.msra.mxu0 0.0
    %4205 = vmatprep.subr.mxu0 0.0
    %4206 = vmatpush1.xpose.msra.mxu0 0.0
    %4207 = vmatprep.subr.mxu0 0.0
    %4208 = vmatpush1.xpose.msra.mxu0 0.0
    %4209 = vmatprep.subr.mxu0 0.0
    %4210 = vmatpush1.xpose.msra.mxu0 0.0
    %4211 = vmatprep.subr.mxu0 0.0
    %4212 = vmatpush1.xpose.msra.mxu0 0.0
    %4213 = vmatprep.mubr.f32.mxu0 0.0
    %4214 = vmatmul.mubr.f32.gmra.mrb[0].mxu0 %v4144
    %v4215 = vpop.f32.mrb[0].mxu0
    %v4216 = vadd.f32 0.0, %v4215
    %v4217 = vpop.f32.mrb[0].mxu0
    %4218 = vdwg.mxu0
    %v4219 = vmul.f32 %v4140, 0.35355338
    %v4220 = vmul.f32 %v4216, 0.35355338
    %v4221 = vsel %vm312, %v4219, -1e+09
    %v4222 = vsel %vm313, %v4220, -1e+09
    %v4223 = vsel %vm317, %v4221, -inf
    %4224 = vmax.xlane.f32.xlu0 %v4223
    %v4225 = vpop.xlane.xlu0 %4224
    %v4226 = vsel %vm317, %v4222, -inf
    %4227 = vmax.xlane.f32.xlu0 %v4226
    %v4228 = vpop.xlane.xlu0 %4227
    %v4229 = vsub.f32 %v4221, %v4225
    %v4230 = vsub.f32 %v4222, %v4228
    %v4231 = vmul.f32 %v4229, 1.442695
    %v4232 = vpow.pop %v4231
    %v4233 = vmul.f32 %v4230, 1.442695
    %v4234 = vpow.pop %v4233
    %v4235 = vsel %vm317, %v4232, 0.0
    %4236 = vadd.xlane.f32.xlu0 %v4235
    %v4237 = vpop.xlane.xlu0 %4236
    %v4238 = vsel %vm317, %v4234, 0.0
    %4239 = vadd.xlane.f32.xlu0 %v4238
    %v4240 = vpop.xlane.xlu0 %4239
    %v4241 = vrcp.pop %v4237
    %v4242 = vrcp.pop %v4240
    %v4243 = vmul.f32 %v4232, %v4241
    %v4244 = vmul.f32 %v4234, %v4242
    %4245 = vrot.lane.b32.xlu0 %v4059, 96
    %v4246 = vpop.permute.xlu0 %4245
    %v4249 = vsel %vm317, %v4243, 0
    %4251 = vmatprep.subr.mxu0 0.0
    %4252 = vmatpush1.msra.mxu0 %v4246
    %4253 = vmatprep.subr.mxu0 0.0
    %4254 = vmatpush1.msra.mxu0 0.0
    %4255 = vmatprep.subr.mxu0 0.0
    %4256 = vmatpush1.msra.mxu0 0.0
    %4257 = vmatprep.subr.mxu0 0.0
    %4258 = vmatpush1.msra.mxu0 0.0
    %4259 = vmatprep.subr.mxu0 0.0
    %4260 = vmatpush1.msra.mxu0 0.0
    %4261 = vmatprep.subr.mxu0 0.0
    %4262 = vmatpush1.msra.mxu0 0.0
    %4263 = vmatprep.subr.mxu0 0.0
    %4264 = vmatpush1.msra.mxu0 0.0
    %4265 = vmatprep.subr.mxu0 0.0
    %4266 = vmatpush1.msra.mxu0 0.0
    %4267 = vmatprep.subr.mxu0 0.0
    %4268 = vmatpush1.msra.mxu0 0.0
    %4269 = vmatprep.subr.mxu0 0.0
    %4270 = vmatpush1.msra.mxu0 0.0
    %4271 = vmatprep.subr.mxu0 0.0
    %4272 = vmatpush1.msra.mxu0 0.0
    %4273 = vmatprep.subr.mxu0 0.0
    %4274 = vmatpush1.msra.mxu0 0.0
    %4275 = vmatprep.subr.mxu0 0.0
    %4276 = vmatpush1.msra.mxu0 0.0
    %4277 = vmatprep.subr.mxu0 0.0
    %4278 = vmatpush1.msra.mxu0 0.0
    %4279 = vmatprep.subr.mxu0 0.0
    %4280 = vmatpush1.msra.mxu0 0.0
    %4281 = vmatprep.subr.mxu0 0.0
    %4282 = vmatpush1.msra.mxu0 0.0
    %4283 = vmatprep.subr.mxu0 0.0
    %4284 = vmatpush1.msra.mxu0 0.0
    %4285 = vmatprep.subr.mxu0 0.0
    %4286 = vmatpush1.msra.mxu0 0.0
    %4287 = vmatprep.subr.mxu0 0.0
    %4288 = vmatpush1.msra.mxu0 0.0
    %4289 = vmatprep.subr.mxu0 0.0
    %4290 = vmatpush1.msra.mxu0 0.0
    %4291 = vmatprep.subr.mxu0 0.0
    %4292 = vmatpush1.msra.mxu0 0.0
    %4293 = vmatprep.subr.mxu0 0.0
    %4294 = vmatpush1.msra.mxu0 0.0
    %4295 = vmatprep.subr.mxu0 0.0
    %4296 = vmatpush1.msra.mxu0 0.0
    %4297 = vmatprep.subr.mxu0 0.0
    %4298 = vmatpush1.msra.mxu0 0.0
    %4299 = vmatprep.subr.mxu0 0.0
    %4300 = vmatpush1.msra.mxu0 0.0
    %4301 = vmatprep.subr.mxu0 0.0
    %4302 = vmatpush1.msra.mxu0 0.0
    %4303 = vmatprep.subr.mxu0 0.0
    %4304 = vmatpush1.msra.mxu0 0.0
    %4305 = vmatprep.subr.mxu0 0.0
    %4306 = vmatpush1.msra.mxu0 0.0
    %4307 = vmatprep.subr.mxu0 0.0
    %4308 = vmatpush1.msra.mxu0 0.0
    %4309 = vmatprep.subr.mxu0 0.0
    %4310 = vmatpush1.msra.mxu0 0.0
    %4311 = vmatprep.subr.mxu0 0.0
    %4312 = vmatpush1.msra.mxu0 0.0
    %4313 = vmatprep.subr.mxu0 0.0
    %4314 = vmatpush1.msra.mxu0 0.0
    %4315 = vmatprep.mubr.f32.mxu0 0.0
    %4316 = vmatmul.mubr.f32.gmra.mrb[0].mxu0 %v4249
    %v4317 = vpop.f32.mrb[0].mxu0
    %v4318 = vadd.f32 0.0, %v4317
    %v4319 = vpop.f32.mrb[0].mxu0
    %4320 = vdwg.mxu0
    %4321 = vrot.lane.b32.xlu0 %v4064, 96
    %v4322 = vpop.permute.xlu0 %4321
    %v4325 = vsel %vm317, %v4244, 0
    %4327 = vmatprep.subr.mxu0 0.0
    %4328 = vmatpush1.msra.mxu0 %v4322
    %4329 = vmatprep.subr.mxu0 0.0
    %4330 = vmatpush1.msra.mxu0 0.0
    %4331 = vmatprep.subr.mxu0 0.0
    %4332 = vmatpush1.msra.mxu0 0.0
    %4333 = vmatprep.subr.mxu0 0.0
    %4334 = vmatpush1.msra.mxu0 0.0
    %4335 = vmatprep.subr.mxu0 0.0
    %4336 = vmatpush1.msra.mxu0 0.0
    %4337 = vmatprep.subr.mxu0 0.0
    %4338 = vmatpush1.msra.mxu0 0.0
    %4339 = vmatprep.subr.mxu0 0.0
    %4340 = vmatpush1.msra.mxu0 0.0
    %4341 = vmatprep.subr.mxu0 0.0
    %4342 = vmatpush1.msra.mxu0 0.0
    %4343 = vmatprep.subr.mxu0 0.0
    %4344 = vmatpush1.msra.mxu0 0.0
    %4345 = vmatprep.subr.mxu0 0.0
    %4346 = vmatpush1.msra.mxu0 0.0
    %4347 = vmatprep.subr.mxu0 0.0
    %4348 = vmatpush1.msra.mxu0 0.0
    %4349 = vmatprep.subr.mxu0 0.0
    %4350 = vmatpush1.msra.mxu0 0.0
    %4351 = vmatprep.subr.mxu0 0.0
    %4352 = vmatpush1.msra.mxu0 0.0
    %4353 = vmatprep.subr.mxu0 0.0
    %4354 = vmatpush1.msra.mxu0 0.0
    %4355 = vmatprep.subr.mxu0 0.0
    %4356 = vmatpush1.msra.mxu0 0.0
    %4357 = vmatprep.subr.mxu0 0.0
    %4358 = vmatpush1.msra.mxu0 0.0
    %4359 = vmatprep.subr.mxu0 0.0
    %4360 = vmatpush1.msra.mxu0 0.0
    %4361 = vmatprep.subr.mxu0 0.0
    %4362 = vmatpush1.msra.mxu0 0.0
    %4363 = vmatprep.subr.mxu0 0.0
    %4364 = vmatpush1.msra.mxu0 0.0
    %4365 = vmatprep.subr.mxu0 0.0
    %4366 = vmatpush1.msra.mxu0 0.0
    %4367 = vmatprep.subr.mxu0 0.0
    %4368 = vmatpush1.msra.mxu0 0.0
    %4369 = vmatprep.subr.mxu0 0.0
    %4370 = vmatpush1.msra.mxu0 0.0
    %4371 = vmatprep.subr.mxu0 0.0
    %4372 = vmatpush1.msra.mxu0 0.0
    %4373 = vmatprep.subr.mxu0 0.0
    %4374 = vmatpush1.msra.mxu0 0.0
    %4375 = vmatprep.subr.mxu0 0.0
    %4376 = vmatpush1.msra.mxu0 0.0
    %4377 = vmatprep.subr.mxu0 0.0
    %4378 = vmatpush1.msra.mxu0 0.0
    %4379 = vmatprep.subr.mxu0 0.0
    %4380 = vmatpush1.msra.mxu0 0.0
    %4381 = vmatprep.subr.mxu0 0.0
    %4382 = vmatpush1.msra.mxu0 0.0
    %4383 = vmatprep.subr.mxu0 0.0
    %4384 = vmatpush1.msra.mxu0 0.0
    %4385 = vmatprep.subr.mxu0 0.0
    %4386 = vmatpush1.msra.mxu0 0.0
    %4387 = vmatprep.subr.mxu0 0.0
    %4388 = vmatpush1.msra.mxu0 0.0
    %4389 = vmatprep.subr.mxu0 0.0
    %4390 = vmatpush1.msra.mxu0 0.0
    %4391 = vmatprep.mubr.f32.mxu0 0.0
    %4392 = vmatmul.mubr.f32.gmra.mrb[0].mxu0 %v4325
    %v4393 = vpop.f32.mrb[0].mxu0
    %v4394 = vadd.f32 0.0, %v4393
    %v4395 = vpop.f32.mrb[0].mxu0
    %4396 = vdwg.mxu0
    %4397 = vrot.lane.b32.xlu0 %v3975, 120
    %v4398 = vpop.permute.xlu0 %4397
    %4399 = vrot.lane.b32.xlu0 %v4059, 120
    %v4400 = vpop.permute.xlu0 %4399
    %v4401 = vsel %vm317, %v4398, 0
    %v4403 = vsel %vm317, %v4400, 0
    %4405 = vmatprep.subr.mxu0 0.0
    %4406 = vmatpush1.xpose.msra.mxu0 %v4403
    %4407 = vmatprep.subr.mxu0 0.0
    %4408 = vmatpush1.xpose.msra.mxu0 0.0
    %4409 = vmatprep.subr.mxu0 0.0
    %4410 = vmatpush1.xpose.msra.mxu0 0.0
    %4411 = vmatprep.subr.mxu0 0.0
    %4412 = vmatpush1.xpose.msra.mxu0 0.0
    %4413 = vmatprep.subr.mxu0 0.0
    %4414 = vmatpush1.xpose.msra.mxu0 0.0
    %4415 = vmatprep.subr.mxu0 0.0
    %4416 = vmatpush1.xpose.msra.mxu0 0.0
    %4417 = vmatprep.subr.mxu0 0.0
    %4418 = vmatpush1.xpose.msra.mxu0 0.0
    %4419 = vmatprep.subr.mxu0 0.0
    %4420 = vmatpush1.xpose.msra.mxu0 0.0
    %4421 = vmatprep.subr.mxu0 0.0
    %4422 = vmatpush1.xpose.msra.mxu0 0.0
    %4423 = vmatprep.subr.mxu0 0.0
    %4424 = vmatpush1.xpose.msra.mxu0 0.0
    %4425 = vmatprep.subr.mxu0 0.0
    %4426 = vmatpush1.xpose.msra.mxu0 0.0
    %4427 = vmatprep.subr.mxu0 0.0
    %4428 = vmatpush1.xpose.msra.mxu0 0.0
    %4429 = vmatprep.subr.mxu0 0.0
    %4430 = vmatpush1.xpose.msra.mxu0 0.0
    %4431 = vmatprep.subr.mxu0 0.0
    %4432 = vmatpush1.xpose.msra.mxu0 0.0
    %4433 = vmatprep.subr.mxu0 0.0
    %4434 = vmatpush1.xpose.msra.mxu0 0.0
    %4435 = vmatprep.subr.mxu0 0.0
    %4436 = vmatpush1.xpose.msra.mxu0 0.0
    %4437 = vmatprep.subr.mxu0 0.0
    %4438 = vmatpush1.xpose.msra.mxu0 0.0
    %4439 = vmatprep.subr.mxu0 0.0
    %4440 = vmatpush1.xpose.msra.mxu0 0.0
    %4441 = vmatprep.subr.mxu0 0.0
    %4442 = vmatpush1.xpose.msra.mxu0 0.0
    %4443 = vmatprep.subr.mxu0 0.0
    %4444 = vmatpush1.xpose.msra.mxu0 0.0
    %4445 = vmatprep.subr.mxu0 0.0
    %4446 = vmatpush1.xpose.msra.mxu0 0.0
    %4447 = vmatprep.subr.mxu0 0.0
    %4448 = vmatpush1.xpose.msra.mxu0 0.0
    %4449 = vmatprep.subr.mxu0 0.0
    %4450 = vmatpush1.xpose.msra.mxu0 0.0
    %4451 = vmatprep.subr.mxu0 0.0
    %4452 = vmatpush1.xpose.msra.mxu0 0.0
    %4453 = vmatprep.subr.mxu0 0.0
    %4454 = vmatpush1.xpose.msra.mxu0 0.0
    %4455 = vmatprep.subr.mxu0 0.0
    %4456 = vmatpush1.xpose.msra.mxu0 0.0
    %4457 = vmatprep.subr.mxu0 0.0
    %4458 = vmatpush1.xpose.msra.mxu0 0.0
    %4459 = vmatprep.subr.mxu0 0.0
    %4460 = vmatpush1.xpose.msra.mxu0 0.0
    %4461 = vmatprep.subr.mxu0 0.0
    %4462 = vmatpush1.xpose.msra.mxu0 0.0
    %4463 = vmatprep.subr.mxu0 0.0
    %4464 = vmatpush1.xpose.msra.mxu0 0.0
    %4465 = vmatprep.subr.mxu0 0.0
    %4466 = vmatpush1.xpose.msra.mxu0 0.0
    %4467 = vmatprep.subr.mxu0 0.0
    %4468 = vmatpush1.xpose.msra.mxu0 0.0
    %4469 = vmatprep.mubr.f32.mxu0 0.0
    %4470 = vmatmul.mubr.f32.gmra.mrb[0].mxu0 %v4401
    %v4471 = vpop.f32.mrb[0].mxu0
    %v4472 = vadd.f32 0.0, %v4471
    %v4473 = vpop.f32.mrb[0].mxu0
    %4474 = vdwg.mxu0
    %4475 = vrot.lane.b32.xlu0 %v3980, 120
    %v4476 = vpop.permute.xlu0 %4475
    %4477 = vrot.lane.b32.xlu0 %v4064, 120
    %v4478 = vpop.permute.xlu0 %4477
    %v4479 = vsel %vm317, %v4476, 0
    %v4481 = vsel %vm317, %v4478, 0
    %4483 = vmatprep.subr.mxu0 0.0
    %4484 = vmatpush1.xpose.msra.mxu0 %v4481
    %4485 = vmatprep.subr.mxu0 0.0
    %4486 = vmatpush1.xpose.msra.mxu0 0.0
    %4487 = vmatprep.subr.mxu0 0.0
    %4488 = vmatpush1.xpose.msra.mxu0 0.0
    %4489 = vmatprep.subr.mxu0 0.0
    %4490 = vmatpush1.xpose.msra.mxu0 0.0
    %4491 = vmatprep.subr.mxu0 0.0
    %4492 = vmatpush1.xpose.msra.mxu0 0.0
    %4493 = vmatprep.subr.mxu0 0.0
    %4494 = vmatpush1.xpose.msra.mxu0 0.0
    %4495 = vmatprep.subr.mxu0 0.0
    %4496 = vmatpush1.xpose.msra.mxu0 0.0
    %4497 = vmatprep.subr.mxu0 0.0
    %4498 = vmatpush1.xpose.msra.mxu0 0.0
    %4499 = vmatprep.subr.mxu0 0.0
    %4500 = vmatpush1.xpose.msra.mxu0 0.0
    %4501 = vmatprep.subr.mxu0 0.0
    %4502 = vmatpush1.xpose.msra.mxu0 0.0
    %4503 = vmatprep.subr.mxu0 0.0
    %4504 = vmatpush1.xpose.msra.mxu0 0.0
    %4505 = vmatprep.subr.mxu0 0.0
    %4506 = vmatpush1.xpose.msra.mxu0 0.0
    %4507 = vmatprep.subr.mxu0 0.0
    %4508 = vmatpush1.xpose.msra.mxu0 0.0
    %4509 = vmatprep.subr.mxu0 0.0
    %4510 = vmatpush1.xpose.msra.mxu0 0.0
    %4511 = vmatprep.subr.mxu0 0.0
    %4512 = vmatpush1.xpose.msra.mxu0 0.0
    %4513 = vmatprep.subr.mxu0 0.0
    %4514 = vmatpush1.xpose.msra.mxu0 0.0
    %4515 = vmatprep.subr.mxu0 0.0
    %4516 = vmatpush1.xpose.msra.mxu0 0.0
    %4517 = vmatprep.subr.mxu0 0.0
    %4518 = vmatpush1.xpose.msra.mxu0 0.0
    %4519 = vmatprep.subr.mxu0 0.0
    %4520 = vmatpush1.xpose.msra.mxu0 0.0
    %4521 = vmatprep.subr.mxu0 0.0
    %4522 = vmatpush1.xpose.msra.mxu0 0.0
    %4523 = vmatprep.subr.mxu0 0.0
    %4524 = vmatpush1.xpose.msra.mxu0 0.0
    %4525 = vmatprep.subr.mxu0 0.0
    %4526 = vmatpush1.xpose.msra.mxu0 0.0
    %4527 = vmatprep.subr.mxu0 0.0
    %4528 = vmatpush1.xpose.msra.mxu0 0.0
    %4529 = vmatprep.subr.mxu0 0.0
    %4530 = vmatpush1.xpose.msra.mxu0 0.0
    %4531 = vmatprep.subr.mxu0 0.0
    %4532 = vmatpush1.xpose.msra.mxu0 0.0
    %4533 = vmatprep.subr.mxu0 0.0
    %4534 = vmatpush1.xpose.msra.mxu0 0.0
    %4535 = vmatprep.subr.mxu0 0.0
    %4536 = vmatpush1.xpose.msra.mxu0 0.0
    %4537 = vmatprep.subr.mxu0 0.0
    %4538 = vmatpush1.xpose.msra.mxu0 0.0
    %4539 = vmatprep.subr.mxu0 0.0
    %4540 = vmatpush1.xpose.msra.mxu0 0.0
    %4541 = vmatprep.subr.mxu0 0.0
    %4542 = vmatpush1.xpose.msra.mxu0 0.0
    %4543 = vmatprep.subr.mxu0 0.0
    %4544 = vmatpush1.xpose.msra.mxu0 0.0
    %4545 = vmatprep.subr.mxu0 0.0
    %4546 = vmatpush1.xpose.msra.mxu0 0.0
    %4547 = vmatprep.mubr.f32.mxu0 0.0
    %4548 = vmatmul.mubr.f32.gmra.mrb[0].mxu0 %v4479
    %v4549 = vpop.f32.mrb[0].mxu0
    %v4550 = vadd.f32 0.0, %v4549
    %v4551 = vpop.f32.mrb[0].mxu0
    %4552 = vdwg.mxu0
    %v4553 = vmul.f32 %v4472, 0.35355338
    %v4554 = vmul.f32 %v4550, 0.35355338
    %v4555 = vsel %vm312, %v4553, -1e+09
    %v4556 = vsel %vm313, %v4554, -1e+09
    %v4557 = vsel %vm317, %v4555, -inf
    %4558 = vmax.xlane.f32.xlu0 %v4557
    %v4559 = vpop.xlane.xlu0 %4558
    %v4560 = vsel %vm317, %v4556, -inf
    %4561 = vmax.xlane.f32.xlu0 %v4560
    %v4562 = vpop.xlane.xlu0 %4561
    %v4563 = vsub.f32 %v4555, %v4559
    %v4564 = vsub.f32 %v4556, %v4562
    %v4565 = vmul.f32 %v4563, 1.442695
    %v4566 = vpow.pop %v4565
    %v4567 = vmul.f32 %v4564, 1.442695
    %v4568 = vpow.pop %v4567
    %v4569 = vsel %vm317, %v4566, 0.0
    %4570 = vadd.xlane.f32.xlu0 %v4569
    %v4571 = vpop.xlane.xlu0 %4570
    %v4572 = vsel %vm317, %v4568, 0.0
    %4573 = vadd.xlane.f32.xlu0 %v4572
    %v4574 = vpop.xlane.xlu0 %4573
    %v4575 = vrcp.pop %v4571
    %v4576 = vrcp.pop %v4574
    %v4577 = vmul.f32 %v4566, %v4575
    %v4578 = vmul.f32 %v4568, %v4576
    %4579 = vrot.lane.b32.xlu0 %v4059, 88
    %v4580 = vpop.permute.xlu0 %4579
    %v4583 = vsel %vm317, %v4577, 0
    %4585 = vmatprep.subr.mxu0 0.0
    %4586 = vmatpush1.msra.mxu0 %v4580
    %4587 = vmatprep.subr.mxu0 0.0
    %4588 = vmatpush1.msra.mxu0 0.0
    %4589 = vmatprep.subr.mxu0 0.0
    %4590 = vmatpush1.msra.mxu0 0.0
    %4591 = vmatprep.subr.mxu0 0.0
    %4592 = vmatpush1.msra.mxu0 0.0
    %4593 = vmatprep.subr.mxu0 0.0
    %4594 = vmatpush1.msra.mxu0 0.0
    %4595 = vmatprep.subr.mxu0 0.0
    %4596 = vmatpush1.msra.mxu0 0.0
    %4597 = vmatprep.subr.mxu0 0.0
    %4598 = vmatpush1.msra.mxu0 0.0
    %4599 = vmatprep.subr.mxu0 0.0
    %4600 = vmatpush1.msra.mxu0 0.0
    %4601 = vmatprep.subr.mxu0 0.0
    %4602 = vmatpush1.msra.mxu0 0.0
    %4603 = vmatprep.subr.mxu0 0.0
    %4604 = vmatpush1.msra.mxu0 0.0
    %4605 = vmatprep.subr.mxu0 0.0
    %4606 = vmatpush1.msra.mxu0 0.0
    %4607 = vmatprep.subr.mxu0 0.0
    %4608 = vmatpush1.msra.mxu0 0.0
    %4609 = vmatprep.subr.mxu0 0.0
    %4610 = vmatpush1.msra.mxu0 0.0
    %4611 = vmatprep.subr.mxu0 0.0
    %4612 = vmatpush1.msra.mxu0 0.0
    %4613 = vmatprep.subr.mxu0 0.0
    %4614 = vmatpush1.msra.mxu0 0.0
    %4615 = vmatprep.subr.mxu0 0.0
    %4616 = vmatpush1.msra.mxu0 0.0
    %4617 = vmatprep.subr.mxu0 0.0
    %4618 = vmatpush1.msra.mxu0 0.0
    %4619 = vmatprep.subr.mxu0 0.0
    %4620 = vmatpush1.msra.mxu0 0.0
    %4621 = vmatprep.subr.mxu0 0.0
    %4622 = vmatpush1.msra.mxu0 0.0
    %4623 = vmatprep.subr.mxu0 0.0
    %4624 = vmatpush1.msra.mxu0 0.0
    %4625 = vmatprep.subr.mxu0 0.0
    %4626 = vmatpush1.msra.mxu0 0.0
    %4627 = vmatprep.subr.mxu0 0.0
    %4628 = vmatpush1.msra.mxu0 0.0
    %4629 = vmatprep.subr.mxu0 0.0
    %4630 = vmatpush1.msra.mxu0 0.0
    %4631 = vmatprep.subr.mxu0 0.0
    %4632 = vmatpush1.msra.mxu0 0.0
    %4633 = vmatprep.subr.mxu0 0.0
    %4634 = vmatpush1.msra.mxu0 0.0
    %4635 = vmatprep.subr.mxu0 0.0
    %4636 = vmatpush1.msra.mxu0 0.0
    %4637 = vmatprep.subr.mxu0 0.0
    %4638 = vmatpush1.msra.mxu0 0.0
    %4639 = vmatprep.subr.mxu0 0.0
    %4640 = vmatpush1.msra.mxu0 0.0
    %4641 = vmatprep.subr.mxu0 0.0
    %4642 = vmatpush1.msra.mxu0 0.0
    %4643 = vmatprep.subr.mxu0 0.0
    %4644 = vmatpush1.msra.mxu0 0.0
    %4645 = vmatprep.subr.mxu0 0.0
    %4646 = vmatpush1.msra.mxu0 0.0
    %4647 = vmatprep.subr.mxu0 0.0
    %4648 = vmatpush1.msra.mxu0 0.0
    %4649 = vmatprep.mubr.f32.mxu0 0.0
    %4650 = vmatmul.mubr.f32.gmra.mrb[0].mxu0 %v4583
    %v4651 = vpop.f32.mrb[0].mxu0
    %v4652 = vadd.f32 0.0, %v4651
    %v4653 = vpop.f32.mrb[0].mxu0
    %4654 = vdwg.mxu0
    %4655 = vrot.lane.b32.xlu0 %v4064, 88
    %v4656 = vpop.permute.xlu0 %4655
    %v4659 = vsel %vm317, %v4578, 0
    %4661 = vmatprep.subr.mxu0 0.0
    %4662 = vmatpush1.msra.mxu0 %v4656
    %4663 = vmatprep.subr.mxu0 0.0
    %4664 = vmatpush1.msra.mxu0 0.0
    %4665 = vmatprep.subr.mxu0 0.0
    %4666 = vmatpush1.msra.mxu0 0.0
    %4667 = vmatprep.subr.mxu0 0.0
    %4668 = vmatpush1.msra.mxu0 0.0
    %4669 = vmatprep.subr.mxu0 0.0
    %4670 = vmatpush1.msra.mxu0 0.0
    %4671 = vmatprep.subr.mxu0 0.0
    %4672 = vmatpush1.msra.mxu0 0.0
    %4673 = vmatprep.subr.mxu0 0.0
    %4674 = vmatpush1.msra.mxu0 0.0
    %4675 = vmatprep.subr.mxu0 0.0
    %4676 = vmatpush1.msra.mxu0 0.0
    %4677 = vmatprep.subr.mxu0 0.0
    %4678 = vmatpush1.msra.mxu0 0.0
    %4679 = vmatprep.subr.mxu0 0.0
    %4680 = vmatpush1.msra.mxu0 0.0
    %4681 = vmatprep.subr.mxu0 0.0
    %4682 = vmatpush1.msra.mxu0 0.0
    %4683 = vmatprep.subr.mxu0 0.0
    %4684 = vmatpush1.msra.mxu0 0.0
    %4685 = vmatprep.subr.mxu0 0.0
    %4686 = vmatpush1.msra.mxu0 0.0
    %4687 = vmatprep.subr.mxu0 0.0
    %4688 = vmatpush1.msra.mxu0 0.0
    %4689 = vmatprep.subr.mxu0 0.0
    %4690 = vmatpush1.msra.mxu0 0.0
    %4691 = vmatprep.subr.mxu0 0.0
    %4692 = vmatpush1.msra.mxu0 0.0
    %4693 = vmatprep.subr.mxu0 0.0
    %4694 = vmatpush1.msra.mxu0 0.0
    %4695 = vmatprep.subr.mxu0 0.0
    %4696 = vmatpush1.msra.mxu0 0.0
    %4697 = vmatprep.subr.mxu0 0.0
    %4698 = vmatpush1.msra.mxu0 0.0
    %4699 = vmatprep.subr.mxu0 0.0
    %4700 = vmatpush1.msra.mxu0 0.0
    %4701 = vmatprep.subr.mxu0 0.0
    %4702 = vmatpush1.msra.mxu0 0.0
    %4703 = vmatprep.subr.mxu0 0.0
    %4704 = vmatpush1.msra.mxu0 0.0
    %4705 = vmatprep.subr.mxu0 0.0
    %4706 = vmatpush1.msra.mxu0 0.0
    %4707 = vmatprep.subr.mxu0 0.0
    %4708 = vmatpush1.msra.mxu0 0.0
    %4709 = vmatprep.subr.mxu0 0.0
    %4710 = vmatpush1.msra.mxu0 0.0
    %4711 = vmatprep.subr.mxu0 0.0
    %4712 = vmatpush1.msra.mxu0 0.0
    %4713 = vmatprep.subr.mxu0 0.0
    %4714 = vmatpush1.msra.mxu0 0.0
    %4715 = vmatprep.subr.mxu0 0.0
    %4716 = vmatpush1.msra.mxu0 0.0
    %4717 = vmatprep.subr.mxu0 0.0
    %4718 = vmatpush1.msra.mxu0 0.0
    %4719 = vmatprep.subr.mxu0 0.0
    %4720 = vmatpush1.msra.mxu0 0.0
    %4721 = vmatprep.subr.mxu0 0.0
    %4722 = vmatpush1.msra.mxu0 0.0
    %4723 = vmatprep.subr.mxu0 0.0
    %4724 = vmatpush1.msra.mxu0 0.0
    %4725 = vmatprep.mubr.f32.mxu0 0.0
    %4726 = vmatmul.mubr.f32.gmra.mrb[0].mxu0 %v4659
    %v4727 = vpop.f32.mrb[0].mxu0
    %v4728 = vadd.f32 0.0, %v4727
    %v4729 = vpop.f32.mrb[0].mxu0
    %4730 = vdwg.mxu0
    %4731 = vrot.lane.b32.xlu0 %v3975, 112
    %v4732 = vpop.permute.xlu0 %4731
    %4733 = vrot.lane.b32.xlu0 %v4059, 112
    %v4734 = vpop.permute.xlu0 %4733
    %v4735 = vsel %vm317, %v4732, 0
    %v4737 = vsel %vm317, %v4734, 0
    %4739 = vmatprep.subr.mxu0 0.0
    %4740 = vmatpush1.xpose.msra.mxu0 %v4737
    %4741 = vmatprep.subr.mxu0 0.0
    %4742 = vmatpush1.xpose.msra.mxu0 0.0
    %4743 = vmatprep.subr.mxu0 0.0
    %4744 = vmatpush1.xpose.msra.mxu0 0.0
    %4745 = vmatprep.subr.mxu0 0.0
    %4746 = vmatpush1.xpose.msra.mxu0 0.0
    %4747 = vmatprep.subr.mxu0 0.0
    %4748 = vmatpush1.xpose.msra.mxu0 0.0
    %4749 = vmatprep.subr.mxu0 0.0
    %4750 = vmatpush1.xpose.msra.mxu0 0.0
    %4751 = vmatprep.subr.mxu0 0.0
    %4752 = vmatpush1.xpose.msra.mxu0 0.0
    %4753 = vmatprep.subr.mxu0 0.0
    %4754 = vmatpush1.xpose.msra.mxu0 0.0
    %4755 = vmatprep.subr.mxu0 0.0
    %4756 = vmatpush1.xpose.msra.mxu0 0.0
    %4757 = vmatprep.subr.mxu0 0.0
    %4758 = vmatpush1.xpose.msra.mxu0 0.0
    %4759 = vmatprep.subr.mxu0 0.0
    %4760 = vmatpush1.xpose.msra.mxu0 0.0
    %4761 = vmatprep.subr.mxu0 0.0
    %4762 = vmatpush1.xpose.msra.mxu0 0.0
    %4763 = vmatprep.subr.mxu0 0.0
    %4764 = vmatpush1.xpose.msra.mxu0 0.0
    %4765 = vmatprep.subr.mxu0 0.0
    %4766 = vmatpush1.xpose.msra.mxu0 0.0
    %4767 = vmatprep.subr.mxu0 0.0
    %4768 = vmatpush1.xpose.msra.mxu0 0.0
    %4769 = vmatprep.subr.mxu0 0.0
    %4770 = vmatpush1.xpose.msra.mxu0 0.0
    %4771 = vmatprep.subr.mxu0 0.0
    %4772 = vmatpush1.xpose.msra.mxu0 0.0
    %4773 = vmatprep.subr.mxu0 0.0
    %4774 = vmatpush1.xpose.msra.mxu0 0.0
    %4775 = vmatprep.subr.mxu0 0.0
    %4776 = vmatpush1.xpose.msra.mxu0 0.0
    %4777 = vmatprep.subr.mxu0 0.0
    %4778 = vmatpush1.xpose.msra.mxu0 0.0
    %4779 = vmatprep.subr.mxu0 0.0
    %4780 = vmatpush1.xpose.msra.mxu0 0.0
    %4781 = vmatprep.subr.mxu0 0.0
    %4782 = vmatpush1.xpose.msra.mxu0 0.0
    %4783 = vmatprep.subr.mxu0 0.0
    %4784 = vmatpush1.xpose.msra.mxu0 0.0
    %4785 = vmatprep.subr.mxu0 0.0
    %4786 = vmatpush1.xpose.msra.mxu0 0.0
    %4787 = vmatprep.subr.mxu0 0.0
    %4788 = vmatpush1.xpose.msra.mxu0 0.0
    %4789 = vmatprep.subr.mxu0 0.0
    %4790 = vmatpush1.xpose.msra.mxu0 0.0
    %4791 = vmatprep.subr.mxu0 0.0
    %4792 = vmatpush1.xpose.msra.mxu0 0.0
    %4793 = vmatprep.subr.mxu0 0.0
    %4794 = vmatpush1.xpose.msra.mxu0 0.0
    %4795 = vmatprep.subr.mxu0 0.0
    %4796 = vmatpush1.xpose.msra.mxu0 0.0
    %4797 = vmatprep.subr.mxu0 0.0
    %4798 = vmatpush1.xpose.msra.mxu0 0.0
    %4799 = vmatprep.subr.mxu0 0.0
    %4800 = vmatpush1.xpose.msra.mxu0 0.0
    %4801 = vmatprep.subr.mxu0 0.0
    %4802 = vmatpush1.xpose.msra.mxu0 0.0
    %4803 = vmatprep.mubr.f32.mxu0 0.0
    %4804 = vmatmul.mubr.f32.gmra.mrb[0].mxu0 %v4735
    %v4805 = vpop.f32.mrb[0].mxu0
    %v4806 = vadd.f32 0.0, %v4805
    %v4807 = vpop.f32.mrb[0].mxu0
    %4808 = vdwg.mxu0
    %4809 = vrot.lane.b32.xlu0 %v3980, 112
    %v4810 = vpop.permute.xlu0 %4809
    %4811 = vrot.lane.b32.xlu0 %v4064, 112
    %v4812 = vpop.permute.xlu0 %4811
    %v4813 = vsel %vm317, %v4810, 0
    %v4815 = vsel %vm317, %v4812, 0
    %4817 = vmatprep.subr.mxu0 0.0
    %4818 = vmatpush1.xpose.msra.mxu0 %v4815
    %4819 = vmatprep.subr.mxu0 0.0
    %4820 = vmatpush1.xpose.msra.mxu0 0.0
    %4821 = vmatprep.subr.mxu0 0.0
    %4822 = vmatpush1.xpose.msra.mxu0 0.0
    %4823 = vmatprep.subr.mxu0 0.0
    %4824 = vmatpush1.xpose.msra.mxu0 0.0
    %4825 = vmatprep.subr.mxu0 0.0
    %4826 = vmatpush1.xpose.msra.mxu0 0.0
    %4827 = vmatprep.subr.mxu0 0.0
    %4828 = vmatpush1.xpose.msra.mxu0 0.0
    %4829 = vmatprep.subr.mxu0 0.0
    %4830 = vmatpush1.xpose.msra.mxu0 0.0
    %4831 = vmatprep.subr.mxu0 0.0
    %4832 = vmatpush1.xpose.msra.mxu0 0.0
    %4833 = vmatprep.subr.mxu0 0.0
    %4834 = vmatpush1.xpose.msra.mxu0 0.0
    %4835 = vmatprep.subr.mxu0 0.0
    %4836 = vmatpush1.xpose.msra.mxu0 0.0
    %4837 = vmatprep.subr.mxu0 0.0
    %4838 = vmatpush1.xpose.msra.mxu0 0.0
    %4839 = vmatprep.subr.mxu0 0.0
    %4840 = vmatpush1.xpose.msra.mxu0 0.0
    %4841 = vmatprep.subr.mxu0 0.0
    %4842 = vmatpush1.xpose.msra.mxu0 0.0
    %4843 = vmatprep.subr.mxu0 0.0
    %4844 = vmatpush1.xpose.msra.mxu0 0.0
    %4845 = vmatprep.subr.mxu0 0.0
    %4846 = vmatpush1.xpose.msra.mxu0 0.0
    %4847 = vmatprep.subr.mxu0 0.0
    %4848 = vmatpush1.xpose.msra.mxu0 0.0
    %4849 = vmatprep.subr.mxu0 0.0
    %4850 = vmatpush1.xpose.msra.mxu0 0.0
    %4851 = vmatprep.subr.mxu0 0.0
    %4852 = vmatpush1.xpose.msra.mxu0 0.0
    %4853 = vmatprep.subr.mxu0 0.0
    %4854 = vmatpush1.xpose.msra.mxu0 0.0
    %4855 = vmatprep.subr.mxu0 0.0
    %4856 = vmatpush1.xpose.msra.mxu0 0.0
    %4857 = vmatprep.subr.mxu0 0.0
    %4858 = vmatpush1.xpose.msra.mxu0 0.0
    %4859 = vmatprep.subr.mxu0 0.0
    %4860 = vmatpush1.xpose.msra.mxu0 0.0
    %4861 = vmatprep.subr.mxu0 0.0
    %4862 = vmatpush1.xpose.msra.mxu0 0.0
    %4863 = vmatprep.subr.mxu0 0.0
    %4864 = vmatpush1.xpose.msra.mxu0 0.0
    %4865 = vmatprep.subr.mxu0 0.0
    %4866 = vmatpush1.xpose.msra.mxu0 0.0
    %4867 = vmatprep.subr.mxu0 0.0
    %4868 = vmatpush1.xpose.msra.mxu0 0.0
    %4869 = vmatprep.subr.mxu0 0.0
    %4870 = vmatpush1.xpose.msra.mxu0 0.0
    %4871 = vmatprep.subr.mxu0 0.0
    %4872 = vmatpush1.xpose.msra.mxu0 0.0
    %4873 = vmatprep.subr.mxu0 0.0
    %4874 = vmatpush1.xpose.msra.mxu0 0.0
    %4875 = vmatprep.subr.mxu0 0.0
    %4876 = vmatpush1.xpose.msra.mxu0 0.0
    %4877 = vmatprep.subr.mxu0 0.0
    %4878 = vmatpush1.xpose.msra.mxu0 0.0
    %4879 = vmatprep.subr.mxu0 0.0
    %4880 = vmatpush1.xpose.msra.mxu0 0.0
    %4881 = vmatprep.mubr.f32.mxu0 0.0
    %4882 = vmatmul.mubr.f32.gmra.mrb[0].mxu0 %v4813
    %v4883 = vpop.f32.mrb[0].mxu0
    %v4884 = vadd.f32 0.0, %v4883
    %v4885 = vpop.f32.mrb[0].mxu0
    %4886 = vdwg.mxu0
    %v4887 = vmul.f32 %v4806, 0.35355338
    %v4888 = vmul.f32 %v4884, 0.35355338
    %v4889 = vsel %vm312, %v4887, -1e+09
    %v4890 = vsel %vm313, %v4888, -1e+09
    %v4891 = vsel %vm317, %v4889, -inf
    %4892 = vmax.xlane.f32.xlu0 %v4891
    %v4893 = vpop.xlane.xlu0 %4892
    %v4894 = vsel %vm317, %v4890, -inf
    %4895 = vmax.xlane.f32.xlu0 %v4894
    %v4896 = vpop.xlane.xlu0 %4895
    %v4897 = vsub.f32 %v4889, %v4893
    %v4898 = vsub.f32 %v4890, %v4896
    %v4899 = vmul.f32 %v4897, 1.442695
    %v4900 = vpow.pop %v4899
    %v4901 = vmul.f32 %v4898, 1.442695
    %v4902 = vpow.pop %v4901
    %v4903 = vsel %vm317, %v4900, 0.0
    %4904 = vadd.xlane.f32.xlu0 %v4903
    %v4905 = vpop.xlane.xlu0 %4904
    %v4906 = vsel %vm317, %v4902, 0.0
    %4907 = vadd.xlane.f32.xlu0 %v4906
    %v4908 = vpop.xlane.xlu0 %4907
    %v4909 = vrcp.pop %v4905
    %v4910 = vrcp.pop %v4908
    %v4911 = vmul.f32 %v4900, %v4909
    %v4912 = vmul.f32 %v4902, %v4910
    %4913 = vrot.lane.b32.xlu0 %v4059, 80
    %v4914 = vpop.permute.xlu0 %4913
    %v4917 = vsel %vm317, %v4911, 0
    %4919 = vmatprep.subr.mxu0 0.0
    %4920 = vmatpush1.msra.mxu0 %v4914
    %4921 = vmatprep.subr.mxu0 0.0
    %4922 = vmatpush1.msra.mxu0 0.0
    %4923 = vmatprep.subr.mxu0 0.0
    %4924 = vmatpush1.msra.mxu0 0.0
    %4925 = vmatprep.subr.mxu0 0.0
    %4926 = vmatpush1.msra.mxu0 0.0
    %4927 = vmatprep.subr.mxu0 0.0
    %4928 = vmatpush1.msra.mxu0 0.0
    %4929 = vmatprep.subr.mxu0 0.0
    %4930 = vmatpush1.msra.mxu0 0.0
    %4931 = vmatprep.subr.mxu0 0.0
    %4932 = vmatpush1.msra.mxu0 0.0
    %4933 = vmatprep.subr.mxu0 0.0
    %4934 = vmatpush1.msra.mxu0 0.0
    %4935 = vmatprep.subr.mxu0 0.0
    %4936 = vmatpush1.msra.mxu0 0.0
    %4937 = vmatprep.subr.mxu0 0.0
    %4938 = vmatpush1.msra.mxu0 0.0
    %4939 = vmatprep.subr.mxu0 0.0
    %4940 = vmatpush1.msra.mxu0 0.0
    %4941 = vmatprep.subr.mxu0 0.0
    %4942 = vmatpush1.msra.mxu0 0.0
    %4943 = vmatprep.subr.mxu0 0.0
    %4944 = vmatpush1.msra.mxu0 0.0
    %4945 = vmatprep.subr.mxu0 0.0
    %4946 = vmatpush1.msra.mxu0 0.0
    %4947 = vmatprep.subr.mxu0 0.0
    %4948 = vmatpush1.msra.mxu0 0.0
    %4949 = vmatprep.subr.mxu0 0.0
    %4950 = vmatpush1.msra.mxu0 0.0
    %4951 = vmatprep.subr.mxu0 0.0
    %4952 = vmatpush1.msra.mxu0 0.0
    %4953 = vmatprep.subr.mxu0 0.0
    %4954 = vmatpush1.msra.mxu0 0.0
    %4955 = vmatprep.subr.mxu0 0.0
    %4956 = vmatpush1.msra.mxu0 0.0
    %4957 = vmatprep.subr.mxu0 0.0
    %4958 = vmatpush1.msra.mxu0 0.0
    %4959 = vmatprep.subr.mxu0 0.0
    %4960 = vmatpush1.msra.mxu0 0.0
    %4961 = vmatprep.subr.mxu0 0.0
    %4962 = vmatpush1.msra.mxu0 0.0
    %4963 = vmatprep.subr.mxu0 0.0
    %4964 = vmatpush1.msra.mxu0 0.0
    %4965 = vmatprep.subr.mxu0 0.0
    %4966 = vmatpush1.msra.mxu0 0.0
    %4967 = vmatprep.subr.mxu0 0.0
    %4968 = vmatpush1.msra.mxu0 0.0
    %4969 = vmatprep.subr.mxu0 0.0
    %4970 = vmatpush1.msra.mxu0 0.0
    %4971 = vmatprep.subr.mxu0 0.0
    %4972 = vmatpush1.msra.mxu0 0.0
    %4973 = vmatprep.subr.mxu0 0.0
    %4974 = vmatpush1.msra.mxu0 0.0
    %4975 = vmatprep.subr.mxu0 0.0
    %4976 = vmatpush1.msra.mxu0 0.0
    %4977 = vmatprep.subr.mxu0 0.0
    %4978 = vmatpush1.msra.mxu0 0.0
    %4979 = vmatprep.subr.mxu0 0.0
    %4980 = vmatpush1.msra.mxu0 0.0
    %4981 = vmatprep.subr.mxu0 0.0
    %4982 = vmatpush1.msra.mxu0 0.0
    %4983 = vmatprep.mubr.f32.mxu0 0.0
    %4984 = vmatmul.mubr.f32.gmra.mrb[0].mxu0 %v4917
    %v4985 = vpop.f32.mrb[0].mxu0
    %v4986 = vadd.f32 0.0, %v4985
    %v4987 = vpop.f32.mrb[0].mxu0
    %4988 = vdwg.mxu0
    %4989 = vrot.lane.b32.xlu0 %v4064, 80
    %v4990 = vpop.permute.xlu0 %4989
    %v4993 = vsel %vm317, %v4912, 0
    %4995 = vmatprep.subr.mxu0 0.0
    %4996 = vmatpush1.msra.mxu0 %v4990
    %4997 = vmatprep.subr.mxu0 0.0
    %4998 = vmatpush1.msra.mxu0 0.0
    %4999 = vmatprep.subr.mxu0 0.0
    %5000 = vmatpush1.msra.mxu0 0.0
    %5001 = vmatprep.subr.mxu0 0.0
    %5002 = vmatpush1.msra.mxu0 0.0
    %5003 = vmatprep.subr.mxu0 0.0
    %5004 = vmatpush1.msra.mxu0 0.0
    %5005 = vmatprep.subr.mxu0 0.0
    %5006 = vmatpush1.msra.mxu0 0.0
    %5007 = vmatprep.subr.mxu0 0.0
    %5008 = vmatpush1.msra.mxu0 0.0
    %5009 = vmatprep.subr.mxu0 0.0
    %5010 = vmatpush1.msra.mxu0 0.0
    %5011 = vmatprep.subr.mxu0 0.0
    %5012 = vmatpush1.msra.mxu0 0.0
    %5013 = vmatprep.subr.mxu0 0.0
    %5014 = vmatpush1.msra.mxu0 0.0
    %5015 = vmatprep.subr.mxu0 0.0
    %5016 = vmatpush1.msra.mxu0 0.0
    %5017 = vmatprep.subr.mxu0 0.0
    %5018 = vmatpush1.msra.mxu0 0.0
    %5019 = vmatprep.subr.mxu0 0.0
    %5020 = vmatpush1.msra.mxu0 0.0
    %5021 = vmatprep.subr.mxu0 0.0
    %5022 = vmatpush1.msra.mxu0 0.0
    %5023 = vmatprep.subr.mxu0 0.0
    %5024 = vmatpush1.msra.mxu0 0.0
    %5025 = vmatprep.subr.mxu0 0.0
    %5026 = vmatpush1.msra.mxu0 0.0
    %5027 = vmatprep.subr.mxu0 0.0
    %5028 = vmatpush1.msra.mxu0 0.0
    %5029 = vmatprep.subr.mxu0 0.0
    %5030 = vmatpush1.msra.mxu0 0.0
    %5031 = vmatprep.subr.mxu0 0.0
    %5032 = vmatpush1.msra.mxu0 0.0
    %5033 = vmatprep.subr.mxu0 0.0
    %5034 = vmatpush1.msra.mxu0 0.0
    %5035 = vmatprep.subr.mxu0 0.0
    %5036 = vmatpush1.msra.mxu0 0.0
    %5037 = vmatprep.subr.mxu0 0.0
    %5038 = vmatpush1.msra.mxu0 0.0
    %5039 = vmatprep.subr.mxu0 0.0
    %5040 = vmatpush1.msra.mxu0 0.0
    %5041 = vmatprep.subr.mxu0 0.0
    %5042 = vmatpush1.msra.mxu0 0.0
    %5043 = vmatprep.subr.mxu0 0.0
    %5044 = vmatpush1.msra.mxu0 0.0
    %5045 = vmatprep.subr.mxu0 0.0
    %5046 = vmatpush1.msra.mxu0 0.0
    %5047 = vmatprep.subr.mxu0 0.0
    %5048 = vmatpush1.msra.mxu0 0.0
    %5049 = vmatprep.subr.mxu0 0.0
    %5050 = vmatpush1.msra.mxu0 0.0
    %5051 = vmatprep.subr.mxu0 0.0
    %5052 = vmatpush1.msra.mxu0 0.0
    %5053 = vmatprep.subr.mxu0 0.0
    %5054 = vmatpush1.msra.mxu0 0.0
    %5055 = vmatprep.subr.mxu0 0.0
    %5056 = vmatpush1.msra.mxu0 0.0
    %5057 = vmatprep.subr.mxu0 0.0
    %5058 = vmatpush1.msra.mxu0 0.0
    %5059 = vmatprep.mubr.f32.mxu0 0.0
    %5060 = vmatmul.mubr.f32.gmra.mrb[0].mxu0 %v4993
    %v5061 = vpop.f32.mrb[0].mxu0
    %v5062 = vadd.f32 0.0, %v5061
    %v5063 = vpop.f32.mrb[0].mxu0
    %5064 = vdwg.mxu0
    %5065 = vrot.lane.b32.xlu0 %v3975, 104
    %v5066 = vpop.permute.xlu0 %5065
    %5067 = vrot.lane.b32.xlu0 %v4059, 104
    %v5068 = vpop.permute.xlu0 %5067
    %v5069 = vsel %vm317, %v5066, 0
    %v5071 = vsel %vm317, %v5068, 0
    %5073 = vmatprep.subr.mxu0 0.0
    %5074 = vmatpush1.xpose.msra.mxu0 %v5071
    %5075 = vmatprep.subr.mxu0 0.0
    %5076 = vmatpush1.xpose.msra.mxu0 0.0
    %5077 = vmatprep.subr.mxu0 0.0
    %5078 = vmatpush1.xpose.msra.mxu0 0.0
    %5079 = vmatprep.subr.mxu0 0.0
    %5080 = vmatpush1.xpose.msra.mxu0 0.0
    %5081 = vmatprep.subr.mxu0 0.0
    %5082 = vmatpush1.xpose.msra.mxu0 0.0
    %5083 = vmatprep.subr.mxu0 0.0
    %5084 = vmatpush1.xpose.msra.mxu0 0.0
    %5085 = vmatprep.subr.mxu0 0.0
    %5086 = vmatpush1.xpose.msra.mxu0 0.0
    %5087 = vmatprep.subr.mxu0 0.0
    %5088 = vmatpush1.xpose.msra.mxu0 0.0
    %5089 = vmatprep.subr.mxu0 0.0
    %5090 = vmatpush1.xpose.msra.mxu0 0.0
    %5091 = vmatprep.subr.mxu0 0.0
    %5092 = vmatpush1.xpose.msra.mxu0 0.0
    %5093 = vmatprep.subr.mxu0 0.0
    %5094 = vmatpush1.xpose.msra.mxu0 0.0
    %5095 = vmatprep.subr.mxu0 0.0
    %5096 = vmatpush1.xpose.msra.mxu0 0.0
    %5097 = vmatprep.subr.mxu0 0.0
    %5098 = vmatpush1.xpose.msra.mxu0 0.0
    %5099 = vmatprep.subr.mxu0 0.0
    %5100 = vmatpush1.xpose.msra.mxu0 0.0
    %5101 = vmatprep.subr.mxu0 0.0
    %5102 = vmatpush1.xpose.msra.mxu0 0.0
    %5103 = vmatprep.subr.mxu0 0.0
    %5104 = vmatpush1.xpose.msra.mxu0 0.0
    %5105 = vmatprep.subr.mxu0 0.0
    %5106 = vmatpush1.xpose.msra.mxu0 0.0
    %5107 = vmatprep.subr.mxu0 0.0
    %5108 = vmatpush1.xpose.msra.mxu0 0.0
    %5109 = vmatprep.subr.mxu0 0.0
    %5110 = vmatpush1.xpose.msra.mxu0 0.0
    %5111 = vmatprep.subr.mxu0 0.0
    %5112 = vmatpush1.xpose.msra.mxu0 0.0
    %5113 = vmatprep.subr.mxu0 0.0
    %5114 = vmatpush1.xpose.msra.mxu0 0.0
    %5115 = vmatprep.subr.mxu0 0.0
    %5116 = vmatpush1.xpose.msra.mxu0 0.0
    %5117 = vmatprep.subr.mxu0 0.0
    %5118 = vmatpush1.xpose.msra.mxu0 0.0
    %5119 = vmatprep.subr.mxu0 0.0
    %5120 = vmatpush1.xpose.msra.mxu0 0.0
    %5121 = vmatprep.subr.mxu0 0.0
    %5122 = vmatpush1.xpose.msra.mxu0 0.0
    %5123 = vmatprep.subr.mxu0 0.0
    %5124 = vmatpush1.xpose.msra.mxu0 0.0
    %5125 = vmatprep.subr.mxu0 0.0
    %5126 = vmatpush1.xpose.msra.mxu0 0.0
    %5127 = vmatprep.subr.mxu0 0.0
    %5128 = vmatpush1.xpose.msra.mxu0 0.0
    %5129 = vmatprep.subr.mxu0 0.0
    %5130 = vmatpush1.xpose.msra.mxu0 0.0
    %5131 = vmatprep.subr.mxu0 0.0
    %5132 = vmatpush1.xpose.msra.mxu0 0.0
    %5133 = vmatprep.subr.mxu0 0.0
    %5134 = vmatpush1.xpose.msra.mxu0 0.0
    %5135 = vmatprep.subr.mxu0 0.0
    %5136 = vmatpush1.xpose.msra.mxu0 0.0
    %5137 = vmatprep.mubr.f32.mxu0 0.0
    %5138 = vmatmul.mubr.f32.gmra.mrb[0].mxu0 %v5069
    %v5139 = vpop.f32.mrb[0].mxu0
    %v5140 = vadd.f32 0.0, %v5139
    %v5141 = vpop.f32.mrb[0].mxu0
    %5142 = vdwg.mxu0
    %5143 = vrot.lane.b32.xlu0 %v3980, 104
    %v5144 = vpop.permute.xlu0 %5143
    %5145 = vrot.lane.b32.xlu0 %v4064, 104
    %v5146 = vpop.permute.xlu0 %5145
    %v5147 = vsel %vm317, %v5144, 0
    %v5149 = vsel %vm317, %v5146, 0
    %5151 = vmatprep.subr.mxu0 0.0
    %5152 = vmatpush1.xpose.msra.mxu0 %v5149
    %5153 = vmatprep.subr.mxu0 0.0
    %5154 = vmatpush1.xpose.msra.mxu0 0.0
    %5155 = vmatprep.subr.mxu0 0.0
    %5156 = vmatpush1.xpose.msra.mxu0 0.0
    %5157 = vmatprep.subr.mxu0 0.0
    %5158 = vmatpush1.xpose.msra.mxu0 0.0
    %5159 = vmatprep.subr.mxu0 0.0
    %5160 = vmatpush1.xpose.msra.mxu0 0.0
    %5161 = vmatprep.subr.mxu0 0.0
    %5162 = vmatpush1.xpose.msra.mxu0 0.0
    %5163 = vmatprep.subr.mxu0 0.0
    %5164 = vmatpush1.xpose.msra.mxu0 0.0
    %5165 = vmatprep.subr.mxu0 0.0
    %5166 = vmatpush1.xpose.msra.mxu0 0.0
    %5167 = vmatprep.subr.mxu0 0.0
    %5168 = vmatpush1.xpose.msra.mxu0 0.0
    %5169 = vmatprep.subr.mxu0 0.0
    %5170 = vmatpush1.xpose.msra.mxu0 0.0
    %5171 = vmatprep.subr.mxu0 0.0
    %5172 = vmatpush1.xpose.msra.mxu0 0.0
    %5173 = vmatprep.subr.mxu0 0.0
    %5174 = vmatpush1.xpose.msra.mxu0 0.0
    %5175 = vmatprep.subr.mxu0 0.0
    %5176 = vmatpush1.xpose.msra.mxu0 0.0
    %5177 = vmatprep.subr.mxu0 0.0
    %5178 = vmatpush1.xpose.msra.mxu0 0.0
    %5179 = vmatprep.subr.mxu0 0.0
    %5180 = vmatpush1.xpose.msra.mxu0 0.0
    %5181 = vmatprep.subr.mxu0 0.0
    %5182 = vmatpush1.xpose.msra.mxu0 0.0
    %5183 = vmatprep.subr.mxu0 0.0
    %5184 = vmatpush1.xpose.msra.mxu0 0.0
    %5185 = vmatprep.subr.mxu0 0.0
    %5186 = vmatpush1.xpose.msra.mxu0 0.0
    %5187 = vmatprep.subr.mxu0 0.0
    %5188 = vmatpush1.xpose.msra.mxu0 0.0
    %5189 = vmatprep.subr.mxu0 0.0
    %5190 = vmatpush1.xpose.msra.mxu0 0.0
    %5191 = vmatprep.subr.mxu0 0.0
    %5192 = vmatpush1.xpose.msra.mxu0 0.0
    %5193 = vmatprep.subr.mxu0 0.0
    %5194 = vmatpush1.xpose.msra.mxu0 0.0
    %5195 = vmatprep.subr.mxu0 0.0
    %5196 = vmatpush1.xpose.msra.mxu0 0.0
    %5197 = vmatprep.subr.mxu0 0.0
    %5198 = vmatpush1.xpose.msra.mxu0 0.0
    %5199 = vmatprep.subr.mxu0 0.0
    %5200 = vmatpush1.xpose.msra.mxu0 0.0
    %5201 = vmatprep.subr.mxu0 0.0
    %5202 = vmatpush1.xpose.msra.mxu0 0.0
    %5203 = vmatprep.subr.mxu0 0.0
    %5204 = vmatpush1.xpose.msra.mxu0 0.0
    %5205 = vmatprep.subr.mxu0 0.0
    %5206 = vmatpush1.xpose.msra.mxu0 0.0
    %5207 = vmatprep.subr.mxu0 0.0
    %5208 = vmatpush1.xpose.msra.mxu0 0.0
    %5209 = vmatprep.subr.mxu0 0.0
    %5210 = vmatpush1.xpose.msra.mxu0 0.0
    %5211 = vmatprep.subr.mxu0 0.0
    %5212 = vmatpush1.xpose.msra.mxu0 0.0
    %5213 = vmatprep.subr.mxu0 0.0
    %5214 = vmatpush1.xpose.msra.mxu0 0.0
    %5215 = vmatprep.mubr.f32.mxu0 0.0
    %5216 = vmatmul.mubr.f32.gmra.mrb[0].mxu0 %v5147
    %v5217 = vpop.f32.mrb[0].mxu0
    %v5218 = vadd.f32 0.0, %v5217
    %v5219 = vpop.f32.mrb[0].mxu0
    %5220 = vdwg.mxu0
    %v5221 = vmul.f32 %v5140, 0.35355338
    %v5222 = vmul.f32 %v5218, 0.35355338
    %v5223 = vsel %vm312, %v5221, -1e+09
    %v5224 = vsel %vm313, %v5222, -1e+09
    %v5225 = vsel %vm317, %v5223, -inf
    %5226 = vmax.xlane.f32.xlu0 %v5225
    %v5227 = vpop.xlane.xlu0 %5226
    %v5228 = vsel %vm317, %v5224, -inf
    %5229 = vmax.xlane.f32.xlu0 %v5228
    %v5230 = vpop.xlane.xlu0 %5229
    %v5231 = vsub.f32 %v5223, %v5227
    %v5232 = vsub.f32 %v5224, %v5230
    %v5233 = vmul.f32 %v5231, 1.442695
    %v5234 = vpow.pop %v5233
    %v5235 = vmul.f32 %v5232, 1.442695
    %v5236 = vpow.pop %v5235
    %v5237 = vsel %vm317, %v5234, 0.0
    %5238 = vadd.xlane.f32.xlu0 %v5237
    %v5239 = vpop.xlane.xlu0 %5238
    %v5240 = vsel %vm317, %v5236, 0.0
    %5241 = vadd.xlane.f32.xlu0 %v5240
    %v5242 = vpop.xlane.xlu0 %5241
    %v5243 = vrcp.pop %v5239
    %v5244 = vrcp.pop %v5242
    %v5245 = vmul.f32 %v5234, %v5243
    %v5246 = vmul.f32 %v5236, %v5244
    %5247 = vrot.lane.b32.xlu0 %v4059, 72
    %v5248 = vpop.permute.xlu0 %5247
    %v5251 = vsel %vm317, %v5245, 0
    %5253 = vmatprep.subr.mxu0 0.0
    %5254 = vmatpush1.msra.mxu0 %v5248
    %5255 = vmatprep.subr.mxu0 0.0
    %5256 = vmatpush1.msra.mxu0 0.0
    %5257 = vmatprep.subr.mxu0 0.0
    %5258 = vmatpush1.msra.mxu0 0.0
    %5259 = vmatprep.subr.mxu0 0.0
    %5260 = vmatpush1.msra.mxu0 0.0
    %5261 = vmatprep.subr.mxu0 0.0
    %5262 = vmatpush1.msra.mxu0 0.0
    %5263 = vmatprep.subr.mxu0 0.0
    %5264 = vmatpush1.msra.mxu0 0.0
    %5265 = vmatprep.subr.mxu0 0.0
    %5266 = vmatpush1.msra.mxu0 0.0
    %5267 = vmatprep.subr.mxu0 0.0
    %5268 = vmatpush1.msra.mxu0 0.0
    %5269 = vmatprep.subr.mxu0 0.0
    %5270 = vmatpush1.msra.mxu0 0.0
    %5271 = vmatprep.subr.mxu0 0.0
    %5272 = vmatpush1.msra.mxu0 0.0
    %5273 = vmatprep.subr.mxu0 0.0
    %5274 = vmatpush1.msra.mxu0 0.0
    %5275 = vmatprep.subr.mxu0 0.0
    %5276 = vmatpush1.msra.mxu0 0.0
    %5277 = vmatprep.subr.mxu0 0.0
    %5278 = vmatpush1.msra.mxu0 0.0
    %5279 = vmatprep.subr.mxu0 0.0
    %5280 = vmatpush1.msra.mxu0 0.0
    %5281 = vmatprep.subr.mxu0 0.0
    %5282 = vmatpush1.msra.mxu0 0.0
    %5283 = vmatprep.subr.mxu0 0.0
    %5284 = vmatpush1.msra.mxu0 0.0
    %5285 = vmatprep.subr.mxu0 0.0
    %5286 = vmatpush1.msra.mxu0 0.0
    %5287 = vmatprep.subr.mxu0 0.0
    %5288 = vmatpush1.msra.mxu0 0.0
    %5289 = vmatprep.subr.mxu0 0.0
    %5290 = vmatpush1.msra.mxu0 0.0
    %5291 = vmatprep.subr.mxu0 0.0
    %5292 = vmatpush1.msra.mxu0 0.0
    %5293 = vmatprep.subr.mxu0 0.0
    %5294 = vmatpush1.msra.mxu0 0.0
    %5295 = vmatprep.subr.mxu0 0.0
    %5296 = vmatpush1.msra.mxu0 0.0
    %5297 = vmatprep.subr.mxu0 0.0
    %5298 = vmatpush1.msra.mxu0 0.0
    %5299 = vmatprep.subr.mxu0 0.0
    %5300 = vmatpush1.msra.mxu0 0.0
    %5301 = vmatprep.subr.mxu0 0.0
    %5302 = vmatpush1.msra.mxu0 0.0
    %5303 = vmatprep.subr.mxu0 0.0
    %5304 = vmatpush1.msra.mxu0 0.0
    %5305 = vmatprep.subr.mxu0 0.0
    %5306 = vmatpush1.msra.mxu0 0.0
    %5307 = vmatprep.subr.mxu0 0.0
    %5308 = vmatpush1.msra.mxu0 0.0
    %5309 = vmatprep.subr.mxu0 0.0
    %5310 = vmatpush1.msra.mxu0 0.0
    %5311 = vmatprep.subr.mxu0 0.0
    %5312 = vmatpush1.msra.mxu0 0.0
    %5313 = vmatprep.subr.mxu0 0.0
    %5314 = vmatpush1.msra.mxu0 0.0
    %5315 = vmatprep.subr.mxu0 0.0
    %5316 = vmatpush1.msra.mxu0 0.0
    %5317 = vmatprep.mubr.f32.mxu0 0.0
    %5318 = vmatmul.mubr.f32.gmra.mrb[0].mxu0 %v5251
    %v5319 = vpop.f32.mrb[0].mxu0
    %v5320 = vadd.f32 0.0, %v5319
    %v5321 = vpop.f32.mrb[0].mxu0
    %5322 = vdwg.mxu0
    %5323 = vrot.lane.b32.xlu0 %v4064, 72
    %v5324 = vpop.permute.xlu0 %5323
    %v5327 = vsel %vm317, %v5246, 0
    %5329 = vmatprep.subr.mxu0 0.0
    %5330 = vmatpush1.msra.mxu0 %v5324
    %5331 = vmatprep.subr.mxu0 0.0
    %5332 = vmatpush1.msra.mxu0 0.0
    %5333 = vmatprep.subr.mxu0 0.0
    %5334 = vmatpush1.msra.mxu0 0.0
    %5335 = vmatprep.subr.mxu0 0.0
    %5336 = vmatpush1.msra.mxu0 0.0
    %5337 = vmatprep.subr.mxu0 0.0
    %5338 = vmatpush1.msra.mxu0 0.0
    %5339 = vmatprep.subr.mxu0 0.0
    %5340 = vmatpush1.msra.mxu0 0.0
    %5341 = vmatprep.subr.mxu0 0.0
    %5342 = vmatpush1.msra.mxu0 0.0
    %5343 = vmatprep.subr.mxu0 0.0
    %5344 = vmatpush1.msra.mxu0 0.0
    %5345 = vmatprep.subr.mxu0 0.0
    %5346 = vmatpush1.msra.mxu0 0.0
    %5347 = vmatprep.subr.mxu0 0.0
    %5348 = vmatpush1.msra.mxu0 0.0
    %5349 = vmatprep.subr.mxu0 0.0
    %5350 = vmatpush1.msra.mxu0 0.0
    %5351 = vmatprep.subr.mxu0 0.0
    %5352 = vmatpush1.msra.mxu0 0.0
    %5353 = vmatprep.subr.mxu0 0.0
    %5354 = vmatpush1.msra.mxu0 0.0
    %5355 = vmatprep.subr.mxu0 0.0
    %5356 = vmatpush1.msra.mxu0 0.0
    %5357 = vmatprep.subr.mxu0 0.0
    %5358 = vmatpush1.msra.mxu0 0.0
    %5359 = vmatprep.subr.mxu0 0.0
    %5360 = vmatpush1.msra.mxu0 0.0
    %5361 = vmatprep.subr.mxu0 0.0
    %5362 = vmatpush1.msra.mxu0 0.0
    %5363 = vmatprep.subr.mxu0 0.0
    %5364 = vmatpush1.msra.mxu0 0.0
    %5365 = vmatprep.subr.mxu0 0.0
    %5366 = vmatpush1.msra.mxu0 0.0
    %5367 = vmatprep.subr.mxu0 0.0
    %5368 = vmatpush1.msra.mxu0 0.0
    %5369 = vmatprep.subr.mxu0 0.0
    %5370 = vmatpush1.msra.mxu0 0.0
    %5371 = vmatprep.subr.mxu0 0.0
    %5372 = vmatpush1.msra.mxu0 0.0
    %5373 = vmatprep.subr.mxu0 0.0
    %5374 = vmatpush1.msra.mxu0 0.0
    %5375 = vmatprep.subr.mxu0 0.0
    %5376 = vmatpush1.msra.mxu0 0.0
    %5377 = vmatprep.subr.mxu0 0.0
    %5378 = vmatpush1.msra.mxu0 0.0
    %5379 = vmatprep.subr.mxu0 0.0
    %5380 = vmatpush1.msra.mxu0 0.0
    %5381 = vmatprep.subr.mxu0 0.0
    %5382 = vmatpush1.msra.mxu0 0.0
    %5383 = vmatprep.subr.mxu0 0.0
    %5384 = vmatpush1.msra.mxu0 0.0
    %5385 = vmatprep.subr.mxu0 0.0
    %5386 = vmatpush1.msra.mxu0 0.0
    %5387 = vmatprep.subr.mxu0 0.0
    %5388 = vmatpush1.msra.mxu0 0.0
    %5389 = vmatprep.subr.mxu0 0.0
    %5390 = vmatpush1.msra.mxu0 0.0
    %5391 = vmatprep.subr.mxu0 0.0
    %5392 = vmatpush1.msra.mxu0 0.0
    %5393 = vmatprep.mubr.f32.mxu0 0.0
    %5394 = vmatmul.mubr.f32.gmra.mrb[0].mxu0 %v5327
    %v5395 = vpop.f32.mrb[0].mxu0
    %v5396 = vadd.f32 0.0, %v5395
    %v5397 = vpop.f32.mrb[0].mxu0
    %5398 = vdwg.mxu0
    %5401 = vrot.lane.b32.xlu0 %v4652, 8
    %v5402 = vpop.permute.xlu0 %5401
    %5403 = vrot.lane.b32.xlu0 %v4728, 8
    %v5404 = vpop.permute.xlu0 %5403
    %5409 = vrot.lane.b32.xlu0 %v4986, 16
    %v5410 = vpop.permute.xlu0 %5409
    %5411 = vrot.lane.b32.xlu0 %v5062, 16
    %v5412 = vpop.permute.xlu0 %5411
    %5417 = vrot.lane.b32.xlu0 %v5320, 24
    %v5418 = vpop.permute.xlu0 %5417
    %5419 = vrot.lane.b32.xlu0 %v5396, 24
    %v5420 = vpop.permute.xlu0 %5419
    %v5423 = vsel %vm317, %v4318, %v5402
    %v5424 = vsel %vm317, %v4394, %v5404
    %v5425 = vsel %vm46, %v5423, %v5410
    %v5426 = vsel %vm46, %v5424, %v5412
    %v5427 = vsel %vm1677, %v5425, %v5418
    %v5428 = vsel %vm1677, %v5426, %v5420
    %v5429 = vld [vmem:[#allocation2 + $0x160] sm:$0xff]
    %v5430 = vld [vmem:[#allocation2 + $0x168] sm:$0xff]
    %v5431 = vld [vmem:[#allocation2 + $0x170] sm:$0xff]
    %v5432 = vld [vmem:[#allocation2 + $0x178] sm:$0xff]
    %v5433 = vld [vmem:[%s2 + $0x16] sm:$0x1]
    %v5434 = vlaneseq
    %v5435 = vshrl.u32 %v5434, 7
    %v5436 = vsub.s32 0, %v5435
    %v5437 = vrot.slane %v5433, %v5436
    %v5439 = vsel %vm130, %v5427, 0
    %v5442 = vsel %vm130, %v5428, 0
    %5444 = vmatprep.subr.mxu0 0.0
    %5445 = vmatpush1.msra.mxu0 %v5429
    %5446 = vmatprep.subr.mxu0 0.0
    %5447 = vmatpush1.msra.mxu0 %v5430
    %5448 = vmatprep.subr.mxu0 0.0
    %5449 = vmatpush1.msra.mxu0 %v5431
    %5450 = vmatprep.subr.mxu0 0.0
    %5451 = vmatpush1.msra.mxu0 %v5432
    %5452 = vmatprep.subr.mxu0 0.0
    %5453 = vmatpush1.msra.mxu0 0.0
    %5454 = vmatprep.subr.mxu0 0.0
    %5455 = vmatpush1.msra.mxu0 0.0
    %5456 = vmatprep.subr.mxu0 0.0
    %5457 = vmatpush1.msra.mxu0 0.0
    %5458 = vmatprep.subr.mxu0 0.0
    %5459 = vmatpush1.msra.mxu0 0.0
    %5460 = vmatprep.subr.mxu0 0.0
    %5461 = vmatpush1.msra.mxu0 0.0
    %5462 = vmatprep.subr.mxu0 0.0
    %5463 = vmatpush1.msra.mxu0 0.0
    %5464 = vmatprep.subr.mxu0 0.0
    %5465 = vmatpush1.msra.mxu0 0.0
    %5466 = vmatprep.subr.mxu0 0.0
    %5467 = vmatpush1.msra.mxu0 0.0
    %5468 = vmatprep.subr.mxu0 0.0
    %5469 = vmatpush1.msra.mxu0 0.0
    %5470 = vmatprep.subr.mxu0 0.0
    %5471 = vmatpush1.msra.mxu0 0.0
    %5472 = vmatprep.subr.mxu0 0.0
    %5473 = vmatpush1.msra.mxu0 0.0
    %5474 = vmatprep.subr.mxu0 0.0
    %5475 = vmatpush1.msra.mxu0 0.0
    %5476 = vmatprep.subr.mxu0 0.0
    %5477 = vmatpush1.msra.mxu0 0.0
    %5478 = vmatprep.subr.mxu0 0.0
    %5479 = vmatpush1.msra.mxu0 0.0
    %5480 = vmatprep.subr.mxu0 0.0
    %5481 = vmatpush1.msra.mxu0 0.0
    %5482 = vmatprep.subr.mxu0 0.0
    %5483 = vmatpush1.msra.mxu0 0.0
    %5484 = vmatprep.subr.mxu0 0.0
    %5485 = vmatpush1.msra.mxu0 0.0
    %5486 = vmatprep.subr.mxu0 0.0
    %5487 = vmatpush1.msra.mxu0 0.0
    %5488 = vmatprep.subr.mxu0 0.0
    %5489 = vmatpush1.msra.mxu0 0.0
    %5490 = vmatprep.subr.mxu0 0.0
    %5491 = vmatpush1.msra.mxu0 0.0
    %5492 = vmatprep.subr.mxu0 0.0
    %5493 = vmatpush1.msra.mxu0 0.0
    %5494 = vmatprep.subr.mxu0 0.0
    %5495 = vmatpush1.msra.mxu0 0.0
    %5496 = vmatprep.subr.mxu0 0.0
    %5497 = vmatpush1.msra.mxu0 0.0
    %5498 = vmatprep.subr.mxu0 0.0
    %5499 = vmatpush1.msra.mxu0 0.0
    %5500 = vmatprep.subr.mxu0 0.0
    %5501 = vmatpush1.msra.mxu0 0.0
    %5502 = vmatprep.subr.mxu0 0.0
    %5503 = vmatpush1.msra.mxu0 0.0
    %5504 = vmatprep.subr.mxu0 0.0
    %5505 = vmatpush1.msra.mxu0 0.0
    %5506 = vmatprep.subr.mxu0 0.0
    %5507 = vmatpush1.msra.mxu0 0.0
    %5508 = vmatprep.mubr.f32.mxu0 0.0
    %5509 = vmatmul.mubr.f32.gmra.mrb[0].mxu0 %v5439
    %v5510 = vpop.f32.mrb[0].mxu0
    %v5511 = vadd.f32 %v5437, %v5510
    %v5512 = vpop.f32.mrb[0].mxu0
    %5513 = vmatprep.mubr.f32.mxu0 0.0
    %5514 = vmatmul.mubr.f32.gmra.mrb[0].mxu0 %v5442
    %v5515 = vpop.f32.mrb[0].mxu0
    %v5516 = vadd.f32 %v5437, %v5515
    %v5517 = vpop.f32.mrb[0].mxu0
    %5518 = vdwg.mxu0
    %v5519 = vadd.f32 %v3851, %v5511
    %v5520 = vadd.f32 %v3852, %v5516
    %v5521 = vld [vmem:[%s2 + $0x17] sm:$0x1]
    %v5522 = vld [vmem:[%s2 + $0x18] sm:$0x1]
    %v5523 = vsel %vm130, %v5519, 0.0
    %5524 = vadd.xlane.f32.xlu0 %v5523
    %v5525 = vpop.xlane.xlu0 %5524
    %v5526 = vsel %vm130, %v5520, 0.0
    %5527 = vadd.xlane.f32.xlu0 %v5526
    %v5528 = vpop.xlane.xlu0 %5527
    %v5529 = vmul.f32 %v5525, %v137
    %v5530 = vmul.f32 %v5528, %v137
    %v5531 = vsub.f32 %v5519, %v5529
    %v5532 = vsub.f32 %v5520, %v5530
    %v5533 = vmul.f32 %v5531, %v5531
    %v5534 = vmul.f32 %v5532, %v5532
    %v5535 = vsel %vm130, %v5533, 0.0
    %5536 = vadd.xlane.f32.xlu0 %v5535
    %v5537 = vpop.xlane.xlu0 %5536
    %v5538 = vsel %vm130, %v5534, 0.0
    %5539 = vadd.xlane.f32.xlu0 %v5538
    %v5540 = vpop.xlane.xlu0 %5539
    %v5541 = vmul.f32 %v5537, %v137
    %v5542 = vmul.f32 %v5540, %v137
    %v5543 = vadd.f32 %v5541, 1e-05
    %v5544 = vadd.f32 %v5542, 1e-05
    %v5545 = vrsqrt.pop %v5543
    %v5546 = vrsqrt.pop %v5544
    %v5547 = vmul.f32 %v5531, %v5545
    %v5548 = vmul.f32 %v5532, %v5546
    %v5549 = vlaneseq
    %v5550 = vshrl.u32 %v5549, 7
    %v5551 = vsub.s32 0, %v5550
    %v5552 = vrot.slane %v5521, %v5551
    %v5553 = vmul.f32 %v5547, %v5552
    %v5554 = vmul.f32 %v5548, %v5552
    %v5555 = vlaneseq
    %v5556 = vshrl.u32 %v5555, 7
    %v5557 = vsub.s32 0, %v5556
    %v5558 = vrot.slane %v5522, %v5557
    %v5559 = vadd.f32 %v5553, %v5558
    %v5560 = vadd.f32 %v5554, %v5558
    %v5561 = vld [vmem:[#allocation2 + $0x180] sm:$0xff]
    %v5562 = vld [vmem:[#allocation2 + $0x188] sm:$0xff]
    %v5563 = vld [vmem:[#allocation2 + $0x190] sm:$0xff]
    %v5564 = vld [vmem:[#allocation2 + $0x198] sm:$0xff]
    %v5565 = vld [vmem:[%s2 + $0x19] sm:$0x1]
    %v5566 = vlaneseq
    %v5567 = vshrl.u32 %v5566, 7
    %v5568 = vsub.s32 0, %v5567
    %v5569 = vrot.slane %v5565, %v5568
    %v5571 = vsel %vm130, %v5559, 0
    %v5574 = vsel %vm130, %v5560, 0
    %5576 = vmatprep.subr.mxu0 0.0
    %5577 = vmatpush1.msra.mxu0 %v5561
    %5578 = vmatprep.subr.mxu0 0.0
    %5579 = vmatpush1.msra.mxu0 %v5562
    %5580 = vmatprep.subr.mxu0 0.0
    %5581 = vmatpush1.msra.mxu0 %v5563
    %5582 = vmatprep.subr.mxu0 0.0
    %5583 = vmatpush1.msra.mxu0 %v5564
    %5584 = vmatprep.subr.mxu0 0.0
    %5585 = vmatpush1.msra.mxu0 0.0
    %5586 = vmatprep.subr.mxu0 0.0
    %5587 = vmatpush1.msra.mxu0 0.0
    %5588 = vmatprep.subr.mxu0 0.0
    %5589 = vmatpush1.msra.mxu0 0.0
    %5590 = vmatprep.subr.mxu0 0.0
    %5591 = vmatpush1.msra.mxu0 0.0
    %5592 = vmatprep.subr.mxu0 0.0
    %5593 = vmatpush1.msra.mxu0 0.0
    %5594 = vmatprep.subr.mxu0 0.0
    %5595 = vmatpush1.msra.mxu0 0.0
    %5596 = vmatprep.subr.mxu0 0.0
    %5597 = vmatpush1.msra.mxu0 0.0
    %5598 = vmatprep.subr.mxu0 0.0
    %5599 = vmatpush1.msra.mxu0 0.0
    %5600 = vmatprep.subr.mxu0 0.0
    %5601 = vmatpush1.msra.mxu0 0.0
    %5602 = vmatprep.subr.mxu0 0.0
    %5603 = vmatpush1.msra.mxu0 0.0
    %5604 = vmatprep.subr.mxu0 0.0
    %5605 = vmatpush1.msra.mxu0 0.0
    %5606 = vmatprep.subr.mxu0 0.0
    %5607 = vmatpush1.msra.mxu0 0.0
    %5608 = vmatprep.subr.mxu0 0.0
    %5609 = vmatpush1.msra.mxu0 0.0
    %5610 = vmatprep.subr.mxu0 0.0
    %5611 = vmatpush1.msra.mxu0 0.0
    %5612 = vmatprep.subr.mxu0 0.0
    %5613 = vmatpush1.msra.mxu0 0.0
    %5614 = vmatprep.subr.mxu0 0.0
    %5615 = vmatpush1.msra.mxu0 0.0
    %5616 = vmatprep.subr.mxu0 0.0
    %5617 = vmatpush1.msra.mxu0 0.0
    %5618 = vmatprep.subr.mxu0 0.0
    %5619 = vmatpush1.msra.mxu0 0.0
    %5620 = vmatprep.subr.mxu0 0.0
    %5621 = vmatpush1.msra.mxu0 0.0
    %5622 = vmatprep.subr.mxu0 0.0
    %5623 = vmatpush1.msra.mxu0 0.0
    %5624 = vmatprep.subr.mxu0 0.0
    %5625 = vmatpush1.msra.mxu0 0.0
    %5626 = vmatprep.subr.mxu0 0.0
    %5627 = vmatpush1.msra.mxu0 0.0
    %5628 = vmatprep.subr.mxu0 0.0
    %5629 = vmatpush1.msra.mxu0 0.0
    %5630 = vmatprep.subr.mxu0 0.0
    %5631 = vmatpush1.msra.mxu0 0.0
    %5632 = vmatprep.subr.mxu0 0.0
    %5633 = vmatpush1.msra.mxu0 0.0
    %5634 = vmatprep.subr.mxu0 0.0
    %5635 = vmatpush1.msra.mxu0 0.0
    %5636 = vmatprep.subr.mxu0 0.0
    %5637 = vmatpush1.msra.mxu0 0.0
    %5638 = vmatprep.subr.mxu0 0.0
    %5639 = vmatpush1.msra.mxu0 0.0
    %5640 = vmatprep.mubr.f32.mxu0 0.0
    %5641 = vmatmul.mubr.f32.gmra.mrb[0].mxu0 %v5571
    %v5642 = vpop.f32.mrb[0].mxu0
    %v5643 = vadd.f32 %v5569, %v5642
    %v5644 = vpop.f32.mrb[0].mxu0
    %5645 = vmatprep.mubr.f32.mxu0 0.0
    %5646 = vmatmul.mubr.f32.gmra.mrb[0].mxu0 %v5574
    %v5647 = vpop.f32.mrb[0].mxu0
    %v5648 = vadd.f32 %v5569, %v5647
    %v5649 = vpop.f32.mrb[0].mxu0
    %5650 = vdwg.mxu0
    %v5651 = vmax.f32 %v5643, 0.0
    %v5652 = vmax.f32 %v5648, 0.0
    %v5653 = vld [vmem:[#allocation2 + $0x1a0] sm:$0xff]
    %v5654 = vld [vmem:[#allocation2 + $0x1a8] sm:$0xff]
    %v5655 = vld [vmem:[#allocation2 + $0x1b0] sm:$0xff]
    %v5656 = vld [vmem:[#allocation2 + $0x1b8] sm:$0xff]
    %v5657 = vld [vmem:[#allocation2 + $0x1c0] sm:$0xff]
    %v5658 = vld [vmem:[#allocation2 + $0x1c8] sm:$0xff]
    %v5659 = vld [vmem:[#allocation2 + $0x1d0] sm:$0xff]
    %v5660 = vld [vmem:[#allocation2 + $0x1d8] sm:$0xff]
    %v5661 = vld [vmem:[%s2 + $0x1a] sm:$0x1]
    %v5662 = vlaneseq
    %v5663 = vshrl.u32 %v5662, 7
    %v5664 = vsub.s32 0, %v5663
    %v5665 = vrot.slane %v5661, %v5664
    %v5667 = vsel %vm1917, %v5651, 0
    %v5670 = vsel %vm1917, %v5652, 0
    %5672 = vmatprep.subr.mxu0 0.0
    %5673 = vmatpush1.msra.mxu0 %v5653
    %5674 = vmatprep.subr.mxu0 0.0
    %5675 = vmatpush1.msra.mxu0 %v5654
    %5676 = vmatprep.subr.mxu0 0.0
    %5677 = vmatpush1.msra.mxu0 %v5655
    %5678 = vmatprep.subr.mxu0 0.0
    %5679 = vmatpush1.msra.mxu0 %v5656
    %5680 = vmatprep.subr.mxu0 0.0
    %5681 = vmatpush1.msra.mxu0 %v5657
    %5682 = vmatprep.subr.mxu0 0.0
    %5683 = vmatpush1.msra.mxu0 %v5658
    %5684 = vmatprep.subr.mxu0 0.0
    %5685 = vmatpush1.msra.mxu0 %v5659
    %5686 = vmatprep.subr.mxu0 0.0
    %5687 = vmatpush1.msra.mxu0 %v5660
    %5688 = vmatprep.subr.mxu0 0.0
    %5689 = vmatpush1.msra.mxu0 0.0
    %5690 = vmatprep.subr.mxu0 0.0
    %5691 = vmatpush1.msra.mxu0 0.0
    %5692 = vmatprep.subr.mxu0 0.0
    %5693 = vmatpush1.msra.mxu0 0.0
    %5694 = vmatprep.subr.mxu0 0.0
    %5695 = vmatpush1.msra.mxu0 0.0
    %5696 = vmatprep.subr.mxu0 0.0
    %5697 = vmatpush1.msra.mxu0 0.0
    %5698 = vmatprep.subr.mxu0 0.0
    %5699 = vmatpush1.msra.mxu0 0.0
    %5700 = vmatprep.subr.mxu0 0.0
    %5701 = vmatpush1.msra.mxu0 0.0
    %5702 = vmatprep.subr.mxu0 0.0
    %5703 = vmatpush1.msra.mxu0 0.0
    %5704 = vmatprep.subr.mxu0 0.0
    %5705 = vmatpush1.msra.mxu0 0.0
    %5706 = vmatprep.subr.mxu0 0.0
    %5707 = vmatpush1.msra.mxu0 0.0
    %5708 = vmatprep.subr.mxu0 0.0
    %5709 = vmatpush1.msra.mxu0 0.0
    %5710 = vmatprep.subr.mxu0 0.0
    %5711 = vmatpush1.msra.mxu0 0.0
    %5712 = vmatprep.subr.mxu0 0.0
    %5713 = vmatpush1.msra.mxu0 0.0
    %5714 = vmatprep.subr.mxu0 0.0
    %5715 = vmatpush1.msra.mxu0 0.0
    %5716 = vmatprep.subr.mxu0 0.0
    %5717 = vmatpush1.msra.mxu0 0.0
    %5718 = vmatprep.subr.mxu0 0.0
    %5719 = vmatpush1.msra.mxu0 0.0
    %5720 = vmatprep.subr.mxu0 0.0
    %5721 = vmatpush1.msra.mxu0 0.0
    %5722 = vmatprep.subr.mxu0 0.0
    %5723 = vmatpush1.msra.mxu0 0.0
    %5724 = vmatprep.subr.mxu0 0.0
    %5725 = vmatpush1.msra.mxu0 0.0
    %5726 = vmatprep.subr.mxu0 0.0
    %5727 = vmatpush1.msra.mxu0 0.0
    %5728 = vmatprep.subr.mxu0 0.0
    %5729 = vmatpush1.msra.mxu0 0.0
    %5730 = vmatprep.subr.mxu0 0.0
    %5731 = vmatpush1.msra.mxu0 0.0
    %5732 = vmatprep.subr.mxu0 0.0
    %5733 = vmatpush1.msra.mxu0 0.0
    %5734 = vmatprep.subr.mxu0 0.0
    %5735 = vmatpush1.msra.mxu0 0.0
    %5736 = vmatprep.mubr.f32.mxu0 0.0
    %5737 = vmatmul.mubr.f32.gmra.mrb[0].mxu0 %v5667
    %v5738 = vpop.f32.mrb[0].mxu0
    %v5739 = vadd.f32 %v5665, %v5738
    %v5740 = vpop.f32.mrb[0].mxu0
    %5741 = vmatprep.mubr.f32.mxu0 0.0
    %5742 = vmatmul.mubr.f32.gmra.mrb[0].mxu0 %v5670
    %v5743 = vpop.f32.mrb[0].mxu0
    %v5744 = vadd.f32 %v5665, %v5743
    %v5745 = vpop.f32.mrb[0].mxu0
    %5746 = vdwg.mxu0
    %v5747 = vadd.f32 %v5519, %v5739
    %v5748 = vadd.f32 %v5520, %v5744
    %v5749 = vld [vmem:[%s2 + $0x1b] sm:$0x1]
    %v5750 = vld [vmem:[%s2 + $0x1c] sm:$0x1]
    %v5751 = vsel %vm130, %v5747, 0.0
    %5752 = vadd.xlane.f32.xlu0 %v5751
    %v5753 = vpop.xlane.xlu0 %5752
    %v5754 = vsel %vm130, %v5748, 0.0
    %5755 = vadd.xlane.f32.xlu0 %v5754
    %v5756 = vpop.xlane.xlu0 %5755
    %v5757 = vmul.f32 %v5753, %v137
    %v5758 = vmul.f32 %v5756, %v137
    %v5759 = vsub.f32 %v5747, %v5757
    %v5760 = vsub.f32 %v5748, %v5758
    %v5761 = vmul.f32 %v5759, %v5759
    %v5762 = vmul.f32 %v5760, %v5760
    %v5763 = vsel %vm130, %v5761, 0.0
    %5764 = vadd.xlane.f32.xlu0 %v5763
    %v5765 = vpop.xlane.xlu0 %5764
    %v5766 = vsel %vm130, %v5762, 0.0
    %5767 = vadd.xlane.f32.xlu0 %v5766
    %v5768 = vpop.xlane.xlu0 %5767
    %v5769 = vmul.f32 %v5765, %v137
    %v5770 = vmul.f32 %v5768, %v137
    %v5771 = vadd.f32 %v5769, 1e-05
    %v5772 = vadd.f32 %v5770, 1e-05
    %v5773 = vrsqrt.pop %v5771
    %v5774 = vrsqrt.pop %v5772
    %v5775 = vmul.f32 %v5759, %v5773
    %v5776 = vmul.f32 %v5760, %v5774
    %v5777 = vlaneseq
    %v5778 = vshrl.u32 %v5777, 7
    %v5779 = vsub.s32 0, %v5778
    %v5780 = vrot.slane %v5749, %v5779
    %v5781 = vmul.f32 %v5775, %v5780
    %v5782 = vmul.f32 %v5776, %v5780
    %v5783 = vlaneseq
    %v5784 = vshrl.u32 %v5783, 7
    %v5785 = vsub.s32 0, %v5784
    %v5786 = vrot.slane %v5750, %v5785
    %v5787 = vadd.f32 %v5781, %v5786
    %v5788 = vadd.f32 %v5782, %v5786
    %v5789 = vld [vmem:[#allocation2 + $0x1e0] sm:$0xff]
    %v5790 = vld [vmem:[#allocation2 + $0x1e8] sm:$0xff]
    %v5791 = vld [vmem:[#allocation2 + $0x1f0] sm:$0xff]
    %v5792 = vld [vmem:[#allocation2 + $0x1f8] sm:$0xff]
    %v5793 = vld [vmem:[%s2 + $0x1d] sm:$0x1]
    %v5794 = vlaneseq
    %v5795 = vshrl.u32 %v5794, 7
    %v5796 = vsub.s32 0, %v5795
    %v5797 = vrot.slane %v5793, %v5796
    %v5799 = vsel %vm130, %v5787, 0
    %v5802 = vsel %vm130, %v5788, 0
    %5804 = vmatprep.subr.mxu0 0.0
    %5805 = vmatpush1.msra.mxu0 %v5789
    %5806 = vmatprep.subr.mxu0 0.0
    %5807 = vmatpush1.msra.mxu0 %v5790
    %5808 = vmatprep.subr.mxu0 0.0
    %5809 = vmatpush1.msra.mxu0 %v5791
    %5810 = vmatprep.subr.mxu0 0.0
    %5811 = vmatpush1.msra.mxu0 %v5792
    %5812 = vmatprep.subr.mxu0 0.0
    %5813 = vmatpush1.msra.mxu0 0.0
    %5814 = vmatprep.subr.mxu0 0.0
    %5815 = vmatpush1.msra.mxu0 0.0
    %5816 = vmatprep.subr.mxu0 0.0
    %5817 = vmatpush1.msra.mxu0 0.0
    %5818 = vmatprep.subr.mxu0 0.0
    %5819 = vmatpush1.msra.mxu0 0.0
    %5820 = vmatprep.subr.mxu0 0.0
    %5821 = vmatpush1.msra.mxu0 0.0
    %5822 = vmatprep.subr.mxu0 0.0
    %5823 = vmatpush1.msra.mxu0 0.0
    %5824 = vmatprep.subr.mxu0 0.0
    %5825 = vmatpush1.msra.mxu0 0.0
    %5826 = vmatprep.subr.mxu0 0.0
    %5827 = vmatpush1.msra.mxu0 0.0
    %5828 = vmatprep.subr.mxu0 0.0
    %5829 = vmatpush1.msra.mxu0 0.0
    %5830 = vmatprep.subr.mxu0 0.0
    %5831 = vmatpush1.msra.mxu0 0.0
    %5832 = vmatprep.subr.mxu0 0.0
    %5833 = vmatpush1.msra.mxu0 0.0
    %5834 = vmatprep.subr.mxu0 0.0
    %5835 = vmatpush1.msra.mxu0 0.0
    %5836 = vmatprep.subr.mxu0 0.0
    %5837 = vmatpush1.msra.mxu0 0.0
    %5838 = vmatprep.subr.mxu0 0.0
    %5839 = vmatpush1.msra.mxu0 0.0
    %5840 = vmatprep.subr.mxu0 0.0
    %5841 = vmatpush1.msra.mxu0 0.0
    %5842 = vmatprep.subr.mxu0 0.0
    %5843 = vmatpush1.msra.mxu0 0.0
    %5844 = vmatprep.subr.mxu0 0.0
    %5845 = vmatpush1.msra.mxu0 0.0
    %5846 = vmatprep.subr.mxu0 0.0
    %5847 = vmatpush1.msra.mxu0 0.0
    %5848 = vmatprep.subr.mxu0 0.0
    %5849 = vmatpush1.msra.mxu0 0.0
    %5850 = vmatprep.subr.mxu0 0.0
    %5851 = vmatpush1.msra.mxu0 0.0
    %5852 = vmatprep.subr.mxu0 0.0
    %5853 = vmatpush1.msra.mxu0 0.0
    %5854 = vmatprep.subr.mxu0 0.0
    %5855 = vmatpush1.msra.mxu0 0.0
    %5856 = vmatprep.subr.mxu0 0.0
    %5857 = vmatpush1.msra.mxu0 0.0
    %5858 = vmatprep.subr.mxu0 0.0
    %5859 = vmatpush1.msra.mxu0 0.0
    %5860 = vmatprep.subr.mxu0 0.0
    %5861 = vmatpush1.msra.mxu0 0.0
    %5862 = vmatprep.subr.mxu0 0.0
    %5863 = vmatpush1.msra.mxu0 0.0
    %5864 = vmatprep.subr.mxu0 0.0
    %5865 = vmatpush1.msra.mxu0 0.0
    %5866 = vmatprep.subr.mxu0 0.0
    %5867 = vmatpush1.msra.mxu0 0.0
    %5868 = vmatprep.mubr.f32.mxu0 0.0
    %5869 = vmatmul.mubr.f32.gmra.mrb[0].mxu0 %v5799
    %v5870 = vpop.f32.mrb[0].mxu0
    %v5871 = vadd.f32 %v5797, %v5870
    %v5872 = vpop.f32.mrb[0].mxu0
    %5873 = vmatprep.mubr.f32.mxu0 0.0
    %5874 = vmatmul.mubr.f32.gmra.mrb[0].mxu0 %v5802
    %v5875 = vpop.f32.mrb[0].mxu0
    %v5876 = vadd.f32 %v5797, %v5875
    %v5877 = vpop.f32.mrb[0].mxu0
    %5878 = vdwg.mxu0
    %v5879 = vsel %vm46, %v5871, -inf
    %5880 = vmax.xlane.f32.xlu0 %v5879
    %v5881 = vpop.xlane.xlu0 %5880
    %v5882 = vsel %vm46, %v5876, -inf
    %5883 = vmax.xlane.f32.xlu0 %v5882
    %v5884 = vpop.xlane.xlu0 %5883
    %v5885 = vsub.f32 %v5871, %v5881
    %v5886 = vsub.f32 %v5876, %v5884
    %v5887 = vmul.f32 %v5885, 1.442695
    %v5888 = vpow.pop %v5887
    %v5889 = vmul.f32 %v5886, 1.442695
    %v5890 = vpow.pop %v5889
    %v5891 = vsel %vm46, %v5888, 0.0
    %5892 = vadd.xlane.f32.xlu0 %v5891
    %v5893 = vpop.xlane.xlu0 %5892
    %v5894 = vsel %vm46, %v5890, 0.0
    %5895 = vadd.xlane.f32.xlu0 %v5894
    %v5896 = vpop.xlane.xlu0 %5895
    %v5897 = vlog2.pop %v5893
    %v5898 = vmul.f32 %v5897, 0.6931472
    %v5899 = vlog2.pop %v5896
    %v5900 = vmul.f32 %v5899, 0.6931472
    %v5901 = vsub.f32 %v5885, %v5898
    %v5902 = vsub.f32 %v5886, %v5900
    %5903 = vset.pattern.permute.xlu0 1
    %5904 = vperm.xlu0 %5903, %v33
    %v5905 = vpop.permute.xlu0 %5904
    %5906 = vset.pattern.permute.xlu0 1
    %5907 = vperm.xlu0 %5906, %v34
    %v5908 = vpop.permute.xlu0 %5907
    %vm5909 = vcmp.eq.s32.totalorder %v305, %v5905
    %vm5910 = vcmp.eq.s32.totalorder %v305, %v5908
    %vm5911 = vcmp.ne.s32.totalorder %v33, 4294967295
    %vm5912 = vcmp.ne.s32.totalorder %v34, 4294967295
    %v5913 = vsel %vm5909, 0.9, 0.006666667
    %v5914 = vsel %vm5910, 0.9, 0.006666667
    %v5915 = vsel %vm5909, -0.105360515, -5.0106354
    %v5916 = vsel %vm5910, -0.105360515, -5.0106354
    %v5917 = vsub.f32 %v5915, %v5901
    %v5918 = vsub.f32 %v5916, %v5902
    %v5919 = vmul.f32 %v5913, %v5917
    %v5920 = vmul.f32 %v5914, %v5918
    %v5921 = vsel %vm5911, 1, 0
    %v5922 = vsel %vm5912, 1, 0
    %5923 = vset.pattern.permute.xlu0 1
    %5924 = vperm.xlu0 %5923, %v5921
    %v5925 = vpop.permute.xlu0 %5924
    %5926 = vset.pattern.permute.xlu0 1
    %5927 = vperm.xlu0 %5926, %v5922
    %v5928 = vpop.permute.xlu0 %5927
    %vm5929 = vcmp.eq.s32.totalorder %v5925, 1
    %vm5930 = vcmp.eq.s32.totalorder %v5928, 1
    %v5931 = vsel %vm5929, %v5919, 0.0
    %v5932 = vsel %vm5930, %v5920, 0.0
    %v5933 = vcvt.s32.f32 %v305
    %vm5934 = vcmp.eq.f32.partialorder %v5871, %v5881
    %vm5935 = vcmp.eq.f32.partialorder %v5876, %v5884
    %v5936 = vsel %vm5934, %v5933, 16.0
    %v5937 = vsel %vm5935, %v5933, 16.0
    %v5938 = vsel %vm46, %v5936, inf
    %5939 = vmin.xlane.f32.xlu0 %v5938
    %v5940 = vpop.xlane.xlu0 %5939
    %v5941 = vsel %vm46, %v5937, inf
    %5942 = vmin.xlane.f32.xlu0 %v5941
    %v5943 = vpop.xlane.xlu0 %5942
    %v5944 = vcvt.s32.f32 %v33
    %v5945 = vcvt.s32.f32 %v34
    %vm5946 = vcmp.eq.f32.partialorder %v5940, %v5944
    %vm5947 = vcmp.eq.f32.partialorder %v5943, %v5945
    %vm5948 = vmand %vm5911, %vm5946
    %vm5949 = vmand %vm5912, %vm5947
    %v5950 = vsel %vm5948, 1.0, 0.0
    %v5951 = vsel %vm5949, 1.0, 0.0
    %5954 = vrot.lane.b32.xlu0 %v5950, 127
    %v5955 = vpop.permute.xlu0 %5954
    %5956 = vrot.lane.b32.xlu0 %v5951, 127
    %v5957 = vpop.permute.xlu0 %5956
    %vm5960 = vcmask 7168
    %v5961 = vsel %vm5960, %v5955, 0.0
    %v5962 = vsel %vm5960, %v5957, 0.0
    %v5963 = vadd.f32 %v5961, %v5962
    %5964 = vadd.xlane.f32.xlu0 %v5963
    %v5965 = vpop.xlane.xlu0 %5964
    %v5966 = vrot.slane %v5965, 4
    %v5967 = vadd.f32 %v5965, %v5966
    %v5968 = vrot.slane %v5967, 2
    %v5969 = vadd.f32 %v5967, %v5968
    %v5970 = vrot.slane %v5969, 1
    %v5971 = vadd.f32 %v5969, %v5970
    %s5972 = vtos %v5971
    %v5973 = vsel %vm5911, 1.0, 0.0
    %v5974 = vsel %vm5912, 1.0, 0.0
    %5977 = vrot.lane.b32.xlu0 %v5973, 127
    %v5978 = vpop.permute.xlu0 %5977
    %5979 = vrot.lane.b32.xlu0 %v5974, 127
    %v5980 = vpop.permute.xlu0 %5979
    %v5983 = vsel %vm5960, %v5978, 0.0
    %v5984 = vsel %vm5960, %v5980, 0.0
    %v5985 = vadd.f32 %v5983, %v5984
    %5986 = vadd.xlane.f32.xlu0 %v5985
    %v5987 = vpop.xlane.xlu0 %5986
    %v5988 = vrot.slane %v5987, 4
    %v5989 = vadd.f32 %v5987, %v5988
    %v5990 = vrot.slane %v5989, 2
    %v5991 = vadd.f32 %v5989, %v5990
    %v5992 = vrot.slane %v5991, 1
    %v5993 = vadd.f32 %v5991, %v5992
    %s5994 = vtos %v5993
    %v5995 = vsel %vm46, %v5931, 0.0
    %v5996 = vsel %vm46, %v5932, 0.0
    %v5997 = vadd.f32 %v5995, %v5996
    %5998 = vadd.xlane.f32.xlu0 %v5997
    %v5999 = vpop.xlane.xlu0 %5998
    %v6000 = vrot.slane %v5999, 4
    %v6001 = vadd.f32 %v5999, %v6000
    %v6002 = vrot.slane %v6001, 2
    %v6003 = vadd.f32 %v6001, %v6002
    %v6004 = vrot.slane %v6003, 1
    %v6005 = vadd.f32 %v6003, %v6004
    %s6006 = vtos %v6005
    %v6007 = vstv %s6006
    %vm6008 = vcmask 0
    %6009 = vst.msk [vmem:[%s5] sm:$0x1] %vm6008, %v6007
    %v6010 = vstv %s5972
    %vm6011 = vcmask 8200
    %6012 = vst.msk [vmem:[%s5] sm:$0x1] %vm6011, %v6010
    %v6013 = vstv %s5994
    %vm6014 = vcmask 16400
    %6015 = vst.msk [vmem:[%s5] sm:$0x1] %vm6014, %v6013
    %vm6016 = vcmask 24600
    %6017 = vst.msk [vmem:[%s5] sm:$0x1] %vm6016, 0.0
    // Predicated region
    $region22: #{asr_forward.1} parent=1 // pred_check
      _
    $region23: #{asr_forward.1} parent=1 // pred_check_branch
      %6019 = sbr.rel (0) target = $region25
    $region24: #{asr_forward.1} parent=1 // pred_region
      _
    $region25: #{asr_forward.1} parent=1 // pred_fallthru
      _
    // Predicated region
    $region26: #{asr_forward.1} parent=1 // pred_check
      _
    $region27: #{asr_forward.1} parent=1 // pred_check_branch
      %6021 = sbr.rel (0) target = $region29
    $region28: #{asr_forward.1} parent=1 // pred_region
      _
    $region29: #{asr_forward.1} parent=1 // pred_fallthru
      _
    // Predicated region
    $region30: #{asr_forward.1} parent=1 // pred_check
      _
    $region31: #{asr_forward.1} parent=1 // pred_check_branch
      %6023 = sbr.rel (0) target = $region33
    $region32: #{asr_forward.1} parent=1 // pred_region
      _
    $region33: #{asr_forward.1} parent=1 // pred_fallthru
      _
    // Predicated region
    $region34: #{asr_forward.1} parent=1 // pred_check
      _
    $region35: #{asr_forward.1} parent=1 // pred_check_branch
      %6025 = sbr.rel (0) target = $region37
    $region36: #{asr_forward.1} parent=1 // pred_region
      _
    $region37: #{asr_forward.1} parent=1 // pred_fallthru
      _
    %6026 = vsyncpa [#allocation3], 1

</llo_original>
